<compile_context>
chip_gen: v7x
topology: tpu7x:2x2x1
jax: 0.10.0
libtpu: 0.0.40
codegen_flags: <defaults>
</compile_context>

<pallas_src>
import functools

import jax
import jax.numpy as jnp
from jax.experimental import pallas as pl
from jax.experimental.pallas import tpu as pltpu

EPS = 1e-5
LANE = 128
# Rows per M-tile. Tune toward 512-2048 for production sizes; kept moderate so
# the small test shapes still exercise the multi-tile (partial-stats) path.
ROW_TILE_TARGET = 256
VMEM_LIMIT_BYTES = 32 * 1024 * 1024

_COMPILER_PARAMS = pltpu.CompilerParams(
    dimension_semantics=("parallel",),          # shards across v7x's 2 TCs
    vmem_limit_bytes=VMEM_LIMIT_BYTES,
)


# ------------------------------ small helpers ------------------------------ #
def _round_up(x, m):
    return (x + m - 1) // m * m


def _pick_row_tile(m, target=ROW_TILE_TARGET):
    """Largest multiple-of-8 divisor of m that is <= target (else m itself)."""
    if m <= target:
        return m
    for t in range(target, 7, -1):
        if m % t == 0 and t % 8 == 0:
            return t
    return m


def _pad_last(a, c):
    pad = c - a.shape[-1]
    if pad == 0:
        return a
    cfg = [(0, 0)] * (a.ndim - 1) + [(0, pad)]
    return jnp.pad(a, cfg)


# ------------------------------- kernels ----------------------------------- #
def _write_stats(y, stats_ref):
    # Per-tile partial BN statistics: row 0 = sum, row 1 = sum of squares.
    s = jnp.sum(y, axis=0, keepdims=True)
    ss = jnp.sum(y * y, axis=0, keepdims=True)
    stats_ref[0] = jnp.concatenate([s, ss], axis=0)


def _mm_stats_kernel(x_ref, w_ref, y_ref, stats_ref):
    # y tile = x tile @ w, plus partial BN stats of the tile.
    y = jnp.dot(x_ref[...], w_ref[...], preferred_element_type=jnp.float32)
    y_ref[...] = y
    _write_stats(y, stats_ref)


def _bnrelu_mm_stats_kernel(x_ref, scale_ref, shift_ref, w_ref, y_ref, stats_ref):
    # Fused: normalize+ReLU the input tile (previous BN phase-2), then matmul.
    x = jnp.maximum(x_ref[...] * scale_ref[...] + shift_ref[...], 0.0)
    y = jnp.dot(x, w_ref[...], preferred_element_type=jnp.float32)
    y_ref[...] = y
    _write_stats(y, stats_ref)


def _bn_act_kernel(y_ref, scale_ref, shift_ref, o_ref, *, relu):
    out = y_ref[...] * scale_ref[...] + shift_ref[...]
    if relu:
        out = jnp.maximum(out, 0.0)
    o_ref[...] = out


def _dual_bn_add_relu_kernel(ya_ref, yb_ref, sa_ref, ba_ref, sb_ref, bb_ref, o_ref):
    # Fused: bn3(y3) + bn_sc(y_sc) + residual add + final ReLU.
    a = ya_ref[...] * sa_ref[...] + ba_ref[...]
    b = yb_ref[...] * sb_ref[...] + bb_ref[...]
    o_ref[...] = jnp.maximum(a + b, 0.0)


def _conv3x3_stats_kernel(*refs, stride, ho, wo, taps):
    # 3x3 conv (padding=1) for one image: 9 shifted-window matmuls accumulated
    # into a VMEM scratch, no im2col materialization. Inputs are stride*stride
    # spatial phases of the spatially padded NHWC image, so every tap reads an
    # UNSTRIDED shifted window.
    nph = stride * stride
    phase_refs = refs[:nph]
    w_ref = refs[nph]
    y_ref = refs[nph + 1]
    stats_ref = refs[nph + 2]
    acc_ref = refs[nph + 3]

    cin = phase_refs[0].shape[-1]

    acc_ref[...] = jnp.zeros_like(acc_ref)
    for t, (ky, kx) in enumerate(taps):
        idx = (ky % stride) * stride + (kx % stride)
        r0, c0 = ky // stride, kx // stride
        patch = phase_refs[idx][0, r0:r0 + ho, c0:c0 + wo, :]   # (ho, wo, cin)
        acc_ref[...] += jnp.dot(patch.reshape(ho * wo, cin), w_ref[t],
                                preferred_element_type=jnp.float32)
    acc = acc_ref[...]
    y_ref[0] = acc
    _write_stats(acc, stats_ref)


# ----------------------------- kernel wrappers ------------------------------ #
def matmul_stats(x, w):
    M, K = x.shape
    C = w.shape[1]
    TM = _pick_row_tile(M)
    grid = (M // TM,)
    y, stats = pl.pallas_call(
        _mm_stats_kernel,
        grid=grid,
        in_specs=[pl.BlockSpec((TM, K), lambda i: (i, 0)),
                  pl.BlockSpec((K, C), lambda i: (0, 0))],
        out_specs=[pl.BlockSpec((TM, C), lambda i: (i, 0)),
                   pl.BlockSpec((1, 2, C), lambda i: (i, 0, 0))],
        out_shape=[jax.ShapeDtypeStruct((M, C), jnp.float32),
                   jax.ShapeDtypeStruct((grid[0], 2, C), jnp.float32)],
        compiler_params=_COMPILER_PARAMS,
    )(x, w)
    return y, stats


def bn_relu_matmul_stats(x, scale, shift, w):
    M, K = x.shape
    C = w.shape[1]
    TM = _pick_row_tile(M)
    grid = (M // TM,)
    y, stats = pl.pallas_call(
        _bnrelu_mm_stats_kernel,
        grid=grid,
        in_specs=[pl.BlockSpec((TM, K), lambda i: (i, 0)),
                  pl.BlockSpec((1, K), lambda i: (0, 0)),
                  pl.BlockSpec((1, K), lambda i: (0, 0)),
                  pl.BlockSpec((K, C), lambda i: (0, 0))],
        out_specs=[pl.BlockSpec((TM, C), lambda i: (i, 0)),
                   pl.BlockSpec((1, 2, C), lambda i: (i, 0, 0))],
        out_shape=[jax.ShapeDtypeStruct((M, C), jnp.float32),
                   jax.ShapeDtypeStruct((grid[0], 2, C), jnp.float32)],
        compiler_params=_COMPILER_PARAMS,
    )(x, scale.reshape(1, K), shift.reshape(1, K), w)
    return y, stats


def bn_act(y, scale, shift, relu):
    M, C = y.shape
    TM = _pick_row_tile(M)
    grid = (M // TM,)
    kernel = functools.partial(_bn_act_kernel, relu=relu)
    return pl.pallas_call(
        kernel,
        grid=grid,
        in_specs=[pl.BlockSpec((TM, C), lambda i: (i, 0)),
                  pl.BlockSpec((1, C), lambda i: (0, 0)),
                  pl.BlockSpec((1, C), lambda i: (0, 0))],
        out_specs=pl.BlockSpec((TM, C), lambda i: (i, 0)),
        out_shape=jax.ShapeDtypeStruct((M, C), jnp.float32),
        compiler_params=_COMPILER_PARAMS,
    )(y, scale.reshape(1, C), shift.reshape(1, C))


def dual_bn_add_relu(ya, yb, sa, ba, sb, bb):
    M, C = ya.shape
    TM = _pick_row_tile(M)
    grid = (M // TM,)
    return pl.pallas_call(
        _dual_bn_add_relu_kernel,
        grid=grid,
        in_specs=[pl.BlockSpec((TM, C), lambda i: (i, 0)),
                  pl.BlockSpec((TM, C), lambda i: (i, 0)),
                  pl.BlockSpec((1, C), lambda i: (0, 0)),
                  pl.BlockSpec((1, C), lambda i: (0, 0)),
                  pl.BlockSpec((1, C), lambda i: (0, 0)),
                  pl.BlockSpec((1, C), lambda i: (0, 0))],
        out_specs=pl.BlockSpec((TM, C), lambda i: (i, 0)),
        out_shape=jax.ShapeDtypeStruct((M, C), jnp.float32),
        compiler_params=_COMPILER_PARAMS,
    )(ya, yb, sa.reshape(1, C), ba.reshape(1, C),
      sb.reshape(1, C), bb.reshape(1, C))


def conv3x3_stats(z_nhwc, w9, stride):
    """3x3 conv, padding=1, given stride. Returns y (N*Ho*Wo, Cout), stats, Ho, Wo."""
    N, H, W, _ = z_nhwc.shape
    Cout = w9.shape[-1]
    Ho = (H - 1) // stride + 1
    Wo = (W - 1) // stride + 1
    zp = jnp.pad(z_nhwc, ((0, 0), (1, 1), (1, 1), (0, 0)))
    # Split into stride*stride spatial phases so every tap is an UNSTRIDED
    # shifted window (total data ~1x the activation, instead of a 9x im2col).
    phases = [zp[:, a::stride, b::stride, :]
              for a in range(stride) for b in range(stride)]
    taps = tuple((ky, kx) for ky in range(3) for kx in range(3))

    in_specs = [pl.BlockSpec((1,) + ph.shape[1:], lambda n: (n, 0, 0, 0))
                for ph in phases]
    in_specs.append(pl.BlockSpec(w9.shape, lambda n: (0, 0, 0)))

    kernel = functools.partial(_conv3x3_stats_kernel, stride=stride,
                               ho=Ho, wo=Wo, taps=taps)
    y, stats = pl.pallas_call(
        kernel,
        grid=(N,),
        in_specs=in_specs,
        out_specs=[pl.BlockSpec((1, Ho * Wo, Cout), lambda n: (n, 0, 0)),
                   pl.BlockSpec((1, 2, Cout), lambda n: (n, 0, 0))],
        out_shape=[jax.ShapeDtypeStruct((N, Ho * Wo, Cout), jnp.float32),
                   jax.ShapeDtypeStruct((N, 2, Cout), jnp.float32)],
        scratch_shapes=[pltpu.VMEM((Ho * Wo, Cout), jnp.float32)],
        compiler_params=_COMPILER_PARAMS,
    )(*phases, w9)
    return y.reshape(N * Ho * Wo, Cout), stats, Ho, Wo


# ------------------------------ JAX glue ------------------------------------ #
def _bn_scale_shift(stats, count, gamma, beta):
    """Fold batch stats (partial sums) + gamma/beta into per-channel scale/shift."""
    s = jnp.sum(stats[:, 0, :], axis=0)
    ss = jnp.sum(stats[:, 1, :], axis=0)
    mean = s / count
    var = jnp.maximum(ss / count - mean * mean, 0.0)   # biased batch variance
    scale = gamma * jax.lax.rsqrt(var + EPS)
    shift = beta - mean * scale
    return scale, shift


def _prep_params(p):
    """Reshape conv weights to matmul layout, zero-pad channels to lane width."""
    planes = p["w1"].shape[0]
    cout = p["w3"].shape[0]
    cp = _round_up(planes, LANE)
    cpo = _round_up(cout, LANE)

    w1 = _pad_last(p["w1"][:, :, 0, 0].T, cp)                        # (Cin, cp)
    w2 = jnp.zeros((9, cp, cp), jnp.float32)
    w2 = w2.at[:, :planes, :planes].set(
        jnp.transpose(p["w2"], (2, 3, 1, 0)).reshape(9, planes, planes))
    w3 = jnp.zeros((cp, cpo), jnp.float32)
    w3 = w3.at[:planes, :cout].set(p["w3"][:, :, 0, 0].T)

    pp = {
        "w1": w1, "w2": w2, "w3": w3,
        "g1": _pad_last(p["g1"], cp), "b1": _pad_last(p["b1"], cp),
        "g2": _pad_last(p["g2"], cp), "b2": _pad_last(p["b2"], cp),
        "g3": _pad_last(p["g3"], cpo), "b3": _pad_last(p["b3"], cpo),
    }
    if "ws" in p:
        pp["ws"] = _pad_last(p["ws"][:, :, 0, 0].T, cpo)             # (Cin, cpo)
        pp["gs"] = _pad_last(p["gs"], cpo)
        pp["bs"] = _pad_last(p["bs"], cpo)
    return pp, planes, cout, cp, cpo


@functools.partial(jax.jit, static_argnums=(2,))
def bottleneck_forward(x_nchw, p, stride):
    """Pallas implementation of BottleNeck.forward. Input/output are NCHW f32."""
    N, Cin, H, W = x_nchw.shape
    pp, planes, cout, cp, cpo = _prep_params(p)
    has_sc = (stride != 1) or (Cin != cout)

    # TODO(synk): the NCHW<->NHWC transposes and the strided shortcut subsample
    # remain separate XLA passes; they could be folded into DMA index maps.
    x = jnp.transpose(x_nchw, (0, 2, 3, 1)).astype(jnp.float32)      # NHWC
    x2d = x.reshape(N * H * W, Cin)
    M1 = N * H * W

    # conv1 (1x1) [phase-1: matmul + partial bn1 stats]
    y1, st1 = matmul_stats(x2d, pp["w1"])                            # (M1, cp)
    s1, b1 = _bn_scale_shift(st1, M1, pp["g1"], pp["b1"])
    # bn1 phase-2 + relu (tiled elementwise)
    z1 = bn_act(y1, s1, b1, relu=True).reshape(N, H, W, cp)

    # conv2 (3x3, stride, pad=1) [phase-1: conv + partial bn2 stats]
    y2, st2, Ho, Wo = conv3x3_stats(z1, pp["w2"], stride)            # (M2, cp)
    M2 = N * Ho * Wo
    s2, b2 = _bn_scale_shift(st2, M2, pp["g2"], pp["b2"])

    # conv3 (1x1) with bn2 phase-2 + relu fused onto its input tile
    y3, st3 = bn_relu_matmul_stats(y2, s2, b2, pp["w3"])             # (M2, cpo)
    s3, b3 = _bn_scale_shift(st3, M2, pp["g3"], pp["b3"])

    # shortcut branch
    if has_sc:
        xs = x[:, ::stride, ::stride, :].reshape(M2, Cin)
        ysc, stsc = matmul_stats(xs, pp["ws"])                       # (M2, cpo)
        ssc, bsc = _bn_scale_shift(stsc, M2, pp["gs"], pp["bs"])
    else:
        ysc = _pad_last(x2d, cpo)
        ssc = jnp.ones((cpo,), jnp.float32)
        bsc = jnp.zeros((cpo,), jnp.float32)

    # bn3 phase-2 + bn_sc phase-2 + residual add + final relu, fused
    out = dual_bn_add_relu(y3, ysc, s3, b3, ssc, bsc)                # (M2, cpo)
    out = out[:, :cout].reshape(N, Ho, Wo, cout)
    return jnp.transpose(out, (0, 3, 1, 2))                          # NCHW


# ------------------------- pure-JAX reference ------------------------------- #
@functools.partial(jax.jit, static_argnums=(2,))
def reference_forward(x, p, stride):
    def conv2d(x, w, stride=1, pad=0):
        return jax.lax.conv_general_dilated(
            x, w, window_strides=(stride, stride),
            padding=[(pad, pad), (pad, pad)],
            dimension_numbers=("NCHW", "OIHW", "NCHW"))

    def bn(x, gamma, beta):
        mean = jnp.mean(x, axis=(0, 2, 3), keepdims=True)
        var = jnp.mean(jnp.square(x - mean), axis=(0, 2, 3), keepdims=True)
        xhat = (x - mean) * jax.lax.rsqrt(var + EPS)
        return xhat * gamma.reshape(1, -1, 1, 1) + beta.reshape(1, -1, 1, 1)

    Cin = x.shape[1]
    Cout = p["w3"].shape[0]
    has_sc = (stride != 1) or (Cin != Cout)

    out = jax.nn.relu(bn(conv2d(x, p["w1"]), p["g1"], p["b1"]))
    out = jax.nn.relu(bn(conv2d(out, p["w2"], stride=stride, pad=1),
                         p["g2"], p["b2"]))
    out = bn(conv2d(out, p["w3"]), p["g3"], p["b3"])
    sc = bn(conv2d(x, p["ws"], stride=stride), p["gs"], p["bs"]) if has_sc else x
    return jax.nn.relu(out + sc)


# ------------------------------ parameters ---------------------------------- #
def make_params(key, in_planes, planes):
    cout = 4 * planes
    ks = jax.random.split(key, 12)
    f = jnp.float32
    return {
        "w1": 0.2 * jax.random.normal(ks[0], (planes, in_planes, 1, 1), f),
        "g1": 1.0 + 0.1 * jax.random.normal(ks[1], (planes,), f),
        "b1": 0.1 * jax.random.normal(ks[2], (planes,), f),
        "w2": 0.2 * jax.random.normal(ks[3], (planes, planes, 3, 3), f),
        "g2": 1.0 + 0.1 * jax.random.normal(ks[4], (planes,), f),
        "b2": 0.1 * jax.random.normal(ks[5], (planes,), f),
        "w3": 0.2 * jax.random.normal(ks[6], (cout, planes, 1, 1), f),
        "g3": 1.0 + 0.1 * jax.random.normal(ks[7], (cout,), f),
        "b3": 0.1 * jax.random.normal(ks[8], (cout,), f),
        "ws": 0.2 * jax.random.normal(ks[9], (cout, in_planes, 1, 1), f),
        "gs": 1.0 + 0.1 * jax.random.normal(ks[10], (cout,), f),
        "bs": 0.1 * jax.random.normal(ks[11], (cout,), f),
    }


if __name__ == "__main__":
    key = jax.random.PRNGKey(0)
    kx, kp = jax.random.split(key)

    N, in_planes, planes, S = 2, 4, 4, 16
    x = jax.random.normal(kx, (N, in_planes, S, S), jnp.float32)
    params = make_params(kp, in_planes, planes)

    for stride in (1, 2):
        out = jax.block_until_ready(bottleneck_forward(x, params, stride))
        ref = jax.block_until_ready(reference_forward(x, params, stride))
        assert out.shape == ref.shape, (out.shape, ref.shape)
        err = float(jnp.max(jnp.abs(out - ref)))
        assert jnp.allclose(out, ref, atol=1e-4, rtol=1e-4), (
            f"mismatch at stride={stride}: max err {err}")

    print("KERNEL_OK")
</pallas_src>

<mosaic_0001>
module attributes {stable_mosaic.version = 11 : i64} {
  func.func @_mm_stats_kernel(%arg0: i32, %arg1: memref<256x4xf32, #tpu.memory_space<vmem>>, %arg2: memref<4x128xf32, #tpu.memory_space<vmem>>, %arg3: memref<256x128xf32, #tpu.memory_space<vmem>>, %arg4: memref<1x2x128xf32, #tpu.memory_space<vmem>>) attributes {dimension_semantics = [#tpu.dimension_semantics<parallel>], iteration_bounds = array<i64: 2>, scalar_prefetch = 0 : i64, scratch_operands = 0 : i64, tpu.core_type = #tpu.core_type<tc>, window_params = [{transform_indices = @transform_0, window_bounds = array<i64: 256, 4>}, {pipeline_mode = #tpu.pipeline_mode<synchronous>, transform_indices = @transform_1, window_bounds = array<i64: 4, 128>}, {transform_indices = @transform_2, window_bounds = array<i64: 256, 128>}, {transform_indices = @transform_3, window_bounds = array<i64: 1, 2, 128>}]} {
    %c0 = arith.constant 0 : index
    %c0_0 = arith.constant 0 : index
    %0 = vector.load %arg1[%c0, %c0_0] : memref<256x4xf32, #tpu.memory_space<vmem>>, vector<256x4xf32>
    %c0_1 = arith.constant 0 : index
    %c0_2 = arith.constant 0 : index
    %1 = vector.load %arg2[%c0_1, %c0_2] : memref<4x128xf32, #tpu.memory_space<vmem>>, vector<4x128xf32>
    %cst = arith.constant dense<0.000000e+00> : vector<256x128xf32>
    %2 = tpu.matmul %0, %1, %cst {dimension_numbers = #tpu.dot_dimension_numbers<[1], [0], [0], [1], [0, 0, 1, 1], [], []>} : vector<256x4xf32>, vector<4x128xf32>, vector<256x128xf32> -> vector<256x128xf32>
    %c0_3 = arith.constant 0 : index
    %c0_4 = arith.constant 0 : index
    %3 = vector.load %arg3[%c0_3, %c0_4] : memref<256x128xf32, #tpu.memory_space<vmem>>, vector<256x128xf32>
    tpu.vector_store %arg3[%c0_3, %c0_4], %2 {strides = array<i32>} : memref<256x128xf32, #tpu.memory_space<vmem>>, vector<256x128xf32>,
    %cst_5 = arith.constant dense<0.000000e+00> : vector<128xf32>
    %4 = vector.multi_reduction <add>, %2, %cst_5 [0] : vector<256x128xf32> to vector<128xf32>
    %5 = vector.shape_cast %4 : vector<128xf32> to vector<1x128xf32>
    %6 = arith.mulf %2, %2 : vector<256x128xf32>
    %cst_6 = arith.constant dense<0.000000e+00> : vector<128xf32>
    %7 = vector.multi_reduction <add>, %6, %cst_6 [0] : vector<256x128xf32> to vector<128xf32>
    %8 = vector.shape_cast %7 : vector<128xf32> to vector<1x128xf32>
    %9 = tpu.concatenate %5, %8 in 0 : vector<1x128xf32>, vector<1x128xf32> -> vector<2x128xf32>
    %c0_7 = arith.constant 0 : index
    %c0_8 = arith.constant 0 : index
    %c0_9 = arith.constant 0 : index
    %10 = vector.load %arg4[%c0_7, %c0_8, %c0_9] : memref<1x2x128xf32, #tpu.memory_space<vmem>>, vector<1x2x128xf32>
    %11 = vector.shape_cast %10 : vector<1x2x128xf32> to vector<2x128xf32>
    %12 = vector.shape_cast %9 : vector<2x128xf32> to vector<1x2x128xf32>
    tpu.vector_store %arg4[%c0_7, %c0_8, %c0_9], %12 {strides = array<i32>} : memref<1x2x128xf32, #tpu.memory_space<vmem>>, vector<1x2x128xf32>,
    return
  }
  func.func @transform_0(%arg0: i32) -> (i32, i32) {
    %c0_i32 = arith.constant 0 : i32
    %c0_i32_0 = arith.constant 0 : i32
    return %arg0, %c0_i32 : i32, i32
  }
  func.func @transform_1(%arg0: i32) -> (i32, i32) {
    %c0_i32 = arith.constant 0 : i32
    %c0_i32_0 = arith.constant 0 : i32
    %c0_i32_1 = arith.constant 0 : i32
    return %c0_i32, %c0_i32_0 : i32, i32
  }
  func.func @transform_2(%arg0: i32) -> (i32, i32) {
    %c0_i32 = arith.constant 0 : i32
    %c0_i32_0 = arith.constant 0 : i32
    return %arg0, %c0_i32 : i32, i32
  }
  func.func @transform_3(%arg0: i32) -> (i32, i32, i32) {
    %c0_i32 = arith.constant 0 : i32
    %c0_i32_0 = arith.constant 0 : i32
    %c0_i32_1 = arith.constant 0 : i32
    return %arg0, %c0_i32, %c0_i32_0 : i32, i32, i32
  }
}

module attributes {stable_mosaic.version = 11 : i64} {
  func.func @_conv3x3_stats_kernel(%arg0: i32, %arg1: memref<1x18x18x128xf32, #tpu.memory_space<vmem>>, %arg2: memref<9x128x128xf32, #tpu.memory_space<vmem>>, %arg3: memref<1x256x128xf32, #tpu.memory_space<vmem>>, %arg4: memref<1x2x128xf32, #tpu.memory_space<vmem>>, %arg5: memref<256x128xf32, #tpu.memory_space<vmem>>) attributes {dimension_semantics = [#tpu.dimension_semantics<parallel>], iteration_bounds = array<i64: 2>, scalar_prefetch = 0 : i64, scratch_operands = 1 : i64, tpu.core_type = #tpu.core_type<tc>, window_params = [{transform_indices = @transform_0, window_bounds = array<i64: 1, 18, 18, 128>}, {pipeline_mode = #tpu.pipeline_mode<synchronous>, transform_indices = @transform_1, window_bounds = array<i64: 9, 128, 128>}, {transform_indices = @transform_2, window_bounds = array<i64: 1, 256, 128>}, {transform_indices = @transform_3, window_bounds = array<i64: 1, 2, 128>}]} {
    %cst = arith.constant 0.000000e+00 : f32
    %0 = vector.broadcast %cst : f32 to vector<256x128xf32>
    %c0 = arith.constant 0 : index
    %c0_0 = arith.constant 0 : index
    %1 = vector.load %arg5[%c0, %c0_0] : memref<256x128xf32, #tpu.memory_space<vmem>>, vector<256x128xf32>
    tpu.vector_store %arg5[%c0, %c0_0], %0 {strides = array<i32>} : memref<256x128xf32, #tpu.memory_space<vmem>>, vector<256x128xf32>,
    %c0_1 = arith.constant 0 : index
    %c0_2 = arith.constant 0 : index
    %c0_3 = arith.constant 0 : index
    %c0_4 = arith.constant 0 : index
    %2 = vector.load %arg1[%c0_1, %c0_2, %c0_3, %c0_4] : memref<1x18x18x128xf32, #tpu.memory_space<vmem>>, vector<1x16x16x128xf32>
    %3 = vector.shape_cast %2 : vector<1x16x16x128xf32> to vector<16x16x128xf32>
    %c0_5 = arith.constant 0 : index
    %c0_6 = arith.constant 0 : index
    %4 = vector.load %arg5[%c0_5, %c0_6] : memref<256x128xf32, #tpu.memory_space<vmem>>, vector<256x128xf32>
    %5 = vector.shape_cast %3 : vector<16x16x128xf32> to vector<256x128xf32>
    %c0_7 = arith.constant 0 : index
    %c0_8 = arith.constant 0 : index
    %c0_9 = arith.constant 0 : index
    %6 = vector.load %arg2[%c0_7, %c0_8, %c0_9] : memref<9x128x128xf32, #tpu.memory_space<vmem>>, vector<1x128x128xf32>
    %7 = vector.shape_cast %6 : vector<1x128x128xf32> to vector<128x128xf32>
    %cst_10 = arith.constant dense<0.000000e+00> : vector<256x128xf32>
    %8 = tpu.matmul %5, %7, %cst_10 {dimension_numbers = #tpu.dot_dimension_numbers<[1], [0], [0], [1], [0, 0, 1, 1], [], []>} : vector<256x128xf32>, vector<128x128xf32>, vector<256x128xf32> -> vector<256x128xf32>
    %9 = arith.addf %4, %8 : vector<256x128xf32>
    %c0_11 = arith.constant 0 : index
    %c0_12 = arith.constant 0 : index
    %10 = vector.load %arg5[%c0_11, %c0_12] : memref<256x128xf32, #tpu.memory_space<vmem>>, vector<256x128xf32>
    tpu.vector_store %arg5[%c0_11, %c0_12], %9 {strides = array<i32>} : memref<256x128xf32, #tpu.memory_space<vmem>>, vector<256x128xf32>,
    %c0_13 = arith.constant 0 : index
    %c0_14 = arith.constant 0 : index
    %c1 = arith.constant 1 : index
    %c0_15 = arith.constant 0 : index
    %11 = vector.load %arg1[%c0_13, %c0_14, %c1, %c0_15] : memref<1x18x18x128xf32, #tpu.memory_space<vmem>>, vector<1x16x16x128xf32>
    %12 = vector.shape_cast %11 : vector<1x16x16x128xf32> to vector<16x16x128xf32>
    %c0_16 = arith.constant 0 : index
    %c0_17 = arith.constant 0 : index
    %13 = vector.load %arg5[%c0_16, %c0_17] : memref<256x128xf32, #tpu.memory_space<vmem>>, vector<256x128xf32>
    %14 = vector.shape_cast %12 : vector<16x16x128xf32> to vector<256x128xf32>
    %c1_18 = arith.constant 1 : index
    %c0_19 = arith.constant 0 : index
    %c0_20 = arith.constant 0 : index
    %15 = vector.load %arg2[%c1_18, %c0_19, %c0_20] : memref<9x128x128xf32, #tpu.memory_space<vmem>>, vector<1x128x128xf32>
    %16 = vector.shape_cast %15 : vector<1x128x128xf32> to vector<128x128xf32>
    %cst_21 = arith.constant dense<0.000000e+00> : vector<256x128xf32>
    %17 = tpu.matmul %14, %16, %cst_21 {dimension_numbers = #tpu.dot_dimension_numbers<[1], [0], [0], [1], [0, 0, 1, 1], [], []>} : vector<256x128xf32>, vector<128x128xf32>, vector<256x128xf32> -> vector<256x128xf32>
    %18 = arith.addf %13, %17 : vector<256x128xf32>
    %c0_22 = arith.constant 0 : index
    %c0_23 = arith.constant 0 : index
    %19 = vector.load %arg5[%c0_22, %c0_23] : memref<256x128xf32, #tpu.memory_space<vmem>>, vector<256x128xf32>
    tpu.vector_store %arg5[%c0_22, %c0_23], %18 {strides = array<i32>} : memref<256x128xf32, #tpu.memory_space<vmem>>, vector<256x128xf32>,
    %c0_24 = arith.constant 0 : index
    %c0_25 = arith.constant 0 : index
    %c2 = arith.constant 2 : index
    %c0_26 = arith.constant 0 : index
    %20 = vector.load %arg1[%c0_24, %c0_25, %c2, %c0_26] : memref<1x18x18x128xf32, #tpu.memory_space<vmem>>, vector<1x16x16x128xf32>
    %21 = vector.shape_cast %20 : vector<1x16x16x128xf32> to vector<16x16x128xf32>
    %c0_27 = arith.constant 0 : index
    %c0_28 = arith.constant 0 : index
    %22 = vector.load %arg5[%c0_27, %c0_28] : memref<256x128xf32, #tpu.memory_space<vmem>>, vector<256x128xf32>
    %23 = vector.shape_cast %21 : vector<16x16x128xf32> to vector<256x128xf32>
    %c2_29 = arith.constant 2 : index
    %c0_30 = arith.constant 0 : index
    %c0_31 = arith.constant 0 : index
    %24 = vector.load %arg2[%c2_29, %c0_30, %c0_31] : memref<9x128x128xf32, #tpu.memory_space<vmem>>, vector<1x128x128xf32>
    %25 = vector.shape_cast %24 : vector<1x128x128xf32> to vector<128x128xf32>
    %cst_32 = arith.constant dense<0.000000e+00> : vector<256x128xf32>
    %26 = tpu.matmul %23, %25, %cst_32 {dimension_numbers = #tpu.dot_dimension_numbers<[1], [0], [0], [1], [0, 0, 1, 1], [], []>} : vector<256x128xf32>, vector<128x128xf32>, vector<256x128xf32> -> vector<256x128xf32>
    %27 = arith.addf %22, %26 : vector<256x128xf32>
    %c0_33 = arith.constant 0 : index
    %c0_34 = arith.constant 0 : index
    %28 = vector.load %arg5[%c0_33, %c0_34] : memref<256x128xf32, #tpu.memory_space<vmem>>, vector<256x128xf32>
    tpu.vector_store %arg5[%c0_33, %c0_34], %27 {strides = array<i32>} : memref<256x128xf32, #tpu.memory_space<vmem>>, vector<256x128xf32>,
    %c0_35 = arith.constant 0 : index
    %c1_36 = arith.constant 1 : index
    %c0_37 = arith.constant 0 : index
    %c0_38 = arith.constant 0 : index
    %29 = vector.load %arg1[%c0_35, %c1_36, %c0_37, %c0_38] : memref<1x18x18x128xf32, #tpu.memory_space<vmem>>, vector<1x16x16x128xf32>
    %30 = vector.shape_cast %29 : vector<1x16x16x128xf32> to vector<16x16x128xf32>
    %c0_39 = arith.constant 0 : index
    %c0_40 = arith.constant 0 : index
    %31 = vector.load %arg5[%c0_39, %c0_40] : memref<256x128xf32, #tpu.memory_space<vmem>>, vector<256x128xf32>
    %32 = vector.shape_cast %30 : vector<16x16x128xf32> to vector<256x128xf32>
    %c3 = arith.constant 3 : index
    %c0_41 = arith.constant 0 : index
    %c0_42 = arith.constant 0 : index
    %33 = vector.load %arg2[%c3, %c0_41, %c0_42] : memref<9x128x128xf32, #tpu.memory_space<vmem>>, vector<1x128x128xf32>
    %34 = vector.shape_cast %33 : vector<1x128x128xf32> to vector<128x128xf32>
    %cst_43 = arith.constant dense<0.000000e+00> : vector<256x128xf32>
    %35 = tpu.matmul %32, %34, %cst_43 {dimension_numbers = #tpu.dot_dimension_numbers<[1], [0], [0], [1], [0, 0, 1, 1], [], []>} : vector<256x128xf32>, vector<128x128xf32>, vector<256x128xf32> -> vector<256x128xf32>
    %36 = arith.addf %31, %35 : vector<256x128xf32>
    %c0_44 = arith.constant 0 : index
    %c0_45 = arith.constant 0 : index
    %37 = vector.load %arg5[%c0_44, %c0_45] : memref<256x128xf32, #tpu.memory_space<vmem>>, vector<256x128xf32>
    tpu.vector_store %arg5[%c0_44, %c0_45], %36 {strides = array<i32>} : memref<256x128xf32, #tpu.memory_space<vmem>>, vector<256x128xf32>,
    %c0_46 = arith.constant 0 : index
    %c1_47 = arith.constant 1 : index
    %c1_48 = arith.constant 1 : index
    %c0_49 = arith.constant 0 : index
    %38 = vector.load %arg1[%c0_46, %c1_47, %c1_48, %c0_49] : memref<1x18x18x128xf32, #tpu.memory_space<vmem>>, vector<1x16x16x128xf32>
    %39 = vector.shape_cast %38 : vector<1x16x16x128xf32> to vector<16x16x128xf32>
    %c0_50 = arith.constant 0 : index
    %c0_51 = arith.constant 0 : index
    %40 = vector.load %arg5[%c0_50, %c0_51] : memref<256x128xf32, #tpu.memory_space<vmem>>, vector<256x128xf32>
    %41 = vector.shape_cast %39 : vector<16x16x128xf32> to vector<256x128xf32>
    %c4 = arith.constant 4 : index
    %c0_52 = arith.constant 0 : index
    %c0_53 = arith.constant 0 : index
    %42 = vector.load %arg2[%c4, %c0_52, %c0_53] : memref<9x128x128xf32, #tpu.memory_space<vmem>>, vector<1x128x128xf32>
    %43 = vector.shape_cast %42 : vector<1x128x128xf32> to vector<128x128xf32>
    %cst_54 = arith.constant dense<0.000000e+00> : vector<256x128xf32>
    %44 = tpu.matmul %41, %43, %cst_54 {dimension_numbers = #tpu.dot_dimension_numbers<[1], [0], [0], [1], [0, 0, 1, 1], [], []>} : vector<256x128xf32>, vector<128x128xf32>, vector<256x128xf32> -> vector<256x128xf32>
    %45 = arith.addf %40, %44 : vector<256x128xf32>
    %c0_55 = arith.constant 0 : index
    %c0_56 = arith.constant 0 : index
    %46 = vector.load %arg5[%c0_55, %c0_56] : memref<256x128xf32, #tpu.memory_space<vmem>>, vector<256x128xf32>
    tpu.vector_store %arg5[%c0_55, %c0_56], %45 {strides = array<i32>} : memref<256x128xf32, #tpu.memory_space<vmem>>, vector<256x128xf32>,
    %c0_57 = arith.constant 0 : index
    %c1_58 = arith.constant 1 : index
    %c2_59 = arith.constant 2 : index
    %c0_60 = arith.constant 0 : index
    %47 = vector.load %arg1[%c0_57, %c1_58, %c2_59, %c0_60] : memref<1x18x18x128xf32, #tpu.memory_space<vmem>>, vector<1x16x16x128xf32>
    %48 = vector.shape_cast %47 : vector<1x16x16x128xf32> to vector<16x16x128xf32>
    %c0_61 = arith.constant 0 : index
    %c0_62 = arith.constant 0 : index
    %49 = vector.load %arg5[%c0_61, %c0_62] : memref<256x128xf32, #tpu.memory_space<vmem>>, vector<256x128xf32>
    %50 = vector.shape_cast %48 : vector<16x16x128xf32> to vector<256x128xf32>
    %c5 = arith.constant 5 : index
    %c0_63 = arith.constant 0 : index
    %c0_64 = arith.constant 0 : index
    %51 = vector.load %arg2[%c5, %c0_63, %c0_64] : memref<9x128x128xf32, #tpu.memory_space<vmem>>, vector<1x128x128xf32>
    %52 = vector.shape_cast %51 : vector<1x128x128xf32> to vector<128x128xf32>
    %cst_65 = arith.constant dense<0.000000e+00> : vector<256x128xf32>
    %53 = tpu.matmul %50, %52, %cst_65 {dimension_numbers = #tpu.dot_dimension_numbers<[1], [0], [0], [1], [0, 0, 1, 1], [], []>} : vector<256x128xf32>, vector<128x128xf32>, vector<256x128xf32> -> vector<256x128xf32>
    %54 = arith.addf %49, %53 : vector<256x128xf32>
    %c0_66 = arith.constant 0 : index
    %c0_67 = arith.constant 0 : index
    %55 = vector.load %arg5[%c0_66, %c0_67] : memref<256x128xf32, #tpu.memory_space<vmem>>, vector<256x128xf32>
    tpu.vector_store %arg5[%c0_66, %c0_67], %54 {strides = array<i32>} : memref<256x128xf32, #tpu.memory_space<vmem>>, vector<256x128xf32>,
    %c0_68 = arith.constant 0 : index
    %c2_69 = arith.constant 2 : index
    %c0_70 = arith.constant 0 : index
    %c0_71 = arith.constant 0 : index
    %56 = vector.load %arg1[%c0_68, %c2_69, %c0_70, %c0_71] : memref<1x18x18x128xf32, #tpu.memory_space<vmem>>, vector<1x16x16x128xf32>
    %57 = vector.shape_cast %56 : vector<1x16x16x128xf32> to vector<16x16x128xf32>
    %c0_72 = arith.constant 0 : index
    %c0_73 = arith.constant 0 : index
    %58 = vector.load %arg5[%c0_72, %c0_73] : memref<256x128xf32, #tpu.memory_space<vmem>>, vector<256x128xf32>
    %59 = vector.shape_cast %57 : vector<16x16x128xf32> to vector<256x128xf32>
    %c6 = arith.constant 6 : index
    %c0_74 = arith.constant 0 : index
    %c0_75 = arith.constant 0 : index
    %60 = vector.load %arg2[%c6, %c0_74, %c0_75] : memref<9x128x128xf32, #tpu.memory_space<vmem>>, vector<1x128x128xf32>
    %61 = vector.shape_cast %60 : vector<1x128x128xf32> to vector<128x128xf32>
    %cst_76 = arith.constant dense<0.000000e+00> : vector<256x128xf32>
    %62 = tpu.matmul %59, %61, %cst_76 {dimension_numbers = #tpu.dot_dimension_numbers<[1], [0], [0], [1], [0, 0, 1, 1], [], []>} : vector<256x128xf32>, vector<128x128xf32>, vector<256x128xf32> -> vector<256x128xf32>
    %63 = arith.addf %58, %62 : vector<256x128xf32>
    %c0_77 = arith.constant 0 : index
    %c0_78 = arith.constant 0 : index
    %64 = vector.load %arg5[%c0_77, %c0_78] : memref<256x128xf32, #tpu.memory_space<vmem>>, vector<256x128xf32>
    tpu.vector_store %arg5[%c0_77, %c0_78], %63 {strides = array<i32>} : memref<256x128xf32, #tpu.memory_space<vmem>>, vector<256x128xf32>,
    %c0_79 = arith.constant 0 : index
    %c2_80 = arith.constant 2 : index
    %c1_81 = arith.constant 1 : index
    %c0_82 = arith.constant 0 : index
    %65 = vector.load %arg1[%c0_79, %c2_80, %c1_81, %c0_82] : memref<1x18x18x128xf32, #tpu.memory_space<vmem>>, vector<1x16x16x128xf32>
    %66 = vector.shape_cast %65 : vector<1x16x16x128xf32> to vector<16x16x128xf32>
    %c0_83 = arith.constant 0 : index
    %c0_84 = arith.constant 0 : index
    %67 = vector.load %arg5[%c0_83, %c0_84] : memref<256x128xf32, #tpu.memory_space<vmem>>, vector<256x128xf32>
    %68 = vector.shape_cast %66 : vector<16x16x128xf32> to vector<256x128xf32>
    %c7 = arith.constant 7 : index
    %c0_85 = arith.constant 0 : index
    %c0_86 = arith.constant 0 : index
    %69 = vector.load %arg2[%c7, %c0_85, %c0_86] : memref<9x128x128xf32, #tpu.memory_space<vmem>>, vector<1x128x128xf32>
    %70 = vector.shape_cast %69 : vector<1x128x128xf32> to vector<128x128xf32>
    %cst_87 = arith.constant dense<0.000000e+00> : vector<256x128xf32>
    %71 = tpu.matmul %68, %70, %cst_87 {dimension_numbers = #tpu.dot_dimension_numbers<[1], [0], [0], [1], [0, 0, 1, 1], [], []>} : vector<256x128xf32>, vector<128x128xf32>, vector<256x128xf32> -> vector<256x128xf32>
    %72 = arith.addf %67, %71 : vector<256x128xf32>
    %c0_88 = arith.constant 0 : index
    %c0_89 = arith.constant 0 : index
    %73 = vector.load %arg5[%c0_88, %c0_89] : memref<256x128xf32, #tpu.memory_space<vmem>>, vector<256x128xf32>
    tpu.vector_store %arg5[%c0_88, %c0_89], %72 {strides = array<i32>} : memref<256x128xf32, #tpu.memory_space<vmem>>, vector<256x128xf32>,
    %c0_90 = arith.constant 0 : index
    %c2_91 = arith.constant 2 : index
    %c2_92 = arith.constant 2 : index
    %c0_93 = arith.constant 0 : index
    %74 = vector.load %arg1[%c0_90, %c2_91, %c2_92, %c0_93] : memref<1x18x18x128xf32, #tpu.memory_space<vmem>>, vector<1x16x16x128xf32>
    %75 = vector.shape_cast %74 : vector<1x16x16x128xf32> to vector<16x16x128xf32>
    %c0_94 = arith.constant 0 : index
    %c0_95 = arith.constant 0 : index
    %76 = vector.load %arg5[%c0_94, %c0_95] : memref<256x128xf32, #tpu.memory_space<vmem>>, vector<256x128xf32>
    %77 = vector.shape_cast %75 : vector<16x16x128xf32> to vector<256x128xf32>
    %c8 = arith.constant 8 : index
    %c0_96 = arith.constant 0 : index
    %c0_97 = arith.constant 0 : index
    %78 = vector.load %arg2[%c8, %c0_96, %c0_97] : memref<9x128x128xf32, #tpu.memory_space<vmem>>, vector<1x128x128xf32>
    %79 = vector.shape_cast %78 : vector<1x128x128xf32> to vector<128x128xf32>
    %cst_98 = arith.constant dense<0.000000e+00> : vector<256x128xf32>
    %80 = tpu.matmul %77, %79, %cst_98 {dimension_numbers = #tpu.dot_dimension_numbers<[1], [0], [0], [1], [0, 0, 1, 1], [], []>} : vector<256x128xf32>, vector<128x128xf32>, vector<256x128xf32> -> vector<256x128xf32>
    %81 = arith.addf %76, %80 : vector<256x128xf32>
    %c0_99 = arith.constant 0 : index
    %c0_100 = arith.constant 0 : index
    %82 = vector.load %arg5[%c0_99, %c0_100] : memref<256x128xf32, #tpu.memory_space<vmem>>, vector<256x128xf32>
    tpu.vector_store %arg5[%c0_99, %c0_100], %81 {strides = array<i32>} : memref<256x128xf32, #tpu.memory_space<vmem>>, vector<256x128xf32>,
    %c0_101 = arith.constant 0 : index
    %c0_102 = arith.constant 0 : index
    %83 = vector.load %arg5[%c0_101, %c0_102] : memref<256x128xf32, #tpu.memory_space<vmem>>, vector<256x128xf32>
    %c0_103 = arith.constant 0 : index
    %c0_104 = arith.constant 0 : index
    %c0_105 = arith.constant 0 : index
    %84 = vector.load %arg3[%c0_103, %c0_104, %c0_105] : memref<1x256x128xf32, #tpu.memory_space<vmem>>, vector<1x256x128xf32>
    %85 = vector.shape_cast %84 : vector<1x256x128xf32> to vector<256x128xf32>
    %86 = vector.shape_cast %83 : vector<256x128xf32> to vector<1x256x128xf32>
    tpu.vector_store %arg3[%c0_103, %c0_104, %c0_105], %86 {strides = array<i32>} : memref<1x256x128xf32, #tpu.memory_space<vmem>>, vector<1x256x128xf32>,
    %cst_106 = arith.constant dense<0.000000e+00> : vector<128xf32>
    %87 = vector.multi_reduction <add>, %83, %cst_106 [0] : vector<256x128xf32> to vector<128xf32>
    %88 = vector.shape_cast %87 : vector<128xf32> to vector<1x128xf32>
    %89 = arith.mulf %83, %83 : vector<256x128xf32>
    %cst_107 = arith.constant dense<0.000000e+00> : vector<128xf32>
    %90 = vector.multi_reduction <add>, %89, %cst_107 [0] : vector<256x128xf32> to vector<128xf32>
    %91 = vector.shape_cast %90 : vector<128xf32> to vector<1x128xf32>
    %92 = tpu.concatenate %88, %91 in 0 : vector<1x128xf32>, vector<1x128xf32> -> vector<2x128xf32>
    %c0_108 = arith.constant 0 : index
    %c0_109 = arith.constant 0 : index
    %c0_110 = arith.constant 0 : index
    %93 = vector.load %arg4[%c0_108, %c0_109, %c0_110] : memref<1x2x128xf32, #tpu.memory_space<vmem>>, vector<1x2x128xf32>
    %94 = vector.shape_cast %93 : vector<1x2x128xf32> to vector<2x128xf32>
    %95 = vector.shape_cast %92 : vector<2x128xf32> to vector<1x2x128xf32>
    tpu.vector_store %arg4[%c0_108, %c0_109, %c0_110], %95 {strides = array<i32>} : memref<1x2x128xf32, #tpu.memory_space<vmem>>, vector<1x2x128xf32>,
    return
  }
  func.func @transform_0(%arg0: i32) -> (i32, i32, i32, i32) {
    %c0_i32 = arith.constant 0 : i32
    %c0_i32_0 = arith.constant 0 : i32
    %c0_i32_1 = arith.constant 0 : i32
    %c0_i32_2 = arith.constant 0 : i32
    return %arg0, %c0_i32, %c0_i32_0, %c0_i32_1 : i32, i32, i32, i32
  }
  func.func @transform_1(%arg0: i32) -> (i32, i32, i32) {
    %c0_i32 = arith.constant 0 : i32
    %c0_i32_0 = arith.constant 0 : i32
    %c0_i32_1 = arith.constant 0 : i32
    %c0_i32_2 = arith.constant 0 : i32
    return %c0_i32, %c0_i32_0, %c0_i32_1 : i32, i32, i32
  }
  func.func @transform_2(%arg0: i32) -> (i32, i32, i32) {
    %c0_i32 = arith.constant 0 : i32
    %c0_i32_0 = arith.constant 0 : i32
    %c0_i32_1 = arith.constant 0 : i32
    return %arg0, %c0_i32, %c0_i32_0 : i32, i32, i32
  }
  func.func @transform_3(%arg0: i32) -> (i32, i32, i32) {
    %c0_i32 = arith.constant 0 : i32
    %c0_i32_0 = arith.constant 0 : i32
    %c0_i32_1 = arith.constant 0 : i32
    return %arg0, %c0_i32, %c0_i32_0 : i32, i32, i32
  }
}

module attributes {stable_mosaic.version = 11 : i64} {
  func.func @_bn_act_kernel(%arg0: i32, %arg1: memref<256x128xf32, #tpu.memory_space<vmem>>, %arg2: memref<1x128xf32, #tpu.memory_space<vmem>>, %arg3: memref<1x128xf32, #tpu.memory_space<vmem>>, %arg4: memref<256x128xf32, #tpu.memory_space<vmem>>) attributes {dimension_semantics = [#tpu.dimension_semantics<parallel>], iteration_bounds = array<i64: 2>, scalar_prefetch = 0 : i64, scratch_operands = 0 : i64, tpu.core_type = #tpu.core_type<tc>, window_params = [{transform_indices = @transform_0, window_bounds = array<i64: 256, 128>}, {pipeline_mode = #tpu.pipeline_mode<synchronous>, transform_indices = @transform_1, window_bounds = array<i64: 1, 128>}, {pipeline_mode = #tpu.pipeline_mode<synchronous>, transform_indices = @transform_2, window_bounds = array<i64: 1, 128>}, {transform_indices = @transform_3, window_bounds = array<i64: 256, 128>}]} {
    %c0 = arith.constant 0 : index
    %c0_0 = arith.constant 0 : index
    %0 = vector.load %arg1[%c0, %c0_0] : memref<256x128xf32, #tpu.memory_space<vmem>>, vector<256x128xf32>
    %c0_1 = arith.constant 0 : index
    %c0_2 = arith.constant 0 : index
    %1 = vector.load %arg2[%c0_1, %c0_2] : memref<1x128xf32, #tpu.memory_space<vmem>>, vector<1x128xf32>
    %2 = vector.broadcast %1 : vector<1x128xf32> to vector<256x128xf32>
    %3 = arith.mulf %0, %2 : vector<256x128xf32>
    %c0_3 = arith.constant 0 : index
    %c0_4 = arith.constant 0 : index
    %4 = vector.load %arg3[%c0_3, %c0_4] : memref<1x128xf32, #tpu.memory_space<vmem>>, vector<1x128xf32>
    %5 = vector.broadcast %4 : vector<1x128xf32> to vector<256x128xf32>
    %6 = arith.addf %3, %5 : vector<256x128xf32>
    %cst = arith.constant 0.000000e+00 : f32
    %7 = vector.broadcast %cst : f32 to vector<256x128xf32>
    %8 = arith.maximumf %6, %7 : vector<256x128xf32>
    %c0_5 = arith.constant 0 : index
    %c0_6 = arith.constant 0 : index
    %9 = vector.load %arg4[%c0_5, %c0_6] : memref<256x128xf32, #tpu.memory_space<vmem>>, vector<256x128xf32>
    tpu.vector_store %arg4[%c0_5, %c0_6], %8 {strides = array<i32>} : memref<256x128xf32, #tpu.memory_space<vmem>>, vector<256x128xf32>,
    return
  }
  func.func @transform_0(%arg0: i32) -> (i32, i32) {
    %c0_i32 = arith.constant 0 : i32
    %c0_i32_0 = arith.constant 0 : i32
    return %arg0, %c0_i32 : i32, i32
  }
  func.func @transform_1(%arg0: i32) -> (i32, i32) {
    %c0_i32 = arith.constant 0 : i32
    %c0_i32_0 = arith.constant 0 : i32
    %c0_i32_1 = arith.constant 0 : i32
    return %c0_i32, %c0_i32_0 : i32, i32
  }
  func.func @transform_2(%arg0: i32) -> (i32, i32) {
    %c0_i32 = arith.constant 0 : i32
    %c0_i32_0 = arith.constant 0 : i32
    %c0_i32_1 = arith.constant 0 : i32
    return %c0_i32, %c0_i32_0 : i32, i32
  }
  func.func @transform_3(%arg0: i32) -> (i32, i32) {
    %c0_i32 = arith.constant 0 : i32
    %c0_i32_0 = arith.constant 0 : i32
    return %arg0, %c0_i32 : i32, i32
  }
}

module attributes {stable_mosaic.version = 11 : i64} {
  func.func @_bnrelu_mm_stats_kernel(%arg0: i32, %arg1: memref<256x128xf32, #tpu.memory_space<vmem>>, %arg2: memref<1x128xf32, #tpu.memory_space<vmem>>, %arg3: memref<1x128xf32, #tpu.memory_space<vmem>>, %arg4: memref<128x128xf32, #tpu.memory_space<vmem>>, %arg5: memref<256x128xf32, #tpu.memory_space<vmem>>, %arg6: memref<1x2x128xf32, #tpu.memory_space<vmem>>) attributes {dimension_semantics = [#tpu.dimension_semantics<parallel>], iteration_bounds = array<i64: 2>, scalar_prefetch = 0 : i64, scratch_operands = 0 : i64, tpu.core_type = #tpu.core_type<tc>, window_params = [{transform_indices = @transform_0, window_bounds = array<i64: 256, 128>}, {pipeline_mode = #tpu.pipeline_mode<synchronous>, transform_indices = @transform_1, window_bounds = array<i64: 1, 128>}, {pipeline_mode = #tpu.pipeline_mode<synchronous>, transform_indices = @transform_2, window_bounds = array<i64: 1, 128>}, {pipeline_mode = #tpu.pipeline_mode<synchronous>, transform_indices = @transform_3, window_bounds = array<i64: 128, 128>}, {transform_indices = @transform_4, window_bounds = array<i64: 256, 128>}, {transform_indices = @transform_5, window_bounds = array<i64: 1, 2, 128>}]} {
    %c0 = arith.constant 0 : index
    %c0_0 = arith.constant 0 : index
    %0 = vector.load %arg1[%c0, %c0_0] : memref<256x128xf32, #tpu.memory_space<vmem>>, vector<256x128xf32>
    %c0_1 = arith.constant 0 : index
    %c0_2 = arith.constant 0 : index
    %1 = vector.load %arg2[%c0_1, %c0_2] : memref<1x128xf32, #tpu.memory_space<vmem>>, vector<1x128xf32>
    %2 = vector.broadcast %1 : vector<1x128xf32> to vector<256x128xf32>
    %3 = arith.mulf %0, %2 : vector<256x128xf32>
    %c0_3 = arith.constant 0 : index
    %c0_4 = arith.constant 0 : index
    %4 = vector.load %arg3[%c0_3, %c0_4] : memref<1x128xf32, #tpu.memory_space<vmem>>, vector<1x128xf32>
    %5 = vector.broadcast %4 : vector<1x128xf32> to vector<256x128xf32>
    %6 = arith.addf %3, %5 : vector<256x128xf32>
    %cst = arith.constant 0.000000e+00 : f32
    %7 = vector.broadcast %cst : f32 to vector<256x128xf32>
    %8 = arith.maximumf %6, %7 : vector<256x128xf32>
    %c0_5 = arith.constant 0 : index
    %c0_6 = arith.constant 0 : index
    %9 = vector.load %arg4[%c0_5, %c0_6] : memref<128x128xf32, #tpu.memory_space<vmem>>, vector<128x128xf32>
    %cst_7 = arith.constant dense<0.000000e+00> : vector<256x128xf32>
    %10 = tpu.matmul %8, %9, %cst_7 {dimension_numbers = #tpu.dot_dimension_numbers<[1], [0], [0], [1], [0, 0, 1, 1], [], []>} : vector<256x128xf32>, vector<128x128xf32>, vector<256x128xf32> -> vector<256x128xf32>
    %c0_8 = arith.constant 0 : index
    %c0_9 = arith.constant 0 : index
    %11 = vector.load %arg5[%c0_8, %c0_9] : memref<256x128xf32, #tpu.memory_space<vmem>>, vector<256x128xf32>
    tpu.vector_store %arg5[%c0_8, %c0_9], %10 {strides = array<i32>} : memref<256x128xf32, #tpu.memory_space<vmem>>, vector<256x128xf32>,
    %cst_10 = arith.constant dense<0.000000e+00> : vector<128xf32>
    %12 = vector.multi_reduction <add>, %10, %cst_10 [0] : vector<256x128xf32> to vector<128xf32>
    %13 = vector.shape_cast %12 : vector<128xf32> to vector<1x128xf32>
    %14 = arith.mulf %10, %10 : vector<256x128xf32>
    %cst_11 = arith.constant dense<0.000000e+00> : vector<128xf32>
    %15 = vector.multi_reduction <add>, %14, %cst_11 [0] : vector<256x128xf32> to vector<128xf32>
    %16 = vector.shape_cast %15 : vector<128xf32> to vector<1x128xf32>
    %17 = tpu.concatenate %13, %16 in 0 : vector<1x128xf32>, vector<1x128xf32> -> vector<2x128xf32>
    %c0_12 = arith.constant 0 : index
    %c0_13 = arith.constant 0 : index
    %c0_14 = arith.constant 0 : index
    %18 = vector.load %arg6[%c0_12, %c0_13, %c0_14] : memref<1x2x128xf32, #tpu.memory_space<vmem>>, vector<1x2x128xf32>
    %19 = vector.shape_cast %18 : vector<1x2x128xf32> to vector<2x128xf32>
    %20 = vector.shape_cast %17 : vector<2x128xf32> to vector<1x2x128xf32>
    tpu.vector_store %arg6[%c0_12, %c0_13, %c0_14], %20 {strides = array<i32>} : memref<1x2x128xf32, #tpu.memory_space<vmem>>, vector<1x2x128xf32>,
    return
  }
  func.func @transform_0(%arg0: i32) -> (i32, i32) {
    %c0_i32 = arith.constant 0 : i32
    %c0_i32_0 = arith.constant 0 : i32
    return %arg0, %c0_i32 : i32, i32
  }
  func.func @transform_1(%arg0: i32) -> (i32, i32) {
    %c0_i32 = arith.constant 0 : i32
    %c0_i32_0 = arith.constant 0 : i32
    %c0_i32_1 = arith.constant 0 : i32
    return %c0_i32, %c0_i32_0 : i32, i32
  }
  func.func @transform_2(%arg0: i32) -> (i32, i32) {
    %c0_i32 = arith.constant 0 : i32
    %c0_i32_0 = arith.constant 0 : i32
    %c0_i32_1 = arith.constant 0 : i32
    return %c0_i32, %c0_i32_0 : i32, i32
  }
  func.func @transform_3(%arg0: i32) -> (i32, i32) {
    %c0_i32 = arith.constant 0 : i32
    %c0_i32_0 = arith.constant 0 : i32
    %c0_i32_1 = arith.constant 0 : i32
    return %c0_i32, %c0_i32_0 : i32, i32
  }
  func.func @transform_4(%arg0: i32) -> (i32, i32) {
    %c0_i32 = arith.constant 0 : i32
    %c0_i32_0 = arith.constant 0 : i32
    return %arg0, %c0_i32 : i32, i32
  }
  func.func @transform_5(%arg0: i32) -> (i32, i32, i32) {
    %c0_i32 = arith.constant 0 : i32
    %c0_i32_0 = arith.constant 0 : i32
    %c0_i32_1 = arith.constant 0 : i32
    return %arg0, %c0_i32, %c0_i32_0 : i32, i32, i32
  }
}

module attributes {stable_mosaic.version = 11 : i64} {
  func.func @_dual_bn_add_relu_kernel(%arg0: i32, %arg1: memref<256x128xf32, #tpu.memory_space<vmem>>, %arg2: memref<256x128xf32, #tpu.memory_space<vmem>>, %arg3: memref<1x128xf32, #tpu.memory_space<vmem>>, %arg4: memref<1x128xf32, #tpu.memory_space<vmem>>, %arg5: memref<1x128xf32, #tpu.memory_space<vmem>>, %arg6: memref<1x128xf32, #tpu.memory_space<vmem>>, %arg7: memref<256x128xf32, #tpu.memory_space<vmem>>) attributes {dimension_semantics = [#tpu.dimension_semantics<parallel>], iteration_bounds = array<i64: 2>, scalar_prefetch = 0 : i64, scratch_operands = 0 : i64, tpu.core_type = #tpu.core_type<tc>, window_params = [{transform_indices = @transform_0, window_bounds = array<i64: 256, 128>}, {transform_indices = @transform_1, window_bounds = array<i64: 256, 128>}, {pipeline_mode = #tpu.pipeline_mode<synchronous>, transform_indices = @transform_2, window_bounds = array<i64: 1, 128>}, {pipeline_mode = #tpu.pipeline_mode<synchronous>, transform_indices = @transform_3, window_bounds = array<i64: 1, 128>}, {pipeline_mode = #tpu.pipeline_mode<synchronous>, transform_indices = @transform_4, window_bounds = array<i64: 1, 128>}, {pipeline_mode = #tpu.pipeline_mode<synchronous>, transform_indices = @transform_5, window_bounds = array<i64: 1, 128>}, {transform_indices = @transform_6, window_bounds = array<i64: 256, 128>}]} {
    %c0 = arith.constant 0 : index
    %c0_0 = arith.constant 0 : index
    %0 = vector.load %arg1[%c0, %c0_0] : memref<256x128xf32, #tpu.memory_space<vmem>>, vector<256x128xf32>
    %c0_1 = arith.constant 0 : index
    %c0_2 = arith.constant 0 : index
    %1 = vector.load %arg3[%c0_1, %c0_2] : memref<1x128xf32, #tpu.memory_space<vmem>>, vector<1x128xf32>
    %2 = vector.broadcast %1 : vector<1x128xf32> to vector<256x128xf32>
    %3 = arith.mulf %0, %2 : vector<256x128xf32>
    %c0_3 = arith.constant 0 : index
    %c0_4 = arith.constant 0 : index
    %4 = vector.load %arg4[%c0_3, %c0_4] : memref<1x128xf32, #tpu.memory_space<vmem>>, vector<1x128xf32>
    %5 = vector.broadcast %4 : vector<1x128xf32> to vector<256x128xf32>
    %6 = arith.addf %3, %5 : vector<256x128xf32>
    %c0_5 = arith.constant 0 : index
    %c0_6 = arith.constant 0 : index
    %7 = vector.load %arg2[%c0_5, %c0_6] : memref<256x128xf32, #tpu.memory_space<vmem>>, vector<256x128xf32>
    %c0_7 = arith.constant 0 : index
    %c0_8 = arith.constant 0 : index
    %8 = vector.load %arg5[%c0_7, %c0_8] : memref<1x128xf32, #tpu.memory_space<vmem>>, vector<1x128xf32>
    %9 = vector.broadcast %8 : vector<1x128xf32> to vector<256x128xf32>
    %10 = arith.mulf %7, %9 : vector<256x128xf32>
    %c0_9 = arith.constant 0 : index
    %c0_10 = arith.constant 0 : index
    %11 = vector.load %arg6[%c0_9, %c0_10] : memref<1x128xf32, #tpu.memory_space<vmem>>, vector<1x128xf32>
    %12 = vector.broadcast %11 : vector<1x128xf32> to vector<256x128xf32>
    %13 = arith.addf %10, %12 : vector<256x128xf32>
    %14 = arith.addf %6, %13 : vector<256x128xf32>
    %cst = arith.constant 0.000000e+00 : f32
    %15 = vector.broadcast %cst : f32 to vector<256x128xf32>
    %16 = arith.maximumf %14, %15 : vector<256x128xf32>
    %c0_11 = arith.constant 0 : index
    %c0_12 = arith.constant 0 : index
    %17 = vector.load %arg7[%c0_11, %c0_12] : memref<256x128xf32, #tpu.memory_space<vmem>>, vector<256x128xf32>
    tpu.vector_store %arg7[%c0_11, %c0_12], %16 {strides = array<i32>} : memref<256x128xf32, #tpu.memory_space<vmem>>, vector<256x128xf32>,
    return
  }
  func.func @transform_0(%arg0: i32) -> (i32, i32) {
    %c0_i32 = arith.constant 0 : i32
    %c0_i32_0 = arith.constant 0 : i32
    return %arg0, %c0_i32 : i32, i32
  }
  func.func @transform_1(%arg0: i32) -> (i32, i32) {
    %c0_i32 = arith.constant 0 : i32
    %c0_i32_0 = arith.constant 0 : i32
    return %arg0, %c0_i32 : i32, i32
  }
  func.func @transform_2(%arg0: i32) -> (i32, i32) {
    %c0_i32 = arith.constant 0 : i32
    %c0_i32_0 = arith.constant 0 : i32
    %c0_i32_1 = arith.constant 0 : i32
    return %c0_i32, %c0_i32_0 : i32, i32
  }
  func.func @transform_3(%arg0: i32) -> (i32, i32) {
    %c0_i32 = arith.constant 0 : i32
    %c0_i32_0 = arith.constant 0 : i32
    %c0_i32_1 = arith.constant 0 : i32
    return %c0_i32, %c0_i32_0 : i32, i32
  }
  func.func @transform_4(%arg0: i32) -> (i32, i32) {
    %c0_i32 = arith.constant 0 : i32
    %c0_i32_0 = arith.constant 0 : i32
    %c0_i32_1 = arith.constant 0 : i32
    return %c0_i32, %c0_i32_0 : i32, i32
  }
  func.func @transform_5(%arg0: i32) -> (i32, i32) {
    %c0_i32 = arith.constant 0 : i32
    %c0_i32_0 = arith.constant 0 : i32
    %c0_i32_1 = arith.constant 0 : i32
    return %c0_i32, %c0_i32_0 : i32, i32
  }
  func.func @transform_6(%arg0: i32) -> (i32, i32) {
    %c0_i32 = arith.constant 0 : i32
    %c0_i32_0 = arith.constant 0 : i32
    return %arg0, %c0_i32 : i32, i32
  }
}

</mosaic_0001>

<llo_original>
// kernel: bottleneck_forward.7
$region0: #{bottleneck_forward.7}
  #allocation0 [shape = 'u32[]', space=smem, size = 0x4, offset = 0x4, fixed_abs, tag = 'smem constant byte address 0x4 - core index']
  #allocation1 [shape = 'u32[144,128]{1,0:T(1,128)}', space=vmem, size = 0x12000, scoped, tag = 'internal scratch']
  %s0 = inlined_call_operand.vmem [shape: f32[512,128], index: 0, kind: input, shape index: {}]
  %s1 = inlined_call_operand.vmem [shape: f32[1,128], index: 1, kind: input, shape index: {}]
  %s2 = inlined_call_operand.vmem [shape: f32[1,128], index: 2, kind: input, shape index: {}]
  %s3 = inlined_call_operand.vmem [shape: f32[512,128], index: 3, kind: output, shape index: {}]
  %s4 = sld [smem:[#allocation0]]
  $region45: #{bottleneck_forward.7} parent=0
    _
  %s6 = ssub.s32 1, %s4
  %s7 = scalar_select 0, %s6, %s4
  loop: start=0, step=1, limit=4
  $region2: #{bottleneck_forward.7} parent=0 // loop_pre_header
    _
  $region3: #{bottleneck_forward.7} parent=0 // loop_header
    %s9 = sphi 0, %s13
    %p10 = scmp.ge.s32.totalorder %s9, 4
    %s19 = sphi 0, %s21
    %s22 = sphi 0, %s19
    %s23 = sphi 0, %s22
    %s39 = sphi 0, %s23
    %s43 = sphi 0, %s43
    %s45 = sphi 0, %s43
    %s46 = sphi 0, %s45
    %s60 = sphi 0, %s46
    %s64 = sphi 0, %s64
    %s66 = sphi 0, %s64
    %s67 = sphi 0, %s66
    %s81 = sphi 0, %s67
    %s87 = sphi 0, %s89
    %s90 = sphi 0, %s87
    %s91 = sphi 0, %s90
    %s107 = sphi 0, %s91
  $region4: #{bottleneck_forward.7} parent=0 // loop_header_branch
    %12 = sbr.rel (%p10) target = $region8
  $region5: #{bottleneck_forward.7} parent=0 // loop_body
    %s14 = ssub.s32 %s9, 1
    %s15 = ssub.s32 %s9, 2
    %s16 = sadd.s32 %s9, 1
    %s17 = ssub.s32 %s9, %s16
    %p18 = scmp.eq.s32.totalorder %s17, 0
    %s20 = sadd.s32 %s19, 1
    %s21 = scalar_select %p18, %s19, %s20
    %p24 = pneg %p18
    %p25 = scmp.eq.s32.totalorder %s9, 1
    %p26 = por %p24, %p25
    %p27 = scmp.ne.s32.totalorder %s19, %s22
    %p28 = scmp.eq.s32.totalorder %s9, 0
    %p29 = por %p27, %p28
    %p30 = scmp.ne.s32.totalorder %s19, %s22
    %p31 = scmp.eq.s32.totalorder %s14, 1
    %p32 = por %p30, %p31
    %p33 = scmp.ne.s32.totalorder %s22, %s23
    %p34 = scmp.eq.s32.totalorder %s14, 0
    %p35 = por %p33, %p34
    %p36 = scmp.ne.s32.totalorder %s22, %s23
    %p37 = scmp.eq.s32.totalorder %s15, 1
    %p38 = por %p36, %p37
    %p40 = scmp.ne.s32.totalorder %s23, %s39
    %p41 = scmp.eq.s32.totalorder %s15, 0
    %p42 = por %p40, %p41
    %s44 = sadd.s32 %s43, 1
    %p47 = scmp.eq.s32.totalorder %s9, 1
    %p48 = scmp.ne.s32.totalorder %s43, %s45
    %p49 = scmp.eq.s32.totalorder %s9, 0
    %p50 = por %p48, %p49
    %p51 = scmp.ne.s32.totalorder %s43, %s45
    %p52 = scmp.eq.s32.totalorder %s14, 1
    %p53 = por %p51, %p52
    %p54 = scmp.ne.s32.totalorder %s45, %s46
    %p55 = scmp.eq.s32.totalorder %s14, 0
    %p56 = por %p54, %p55
    %p57 = scmp.ne.s32.totalorder %s45, %s46
    %p58 = scmp.eq.s32.totalorder %s15, 1
    %p59 = por %p57, %p58
    %p61 = scmp.ne.s32.totalorder %s46, %s60
    %p62 = scmp.eq.s32.totalorder %s15, 0
    %p63 = por %p61, %p62
    %s65 = sadd.s32 %s64, 1
    %p68 = scmp.eq.s32.totalorder %s9, 1
    %p69 = scmp.ne.s32.totalorder %s64, %s66
    %p70 = scmp.eq.s32.totalorder %s9, 0
    %p71 = por %p69, %p70
    %p72 = scmp.ne.s32.totalorder %s64, %s66
    %p73 = scmp.eq.s32.totalorder %s14, 1
    %p74 = por %p72, %p73
    %p75 = scmp.ne.s32.totalorder %s66, %s67
    %p76 = scmp.eq.s32.totalorder %s14, 0
    %p77 = por %p75, %p76
    %p78 = scmp.ne.s32.totalorder %s66, %s67
    %p79 = scmp.eq.s32.totalorder %s15, 1
    %p80 = por %p78, %p79
    %p82 = scmp.ne.s32.totalorder %s67, %s81
    %p83 = scmp.eq.s32.totalorder %s15, 0
    %p84 = por %p82, %p83
    %s85 = ssub.s32 %s9, %s16
    %p86 = scmp.eq.s32.totalorder %s85, 0
    %s88 = sadd.s32 %s87, 1
    %s89 = scalar_select %p86, %s87, %s88
    %p92 = pneg %p86
    %p93 = scmp.eq.s32.totalorder %s9, 1
    %p94 = por %p92, %p93
    %p95 = scmp.ne.s32.totalorder %s87, %s90
    %p96 = scmp.eq.s32.totalorder %s9, 0
    %p97 = por %p95, %p96
    %p98 = scmp.ne.s32.totalorder %s87, %s90
    %p99 = scmp.eq.s32.totalorder %s14, 1
    %p100 = por %p98, %p99
    %p101 = scmp.ne.s32.totalorder %s90, %s91
    %p102 = scmp.eq.s32.totalorder %s14, 0
    %p103 = por %p101, %p102
    %p104 = scmp.ne.s32.totalorder %s90, %s91
    %p105 = scmp.eq.s32.totalorder %s15, 1
    %p106 = por %p104, %p105
    %p108 = scmp.ne.s32.totalorder %s91, %s107
    %p109 = scmp.eq.s32.totalorder %s15, 0
    %p110 = por %p108, %p109
    %p111 = scmp.le.s32.totalorder 1, %s9
    %p112 = scmp.lt.s32.totalorder %s9, 3
    %p113 = pnand %p111, %p112
    %p114 = pneg %p113
    // Predicated region
    $region9: #{bottleneck_forward.7} parent=5 // pred_check
      _
    $region10: #{bottleneck_forward.7} parent=5 // pred_check_branch
      %116 = sbr.rel (%p113) target = $region12
    $region11: #{bottleneck_forward.7} parent=5 // pred_region
      %s117 = ssub.s32 %s9, 1
      // Predicated region
      $region13: #{bottleneck_forward.7} parent=11 // pred_check
        %p118 = pneg %p56
      $region14: #{bottleneck_forward.7} parent=11 // pred_check_branch
        %120 = sbr.rel (%p118) target = $region16
      $region15: #{bottleneck_forward.7} parent=11 // pred_region
        _
      $region16: #{bottleneck_forward.7} parent=11 // pred_fallthru
        _
      // Predicated region
      $region17: #{bottleneck_forward.7} parent=11 // pred_check
        %p121 = pneg %p77
      $region18: #{bottleneck_forward.7} parent=11 // pred_check_branch
        %123 = sbr.rel (%p121) target = $region20
      $region19: #{bottleneck_forward.7} parent=11 // pred_region
        _
      $region20: #{bottleneck_forward.7} parent=11 // pred_fallthru
        _
    $region12: #{bottleneck_forward.7} parent=5 // pred_fallthru
      _
    %p124 = scmp.lt.s32.totalorder %s9, 2
    // Predicated region
    $region21: #{bottleneck_forward.7} parent=5 // pred_check
      %p125 = pneg %p124
    $region22: #{bottleneck_forward.7} parent=5 // pred_check_branch
      %127 = sbr.rel (%p125) target = $region24
    $region23: #{bottleneck_forward.7} parent=5 // pred_region
      // Predicated region
      $region25: #{bottleneck_forward.7} parent=23 // pred_check
        %p128 = pneg %p29
      $region26: #{bottleneck_forward.7} parent=23 // pred_check_branch
        %130 = sbr.rel (%p128) target = $region28
      $region27: #{bottleneck_forward.7} parent=23 // pred_region
        %s131 = smul.u32 32, %s9
        %p132 = scmp.lt.s32.totalorder %s131, 63
        %s133 = scalar_select %p132, %s131, 63
        %s134 = smul.addr %s133, 8
        %s135 = scalar_lea.vmem %s0, %s134
        %s136 = smul.u32 32, %s9
      $region28: #{bottleneck_forward.7} parent=23 // pred_fallthru
        _
    $region24: #{bottleneck_forward.7} parent=5 // pred_fallthru
      _
    %p137 = scmp.le.s32.totalorder 1, %s9
    %p138 = scmp.lt.s32.totalorder %s9, 3
    %p139 = pnand %p137, %p138
    %p140 = pneg %p139
    // Predicated region
    $region29: #{bottleneck_forward.7} parent=5 // pred_check
      _
    $region30: #{bottleneck_forward.7} parent=5 // pred_check_branch
      %142 = sbr.rel (%p139) target = $region32
    $region31: #{bottleneck_forward.7} parent=5 // pred_region
      %s143 = ssub.s32 %s9, 1
      %s144 = smul.u32 32, %s14
      %p145 = scmp.lt.s32.totalorder %s144, 63
      %s146 = scalar_select %p145, %s144, 63
      %s147 = smul.addr %s146, 8
      %s148 = scalar_lea.vmem %s0, %s147
      %p149 = pneg %p35
      %p150 = pneg %p32
      %p151 = pneg %p56
      %p152 = pneg %p53
      %p153 = pneg %p77
      %p154 = pneg %p74
      %p155 = pneg %p103
      %p156 = pneg %p100
      %s157 = smul.u32 32, %s14
      %p158 = scmp.lt.s32.totalorder %s157, 63
      %s159 = scalar_select %p158, %s157, 63
      %s160 = smul.addr %s159, 8
      %s161 = scalar_lea.vmem %s3, %s160
      %s162 = smul.u32 32, %s14
      %p163 = scmp.lt.s32.totalorder %s162, 63
      %s164 = scalar_select %p163, %s162, 63
      %s165 = smul.addr %s164, 8
      %s166 = scalar_lea.vmem %s0, %s165
      %s167 = smul.u32 32, %s14
      %s168 = smul.u32 32, %s14
      %p169 = scmp.lt.s32.totalorder %s168, 63
      %s170 = scalar_select %p169, %s168, 63
      %s171 = smul.addr %s170, 8
      %s172 = scalar_lea.vmem %s3, %s171
      %s173 = smul.u32 32, %s14
      %v174 = vld [vmem:[%s166] sm:$0xff]
      %v175 = vld [vmem:[%s166 + $0x8] sm:$0xff]
      %v176 = vld [vmem:[%s166 + $0x10] sm:$0xff]
      %v177 = vld [vmem:[%s166 + $0x18] sm:$0xff]
      %v178 = vld [vmem:[%s166 + $0x20] sm:$0xff]
      %v179 = vld [vmem:[%s166 + $0x28] sm:$0xff]
      %v180 = vld [vmem:[%s166 + $0x30] sm:$0xff]
      %v181 = vld [vmem:[%s166 + $0x38] sm:$0xff]
      %v182 = vld [vmem:[%s166 + $0x40] sm:$0xff]
      %v183 = vld [vmem:[%s166 + $0x48] sm:$0xff]
      %v184 = vld [vmem:[%s166 + $0x50] sm:$0xff]
      %v185 = vld [vmem:[%s166 + $0x58] sm:$0xff]
      %v186 = vld [vmem:[%s166 + $0x60] sm:$0xff]
      %v187 = vld [vmem:[%s166 + $0x68] sm:$0xff]
      %v188 = vld [vmem:[%s166 + $0x70] sm:$0xff]
      %v189 = vld [vmem:[%s166 + $0x78] sm:$0xff]
      %v190 = vld [vmem:[%s166 + $0x80] sm:$0xff]
      %v191 = vld [vmem:[%s166 + $0x88] sm:$0xff]
      %v192 = vld [vmem:[%s166 + $0x90] sm:$0xff]
      %v193 = vld [vmem:[%s166 + $0x98] sm:$0xff]
      %v194 = vld [vmem:[%s166 + $0xa0] sm:$0xff]
      %v195 = vld [vmem:[%s166 + $0xa8] sm:$0xff]
      %v196 = vld [vmem:[%s166 + $0xb0] sm:$0xff]
      %v197 = vld [vmem:[%s166 + $0xb8] sm:$0xff]
      %v198 = vld [vmem:[%s166 + $0xc0] sm:$0xff]
      %v199 = vld [vmem:[%s166 + $0xc8] sm:$0xff]
      %v200 = vld [vmem:[%s166 + $0xd0] sm:$0xff]
      %v201 = vld [vmem:[%s166 + $0xd8] sm:$0xff]
      %v202 = vld [vmem:[%s166 + $0xe0] sm:$0xff]
      %v203 = vld [vmem:[%s166 + $0xe8] sm:$0xff]
      %v204 = vld [vmem:[%s166 + $0xf0] sm:$0xff]
      %v205 = vld [vmem:[%s166 + $0xf8] sm:$0xff]
      %v206 = vld [vmem:[%s1] sm:$0x1]
      %v208 = vlaneseq
      %v209 = vshrl.u32 %v208, 7
      %v210 = vsub.s32 0, %v209
      %v211 = vrot.slane %v206, %v210
      %v213 = vmul.f32 %v174, %v211
      %v214 = vmul.f32 %v175, %v211
      %v215 = vmul.f32 %v176, %v211
      %v216 = vmul.f32 %v177, %v211
      %v217 = vmul.f32 %v178, %v211
      %v218 = vmul.f32 %v179, %v211
      %v219 = vmul.f32 %v180, %v211
      %v220 = vmul.f32 %v181, %v211
      %v221 = vmul.f32 %v182, %v211
      %v222 = vmul.f32 %v183, %v211
      %v223 = vmul.f32 %v184, %v211
      %v224 = vmul.f32 %v185, %v211
      %v225 = vmul.f32 %v186, %v211
      %v226 = vmul.f32 %v187, %v211
      %v227 = vmul.f32 %v188, %v211
      %v228 = vmul.f32 %v189, %v211
      %v229 = vmul.f32 %v190, %v211
      %v230 = vmul.f32 %v191, %v211
      %v231 = vmul.f32 %v192, %v211
      %v232 = vmul.f32 %v193, %v211
      %v233 = vmul.f32 %v194, %v211
      %v234 = vmul.f32 %v195, %v211
      %v235 = vmul.f32 %v196, %v211
      %v236 = vmul.f32 %v197, %v211
      %v237 = vmul.f32 %v198, %v211
      %v238 = vmul.f32 %v199, %v211
      %v239 = vmul.f32 %v200, %v211
      %v240 = vmul.f32 %v201, %v211
      %v241 = vmul.f32 %v202, %v211
      %v242 = vmul.f32 %v203, %v211
      %v243 = vmul.f32 %v204, %v211
      %v244 = vmul.f32 %v205, %v211
      %v245 = vld [vmem:[%s2] sm:$0x1]
      %v247 = vlaneseq
      %v248 = vshrl.u32 %v247, 7
      %v249 = vsub.s32 0, %v248
      %v250 = vrot.slane %v245, %v249
      %v252 = vadd.f32 %v213, %v250
      %v253 = vadd.f32 %v214, %v250
      %v254 = vadd.f32 %v215, %v250
      %v255 = vadd.f32 %v216, %v250
      %v256 = vadd.f32 %v217, %v250
      %v257 = vadd.f32 %v218, %v250
      %v258 = vadd.f32 %v219, %v250
      %v259 = vadd.f32 %v220, %v250
      %v260 = vadd.f32 %v221, %v250
      %v261 = vadd.f32 %v222, %v250
      %v262 = vadd.f32 %v223, %v250
      %v263 = vadd.f32 %v224, %v250
      %v264 = vadd.f32 %v225, %v250
      %v265 = vadd.f32 %v226, %v250
      %v266 = vadd.f32 %v227, %v250
      %v267 = vadd.f32 %v228, %v250
      %v268 = vadd.f32 %v229, %v250
      %v269 = vadd.f32 %v230, %v250
      %v270 = vadd.f32 %v231, %v250
      %v271 = vadd.f32 %v232, %v250
      %v272 = vadd.f32 %v233, %v250
      %v273 = vadd.f32 %v234, %v250
      %v274 = vadd.f32 %v235, %v250
      %v275 = vadd.f32 %v236, %v250
      %v276 = vadd.f32 %v237, %v250
      %v277 = vadd.f32 %v238, %v250
      %v278 = vadd.f32 %v239, %v250
      %v279 = vadd.f32 %v240, %v250
      %v280 = vadd.f32 %v241, %v250
      %v281 = vadd.f32 %v242, %v250
      %v282 = vadd.f32 %v243, %v250
      %v283 = vadd.f32 %v244, %v250
      %v284 = vmax.f32 %v252, 0.0
      %v285 = vmax.f32 %v253, 0.0
      %v286 = vmax.f32 %v254, 0.0
      %v287 = vmax.f32 %v255, 0.0
      %v288 = vmax.f32 %v256, 0.0
      %v289 = vmax.f32 %v257, 0.0
      %v290 = vmax.f32 %v258, 0.0
      %v291 = vmax.f32 %v259, 0.0
      %v292 = vmax.f32 %v260, 0.0
      %v293 = vmax.f32 %v261, 0.0
      %v294 = vmax.f32 %v262, 0.0
      %v295 = vmax.f32 %v263, 0.0
      %v296 = vmax.f32 %v264, 0.0
      %v297 = vmax.f32 %v265, 0.0
      %v298 = vmax.f32 %v266, 0.0
      %v299 = vmax.f32 %v267, 0.0
      %v300 = vmax.f32 %v268, 0.0
      %v301 = vmax.f32 %v269, 0.0
      %v302 = vmax.f32 %v270, 0.0
      %v303 = vmax.f32 %v271, 0.0
      %v304 = vmax.f32 %v272, 0.0
      %v305 = vmax.f32 %v273, 0.0
      %v306 = vmax.f32 %v274, 0.0
      %v307 = vmax.f32 %v275, 0.0
      %v308 = vmax.f32 %v276, 0.0
      %v309 = vmax.f32 %v277, 0.0
      %v310 = vmax.f32 %v278, 0.0
      %v311 = vmax.f32 %v279, 0.0
      %v312 = vmax.f32 %v280, 0.0
      %v313 = vmax.f32 %v281, 0.0
      %v314 = vmax.f32 %v282, 0.0
      %v315 = vmax.f32 %v283, 0.0
      %316 = vst [vmem:[%s172] sm:$0xff] %v284
      %317 = vst [vmem:[%s172 + $0x8] sm:$0xff] %v285
      %318 = vst [vmem:[%s172 + $0x10] sm:$0xff] %v286
      %319 = vst [vmem:[%s172 + $0x18] sm:$0xff] %v287
      %320 = vst [vmem:[%s172 + $0x20] sm:$0xff] %v288
      %321 = vst [vmem:[%s172 + $0x28] sm:$0xff] %v289
      %322 = vst [vmem:[%s172 + $0x30] sm:$0xff] %v290
      %323 = vst [vmem:[%s172 + $0x38] sm:$0xff] %v291
      %324 = vst [vmem:[%s172 + $0x40] sm:$0xff] %v292
      %325 = vst [vmem:[%s172 + $0x48] sm:$0xff] %v293
      %326 = vst [vmem:[%s172 + $0x50] sm:$0xff] %v294
      %327 = vst [vmem:[%s172 + $0x58] sm:$0xff] %v295
      %328 = vst [vmem:[%s172 + $0x60] sm:$0xff] %v296
      %329 = vst [vmem:[%s172 + $0x68] sm:$0xff] %v297
      %330 = vst [vmem:[%s172 + $0x70] sm:$0xff] %v298
      %331 = vst [vmem:[%s172 + $0x78] sm:$0xff] %v299
      %332 = vst [vmem:[%s172 + $0x80] sm:$0xff] %v300
      %333 = vst [vmem:[%s172 + $0x88] sm:$0xff] %v301
      %334 = vst [vmem:[%s172 + $0x90] sm:$0xff] %v302
      %335 = vst [vmem:[%s172 + $0x98] sm:$0xff] %v303
      %336 = vst [vmem:[%s172 + $0xa0] sm:$0xff] %v304
      %337 = vst [vmem:[%s172 + $0xa8] sm:$0xff] %v305
      %338 = vst [vmem:[%s172 + $0xb0] sm:$0xff] %v306
      %339 = vst [vmem:[%s172 + $0xb8] sm:$0xff] %v307
      %340 = vst [vmem:[%s172 + $0xc0] sm:$0xff] %v308
      %341 = vst [vmem:[%s172 + $0xc8] sm:$0xff] %v309
      %342 = vst [vmem:[%s172 + $0xd0] sm:$0xff] %v310
      %343 = vst [vmem:[%s172 + $0xd8] sm:$0xff] %v311
      %344 = vst [vmem:[%s172 + $0xe0] sm:$0xff] %v312
      %345 = vst [vmem:[%s172 + $0xe8] sm:$0xff] %v313
      %346 = vst [vmem:[%s172 + $0xf0] sm:$0xff] %v314
      %347 = vst [vmem:[%s172 + $0xf8] sm:$0xff] %v315
      %s348 = smul.u32 32, %s14
      %p349 = scmp.lt.s32.totalorder %s348, 63
      %s350 = scalar_select %p349, %s348, 63
      %s351 = smul.addr %s350, 8
      %s352 = scalar_lea.vmem %s3, %s351
      // Predicated region
      $region33: #{bottleneck_forward.7} parent=31 // pred_check
        %p353 = pneg %p100
      $region34: #{bottleneck_forward.7} parent=31 // pred_check_branch
        %355 = sbr.rel (%p353) target = $region36
      $region35: #{bottleneck_forward.7} parent=31 // pred_region
        %s356 = smul.u32 32, %s14
      $region36: #{bottleneck_forward.7} parent=31 // pred_fallthru
        _
    $region32: #{bottleneck_forward.7} parent=5 // pred_fallthru
      _
    %p357 = scmp.le.s32.totalorder 2, %s9
    // Predicated region
    $region37: #{bottleneck_forward.7} parent=5 // pred_check
      %p358 = pneg %p357
    $region38: #{bottleneck_forward.7} parent=5 // pred_check_branch
      %360 = sbr.rel (%p358) target = $region40
    $region39: #{bottleneck_forward.7} parent=5 // pred_region
      %s361 = ssub.s32 %s9, 2
      // Predicated region
      $region41: #{bottleneck_forward.7} parent=39 // pred_check
        %p362 = pneg %p106
      $region42: #{bottleneck_forward.7} parent=39 // pred_check_branch
        %364 = sbr.rel (%p362) target = $region44
      $region43: #{bottleneck_forward.7} parent=39 // pred_region
        %s365 = smul.u32 32, %s15
        %p366 = scmp.lt.s32.totalorder %s365, 63
        %s367 = scalar_select %p366, %s365, 63
        %s368 = smul.addr %s367, 8
        %s369 = scalar_lea.vmem %s3, %s368
      $region44: #{bottleneck_forward.7} parent=39 // pred_fallthru
        _
    $region40: #{bottleneck_forward.7} parent=5 // pred_fallthru
      _
  $region6: #{bottleneck_forward.7} parent=0 // loop_footer
    %s13 = sadd.s32 1, %s9
  $region7: #{bottleneck_forward.7} parent=0 // loop_footer_branch
    %8 = sbr.rel target = $region3
  $region8: #{bottleneck_forward.7} parent=0 // loop_exit
    _

// kernel: bottleneck_forward.6
$region0: #{bottleneck_forward.6}
  #allocation0 [shape = 'u32[]', space=smem, size = 0x4, offset = 0x4, fixed_abs, tag = 'smem constant byte address 0x4 - core index']
  #allocation1 [shape = 'u32[144,128]{1,0:T(1,128)}', space=vmem, size = 0x12000, scoped, tag = 'internal scratch']
  %s0 = inlined_call_operand.vmem [shape: f32[512,4], index: 0, kind: input, shape index: {}]
  %s1 = inlined_call_operand.vmem [shape: f32[4,128], index: 1, kind: input, shape index: {}]
  %s2 = inlined_call_operand.vmem [shape: f32[512,128], index: 2, kind: output, shape index: {0}]
  %s3 = inlined_call_operand.vmem [shape: f32[2,2,128], index: 3, kind: output, shape index: {1}]
  %4 = xla_tuple %s2, %s3
  %s5 = sld [smem:[#allocation0]]
  $region49: #{bottleneck_forward.6} parent=0
    _
  %s7 = ssub.s32 1, %s5
  %s8 = scalar_select 0, %s7, %s5
  loop: start=0, step=1, limit=4
  $region2: #{bottleneck_forward.6} parent=0 // loop_pre_header
    _
  $region3: #{bottleneck_forward.6} parent=0 // loop_header
    %s10 = sphi 0, %s14
    %p11 = scmp.ge.s32.totalorder %s10, 4
    %s20 = sphi 0, %s22
    %s23 = sphi 0, %s20
    %s24 = sphi 0, %s23
    %s40 = sphi 0, %s24
    %s44 = sphi 0, %s44
    %s46 = sphi 0, %s44
    %s47 = sphi 0, %s46
    %s61 = sphi 0, %s47
    %s67 = sphi 0, %s69
    %s70 = sphi 0, %s67
    %s71 = sphi 0, %s70
    %s87 = sphi 0, %s71
    %s93 = sphi 0, %s95
    %s96 = sphi 0, %s93
    %s97 = sphi 0, %s96
    %s113 = sphi 0, %s97
  $region4: #{bottleneck_forward.6} parent=0 // loop_header_branch
    %13 = sbr.rel (%p11) target = $region8
  $region5: #{bottleneck_forward.6} parent=0 // loop_body
    %s15 = ssub.s32 %s10, 1
    %s16 = ssub.s32 %s10, 2
    %s17 = sadd.s32 %s10, 1
    %s18 = ssub.s32 %s10, %s17
    %p19 = scmp.eq.s32.totalorder %s18, 0
    %s21 = sadd.s32 %s20, 1
    %s22 = scalar_select %p19, %s20, %s21
    %p25 = pneg %p19
    %p26 = scmp.eq.s32.totalorder %s10, 1
    %p27 = por %p25, %p26
    %p28 = scmp.ne.s32.totalorder %s20, %s23
    %p29 = scmp.eq.s32.totalorder %s10, 0
    %p30 = por %p28, %p29
    %p31 = scmp.ne.s32.totalorder %s20, %s23
    %p32 = scmp.eq.s32.totalorder %s15, 1
    %p33 = por %p31, %p32
    %p34 = scmp.ne.s32.totalorder %s23, %s24
    %p35 = scmp.eq.s32.totalorder %s15, 0
    %p36 = por %p34, %p35
    %p37 = scmp.ne.s32.totalorder %s23, %s24
    %p38 = scmp.eq.s32.totalorder %s16, 1
    %p39 = por %p37, %p38
    %p41 = scmp.ne.s32.totalorder %s24, %s40
    %p42 = scmp.eq.s32.totalorder %s16, 0
    %p43 = por %p41, %p42
    %s45 = sadd.s32 %s44, 1
    %p48 = scmp.eq.s32.totalorder %s10, 1
    %p49 = scmp.ne.s32.totalorder %s44, %s46
    %p50 = scmp.eq.s32.totalorder %s10, 0
    %p51 = por %p49, %p50
    %p52 = scmp.ne.s32.totalorder %s44, %s46
    %p53 = scmp.eq.s32.totalorder %s15, 1
    %p54 = por %p52, %p53
    %p55 = scmp.ne.s32.totalorder %s46, %s47
    %p56 = scmp.eq.s32.totalorder %s15, 0
    %p57 = por %p55, %p56
    %p58 = scmp.ne.s32.totalorder %s46, %s47
    %p59 = scmp.eq.s32.totalorder %s16, 1
    %p60 = por %p58, %p59
    %p62 = scmp.ne.s32.totalorder %s47, %s61
    %p63 = scmp.eq.s32.totalorder %s16, 0
    %p64 = por %p62, %p63
    %s65 = ssub.s32 %s10, %s17
    %p66 = scmp.eq.s32.totalorder %s65, 0
    %s68 = sadd.s32 %s67, 1
    %s69 = scalar_select %p66, %s67, %s68
    %p72 = pneg %p66
    %p73 = scmp.eq.s32.totalorder %s10, 1
    %p74 = por %p72, %p73
    %p75 = scmp.ne.s32.totalorder %s67, %s70
    %p76 = scmp.eq.s32.totalorder %s10, 0
    %p77 = por %p75, %p76
    %p78 = scmp.ne.s32.totalorder %s67, %s70
    %p79 = scmp.eq.s32.totalorder %s15, 1
    %p80 = por %p78, %p79
    %p81 = scmp.ne.s32.totalorder %s70, %s71
    %p82 = scmp.eq.s32.totalorder %s15, 0
    %p83 = por %p81, %p82
    %p84 = scmp.ne.s32.totalorder %s70, %s71
    %p85 = scmp.eq.s32.totalorder %s16, 1
    %p86 = por %p84, %p85
    %p88 = scmp.ne.s32.totalorder %s71, %s87
    %p89 = scmp.eq.s32.totalorder %s16, 0
    %p90 = por %p88, %p89
    %s91 = ssub.s32 %s10, %s17
    %p92 = scmp.eq.s32.totalorder %s91, 0
    %s94 = sadd.s32 %s93, 1
    %s95 = scalar_select %p92, %s93, %s94
    %p98 = pneg %p92
    %p99 = scmp.eq.s32.totalorder %s10, 1
    %p100 = por %p98, %p99
    %p101 = scmp.ne.s32.totalorder %s93, %s96
    %p102 = scmp.eq.s32.totalorder %s10, 0
    %p103 = por %p101, %p102
    %p104 = scmp.ne.s32.totalorder %s93, %s96
    %p105 = scmp.eq.s32.totalorder %s15, 1
    %p106 = por %p104, %p105
    %p107 = scmp.ne.s32.totalorder %s96, %s97
    %p108 = scmp.eq.s32.totalorder %s15, 0
    %p109 = por %p107, %p108
    %p110 = scmp.ne.s32.totalorder %s96, %s97
    %p111 = scmp.eq.s32.totalorder %s16, 1
    %p112 = por %p110, %p111
    %p114 = scmp.ne.s32.totalorder %s97, %s113
    %p115 = scmp.eq.s32.totalorder %s16, 0
    %p116 = por %p114, %p115
    %p117 = scmp.le.s32.totalorder 1, %s10
    %p118 = scmp.lt.s32.totalorder %s10, 3
    %p119 = pnand %p117, %p118
    %p120 = pneg %p119
    // Predicated region
    $region9: #{bottleneck_forward.6} parent=5 // pred_check
      _
    $region10: #{bottleneck_forward.6} parent=5 // pred_check_branch
      %122 = sbr.rel (%p119) target = $region12
    $region11: #{bottleneck_forward.6} parent=5 // pred_region
      %s123 = ssub.s32 %s10, 1
      // Predicated region
      $region13: #{bottleneck_forward.6} parent=11 // pred_check
        %p124 = pneg %p57
      $region14: #{bottleneck_forward.6} parent=11 // pred_check_branch
        %126 = sbr.rel (%p124) target = $region16
      $region15: #{bottleneck_forward.6} parent=11 // pred_region
        _
      $region16: #{bottleneck_forward.6} parent=11 // pred_fallthru
        _
    $region12: #{bottleneck_forward.6} parent=5 // pred_fallthru
      _
    %p127 = scmp.lt.s32.totalorder %s10, 2
    // Predicated region
    $region17: #{bottleneck_forward.6} parent=5 // pred_check
      %p128 = pneg %p127
    $region18: #{bottleneck_forward.6} parent=5 // pred_check_branch
      %130 = sbr.rel (%p128) target = $region20
    $region19: #{bottleneck_forward.6} parent=5 // pred_region
      // Predicated region
      $region21: #{bottleneck_forward.6} parent=19 // pred_check
        %p131 = pneg %p30
      $region22: #{bottleneck_forward.6} parent=19 // pred_check_branch
        %133 = sbr.rel (%p131) target = $region24
      $region23: #{bottleneck_forward.6} parent=19 // pred_region
        %s134 = smul.u32 32, %s10
        %p135 = scmp.lt.s32.totalorder %s134, 63
        %s136 = scalar_select %p135, %s134, 63
        %s137 = smul.addr %s136, 8
        %s138 = scalar_lea.vmem %s0, %s137
        %s139 = smul.u32 32, %s10
      $region24: #{bottleneck_forward.6} parent=19 // pred_fallthru
        _
    $region20: #{bottleneck_forward.6} parent=5 // pred_fallthru
      _
    %p140 = scmp.le.s32.totalorder 1, %s10
    %p141 = scmp.lt.s32.totalorder %s10, 3
    %p142 = pnand %p140, %p141
    %p143 = pneg %p142
    // Predicated region
    $region25: #{bottleneck_forward.6} parent=5 // pred_check
      _
    $region26: #{bottleneck_forward.6} parent=5 // pred_check_branch
      %145 = sbr.rel (%p142) target = $region28
    $region27: #{bottleneck_forward.6} parent=5 // pred_region
      %s146 = ssub.s32 %s10, 1
      %s147 = smul.u32 32, %s15
      %p148 = scmp.lt.s32.totalorder %s147, 63
      %s149 = scalar_select %p148, %s147, 63
      %s150 = smul.addr %s149, 8
      %s151 = scalar_lea.vmem %s0, %s150
      %p152 = pneg %p36
      %p153 = pneg %p33
      %p154 = pneg %p57
      %p155 = pneg %p54
      %p156 = pneg %p83
      %p157 = pneg %p80
      %s158 = smul.u32 32, %s15
      %p159 = scmp.lt.s32.totalorder %s158, 63
      %s160 = scalar_select %p159, %s158, 63
      %s161 = smul.addr %s160, 8
      %s162 = scalar_lea.vmem %s2, %s161
      %p163 = pneg %p109
      %p164 = pneg %p106
      %p165 = scmp.lt.s32.totalorder %s15, 1
      %s166 = scalar_select %p165, %s15, 1
      %s167 = smul.addr %s166, 2
      %s168 = scalar_lea.vmem %s3, %s167
      %s169 = smul.u32 32, %s15
      %p170 = scmp.lt.s32.totalorder %s169, 63
      %s171 = scalar_select %p170, %s169, 63
      %s172 = smul.addr %s171, 8
      %s173 = scalar_lea.vmem %s0, %s172
      %s174 = smul.u32 32, %s15
      %s175 = smul.u32 32, %s15
      %p176 = scmp.lt.s32.totalorder %s175, 63
      %s177 = scalar_select %p176, %s175, 63
      %s178 = smul.addr %s177, 8
      %s179 = scalar_lea.vmem %s2, %s178
      %s180 = smul.u32 32, %s15
      %p181 = scmp.lt.s32.totalorder %s15, 1
      %s182 = scalar_select %p181, %s15, 1
      %s183 = smul.addr %s182, 2
      %s184 = scalar_lea.vmem %s3, %s183
      %v185 = vld [vmem:[%s173] sm:$0xff]
      %v186 = vld [vmem:[%s173 + $0x8] sm:$0xff]
      %v187 = vld [vmem:[%s173 + $0x10] sm:$0xff]
      %v188 = vld [vmem:[%s173 + $0x18] sm:$0xff]
      %v189 = vld [vmem:[%s173 + $0x20] sm:$0xff]
      %v190 = vld [vmem:[%s173 + $0x28] sm:$0xff]
      %v191 = vld [vmem:[%s173 + $0x30] sm:$0xff]
      %v192 = vld [vmem:[%s173 + $0x38] sm:$0xff]
      %v193 = vld [vmem:[%s173 + $0x40] sm:$0xff]
      %v194 = vld [vmem:[%s173 + $0x48] sm:$0xff]
      %v195 = vld [vmem:[%s173 + $0x50] sm:$0xff]
      %v196 = vld [vmem:[%s173 + $0x58] sm:$0xff]
      %v197 = vld [vmem:[%s173 + $0x60] sm:$0xff]
      %v198 = vld [vmem:[%s173 + $0x68] sm:$0xff]
      %v199 = vld [vmem:[%s173 + $0x70] sm:$0xff]
      %v200 = vld [vmem:[%s173 + $0x78] sm:$0xff]
      %v201 = vld [vmem:[%s173 + $0x80] sm:$0xff]
      %v202 = vld [vmem:[%s173 + $0x88] sm:$0xff]
      %v203 = vld [vmem:[%s173 + $0x90] sm:$0xff]
      %v204 = vld [vmem:[%s173 + $0x98] sm:$0xff]
      %v205 = vld [vmem:[%s173 + $0xa0] sm:$0xff]
      %v206 = vld [vmem:[%s173 + $0xa8] sm:$0xff]
      %v207 = vld [vmem:[%s173 + $0xb0] sm:$0xff]
      %v208 = vld [vmem:[%s173 + $0xb8] sm:$0xff]
      %v209 = vld [vmem:[%s173 + $0xc0] sm:$0xff]
      %v210 = vld [vmem:[%s173 + $0xc8] sm:$0xff]
      %v211 = vld [vmem:[%s173 + $0xd0] sm:$0xff]
      %v212 = vld [vmem:[%s173 + $0xd8] sm:$0xff]
      %v213 = vld [vmem:[%s173 + $0xe0] sm:$0xff]
      %v214 = vld [vmem:[%s173 + $0xe8] sm:$0xff]
      %v215 = vld [vmem:[%s173 + $0xf0] sm:$0xff]
      %v216 = vld [vmem:[%s173 + $0xf8] sm:$0xff]
      %v217 = vld [vmem:[%s1] sm:$0xf]
      %vm218 = vcmask 31744
      %v220 = vsel %vm218, %v185, 0
      %v223 = vsel %vm218, %v186, 0
      %v226 = vsel %vm218, %v187, 0
      %v229 = vsel %vm218, %v188, 0
      %v232 = vsel %vm218, %v189, 0
      %v235 = vsel %vm218, %v190, 0
      %v238 = vsel %vm218, %v191, 0
      %v241 = vsel %vm218, %v192, 0
      %v244 = vsel %vm218, %v193, 0
      %v247 = vsel %vm218, %v194, 0
      %v250 = vsel %vm218, %v195, 0
      %v253 = vsel %vm218, %v196, 0
      %v256 = vsel %vm218, %v197, 0
      %v259 = vsel %vm218, %v198, 0
      %v262 = vsel %vm218, %v199, 0
      %v265 = vsel %vm218, %v200, 0
      %v268 = vsel %vm218, %v201, 0
      %v271 = vsel %vm218, %v202, 0
      %v274 = vsel %vm218, %v203, 0
      %v277 = vsel %vm218, %v204, 0
      %v280 = vsel %vm218, %v205, 0
      %v283 = vsel %vm218, %v206, 0
      %v286 = vsel %vm218, %v207, 0
      %v289 = vsel %vm218, %v208, 0
      %v292 = vsel %vm218, %v209, 0
      %v295 = vsel %vm218, %v210, 0
      %v298 = vsel %vm218, %v211, 0
      %v301 = vsel %vm218, %v212, 0
      %v304 = vsel %vm218, %v213, 0
      %v307 = vsel %vm218, %v214, 0
      %v310 = vsel %vm218, %v215, 0
      %v313 = vsel %vm218, %v216, 0
      %vm315 = vcmask 1043456
      %v317 = vsel %vm315, %v217, 0
      %319 = vmatprep.subr.mxu0 0.0
      %320 = vmatpush1.msra.mxu0 %v317
      %321 = vmatprep.subr.mxu0 0.0
      %322 = vmatpush1.msra.mxu0 0.0
      %323 = vmatprep.subr.mxu0 0.0
      %324 = vmatpush1.msra.mxu0 0.0
      %325 = vmatprep.subr.mxu0 0.0
      %326 = vmatpush1.msra.mxu0 0.0
      %327 = vmatprep.subr.mxu0 0.0
      %328 = vmatpush1.msra.mxu0 0.0
      %329 = vmatprep.subr.mxu0 0.0
      %330 = vmatpush1.msra.mxu0 0.0
      %331 = vmatprep.subr.mxu0 0.0
      %332 = vmatpush1.msra.mxu0 0.0
      %333 = vmatprep.subr.mxu0 0.0
      %334 = vmatpush1.msra.mxu0 0.0
      %335 = vmatprep.subr.mxu0 0.0
      %336 = vmatpush1.msra.mxu0 0.0
      %337 = vmatprep.subr.mxu0 0.0
      %338 = vmatpush1.msra.mxu0 0.0
      %339 = vmatprep.subr.mxu0 0.0
      %340 = vmatpush1.msra.mxu0 0.0
      %341 = vmatprep.subr.mxu0 0.0
      %342 = vmatpush1.msra.mxu0 0.0
      %343 = vmatprep.subr.mxu0 0.0
      %344 = vmatpush1.msra.mxu0 0.0
      %345 = vmatprep.subr.mxu0 0.0
      %346 = vmatpush1.msra.mxu0 0.0
      %347 = vmatprep.subr.mxu0 0.0
      %348 = vmatpush1.msra.mxu0 0.0
      %349 = vmatprep.subr.mxu0 0.0
      %350 = vmatpush1.msra.mxu0 0.0
      %351 = vmatprep.subr.mxu0 0.0
      %352 = vmatpush1.msra.mxu0 0.0
      %353 = vmatprep.subr.mxu0 0.0
      %354 = vmatpush1.msra.mxu0 0.0
      %355 = vmatprep.subr.mxu0 0.0
      %356 = vmatpush1.msra.mxu0 0.0
      %357 = vmatprep.subr.mxu0 0.0
      %358 = vmatpush1.msra.mxu0 0.0
      %359 = vmatprep.subr.mxu0 0.0
      %360 = vmatpush1.msra.mxu0 0.0
      %361 = vmatprep.subr.mxu0 0.0
      %362 = vmatpush1.msra.mxu0 0.0
      %363 = vmatprep.subr.mxu0 0.0
      %364 = vmatpush1.msra.mxu0 0.0
      %365 = vmatprep.subr.mxu0 0.0
      %366 = vmatpush1.msra.mxu0 0.0
      %367 = vmatprep.subr.mxu0 0.0
      %368 = vmatpush1.msra.mxu0 0.0
      %369 = vmatprep.subr.mxu0 0.0
      %370 = vmatpush1.msra.mxu0 0.0
      %371 = vmatprep.subr.mxu0 0.0
      %372 = vmatpush1.msra.mxu0 0.0
      %373 = vmatprep.subr.mxu0 0.0
      %374 = vmatpush1.msra.mxu0 0.0
      %375 = vmatprep.subr.mxu0 0.0
      %376 = vmatpush1.msra.mxu0 0.0
      %377 = vmatprep.subr.mxu0 0.0
      %378 = vmatpush1.msra.mxu0 0.0
      %379 = vmatprep.subr.mxu0 0.0
      %380 = vmatpush1.msra.mxu0 0.0
      %381 = vmatprep.subr.mxu0 0.0
      %382 = vmatpush1.msra.mxu0 0.0
      %383 = vmatprep.mubr.f32.mxu0 0.0
      %384 = vmatmul.mubr.f32.gmra.mrb[0].mxu0 %v220
      %v385 = vpop.f32.mrb[0].mxu0
      %v386 = vadd.f32 0.0, %v385
      %v387 = vpop.f32.mrb[0].mxu0
      %388 = vmatprep.mubr.f32.mxu0 0.0
      %389 = vmatmul.mubr.f32.gmra.mrb[0].mxu0 %v223
      %v390 = vpop.f32.mrb[0].mxu0
      %v391 = vadd.f32 0.0, %v390
      %v392 = vpop.f32.mrb[0].mxu0
      %393 = vmatprep.mubr.f32.mxu0 0.0
      %394 = vmatmul.mubr.f32.gmra.mrb[0].mxu0 %v226
      %v395 = vpop.f32.mrb[0].mxu0
      %v396 = vadd.f32 0.0, %v395
      %v397 = vpop.f32.mrb[0].mxu0
      %398 = vmatprep.mubr.f32.mxu0 0.0
      %399 = vmatmul.mubr.f32.gmra.mrb[0].mxu0 %v229
      %v400 = vpop.f32.mrb[0].mxu0
      %v401 = vadd.f32 0.0, %v400
      %v402 = vpop.f32.mrb[0].mxu0
      %403 = vmatprep.mubr.f32.mxu0 0.0
      %404 = vmatmul.mubr.f32.gmra.mrb[0].mxu0 %v232
      %v405 = vpop.f32.mrb[0].mxu0
      %v406 = vadd.f32 0.0, %v405
      %v407 = vpop.f32.mrb[0].mxu0
      %408 = vmatprep.mubr.f32.mxu0 0.0
      %409 = vmatmul.mubr.f32.gmra.mrb[0].mxu0 %v235
      %v410 = vpop.f32.mrb[0].mxu0
      %v411 = vadd.f32 0.0, %v410
      %v412 = vpop.f32.mrb[0].mxu0
      %413 = vmatprep.mubr.f32.mxu0 0.0
      %414 = vmatmul.mubr.f32.gmra.mrb[0].mxu0 %v238
      %v415 = vpop.f32.mrb[0].mxu0
      %v416 = vadd.f32 0.0, %v415
      %v417 = vpop.f32.mrb[0].mxu0
      %418 = vmatprep.mubr.f32.mxu0 0.0
      %419 = vmatmul.mubr.f32.gmra.mrb[0].mxu0 %v241
      %v420 = vpop.f32.mrb[0].mxu0
      %v421 = vadd.f32 0.0, %v420
      %v422 = vpop.f32.mrb[0].mxu0
      %423 = vmatprep.mubr.f32.mxu0 0.0
      %424 = vmatmul.mubr.f32.gmra.mrb[0].mxu0 %v244
      %v425 = vpop.f32.mrb[0].mxu0
      %v426 = vadd.f32 0.0, %v425
      %v427 = vpop.f32.mrb[0].mxu0
      %428 = vmatprep.mubr.f32.mxu0 0.0
      %429 = vmatmul.mubr.f32.gmra.mrb[0].mxu0 %v247
      %v430 = vpop.f32.mrb[0].mxu0
      %v431 = vadd.f32 0.0, %v430
      %v432 = vpop.f32.mrb[0].mxu0
      %433 = vmatprep.mubr.f32.mxu0 0.0
      %434 = vmatmul.mubr.f32.gmra.mrb[0].mxu0 %v250
      %v435 = vpop.f32.mrb[0].mxu0
      %v436 = vadd.f32 0.0, %v435
      %v437 = vpop.f32.mrb[0].mxu0
      %438 = vmatprep.mubr.f32.mxu0 0.0
      %439 = vmatmul.mubr.f32.gmra.mrb[0].mxu0 %v253
      %v440 = vpop.f32.mrb[0].mxu0
      %v441 = vadd.f32 0.0, %v440
      %v442 = vpop.f32.mrb[0].mxu0
      %443 = vmatprep.mubr.f32.mxu0 0.0
      %444 = vmatmul.mubr.f32.gmra.mrb[0].mxu0 %v256
      %v445 = vpop.f32.mrb[0].mxu0
      %v446 = vadd.f32 0.0, %v445
      %v447 = vpop.f32.mrb[0].mxu0
      %448 = vmatprep.mubr.f32.mxu0 0.0
      %449 = vmatmul.mubr.f32.gmra.mrb[0].mxu0 %v259
      %v450 = vpop.f32.mrb[0].mxu0
      %v451 = vadd.f32 0.0, %v450
      %v452 = vpop.f32.mrb[0].mxu0
      %453 = vmatprep.mubr.f32.mxu0 0.0
      %454 = vmatmul.mubr.f32.gmra.mrb[0].mxu0 %v262
      %v455 = vpop.f32.mrb[0].mxu0
      %v456 = vadd.f32 0.0, %v455
      %v457 = vpop.f32.mrb[0].mxu0
      %458 = vmatprep.mubr.f32.mxu0 0.0
      %459 = vmatmul.mubr.f32.gmra.mrb[0].mxu0 %v265
      %v460 = vpop.f32.mrb[0].mxu0
      %v461 = vadd.f32 0.0, %v460
      %v462 = vpop.f32.mrb[0].mxu0
      %463 = vmatprep.mubr.f32.mxu0 0.0
      %464 = vmatmul.mubr.f32.gmra.mrb[0].mxu0 %v268
      %v465 = vpop.f32.mrb[0].mxu0
      %v466 = vadd.f32 0.0, %v465
      %v467 = vpop.f32.mrb[0].mxu0
      %468 = vmatprep.mubr.f32.mxu0 0.0
      %469 = vmatmul.mubr.f32.gmra.mrb[0].mxu0 %v271
      %v470 = vpop.f32.mrb[0].mxu0
      %v471 = vadd.f32 0.0, %v470
      %v472 = vpop.f32.mrb[0].mxu0
      %473 = vmatprep.mubr.f32.mxu0 0.0
      %474 = vmatmul.mubr.f32.gmra.mrb[0].mxu0 %v274
      %v475 = vpop.f32.mrb[0].mxu0
      %v476 = vadd.f32 0.0, %v475
      %v477 = vpop.f32.mrb[0].mxu0
      %478 = vmatprep.mubr.f32.mxu0 0.0
      %479 = vmatmul.mubr.f32.gmra.mrb[0].mxu0 %v277
      %v480 = vpop.f32.mrb[0].mxu0
      %v481 = vadd.f32 0.0, %v480
      %v482 = vpop.f32.mrb[0].mxu0
      %483 = vmatprep.mubr.f32.mxu0 0.0
      %484 = vmatmul.mubr.f32.gmra.mrb[0].mxu0 %v280
      %v485 = vpop.f32.mrb[0].mxu0
      %v486 = vadd.f32 0.0, %v485
      %v487 = vpop.f32.mrb[0].mxu0
      %488 = vmatprep.mubr.f32.mxu0 0.0
      %489 = vmatmul.mubr.f32.gmra.mrb[0].mxu0 %v283
      %v490 = vpop.f32.mrb[0].mxu0
      %v491 = vadd.f32 0.0, %v490
      %v492 = vpop.f32.mrb[0].mxu0
      %493 = vmatprep.mubr.f32.mxu0 0.0
      %494 = vmatmul.mubr.f32.gmra.mrb[0].mxu0 %v286
      %v495 = vpop.f32.mrb[0].mxu0
      %v496 = vadd.f32 0.0, %v495
      %v497 = vpop.f32.mrb[0].mxu0
      %498 = vmatprep.mubr.f32.mxu0 0.0
      %499 = vmatmul.mubr.f32.gmra.mrb[0].mxu0 %v289
      %v500 = vpop.f32.mrb[0].mxu0
      %v501 = vadd.f32 0.0, %v500
      %v502 = vpop.f32.mrb[0].mxu0
      %503 = vmatprep.mubr.f32.mxu0 0.0
      %504 = vmatmul.mubr.f32.gmra.mrb[0].mxu0 %v292
      %v505 = vpop.f32.mrb[0].mxu0
      %v506 = vadd.f32 0.0, %v505
      %v507 = vpop.f32.mrb[0].mxu0
      %508 = vmatprep.mubr.f32.mxu0 0.0
      %509 = vmatmul.mubr.f32.gmra.mrb[0].mxu0 %v295
      %v510 = vpop.f32.mrb[0].mxu0
      %v511 = vadd.f32 0.0, %v510
      %v512 = vpop.f32.mrb[0].mxu0
      %513 = vmatprep.mubr.f32.mxu0 0.0
      %514 = vmatmul.mubr.f32.gmra.mrb[0].mxu0 %v298
      %v515 = vpop.f32.mrb[0].mxu0
      %v516 = vadd.f32 0.0, %v515
      %v517 = vpop.f32.mrb[0].mxu0
      %518 = vmatprep.mubr.f32.mxu0 0.0
      %519 = vmatmul.mubr.f32.gmra.mrb[0].mxu0 %v301
      %v520 = vpop.f32.mrb[0].mxu0
      %v521 = vadd.f32 0.0, %v520
      %v522 = vpop.f32.mrb[0].mxu0
      %523 = vmatprep.mubr.f32.mxu0 0.0
      %524 = vmatmul.mubr.f32.gmra.mrb[0].mxu0 %v304
      %v525 = vpop.f32.mrb[0].mxu0
      %v526 = vadd.f32 0.0, %v525
      %v527 = vpop.f32.mrb[0].mxu0
      %528 = vmatprep.mubr.f32.mxu0 0.0
      %529 = vmatmul.mubr.f32.gmra.mrb[0].mxu0 %v307
      %v530 = vpop.f32.mrb[0].mxu0
      %v531 = vadd.f32 0.0, %v530
      %v532 = vpop.f32.mrb[0].mxu0
      %533 = vmatprep.mubr.f32.mxu0 0.0
      %534 = vmatmul.mubr.f32.gmra.mrb[0].mxu0 %v310
      %v535 = vpop.f32.mrb[0].mxu0
      %v536 = vadd.f32 0.0, %v535
      %v537 = vpop.f32.mrb[0].mxu0
      %538 = vmatprep.mubr.f32.mxu0 0.0
      %539 = vmatmul.mubr.f32.gmra.mrb[0].mxu0 %v313
      %v540 = vpop.f32.mrb[0].mxu0
      %v541 = vadd.f32 0.0, %v540
      %v542 = vpop.f32.mrb[0].mxu0
      %543 = vdwg.mxu0
      %544 = vst [vmem:[%s179] sm:$0xff] %v386
      %545 = vst [vmem:[%s179 + $0x8] sm:$0xff] %v391
      %546 = vst [vmem:[%s179 + $0x10] sm:$0xff] %v396
      %547 = vst [vmem:[%s179 + $0x18] sm:$0xff] %v401
      %548 = vst [vmem:[%s179 + $0x20] sm:$0xff] %v406
      %549 = vst [vmem:[%s179 + $0x28] sm:$0xff] %v411
      %550 = vst [vmem:[%s179 + $0x30] sm:$0xff] %v416
      %551 = vst [vmem:[%s179 + $0x38] sm:$0xff] %v421
      %552 = vst [vmem:[%s179 + $0x40] sm:$0xff] %v426
      %553 = vst [vmem:[%s179 + $0x48] sm:$0xff] %v431
      %554 = vst [vmem:[%s179 + $0x50] sm:$0xff] %v436
      %555 = vst [vmem:[%s179 + $0x58] sm:$0xff] %v441
      %556 = vst [vmem:[%s179 + $0x60] sm:$0xff] %v446
      %557 = vst [vmem:[%s179 + $0x68] sm:$0xff] %v451
      %558 = vst [vmem:[%s179 + $0x70] sm:$0xff] %v456
      %559 = vst [vmem:[%s179 + $0x78] sm:$0xff] %v461
      %560 = vst [vmem:[%s179 + $0x80] sm:$0xff] %v466
      %561 = vst [vmem:[%s179 + $0x88] sm:$0xff] %v471
      %562 = vst [vmem:[%s179 + $0x90] sm:$0xff] %v476
      %563 = vst [vmem:[%s179 + $0x98] sm:$0xff] %v481
      %564 = vst [vmem:[%s179 + $0xa0] sm:$0xff] %v486
      %565 = vst [vmem:[%s179 + $0xa8] sm:$0xff] %v491
      %566 = vst [vmem:[%s179 + $0xb0] sm:$0xff] %v496
      %567 = vst [vmem:[%s179 + $0xb8] sm:$0xff] %v501
      %568 = vst [vmem:[%s179 + $0xc0] sm:$0xff] %v506
      %569 = vst [vmem:[%s179 + $0xc8] sm:$0xff] %v511
      %570 = vst [vmem:[%s179 + $0xd0] sm:$0xff] %v516
      %571 = vst [vmem:[%s179 + $0xd8] sm:$0xff] %v521
      %572 = vst [vmem:[%s179 + $0xe0] sm:$0xff] %v526
      %573 = vst [vmem:[%s179 + $0xe8] sm:$0xff] %v531
      %574 = vst [vmem:[%s179 + $0xf0] sm:$0xff] %v536
      %575 = vst [vmem:[%s179 + $0xf8] sm:$0xff] %v541
      %v576 = vadd.f32 %v386, %v391
      %v577 = vadd.f32 %v576, %v396
      %v578 = vadd.f32 %v577, %v401
      %v579 = vadd.f32 %v578, %v406
      %v580 = vadd.f32 %v579, %v411
      %v581 = vadd.f32 %v580, %v416
      %v582 = vadd.f32 %v581, %v421
      %v583 = vadd.f32 %v582, %v426
      %v584 = vadd.f32 %v583, %v431
      %v585 = vadd.f32 %v584, %v436
      %v586 = vadd.f32 %v585, %v441
      %v587 = vadd.f32 %v586, %v446
      %v588 = vadd.f32 %v587, %v451
      %v589 = vadd.f32 %v588, %v456
      %v590 = vadd.f32 %v589, %v461
      %v591 = vadd.f32 %v590, %v466
      %v592 = vadd.f32 %v591, %v471
      %v593 = vadd.f32 %v592, %v476
      %v594 = vadd.f32 %v593, %v481
      %v595 = vadd.f32 %v594, %v486
      %v596 = vadd.f32 %v595, %v491
      %v597 = vadd.f32 %v596, %v496
      %v598 = vadd.f32 %v597, %v501
      %v599 = vadd.f32 %v598, %v506
      %v600 = vadd.f32 %v599, %v511
      %v601 = vadd.f32 %v600, %v516
      %v602 = vadd.f32 %v601, %v521
      %v603 = vadd.f32 %v602, %v526
      %v604 = vadd.f32 %v603, %v531
      %v605 = vadd.f32 %v604, %v536
      %v606 = vadd.f32 %v605, %v541
      %v607 = vrot.slane %v606, 4
      %v608 = vadd.f32 %v606, %v607
      %v609 = vrot.slane %v608, 2
      %v610 = vadd.f32 %v608, %v609
      %v611 = vrot.slane %v610, 1
      %v612 = vadd.f32 %v610, %v611
      %v613 = vmul.f32 %v386, %v386
      %v614 = vmul.f32 %v391, %v391
      %v615 = vmul.f32 %v396, %v396
      %v616 = vmul.f32 %v401, %v401
      %v617 = vmul.f32 %v406, %v406
      %v618 = vmul.f32 %v411, %v411
      %v619 = vmul.f32 %v416, %v416
      %v620 = vmul.f32 %v421, %v421
      %v621 = vmul.f32 %v426, %v426
      %v622 = vmul.f32 %v431, %v431
      %v623 = vmul.f32 %v436, %v436
      %v624 = vmul.f32 %v441, %v441
      %v625 = vmul.f32 %v446, %v446
      %v626 = vmul.f32 %v451, %v451
      %v627 = vmul.f32 %v456, %v456
      %v628 = vmul.f32 %v461, %v461
      %v629 = vmul.f32 %v466, %v466
      %v630 = vmul.f32 %v471, %v471
      %v631 = vmul.f32 %v476, %v476
      %v632 = vmul.f32 %v481, %v481
      %v633 = vmul.f32 %v486, %v486
      %v634 = vmul.f32 %v491, %v491
      %v635 = vmul.f32 %v496, %v496
      %v636 = vmul.f32 %v501, %v501
      %v637 = vmul.f32 %v506, %v506
      %v638 = vmul.f32 %v511, %v511
      %v639 = vmul.f32 %v516, %v516
      %v640 = vmul.f32 %v521, %v521
      %v641 = vmul.f32 %v526, %v526
      %v642 = vmul.f32 %v531, %v531
      %v643 = vmul.f32 %v536, %v536
      %v644 = vmul.f32 %v541, %v541
      %v645 = vadd.f32 %v613, %v614
      %v646 = vadd.f32 %v645, %v615
      %v647 = vadd.f32 %v646, %v616
      %v648 = vadd.f32 %v647, %v617
      %v649 = vadd.f32 %v648, %v618
      %v650 = vadd.f32 %v649, %v619
      %v651 = vadd.f32 %v650, %v620
      %v652 = vadd.f32 %v651, %v621
      %v653 = vadd.f32 %v652, %v622
      %v654 = vadd.f32 %v653, %v623
      %v655 = vadd.f32 %v654, %v624
      %v656 = vadd.f32 %v655, %v625
      %v657 = vadd.f32 %v656, %v626
      %v658 = vadd.f32 %v657, %v627
      %v659 = vadd.f32 %v658, %v628
      %v660 = vadd.f32 %v659, %v629
      %v661 = vadd.f32 %v660, %v630
      %v662 = vadd.f32 %v661, %v631
      %v663 = vadd.f32 %v662, %v632
      %v664 = vadd.f32 %v663, %v633
      %v665 = vadd.f32 %v664, %v634
      %v666 = vadd.f32 %v665, %v635
      %v667 = vadd.f32 %v666, %v636
      %v668 = vadd.f32 %v667, %v637
      %v669 = vadd.f32 %v668, %v638
      %v670 = vadd.f32 %v669, %v639
      %v671 = vadd.f32 %v670, %v640
      %v672 = vadd.f32 %v671, %v641
      %v673 = vadd.f32 %v672, %v642
      %v674 = vadd.f32 %v673, %v643
      %v675 = vadd.f32 %v674, %v644
      %v676 = vrot.slane %v675, 4
      %v677 = vadd.f32 %v675, %v676
      %v678 = vrot.slane %v677, 2
      %v679 = vadd.f32 %v677, %v678
      %v680 = vrot.slane %v679, 1
      %v681 = vadd.f32 %v679, %v680
      %vm682 = vcmask 1040384
      %v683 = vsel %vm682, %v612, %v681
      %684 = vst [vmem:[%s184] sm:$0x3] %v683
      %s685 = smul.u32 32, %s15
      %p686 = scmp.lt.s32.totalorder %s685, 63
      %s687 = scalar_select %p686, %s685, 63
      %s688 = smul.addr %s687, 8
      %s689 = scalar_lea.vmem %s2, %s688
      %p690 = scmp.lt.s32.totalorder %s15, 1
      %s691 = scalar_select %p690, %s15, 1
      %s692 = smul.addr %s691, 2
      %s693 = scalar_lea.vmem %s3, %s692
      // Predicated region
      $region29: #{bottleneck_forward.6} parent=27 // pred_check
        %p694 = pneg %p80
      $region30: #{bottleneck_forward.6} parent=27 // pred_check_branch
        %696 = sbr.rel (%p694) target = $region32
      $region31: #{bottleneck_forward.6} parent=27 // pred_region
        %s697 = smul.u32 32, %s15
      $region32: #{bottleneck_forward.6} parent=27 // pred_fallthru
        _
      // Predicated region
      $region33: #{bottleneck_forward.6} parent=27 // pred_check
        %p698 = pneg %p106
      $region34: #{bottleneck_forward.6} parent=27 // pred_check_branch
        %700 = sbr.rel (%p698) target = $region36
      $region35: #{bottleneck_forward.6} parent=27 // pred_region
        _
      $region36: #{bottleneck_forward.6} parent=27 // pred_fallthru
        _
    $region28: #{bottleneck_forward.6} parent=5 // pred_fallthru
      _
    %p701 = scmp.le.s32.totalorder 2, %s10
    // Predicated region
    $region37: #{bottleneck_forward.6} parent=5 // pred_check
      %p702 = pneg %p701
    $region38: #{bottleneck_forward.6} parent=5 // pred_check_branch
      %704 = sbr.rel (%p702) target = $region40
    $region39: #{bottleneck_forward.6} parent=5 // pred_region
      %s705 = ssub.s32 %s10, 2
      // Predicated region
      $region41: #{bottleneck_forward.6} parent=39 // pred_check
        %p706 = pneg %p86
      $region42: #{bottleneck_forward.6} parent=39 // pred_check_branch
        %708 = sbr.rel (%p706) target = $region44
      $region43: #{bottleneck_forward.6} parent=39 // pred_region
        %s709 = smul.u32 32, %s16
        %p710 = scmp.lt.s32.totalorder %s709, 63
        %s711 = scalar_select %p710, %s709, 63
        %s712 = smul.addr %s711, 8
        %s713 = scalar_lea.vmem %s2, %s712
      $region44: #{bottleneck_forward.6} parent=39 // pred_fallthru
        _
      // Predicated region
      $region45: #{bottleneck_forward.6} parent=39 // pred_check
        %p714 = pneg %p112
      $region46: #{bottleneck_forward.6} parent=39 // pred_check_branch
        %716 = sbr.rel (%p714) target = $region48
      $region47: #{bottleneck_forward.6} parent=39 // pred_region
        %p717 = scmp.lt.s32.totalorder %s16, 1
        %s718 = scalar_select %p717, %s16, 1
        %s719 = smul.addr %s718, 2
        %s720 = scalar_lea.vmem %s3, %s719
      $region48: #{bottleneck_forward.6} parent=39 // pred_fallthru
        _
    $region40: #{bottleneck_forward.6} parent=5 // pred_fallthru
      _
  $region6: #{bottleneck_forward.6} parent=0 // loop_footer
    %s14 = sadd.s32 1, %s10
  $region7: #{bottleneck_forward.6} parent=0 // loop_footer_branch
    %9 = sbr.rel target = $region3
  $region8: #{bottleneck_forward.6} parent=0 // loop_exit
    _

// kernel: bottleneck_forward.9
$region0: #{bottleneck_forward.9}
  #allocation0 [shape = 'u32[]', space=smem, size = 0x4, offset = 0x4, fixed_abs, tag = 'smem constant byte address 0x4 - core index']
  #allocation1 [shape = 'u32[144,128]{1,0:T(1,128)}', space=vmem, size = 0x12000, scoped, tag = 'internal scratch']
  %s0 = inlined_call_operand.vmem [shape: f32[512,128], index: 0, kind: input, shape index: {}]
  %s1 = inlined_call_operand.vmem [shape: f32[1,128], index: 1, kind: input, shape index: {}]
  %s2 = inlined_call_operand.vmem [shape: f32[1,128], index: 2, kind: input, shape index: {}]
  %s3 = inlined_call_operand.vmem [shape: f32[128,128], index: 3, kind: input, shape index: {}]
  %s4 = inlined_call_operand.vmem [shape: f32[512,128], index: 4, kind: output, shape index: {0}]
  %s5 = inlined_call_operand.vmem [shape: f32[2,2,128], index: 5, kind: output, shape index: {1}]
  %6 = xla_tuple %s4, %s5
  %s7 = sld [smem:[#allocation0]]
  $region57: #{bottleneck_forward.9} parent=0
    _
  %s9 = ssub.s32 1, %s7
  %s10 = scalar_select 0, %s9, %s7
  loop: start=0, step=1, limit=4
  $region2: #{bottleneck_forward.9} parent=0 // loop_pre_header
    _
  $region3: #{bottleneck_forward.9} parent=0 // loop_header
    %s12 = sphi 0, %s16
    %p13 = scmp.ge.s32.totalorder %s12, 4
    %s22 = sphi 0, %s24
    %s25 = sphi 0, %s22
    %s26 = sphi 0, %s25
    %s42 = sphi 0, %s26
    %s46 = sphi 0, %s46
    %s48 = sphi 0, %s46
    %s49 = sphi 0, %s48
    %s63 = sphi 0, %s49
    %s67 = sphi 0, %s67
    %s69 = sphi 0, %s67
    %s70 = sphi 0, %s69
    %s84 = sphi 0, %s70
    %s88 = sphi 0, %s88
    %s90 = sphi 0, %s88
    %s91 = sphi 0, %s90
    %s105 = sphi 0, %s91
    %s111 = sphi 0, %s113
    %s114 = sphi 0, %s111
    %s115 = sphi 0, %s114
    %s131 = sphi 0, %s115
    %s137 = sphi 0, %s139
    %s140 = sphi 0, %s137
    %s141 = sphi 0, %s140
    %s157 = sphi 0, %s141
  $region4: #{bottleneck_forward.9} parent=0 // loop_header_branch
    %15 = sbr.rel (%p13) target = $region8
  $region5: #{bottleneck_forward.9} parent=0 // loop_body
    %s17 = ssub.s32 %s12, 1
    %s18 = ssub.s32 %s12, 2
    %s19 = sadd.s32 %s12, 1
    %s20 = ssub.s32 %s12, %s19
    %p21 = scmp.eq.s32.totalorder %s20, 0
    %s23 = sadd.s32 %s22, 1
    %s24 = scalar_select %p21, %s22, %s23
    %p27 = pneg %p21
    %p28 = scmp.eq.s32.totalorder %s12, 1
    %p29 = por %p27, %p28
    %p30 = scmp.ne.s32.totalorder %s22, %s25
    %p31 = scmp.eq.s32.totalorder %s12, 0
    %p32 = por %p30, %p31
    %p33 = scmp.ne.s32.totalorder %s22, %s25
    %p34 = scmp.eq.s32.totalorder %s17, 1
    %p35 = por %p33, %p34
    %p36 = scmp.ne.s32.totalorder %s25, %s26
    %p37 = scmp.eq.s32.totalorder %s17, 0
    %p38 = por %p36, %p37
    %p39 = scmp.ne.s32.totalorder %s25, %s26
    %p40 = scmp.eq.s32.totalorder %s18, 1
    %p41 = por %p39, %p40
    %p43 = scmp.ne.s32.totalorder %s26, %s42
    %p44 = scmp.eq.s32.totalorder %s18, 0
    %p45 = por %p43, %p44
    %s47 = sadd.s32 %s46, 1
    %p50 = scmp.eq.s32.totalorder %s12, 1
    %p51 = scmp.ne.s32.totalorder %s46, %s48
    %p52 = scmp.eq.s32.totalorder %s12, 0
    %p53 = por %p51, %p52
    %p54 = scmp.ne.s32.totalorder %s46, %s48
    %p55 = scmp.eq.s32.totalorder %s17, 1
    %p56 = por %p54, %p55
    %p57 = scmp.ne.s32.totalorder %s48, %s49
    %p58 = scmp.eq.s32.totalorder %s17, 0
    %p59 = por %p57, %p58
    %p60 = scmp.ne.s32.totalorder %s48, %s49
    %p61 = scmp.eq.s32.totalorder %s18, 1
    %p62 = por %p60, %p61
    %p64 = scmp.ne.s32.totalorder %s49, %s63
    %p65 = scmp.eq.s32.totalorder %s18, 0
    %p66 = por %p64, %p65
    %s68 = sadd.s32 %s67, 1
    %p71 = scmp.eq.s32.totalorder %s12, 1
    %p72 = scmp.ne.s32.totalorder %s67, %s69
    %p73 = scmp.eq.s32.totalorder %s12, 0
    %p74 = por %p72, %p73
    %p75 = scmp.ne.s32.totalorder %s67, %s69
    %p76 = scmp.eq.s32.totalorder %s17, 1
    %p77 = por %p75, %p76
    %p78 = scmp.ne.s32.totalorder %s69, %s70
    %p79 = scmp.eq.s32.totalorder %s17, 0
    %p80 = por %p78, %p79
    %p81 = scmp.ne.s32.totalorder %s69, %s70
    %p82 = scmp.eq.s32.totalorder %s18, 1
    %p83 = por %p81, %p82
    %p85 = scmp.ne.s32.totalorder %s70, %s84
    %p86 = scmp.eq.s32.totalorder %s18, 0
    %p87 = por %p85, %p86
    %s89 = sadd.s32 %s88, 1
    %p92 = scmp.eq.s32.totalorder %s12, 1
    %p93 = scmp.ne.s32.totalorder %s88, %s90
    %p94 = scmp.eq.s32.totalorder %s12, 0
    %p95 = por %p93, %p94
    %p96 = scmp.ne.s32.totalorder %s88, %s90
    %p97 = scmp.eq.s32.totalorder %s17, 1
    %p98 = por %p96, %p97
    %p99 = scmp.ne.s32.totalorder %s90, %s91
    %p100 = scmp.eq.s32.totalorder %s17, 0
    %p101 = por %p99, %p100
    %p102 = scmp.ne.s32.totalorder %s90, %s91
    %p103 = scmp.eq.s32.totalorder %s18, 1
    %p104 = por %p102, %p103
    %p106 = scmp.ne.s32.totalorder %s91, %s105
    %p107 = scmp.eq.s32.totalorder %s18, 0
    %p108 = por %p106, %p107
    %s109 = ssub.s32 %s12, %s19
    %p110 = scmp.eq.s32.totalorder %s109, 0
    %s112 = sadd.s32 %s111, 1
    %s113 = scalar_select %p110, %s111, %s112
    %p116 = pneg %p110
    %p117 = scmp.eq.s32.totalorder %s12, 1
    %p118 = por %p116, %p117
    %p119 = scmp.ne.s32.totalorder %s111, %s114
    %p120 = scmp.eq.s32.totalorder %s12, 0
    %p121 = por %p119, %p120
    %p122 = scmp.ne.s32.totalorder %s111, %s114
    %p123 = scmp.eq.s32.totalorder %s17, 1
    %p124 = por %p122, %p123
    %p125 = scmp.ne.s32.totalorder %s114, %s115
    %p126 = scmp.eq.s32.totalorder %s17, 0
    %p127 = por %p125, %p126
    %p128 = scmp.ne.s32.totalorder %s114, %s115
    %p129 = scmp.eq.s32.totalorder %s18, 1
    %p130 = por %p128, %p129
    %p132 = scmp.ne.s32.totalorder %s115, %s131
    %p133 = scmp.eq.s32.totalorder %s18, 0
    %p134 = por %p132, %p133
    %s135 = ssub.s32 %s12, %s19
    %p136 = scmp.eq.s32.totalorder %s135, 0
    %s138 = sadd.s32 %s137, 1
    %s139 = scalar_select %p136, %s137, %s138
    %p142 = pneg %p136
    %p143 = scmp.eq.s32.totalorder %s12, 1
    %p144 = por %p142, %p143
    %p145 = scmp.ne.s32.totalorder %s137, %s140
    %p146 = scmp.eq.s32.totalorder %s12, 0
    %p147 = por %p145, %p146
    %p148 = scmp.ne.s32.totalorder %s137, %s140
    %p149 = scmp.eq.s32.totalorder %s17, 1
    %p150 = por %p148, %p149
    %p151 = scmp.ne.s32.totalorder %s140, %s141
    %p152 = scmp.eq.s32.totalorder %s17, 0
    %p153 = por %p151, %p152
    %p154 = scmp.ne.s32.totalorder %s140, %s141
    %p155 = scmp.eq.s32.totalorder %s18, 1
    %p156 = por %p154, %p155
    %p158 = scmp.ne.s32.totalorder %s141, %s157
    %p159 = scmp.eq.s32.totalorder %s18, 0
    %p160 = por %p158, %p159
    %p161 = scmp.le.s32.totalorder 1, %s12
    %p162 = scmp.lt.s32.totalorder %s12, 3
    %p163 = pnand %p161, %p162
    %p164 = pneg %p163
    // Predicated region
    $region9: #{bottleneck_forward.9} parent=5 // pred_check
      _
    $region10: #{bottleneck_forward.9} parent=5 // pred_check_branch
      %166 = sbr.rel (%p163) target = $region12
    $region11: #{bottleneck_forward.9} parent=5 // pred_region
      %s167 = ssub.s32 %s12, 1
      // Predicated region
      $region13: #{bottleneck_forward.9} parent=11 // pred_check
        %p168 = pneg %p59
      $region14: #{bottleneck_forward.9} parent=11 // pred_check_branch
        %170 = sbr.rel (%p168) target = $region16
      $region15: #{bottleneck_forward.9} parent=11 // pred_region
        _
      $region16: #{bottleneck_forward.9} parent=11 // pred_fallthru
        _
      // Predicated region
      $region17: #{bottleneck_forward.9} parent=11 // pred_check
        %p171 = pneg %p80
      $region18: #{bottleneck_forward.9} parent=11 // pred_check_branch
        %173 = sbr.rel (%p171) target = $region20
      $region19: #{bottleneck_forward.9} parent=11 // pred_region
        _
      $region20: #{bottleneck_forward.9} parent=11 // pred_fallthru
        _
      // Predicated region
      $region21: #{bottleneck_forward.9} parent=11 // pred_check
        %p174 = pneg %p101
      $region22: #{bottleneck_forward.9} parent=11 // pred_check_branch
        %176 = sbr.rel (%p174) target = $region24
      $region23: #{bottleneck_forward.9} parent=11 // pred_region
        _
      $region24: #{bottleneck_forward.9} parent=11 // pred_fallthru
        _
    $region12: #{bottleneck_forward.9} parent=5 // pred_fallthru
      _
    %p177 = scmp.lt.s32.totalorder %s12, 2
    // Predicated region
    $region25: #{bottleneck_forward.9} parent=5 // pred_check
      %p178 = pneg %p177
    $region26: #{bottleneck_forward.9} parent=5 // pred_check_branch
      %180 = sbr.rel (%p178) target = $region28
    $region27: #{bottleneck_forward.9} parent=5 // pred_region
      // Predicated region
      $region29: #{bottleneck_forward.9} parent=27 // pred_check
        %p181 = pneg %p32
      $region30: #{bottleneck_forward.9} parent=27 // pred_check_branch
        %183 = sbr.rel (%p181) target = $region32
      $region31: #{bottleneck_forward.9} parent=27 // pred_region
        %s184 = smul.u32 32, %s12
        %p185 = scmp.lt.s32.totalorder %s184, 63
        %s186 = scalar_select %p185, %s184, 63
        %s187 = smul.addr %s186, 8
        %s188 = scalar_lea.vmem %s0, %s187
        %s189 = smul.u32 32, %s12
      $region32: #{bottleneck_forward.9} parent=27 // pred_fallthru
        _
    $region28: #{bottleneck_forward.9} parent=5 // pred_fallthru
      _
    %p190 = scmp.le.s32.totalorder 1, %s12
    %p191 = scmp.lt.s32.totalorder %s12, 3
    %p192 = pnand %p190, %p191
    %p193 = pneg %p192
    // Predicated region
    $region33: #{bottleneck_forward.9} parent=5 // pred_check
      _
    $region34: #{bottleneck_forward.9} parent=5 // pred_check_branch
      %195 = sbr.rel (%p192) target = $region36
    $region35: #{bottleneck_forward.9} parent=5 // pred_region
      %s196 = ssub.s32 %s12, 1
      %s197 = smul.u32 32, %s17
      %p198 = scmp.lt.s32.totalorder %s197, 63
      %s199 = scalar_select %p198, %s197, 63
      %s200 = smul.addr %s199, 8
      %s201 = scalar_lea.vmem %s0, %s200
      %p202 = pneg %p38
      %p203 = pneg %p35
      %p204 = pneg %p59
      %p205 = pneg %p56
      %p206 = pneg %p80
      %p207 = pneg %p77
      %p208 = pneg %p101
      %p209 = pneg %p98
      %p210 = pneg %p127
      %p211 = pneg %p124
      %s212 = smul.u32 32, %s17
      %p213 = scmp.lt.s32.totalorder %s212, 63
      %s214 = scalar_select %p213, %s212, 63
      %s215 = smul.addr %s214, 8
      %s216 = scalar_lea.vmem %s4, %s215
      %p217 = pneg %p153
      %p218 = pneg %p150
      %p219 = scmp.lt.s32.totalorder %s17, 1
      %s220 = scalar_select %p219, %s17, 1
      %s221 = smul.addr %s220, 2
      %s222 = scalar_lea.vmem %s5, %s221
      %s223 = smul.u32 32, %s17
      %p224 = scmp.lt.s32.totalorder %s223, 63
      %s225 = scalar_select %p224, %s223, 63
      %s226 = smul.addr %s225, 8
      %s227 = scalar_lea.vmem %s0, %s226
      %s228 = smul.u32 32, %s17
      %s229 = smul.u32 32, %s17
      %p230 = scmp.lt.s32.totalorder %s229, 63
      %s231 = scalar_select %p230, %s229, 63
      %s232 = smul.addr %s231, 8
      %s233 = scalar_lea.vmem %s4, %s232
      %s234 = smul.u32 32, %s17
      %p235 = scmp.lt.s32.totalorder %s17, 1
      %s236 = scalar_select %p235, %s17, 1
      %s237 = smul.addr %s236, 2
      %s238 = scalar_lea.vmem %s5, %s237
      %v239 = vld [vmem:[%s227] sm:$0xff]
      %v240 = vld [vmem:[%s227 + $0x8] sm:$0xff]
      %v241 = vld [vmem:[%s227 + $0x10] sm:$0xff]
      %v242 = vld [vmem:[%s227 + $0x18] sm:$0xff]
      %v243 = vld [vmem:[%s227 + $0x20] sm:$0xff]
      %v244 = vld [vmem:[%s227 + $0x28] sm:$0xff]
      %v245 = vld [vmem:[%s227 + $0x30] sm:$0xff]
      %v246 = vld [vmem:[%s227 + $0x38] sm:$0xff]
      %v247 = vld [vmem:[%s227 + $0x40] sm:$0xff]
      %v248 = vld [vmem:[%s227 + $0x48] sm:$0xff]
      %v249 = vld [vmem:[%s227 + $0x50] sm:$0xff]
      %v250 = vld [vmem:[%s227 + $0x58] sm:$0xff]
      %v251 = vld [vmem:[%s227 + $0x60] sm:$0xff]
      %v252 = vld [vmem:[%s227 + $0x68] sm:$0xff]
      %v253 = vld [vmem:[%s227 + $0x70] sm:$0xff]
      %v254 = vld [vmem:[%s227 + $0x78] sm:$0xff]
      %v255 = vld [vmem:[%s227 + $0x80] sm:$0xff]
      %v256 = vld [vmem:[%s227 + $0x88] sm:$0xff]
      %v257 = vld [vmem:[%s227 + $0x90] sm:$0xff]
      %v258 = vld [vmem:[%s227 + $0x98] sm:$0xff]
      %v259 = vld [vmem:[%s227 + $0xa0] sm:$0xff]
      %v260 = vld [vmem:[%s227 + $0xa8] sm:$0xff]
      %v261 = vld [vmem:[%s227 + $0xb0] sm:$0xff]
      %v262 = vld [vmem:[%s227 + $0xb8] sm:$0xff]
      %v263 = vld [vmem:[%s227 + $0xc0] sm:$0xff]
      %v264 = vld [vmem:[%s227 + $0xc8] sm:$0xff]
      %v265 = vld [vmem:[%s227 + $0xd0] sm:$0xff]
      %v266 = vld [vmem:[%s227 + $0xd8] sm:$0xff]
      %v267 = vld [vmem:[%s227 + $0xe0] sm:$0xff]
      %v268 = vld [vmem:[%s227 + $0xe8] sm:$0xff]
      %v269 = vld [vmem:[%s227 + $0xf0] sm:$0xff]
      %v270 = vld [vmem:[%s227 + $0xf8] sm:$0xff]
      %v271 = vld [vmem:[%s1] sm:$0x1]
      %v273 = vlaneseq
      %v274 = vshrl.u32 %v273, 7
      %v275 = vsub.s32 0, %v274
      %v276 = vrot.slane %v271, %v275
      %v278 = vmul.f32 %v239, %v276
      %v279 = vmul.f32 %v240, %v276
      %v280 = vmul.f32 %v241, %v276
      %v281 = vmul.f32 %v242, %v276
      %v282 = vmul.f32 %v243, %v276
      %v283 = vmul.f32 %v244, %v276
      %v284 = vmul.f32 %v245, %v276
      %v285 = vmul.f32 %v246, %v276
      %v286 = vmul.f32 %v247, %v276
      %v287 = vmul.f32 %v248, %v276
      %v288 = vmul.f32 %v249, %v276
      %v289 = vmul.f32 %v250, %v276
      %v290 = vmul.f32 %v251, %v276
      %v291 = vmul.f32 %v252, %v276
      %v292 = vmul.f32 %v253, %v276
      %v293 = vmul.f32 %v254, %v276
      %v294 = vmul.f32 %v255, %v276
      %v295 = vmul.f32 %v256, %v276
      %v296 = vmul.f32 %v257, %v276
      %v297 = vmul.f32 %v258, %v276
      %v298 = vmul.f32 %v259, %v276
      %v299 = vmul.f32 %v260, %v276
      %v300 = vmul.f32 %v261, %v276
      %v301 = vmul.f32 %v262, %v276
      %v302 = vmul.f32 %v263, %v276
      %v303 = vmul.f32 %v264, %v276
      %v304 = vmul.f32 %v265, %v276
      %v305 = vmul.f32 %v266, %v276
      %v306 = vmul.f32 %v267, %v276
      %v307 = vmul.f32 %v268, %v276
      %v308 = vmul.f32 %v269, %v276
      %v309 = vmul.f32 %v270, %v276
      %v310 = vld [vmem:[%s2] sm:$0x1]
      %v312 = vlaneseq
      %v313 = vshrl.u32 %v312, 7
      %v314 = vsub.s32 0, %v313
      %v315 = vrot.slane %v310, %v314
      %v317 = vadd.f32 %v278, %v315
      %v318 = vadd.f32 %v279, %v315
      %v319 = vadd.f32 %v280, %v315
      %v320 = vadd.f32 %v281, %v315
      %v321 = vadd.f32 %v282, %v315
      %v322 = vadd.f32 %v283, %v315
      %v323 = vadd.f32 %v284, %v315
      %v324 = vadd.f32 %v285, %v315
      %v325 = vadd.f32 %v286, %v315
      %v326 = vadd.f32 %v287, %v315
      %v327 = vadd.f32 %v288, %v315
      %v328 = vadd.f32 %v289, %v315
      %v329 = vadd.f32 %v290, %v315
      %v330 = vadd.f32 %v291, %v315
      %v331 = vadd.f32 %v292, %v315
      %v332 = vadd.f32 %v293, %v315
      %v333 = vadd.f32 %v294, %v315
      %v334 = vadd.f32 %v295, %v315
      %v335 = vadd.f32 %v296, %v315
      %v336 = vadd.f32 %v297, %v315
      %v337 = vadd.f32 %v298, %v315
      %v338 = vadd.f32 %v299, %v315
      %v339 = vadd.f32 %v300, %v315
      %v340 = vadd.f32 %v301, %v315
      %v341 = vadd.f32 %v302, %v315
      %v342 = vadd.f32 %v303, %v315
      %v343 = vadd.f32 %v304, %v315
      %v344 = vadd.f32 %v305, %v315
      %v345 = vadd.f32 %v306, %v315
      %v346 = vadd.f32 %v307, %v315
      %v347 = vadd.f32 %v308, %v315
      %v348 = vadd.f32 %v309, %v315
      %v349 = vmax.f32 %v317, 0.0
      %v350 = vmax.f32 %v318, 0.0
      %v351 = vmax.f32 %v319, 0.0
      %v352 = vmax.f32 %v320, 0.0
      %v353 = vmax.f32 %v321, 0.0
      %v354 = vmax.f32 %v322, 0.0
      %v355 = vmax.f32 %v323, 0.0
      %v356 = vmax.f32 %v324, 0.0
      %v357 = vmax.f32 %v325, 0.0
      %v358 = vmax.f32 %v326, 0.0
      %v359 = vmax.f32 %v327, 0.0
      %v360 = vmax.f32 %v328, 0.0
      %v361 = vmax.f32 %v329, 0.0
      %v362 = vmax.f32 %v330, 0.0
      %v363 = vmax.f32 %v331, 0.0
      %v364 = vmax.f32 %v332, 0.0
      %v365 = vmax.f32 %v333, 0.0
      %v366 = vmax.f32 %v334, 0.0
      %v367 = vmax.f32 %v335, 0.0
      %v368 = vmax.f32 %v336, 0.0
      %v369 = vmax.f32 %v337, 0.0
      %v370 = vmax.f32 %v338, 0.0
      %v371 = vmax.f32 %v339, 0.0
      %v372 = vmax.f32 %v340, 0.0
      %v373 = vmax.f32 %v341, 0.0
      %v374 = vmax.f32 %v342, 0.0
      %v375 = vmax.f32 %v343, 0.0
      %v376 = vmax.f32 %v344, 0.0
      %v377 = vmax.f32 %v345, 0.0
      %v378 = vmax.f32 %v346, 0.0
      %v379 = vmax.f32 %v347, 0.0
      %v380 = vmax.f32 %v348, 0.0
      %v381 = vld [vmem:[%s3] sm:$0xff]
      %v382 = vld [vmem:[%s3 + $0x8] sm:$0xff]
      %v383 = vld [vmem:[%s3 + $0x10] sm:$0xff]
      %v384 = vld [vmem:[%s3 + $0x18] sm:$0xff]
      %v385 = vld [vmem:[%s3 + $0x20] sm:$0xff]
      %v386 = vld [vmem:[%s3 + $0x28] sm:$0xff]
      %v387 = vld [vmem:[%s3 + $0x30] sm:$0xff]
      %v388 = vld [vmem:[%s3 + $0x38] sm:$0xff]
      %v389 = vld [vmem:[%s3 + $0x40] sm:$0xff]
      %v390 = vld [vmem:[%s3 + $0x48] sm:$0xff]
      %v391 = vld [vmem:[%s3 + $0x50] sm:$0xff]
      %v392 = vld [vmem:[%s3 + $0x58] sm:$0xff]
      %v393 = vld [vmem:[%s3 + $0x60] sm:$0xff]
      %v394 = vld [vmem:[%s3 + $0x68] sm:$0xff]
      %v395 = vld [vmem:[%s3 + $0x70] sm:$0xff]
      %v396 = vld [vmem:[%s3 + $0x78] sm:$0xff]
      %397 = vmatprep.subr.mxu0 0.0
      %398 = vmatpush1.msra.mxu0 %v381
      %399 = vmatprep.subr.mxu0 0.0
      %400 = vmatpush1.msra.mxu0 %v382
      %401 = vmatprep.subr.mxu0 0.0
      %402 = vmatpush1.msra.mxu0 %v383
      %403 = vmatprep.subr.mxu0 0.0
      %404 = vmatpush1.msra.mxu0 %v384
      %405 = vmatprep.subr.mxu0 0.0
      %406 = vmatpush1.msra.mxu0 %v385
      %407 = vmatprep.subr.mxu0 0.0
      %408 = vmatpush1.msra.mxu0 %v386
      %409 = vmatprep.subr.mxu0 0.0
      %410 = vmatpush1.msra.mxu0 %v387
      %411 = vmatprep.subr.mxu0 0.0
      %412 = vmatpush1.msra.mxu0 %v388
      %413 = vmatprep.subr.mxu0 0.0
      %414 = vmatpush1.msra.mxu0 %v389
      %415 = vmatprep.subr.mxu0 0.0
      %416 = vmatpush1.msra.mxu0 %v390
      %417 = vmatprep.subr.mxu0 0.0
      %418 = vmatpush1.msra.mxu0 %v391
      %419 = vmatprep.subr.mxu0 0.0
      %420 = vmatpush1.msra.mxu0 %v392
      %421 = vmatprep.subr.mxu0 0.0
      %422 = vmatpush1.msra.mxu0 %v393
      %423 = vmatprep.subr.mxu0 0.0
      %424 = vmatpush1.msra.mxu0 %v394
      %425 = vmatprep.subr.mxu0 0.0
      %426 = vmatpush1.msra.mxu0 %v395
      %427 = vmatprep.subr.mxu0 0.0
      %428 = vmatpush1.msra.mxu0 %v396
      %429 = vmatprep.subr.mxu0 0.0
      %430 = vmatpush1.msra.mxu0 0.0
      %431 = vmatprep.subr.mxu0 0.0
      %432 = vmatpush1.msra.mxu0 0.0
      %433 = vmatprep.subr.mxu0 0.0
      %434 = vmatpush1.msra.mxu0 0.0
      %435 = vmatprep.subr.mxu0 0.0
      %436 = vmatpush1.msra.mxu0 0.0
      %437 = vmatprep.subr.mxu0 0.0
      %438 = vmatpush1.msra.mxu0 0.0
      %439 = vmatprep.subr.mxu0 0.0
      %440 = vmatpush1.msra.mxu0 0.0
      %441 = vmatprep.subr.mxu0 0.0
      %442 = vmatpush1.msra.mxu0 0.0
      %443 = vmatprep.subr.mxu0 0.0
      %444 = vmatpush1.msra.mxu0 0.0
      %445 = vmatprep.subr.mxu0 0.0
      %446 = vmatpush1.msra.mxu0 0.0
      %447 = vmatprep.subr.mxu0 0.0
      %448 = vmatpush1.msra.mxu0 0.0
      %449 = vmatprep.subr.mxu0 0.0
      %450 = vmatpush1.msra.mxu0 0.0
      %451 = vmatprep.subr.mxu0 0.0
      %452 = vmatpush1.msra.mxu0 0.0
      %453 = vmatprep.subr.mxu0 0.0
      %454 = vmatpush1.msra.mxu0 0.0
      %455 = vmatprep.subr.mxu0 0.0
      %456 = vmatpush1.msra.mxu0 0.0
      %457 = vmatprep.subr.mxu0 0.0
      %458 = vmatpush1.msra.mxu0 0.0
      %459 = vmatprep.subr.mxu0 0.0
      %460 = vmatpush1.msra.mxu0 0.0
      %461 = vmatprep.mubr.f32.mxu0 0.0
      %462 = vmatmul.mubr.f32.gmra.mrb[0].mxu0 %v349
      %v463 = vpop.f32.mrb[0].mxu0
      %v464 = vadd.f32 0.0, %v463
      %v465 = vpop.f32.mrb[0].mxu0
      %466 = vmatprep.mubr.f32.mxu0 0.0
      %467 = vmatmul.mubr.f32.gmra.mrb[0].mxu0 %v350
      %v468 = vpop.f32.mrb[0].mxu0
      %v469 = vadd.f32 0.0, %v468
      %v470 = vpop.f32.mrb[0].mxu0
      %471 = vmatprep.mubr.f32.mxu0 0.0
      %472 = vmatmul.mubr.f32.gmra.mrb[0].mxu0 %v351
      %v473 = vpop.f32.mrb[0].mxu0
      %v474 = vadd.f32 0.0, %v473
      %v475 = vpop.f32.mrb[0].mxu0
      %476 = vmatprep.mubr.f32.mxu0 0.0
      %477 = vmatmul.mubr.f32.gmra.mrb[0].mxu0 %v352
      %v478 = vpop.f32.mrb[0].mxu0
      %v479 = vadd.f32 0.0, %v478
      %v480 = vpop.f32.mrb[0].mxu0
      %481 = vmatprep.mubr.f32.mxu0 0.0
      %482 = vmatmul.mubr.f32.gmra.mrb[0].mxu0 %v353
      %v483 = vpop.f32.mrb[0].mxu0
      %v484 = vadd.f32 0.0, %v483
      %v485 = vpop.f32.mrb[0].mxu0
      %486 = vmatprep.mubr.f32.mxu0 0.0
      %487 = vmatmul.mubr.f32.gmra.mrb[0].mxu0 %v354
      %v488 = vpop.f32.mrb[0].mxu0
      %v489 = vadd.f32 0.0, %v488
      %v490 = vpop.f32.mrb[0].mxu0
      %491 = vmatprep.mubr.f32.mxu0 0.0
      %492 = vmatmul.mubr.f32.gmra.mrb[0].mxu0 %v355
      %v493 = vpop.f32.mrb[0].mxu0
      %v494 = vadd.f32 0.0, %v493
      %v495 = vpop.f32.mrb[0].mxu0
      %496 = vmatprep.mubr.f32.mxu0 0.0
      %497 = vmatmul.mubr.f32.gmra.mrb[0].mxu0 %v356
      %v498 = vpop.f32.mrb[0].mxu0
      %v499 = vadd.f32 0.0, %v498
      %v500 = vpop.f32.mrb[0].mxu0
      %501 = vmatprep.mubr.f32.mxu0 0.0
      %502 = vmatmul.mubr.f32.gmra.mrb[0].mxu0 %v357
      %v503 = vpop.f32.mrb[0].mxu0
      %v504 = vadd.f32 0.0, %v503
      %v505 = vpop.f32.mrb[0].mxu0
      %506 = vmatprep.mubr.f32.mxu0 0.0
      %507 = vmatmul.mubr.f32.gmra.mrb[0].mxu0 %v358
      %v508 = vpop.f32.mrb[0].mxu0
      %v509 = vadd.f32 0.0, %v508
      %v510 = vpop.f32.mrb[0].mxu0
      %511 = vmatprep.mubr.f32.mxu0 0.0
      %512 = vmatmul.mubr.f32.gmra.mrb[0].mxu0 %v359
      %v513 = vpop.f32.mrb[0].mxu0
      %v514 = vadd.f32 0.0, %v513
      %v515 = vpop.f32.mrb[0].mxu0
      %516 = vmatprep.mubr.f32.mxu0 0.0
      %517 = vmatmul.mubr.f32.gmra.mrb[0].mxu0 %v360
      %v518 = vpop.f32.mrb[0].mxu0
      %v519 = vadd.f32 0.0, %v518
      %v520 = vpop.f32.mrb[0].mxu0
      %521 = vmatprep.mubr.f32.mxu0 0.0
      %522 = vmatmul.mubr.f32.gmra.mrb[0].mxu0 %v361
      %v523 = vpop.f32.mrb[0].mxu0
      %v524 = vadd.f32 0.0, %v523
      %v525 = vpop.f32.mrb[0].mxu0
      %526 = vmatprep.mubr.f32.mxu0 0.0
      %527 = vmatmul.mubr.f32.gmra.mrb[0].mxu0 %v362
      %v528 = vpop.f32.mrb[0].mxu0
      %v529 = vadd.f32 0.0, %v528
      %v530 = vpop.f32.mrb[0].mxu0
      %531 = vmatprep.mubr.f32.mxu0 0.0
      %532 = vmatmul.mubr.f32.gmra.mrb[0].mxu0 %v363
      %v533 = vpop.f32.mrb[0].mxu0
      %v534 = vadd.f32 0.0, %v533
      %v535 = vpop.f32.mrb[0].mxu0
      %536 = vmatprep.mubr.f32.mxu0 0.0
      %537 = vmatmul.mubr.f32.gmra.mrb[0].mxu0 %v364
      %v538 = vpop.f32.mrb[0].mxu0
      %v539 = vadd.f32 0.0, %v538
      %v540 = vpop.f32.mrb[0].mxu0
      %541 = vmatprep.mubr.f32.mxu0 0.0
      %542 = vmatmul.mubr.f32.gmra.mrb[0].mxu0 %v365
      %v543 = vpop.f32.mrb[0].mxu0
      %v544 = vadd.f32 0.0, %v543
      %v545 = vpop.f32.mrb[0].mxu0
      %546 = vmatprep.mubr.f32.mxu0 0.0
      %547 = vmatmul.mubr.f32.gmra.mrb[0].mxu0 %v366
      %v548 = vpop.f32.mrb[0].mxu0
      %v549 = vadd.f32 0.0, %v548
      %v550 = vpop.f32.mrb[0].mxu0
      %551 = vmatprep.mubr.f32.mxu0 0.0
      %552 = vmatmul.mubr.f32.gmra.mrb[0].mxu0 %v367
      %v553 = vpop.f32.mrb[0].mxu0
      %v554 = vadd.f32 0.0, %v553
      %v555 = vpop.f32.mrb[0].mxu0
      %556 = vmatprep.mubr.f32.mxu0 0.0
      %557 = vmatmul.mubr.f32.gmra.mrb[0].mxu0 %v368
      %v558 = vpop.f32.mrb[0].mxu0
      %v559 = vadd.f32 0.0, %v558
      %v560 = vpop.f32.mrb[0].mxu0
      %561 = vmatprep.mubr.f32.mxu0 0.0
      %562 = vmatmul.mubr.f32.gmra.mrb[0].mxu0 %v369
      %v563 = vpop.f32.mrb[0].mxu0
      %v564 = vadd.f32 0.0, %v563
      %v565 = vpop.f32.mrb[0].mxu0
      %566 = vmatprep.mubr.f32.mxu0 0.0
      %567 = vmatmul.mubr.f32.gmra.mrb[0].mxu0 %v370
      %v568 = vpop.f32.mrb[0].mxu0
      %v569 = vadd.f32 0.0, %v568
      %v570 = vpop.f32.mrb[0].mxu0
      %571 = vmatprep.mubr.f32.mxu0 0.0
      %572 = vmatmul.mubr.f32.gmra.mrb[0].mxu0 %v371
      %v573 = vpop.f32.mrb[0].mxu0
      %v574 = vadd.f32 0.0, %v573
      %v575 = vpop.f32.mrb[0].mxu0
      %576 = vmatprep.mubr.f32.mxu0 0.0
      %577 = vmatmul.mubr.f32.gmra.mrb[0].mxu0 %v372
      %v578 = vpop.f32.mrb[0].mxu0
      %v579 = vadd.f32 0.0, %v578
      %v580 = vpop.f32.mrb[0].mxu0
      %581 = vmatprep.mubr.f32.mxu0 0.0
      %582 = vmatmul.mubr.f32.gmra.mrb[0].mxu0 %v373
      %v583 = vpop.f32.mrb[0].mxu0
      %v584 = vadd.f32 0.0, %v583
      %v585 = vpop.f32.mrb[0].mxu0
      %586 = vmatprep.mubr.f32.mxu0 0.0
      %587 = vmatmul.mubr.f32.gmra.mrb[0].mxu0 %v374
      %v588 = vpop.f32.mrb[0].mxu0
      %v589 = vadd.f32 0.0, %v588
      %v590 = vpop.f32.mrb[0].mxu0
      %591 = vmatprep.mubr.f32.mxu0 0.0
      %592 = vmatmul.mubr.f32.gmra.mrb[0].mxu0 %v375
      %v593 = vpop.f32.mrb[0].mxu0
      %v594 = vadd.f32 0.0, %v593
      %v595 = vpop.f32.mrb[0].mxu0
      %596 = vmatprep.mubr.f32.mxu0 0.0
      %597 = vmatmul.mubr.f32.gmra.mrb[0].mxu0 %v376
      %v598 = vpop.f32.mrb[0].mxu0
      %v599 = vadd.f32 0.0, %v598
      %v600 = vpop.f32.mrb[0].mxu0
      %601 = vmatprep.mubr.f32.mxu0 0.0
      %602 = vmatmul.mubr.f32.gmra.mrb[0].mxu0 %v377
      %v603 = vpop.f32.mrb[0].mxu0
      %v604 = vadd.f32 0.0, %v603
      %v605 = vpop.f32.mrb[0].mxu0
      %606 = vmatprep.mubr.f32.mxu0 0.0
      %607 = vmatmul.mubr.f32.gmra.mrb[0].mxu0 %v378
      %v608 = vpop.f32.mrb[0].mxu0
      %v609 = vadd.f32 0.0, %v608
      %v610 = vpop.f32.mrb[0].mxu0
      %611 = vmatprep.mubr.f32.mxu0 0.0
      %612 = vmatmul.mubr.f32.gmra.mrb[0].mxu0 %v379
      %v613 = vpop.f32.mrb[0].mxu0
      %v614 = vadd.f32 0.0, %v613
      %v615 = vpop.f32.mrb[0].mxu0
      %616 = vmatprep.mubr.f32.mxu0 0.0
      %617 = vmatmul.mubr.f32.gmra.mrb[0].mxu0 %v380
      %v618 = vpop.f32.mrb[0].mxu0
      %v619 = vadd.f32 0.0, %v618
      %v620 = vpop.f32.mrb[0].mxu0
      %621 = vdwg.mxu0
      %622 = vst [vmem:[%s233] sm:$0xff] %v464
      %623 = vst [vmem:[%s233 + $0x8] sm:$0xff] %v469
      %624 = vst [vmem:[%s233 + $0x10] sm:$0xff] %v474
      %625 = vst [vmem:[%s233 + $0x18] sm:$0xff] %v479
      %626 = vst [vmem:[%s233 + $0x20] sm:$0xff] %v484
      %627 = vst [vmem:[%s233 + $0x28] sm:$0xff] %v489
      %628 = vst [vmem:[%s233 + $0x30] sm:$0xff] %v494
      %629 = vst [vmem:[%s233 + $0x38] sm:$0xff] %v499
      %630 = vst [vmem:[%s233 + $0x40] sm:$0xff] %v504
      %631 = vst [vmem:[%s233 + $0x48] sm:$0xff] %v509
      %632 = vst [vmem:[%s233 + $0x50] sm:$0xff] %v514
      %633 = vst [vmem:[%s233 + $0x58] sm:$0xff] %v519
      %634 = vst [vmem:[%s233 + $0x60] sm:$0xff] %v524
      %635 = vst [vmem:[%s233 + $0x68] sm:$0xff] %v529
      %636 = vst [vmem:[%s233 + $0x70] sm:$0xff] %v534
      %637 = vst [vmem:[%s233 + $0x78] sm:$0xff] %v539
      %638 = vst [vmem:[%s233 + $0x80] sm:$0xff] %v544
      %639 = vst [vmem:[%s233 + $0x88] sm:$0xff] %v549
      %640 = vst [vmem:[%s233 + $0x90] sm:$0xff] %v554
      %641 = vst [vmem:[%s233 + $0x98] sm:$0xff] %v559
      %642 = vst [vmem:[%s233 + $0xa0] sm:$0xff] %v564
      %643 = vst [vmem:[%s233 + $0xa8] sm:$0xff] %v569
      %644 = vst [vmem:[%s233 + $0xb0] sm:$0xff] %v574
      %645 = vst [vmem:[%s233 + $0xb8] sm:$0xff] %v579
      %646 = vst [vmem:[%s233 + $0xc0] sm:$0xff] %v584
      %647 = vst [vmem:[%s233 + $0xc8] sm:$0xff] %v589
      %648 = vst [vmem:[%s233 + $0xd0] sm:$0xff] %v594
      %649 = vst [vmem:[%s233 + $0xd8] sm:$0xff] %v599
      %650 = vst [vmem:[%s233 + $0xe0] sm:$0xff] %v604
      %651 = vst [vmem:[%s233 + $0xe8] sm:$0xff] %v609
      %652 = vst [vmem:[%s233 + $0xf0] sm:$0xff] %v614
      %653 = vst [vmem:[%s233 + $0xf8] sm:$0xff] %v619
      %v654 = vadd.f32 %v464, %v469
      %v655 = vadd.f32 %v654, %v474
      %v656 = vadd.f32 %v655, %v479
      %v657 = vadd.f32 %v656, %v484
      %v658 = vadd.f32 %v657, %v489
      %v659 = vadd.f32 %v658, %v494
      %v660 = vadd.f32 %v659, %v499
      %v661 = vadd.f32 %v660, %v504
      %v662 = vadd.f32 %v661, %v509
      %v663 = vadd.f32 %v662, %v514
      %v664 = vadd.f32 %v663, %v519
      %v665 = vadd.f32 %v664, %v524
      %v666 = vadd.f32 %v665, %v529
      %v667 = vadd.f32 %v666, %v534
      %v668 = vadd.f32 %v667, %v539
      %v669 = vadd.f32 %v668, %v544
      %v670 = vadd.f32 %v669, %v549
      %v671 = vadd.f32 %v670, %v554
      %v672 = vadd.f32 %v671, %v559
      %v673 = vadd.f32 %v672, %v564
      %v674 = vadd.f32 %v673, %v569
      %v675 = vadd.f32 %v674, %v574
      %v676 = vadd.f32 %v675, %v579
      %v677 = vadd.f32 %v676, %v584
      %v678 = vadd.f32 %v677, %v589
      %v679 = vadd.f32 %v678, %v594
      %v680 = vadd.f32 %v679, %v599
      %v681 = vadd.f32 %v680, %v604
      %v682 = vadd.f32 %v681, %v609
      %v683 = vadd.f32 %v682, %v614
      %v684 = vadd.f32 %v683, %v619
      %v685 = vrot.slane %v684, 4
      %v686 = vadd.f32 %v684, %v685
      %v687 = vrot.slane %v686, 2
      %v688 = vadd.f32 %v686, %v687
      %v689 = vrot.slane %v688, 1
      %v690 = vadd.f32 %v688, %v689
      %v691 = vmul.f32 %v464, %v464
      %v692 = vmul.f32 %v469, %v469
      %v693 = vmul.f32 %v474, %v474
      %v694 = vmul.f32 %v479, %v479
      %v695 = vmul.f32 %v484, %v484
      %v696 = vmul.f32 %v489, %v489
      %v697 = vmul.f32 %v494, %v494
      %v698 = vmul.f32 %v499, %v499
      %v699 = vmul.f32 %v504, %v504
      %v700 = vmul.f32 %v509, %v509
      %v701 = vmul.f32 %v514, %v514
      %v702 = vmul.f32 %v519, %v519
      %v703 = vmul.f32 %v524, %v524
      %v704 = vmul.f32 %v529, %v529
      %v705 = vmul.f32 %v534, %v534
      %v706 = vmul.f32 %v539, %v539
      %v707 = vmul.f32 %v544, %v544
      %v708 = vmul.f32 %v549, %v549
      %v709 = vmul.f32 %v554, %v554
      %v710 = vmul.f32 %v559, %v559
      %v711 = vmul.f32 %v564, %v564
      %v712 = vmul.f32 %v569, %v569
      %v713 = vmul.f32 %v574, %v574
      %v714 = vmul.f32 %v579, %v579
      %v715 = vmul.f32 %v584, %v584
      %v716 = vmul.f32 %v589, %v589
      %v717 = vmul.f32 %v594, %v594
      %v718 = vmul.f32 %v599, %v599
      %v719 = vmul.f32 %v604, %v604
      %v720 = vmul.f32 %v609, %v609
      %v721 = vmul.f32 %v614, %v614
      %v722 = vmul.f32 %v619, %v619
      %v723 = vadd.f32 %v691, %v692
      %v724 = vadd.f32 %v723, %v693
      %v725 = vadd.f32 %v724, %v694
      %v726 = vadd.f32 %v725, %v695
      %v727 = vadd.f32 %v726, %v696
      %v728 = vadd.f32 %v727, %v697
      %v729 = vadd.f32 %v728, %v698
      %v730 = vadd.f32 %v729, %v699
      %v731 = vadd.f32 %v730, %v700
      %v732 = vadd.f32 %v731, %v701
      %v733 = vadd.f32 %v732, %v702
      %v734 = vadd.f32 %v733, %v703
      %v735 = vadd.f32 %v734, %v704
      %v736 = vadd.f32 %v735, %v705
      %v737 = vadd.f32 %v736, %v706
      %v738 = vadd.f32 %v737, %v707
      %v739 = vadd.f32 %v738, %v708
      %v740 = vadd.f32 %v739, %v709
      %v741 = vadd.f32 %v740, %v710
      %v742 = vadd.f32 %v741, %v711
      %v743 = vadd.f32 %v742, %v712
      %v744 = vadd.f32 %v743, %v713
      %v745 = vadd.f32 %v744, %v714
      %v746 = vadd.f32 %v745, %v715
      %v747 = vadd.f32 %v746, %v716
      %v748 = vadd.f32 %v747, %v717
      %v749 = vadd.f32 %v748, %v718
      %v750 = vadd.f32 %v749, %v719
      %v751 = vadd.f32 %v750, %v720
      %v752 = vadd.f32 %v751, %v721
      %v753 = vadd.f32 %v752, %v722
      %v754 = vrot.slane %v753, 4
      %v755 = vadd.f32 %v753, %v754
      %v756 = vrot.slane %v755, 2
      %v757 = vadd.f32 %v755, %v756
      %v758 = vrot.slane %v757, 1
      %v759 = vadd.f32 %v757, %v758
      %vm760 = vcmask 1040384
      %v761 = vsel %vm760, %v690, %v759
      %762 = vst [vmem:[%s238] sm:$0x3] %v761
      %s763 = smul.u32 32, %s17
      %p764 = scmp.lt.s32.totalorder %s763, 63
      %s765 = scalar_select %p764, %s763, 63
      %s766 = smul.addr %s765, 8
      %s767 = scalar_lea.vmem %s4, %s766
      %p768 = scmp.lt.s32.totalorder %s17, 1
      %s769 = scalar_select %p768, %s17, 1
      %s770 = smul.addr %s769, 2
      %s771 = scalar_lea.vmem %s5, %s770
      // Predicated region
      $region37: #{bottleneck_forward.9} parent=35 // pred_check
        %p772 = pneg %p124
      $region38: #{bottleneck_forward.9} parent=35 // pred_check_branch
        %774 = sbr.rel (%p772) target = $region40
      $region39: #{bottleneck_forward.9} parent=35 // pred_region
        %s775 = smul.u32 32, %s17
      $region40: #{bottleneck_forward.9} parent=35 // pred_fallthru
        _
      // Predicated region
      $region41: #{bottleneck_forward.9} parent=35 // pred_check
        %p776 = pneg %p150
      $region42: #{bottleneck_forward.9} parent=35 // pred_check_branch
        %778 = sbr.rel (%p776) target = $region44
      $region43: #{bottleneck_forward.9} parent=35 // pred_region
        _
      $region44: #{bottleneck_forward.9} parent=35 // pred_fallthru
        _
    $region36: #{bottleneck_forward.9} parent=5 // pred_fallthru
      _
    %p779 = scmp.le.s32.totalorder 2, %s12
    // Predicated region
    $region45: #{bottleneck_forward.9} parent=5 // pred_check
      %p780 = pneg %p779
    $region46: #{bottleneck_forward.9} parent=5 // pred_check_branch
      %782 = sbr.rel (%p780) target = $region48
    $region47: #{bottleneck_forward.9} parent=5 // pred_region
      %s783 = ssub.s32 %s12, 2
      // Predicated region
      $region49: #{bottleneck_forward.9} parent=47 // pred_check
        %p784 = pneg %p130
      $region50: #{bottleneck_forward.9} parent=47 // pred_check_branch
        %786 = sbr.rel (%p784) target = $region52
      $region51: #{bottleneck_forward.9} parent=47 // pred_region
        %s787 = smul.u32 32, %s18
        %p788 = scmp.lt.s32.totalorder %s787, 63
        %s789 = scalar_select %p788, %s787, 63
        %s790 = smul.addr %s789, 8
        %s791 = scalar_lea.vmem %s4, %s790
      $region52: #{bottleneck_forward.9} parent=47 // pred_fallthru
        _
      // Predicated region
      $region53: #{bottleneck_forward.9} parent=47 // pred_check
        %p792 = pneg %p156
      $region54: #{bottleneck_forward.9} parent=47 // pred_check_branch
        %794 = sbr.rel (%p792) target = $region56
      $region55: #{bottleneck_forward.9} parent=47 // pred_region
        %p795 = scmp.lt.s32.totalorder %s18, 1
        %s796 = scalar_select %p795, %s18, 1
        %s797 = smul.addr %s796, 2
        %s798 = scalar_lea.vmem %s5, %s797
      $region56: #{bottleneck_forward.9} parent=47 // pred_fallthru
        _
    $region48: #{bottleneck_forward.9} parent=5 // pred_fallthru
      _
  $region6: #{bottleneck_forward.9} parent=0 // loop_footer
    %s16 = sadd.s32 1, %s12
  $region7: #{bottleneck_forward.9} parent=0 // loop_footer_branch
    %11 = sbr.rel target = $region3
  $region8: #{bottleneck_forward.9} parent=0 // loop_exit
    _

// kernel: bottleneck_forward.11
$region0: #{bottleneck_forward.11}
  #allocation0 [shape = 'u32[]', space=smem, size = 0x4, offset = 0x4, fixed_abs, tag = 'smem constant byte address 0x4 - core index']
  #allocation1 [shape = 'u32[144,128]{1,0:T(1,128)}', space=vmem, size = 0x12000, scoped, tag = 'internal scratch']
  %s0 = inlined_call_operand.vmem [shape: f32[512,128], index: 0, kind: input, shape index: {}]
  %s1 = inlined_call_operand.vmem [shape: f32[512,128], index: 1, kind: input, shape index: {}]
  %s2 = inlined_call_operand.vmem [shape: f32[1,128], index: 2, kind: input, shape index: {}]
  %s3 = inlined_call_operand.vmem [shape: f32[1,128], index: 3, kind: input, shape index: {}]
  %s4 = inlined_call_operand.vmem [shape: f32[1,128], index: 4, kind: input, shape index: {}]
  %s5 = inlined_call_operand.vmem [shape: f32[1,128], index: 5, kind: input, shape index: {}]
  %s6 = inlined_call_operand.vmem [shape: f32[512,128], index: 6, kind: output, shape index: {}]
  %s7 = sld [smem:[#allocation0]]
  $region57: #{bottleneck_forward.11} parent=0
    _
  %s9 = ssub.s32 1, %s7
  %s10 = scalar_select 0, %s9, %s7
  loop: start=0, step=1, limit=4
  $region2: #{bottleneck_forward.11} parent=0 // loop_pre_header
    _
  $region3: #{bottleneck_forward.11} parent=0 // loop_header
    %s12 = sphi 0, %s16
    %p13 = scmp.ge.s32.totalorder %s12, 4
    %s22 = sphi 0, %s24
    %s25 = sphi 0, %s22
    %s26 = sphi 0, %s25
    %s42 = sphi 0, %s26
    %s48 = sphi 0, %s50
    %s51 = sphi 0, %s48
    %s52 = sphi 0, %s51
    %s68 = sphi 0, %s52
    %s72 = sphi 0, %s72
    %s74 = sphi 0, %s72
    %s75 = sphi 0, %s74
    %s89 = sphi 0, %s75
    %s93 = sphi 0, %s93
    %s95 = sphi 0, %s93
    %s96 = sphi 0, %s95
    %s110 = sphi 0, %s96
    %s114 = sphi 0, %s114
    %s116 = sphi 0, %s114
    %s117 = sphi 0, %s116
    %s131 = sphi 0, %s117
    %s135 = sphi 0, %s135
    %s137 = sphi 0, %s135
    %s138 = sphi 0, %s137
    %s152 = sphi 0, %s138
    %s158 = sphi 0, %s160
    %s161 = sphi 0, %s158
    %s162 = sphi 0, %s161
    %s178 = sphi 0, %s162
  $region4: #{bottleneck_forward.11} parent=0 // loop_header_branch
    %15 = sbr.rel (%p13) target = $region8
  $region5: #{bottleneck_forward.11} parent=0 // loop_body
    %s17 = ssub.s32 %s12, 1
    %s18 = ssub.s32 %s12, 2
    %s19 = sadd.s32 %s12, 1
    %s20 = ssub.s32 %s12, %s19
    %p21 = scmp.eq.s32.totalorder %s20, 0
    %s23 = sadd.s32 %s22, 1
    %s24 = scalar_select %p21, %s22, %s23
    %p27 = pneg %p21
    %p28 = scmp.eq.s32.totalorder %s12, 1
    %p29 = por %p27, %p28
    %p30 = scmp.ne.s32.totalorder %s22, %s25
    %p31 = scmp.eq.s32.totalorder %s12, 0
    %p32 = por %p30, %p31
    %p33 = scmp.ne.s32.totalorder %s22, %s25
    %p34 = scmp.eq.s32.totalorder %s17, 1
    %p35 = por %p33, %p34
    %p36 = scmp.ne.s32.totalorder %s25, %s26
    %p37 = scmp.eq.s32.totalorder %s17, 0
    %p38 = por %p36, %p37
    %p39 = scmp.ne.s32.totalorder %s25, %s26
    %p40 = scmp.eq.s32.totalorder %s18, 1
    %p41 = por %p39, %p40
    %p43 = scmp.ne.s32.totalorder %s26, %s42
    %p44 = scmp.eq.s32.totalorder %s18, 0
    %p45 = por %p43, %p44
    %s46 = ssub.s32 %s12, %s19
    %p47 = scmp.eq.s32.totalorder %s46, 0
    %s49 = sadd.s32 %s48, 1
    %s50 = scalar_select %p47, %s48, %s49
    %p53 = pneg %p47
    %p54 = scmp.eq.s32.totalorder %s12, 1
    %p55 = por %p53, %p54
    %p56 = scmp.ne.s32.totalorder %s48, %s51
    %p57 = scmp.eq.s32.totalorder %s12, 0
    %p58 = por %p56, %p57
    %p59 = scmp.ne.s32.totalorder %s48, %s51
    %p60 = scmp.eq.s32.totalorder %s17, 1
    %p61 = por %p59, %p60
    %p62 = scmp.ne.s32.totalorder %s51, %s52
    %p63 = scmp.eq.s32.totalorder %s17, 0
    %p64 = por %p62, %p63
    %p65 = scmp.ne.s32.totalorder %s51, %s52
    %p66 = scmp.eq.s32.totalorder %s18, 1
    %p67 = por %p65, %p66
    %p69 = scmp.ne.s32.totalorder %s52, %s68
    %p70 = scmp.eq.s32.totalorder %s18, 0
    %p71 = por %p69, %p70
    %s73 = sadd.s32 %s72, 1
    %p76 = scmp.eq.s32.totalorder %s12, 1
    %p77 = scmp.ne.s32.totalorder %s72, %s74
    %p78 = scmp.eq.s32.totalorder %s12, 0
    %p79 = por %p77, %p78
    %p80 = scmp.ne.s32.totalorder %s72, %s74
    %p81 = scmp.eq.s32.totalorder %s17, 1
    %p82 = por %p80, %p81
    %p83 = scmp.ne.s32.totalorder %s74, %s75
    %p84 = scmp.eq.s32.totalorder %s17, 0
    %p85 = por %p83, %p84
    %p86 = scmp.ne.s32.totalorder %s74, %s75
    %p87 = scmp.eq.s32.totalorder %s18, 1
    %p88 = por %p86, %p87
    %p90 = scmp.ne.s32.totalorder %s75, %s89
    %p91 = scmp.eq.s32.totalorder %s18, 0
    %p92 = por %p90, %p91
    %s94 = sadd.s32 %s93, 1
    %p97 = scmp.eq.s32.totalorder %s12, 1
    %p98 = scmp.ne.s32.totalorder %s93, %s95
    %p99 = scmp.eq.s32.totalorder %s12, 0
    %p100 = por %p98, %p99
    %p101 = scmp.ne.s32.totalorder %s93, %s95
    %p102 = scmp.eq.s32.totalorder %s17, 1
    %p103 = por %p101, %p102
    %p104 = scmp.ne.s32.totalorder %s95, %s96
    %p105 = scmp.eq.s32.totalorder %s17, 0
    %p106 = por %p104, %p105
    %p107 = scmp.ne.s32.totalorder %s95, %s96
    %p108 = scmp.eq.s32.totalorder %s18, 1
    %p109 = por %p107, %p108
    %p111 = scmp.ne.s32.totalorder %s96, %s110
    %p112 = scmp.eq.s32.totalorder %s18, 0
    %p113 = por %p111, %p112
    %s115 = sadd.s32 %s114, 1
    %p118 = scmp.eq.s32.totalorder %s12, 1
    %p119 = scmp.ne.s32.totalorder %s114, %s116
    %p120 = scmp.eq.s32.totalorder %s12, 0
    %p121 = por %p119, %p120
    %p122 = scmp.ne.s32.totalorder %s114, %s116
    %p123 = scmp.eq.s32.totalorder %s17, 1
    %p124 = por %p122, %p123
    %p125 = scmp.ne.s32.totalorder %s116, %s117
    %p126 = scmp.eq.s32.totalorder %s17, 0
    %p127 = por %p125, %p126
    %p128 = scmp.ne.s32.totalorder %s116, %s117
    %p129 = scmp.eq.s32.totalorder %s18, 1
    %p130 = por %p128, %p129
    %p132 = scmp.ne.s32.totalorder %s117, %s131
    %p133 = scmp.eq.s32.totalorder %s18, 0
    %p134 = por %p132, %p133
    %s136 = sadd.s32 %s135, 1
    %p139 = scmp.eq.s32.totalorder %s12, 1
    %p140 = scmp.ne.s32.totalorder %s135, %s137
    %p141 = scmp.eq.s32.totalorder %s12, 0
    %p142 = por %p140, %p141
    %p143 = scmp.ne.s32.totalorder %s135, %s137
    %p144 = scmp.eq.s32.totalorder %s17, 1
    %p145 = por %p143, %p144
    %p146 = scmp.ne.s32.totalorder %s137, %s138
    %p147 = scmp.eq.s32.totalorder %s17, 0
    %p148 = por %p146, %p147
    %p149 = scmp.ne.s32.totalorder %s137, %s138
    %p150 = scmp.eq.s32.totalorder %s18, 1
    %p151 = por %p149, %p150
    %p153 = scmp.ne.s32.totalorder %s138, %s152
    %p154 = scmp.eq.s32.totalorder %s18, 0
    %p155 = por %p153, %p154
    %s156 = ssub.s32 %s12, %s19
    %p157 = scmp.eq.s32.totalorder %s156, 0
    %s159 = sadd.s32 %s158, 1
    %s160 = scalar_select %p157, %s158, %s159
    %p163 = pneg %p157
    %p164 = scmp.eq.s32.totalorder %s12, 1
    %p165 = por %p163, %p164
    %p166 = scmp.ne.s32.totalorder %s158, %s161
    %p167 = scmp.eq.s32.totalorder %s12, 0
    %p168 = por %p166, %p167
    %p169 = scmp.ne.s32.totalorder %s158, %s161
    %p170 = scmp.eq.s32.totalorder %s17, 1
    %p171 = por %p169, %p170
    %p172 = scmp.ne.s32.totalorder %s161, %s162
    %p173 = scmp.eq.s32.totalorder %s17, 0
    %p174 = por %p172, %p173
    %p175 = scmp.ne.s32.totalorder %s161, %s162
    %p176 = scmp.eq.s32.totalorder %s18, 1
    %p177 = por %p175, %p176
    %p179 = scmp.ne.s32.totalorder %s162, %s178
    %p180 = scmp.eq.s32.totalorder %s18, 0
    %p181 = por %p179, %p180
    %p182 = scmp.le.s32.totalorder 1, %s12
    %p183 = scmp.lt.s32.totalorder %s12, 3
    %p184 = pnand %p182, %p183
    %p185 = pneg %p184
    // Predicated region
    $region9: #{bottleneck_forward.11} parent=5 // pred_check
      _
    $region10: #{bottleneck_forward.11} parent=5 // pred_check_branch
      %187 = sbr.rel (%p184) target = $region12
    $region11: #{bottleneck_forward.11} parent=5 // pred_region
      %s188 = ssub.s32 %s12, 1
      // Predicated region
      $region13: #{bottleneck_forward.11} parent=11 // pred_check
        %p189 = pneg %p85
      $region14: #{bottleneck_forward.11} parent=11 // pred_check_branch
        %191 = sbr.rel (%p189) target = $region16
      $region15: #{bottleneck_forward.11} parent=11 // pred_region
        _
      $region16: #{bottleneck_forward.11} parent=11 // pred_fallthru
        _
      // Predicated region
      $region17: #{bottleneck_forward.11} parent=11 // pred_check
        %p192 = pneg %p106
      $region18: #{bottleneck_forward.11} parent=11 // pred_check_branch
        %194 = sbr.rel (%p192) target = $region20
      $region19: #{bottleneck_forward.11} parent=11 // pred_region
        _
      $region20: #{bottleneck_forward.11} parent=11 // pred_fallthru
        _
      // Predicated region
      $region21: #{bottleneck_forward.11} parent=11 // pred_check
        %p195 = pneg %p127
      $region22: #{bottleneck_forward.11} parent=11 // pred_check_branch
        %197 = sbr.rel (%p195) target = $region24
      $region23: #{bottleneck_forward.11} parent=11 // pred_region
        _
      $region24: #{bottleneck_forward.11} parent=11 // pred_fallthru
        _
      // Predicated region
      $region25: #{bottleneck_forward.11} parent=11 // pred_check
        %p198 = pneg %p148
      $region26: #{bottleneck_forward.11} parent=11 // pred_check_branch
        %200 = sbr.rel (%p198) target = $region28
      $region27: #{bottleneck_forward.11} parent=11 // pred_region
        _
      $region28: #{bottleneck_forward.11} parent=11 // pred_fallthru
        _
    $region12: #{bottleneck_forward.11} parent=5 // pred_fallthru
      _
    %p201 = scmp.lt.s32.totalorder %s12, 2
    // Predicated region
    $region29: #{bottleneck_forward.11} parent=5 // pred_check
      %p202 = pneg %p201
    $region30: #{bottleneck_forward.11} parent=5 // pred_check_branch
      %204 = sbr.rel (%p202) target = $region32
    $region31: #{bottleneck_forward.11} parent=5 // pred_region
      // Predicated region
      $region33: #{bottleneck_forward.11} parent=31 // pred_check
        %p205 = pneg %p32
      $region34: #{bottleneck_forward.11} parent=31 // pred_check_branch
        %207 = sbr.rel (%p205) target = $region36
      $region35: #{bottleneck_forward.11} parent=31 // pred_region
        %s208 = smul.u32 32, %s12
        %p209 = scmp.lt.s32.totalorder %s208, 63
        %s210 = scalar_select %p209, %s208, 63
        %s211 = smul.addr %s210, 8
        %s212 = scalar_lea.vmem %s0, %s211
        %s213 = smul.u32 32, %s12
      $region36: #{bottleneck_forward.11} parent=31 // pred_fallthru
        _
      // Predicated region
      $region37: #{bottleneck_forward.11} parent=31 // pred_check
        %p214 = pneg %p58
      $region38: #{bottleneck_forward.11} parent=31 // pred_check_branch
        %216 = sbr.rel (%p214) target = $region40
      $region39: #{bottleneck_forward.11} parent=31 // pred_region
        %s217 = smul.u32 32, %s12
        %p218 = scmp.lt.s32.totalorder %s217, 63
        %s219 = scalar_select %p218, %s217, 63
        %s220 = smul.addr %s219, 8
        %s221 = scalar_lea.vmem %s1, %s220
        %s222 = smul.u32 32, %s12
      $region40: #{bottleneck_forward.11} parent=31 // pred_fallthru
        _
    $region32: #{bottleneck_forward.11} parent=5 // pred_fallthru
      _
    %p223 = scmp.le.s32.totalorder 1, %s12
    %p224 = scmp.lt.s32.totalorder %s12, 3
    %p225 = pnand %p223, %p224
    %p226 = pneg %p225
    // Predicated region
    $region41: #{bottleneck_forward.11} parent=5 // pred_check
      _
    $region42: #{bottleneck_forward.11} parent=5 // pred_check_branch
      %228 = sbr.rel (%p225) target = $region44
    $region43: #{bottleneck_forward.11} parent=5 // pred_region
      %s229 = ssub.s32 %s12, 1
      %s230 = smul.u32 32, %s17
      %p231 = scmp.lt.s32.totalorder %s230, 63
      %s232 = scalar_select %p231, %s230, 63
      %s233 = smul.addr %s232, 8
      %s234 = scalar_lea.vmem %s0, %s233
      %p235 = pneg %p38
      %p236 = pneg %p35
      %s237 = smul.u32 32, %s17
      %p238 = scmp.lt.s32.totalorder %s237, 63
      %s239 = scalar_select %p238, %s237, 63
      %s240 = smul.addr %s239, 8
      %s241 = scalar_lea.vmem %s1, %s240
      %p242 = pneg %p64
      %p243 = pneg %p61
      %p244 = pneg %p85
      %p245 = pneg %p82
      %p246 = pneg %p106
      %p247 = pneg %p103
      %p248 = pneg %p127
      %p249 = pneg %p124
      %p250 = pneg %p148
      %p251 = pneg %p145
      %p252 = pneg %p174
      %p253 = pneg %p171
      %s254 = smul.u32 32, %s17
      %p255 = scmp.lt.s32.totalorder %s254, 63
      %s256 = scalar_select %p255, %s254, 63
      %s257 = smul.addr %s256, 8
      %s258 = scalar_lea.vmem %s6, %s257
      %s259 = smul.u32 32, %s17
      %p260 = scmp.lt.s32.totalorder %s259, 63
      %s261 = scalar_select %p260, %s259, 63
      %s262 = smul.addr %s261, 8
      %s263 = scalar_lea.vmem %s0, %s262
      %s264 = smul.u32 32, %s17
      %s265 = smul.u32 32, %s17
      %p266 = scmp.lt.s32.totalorder %s265, 63
      %s267 = scalar_select %p266, %s265, 63
      %s268 = smul.addr %s267, 8
      %s269 = scalar_lea.vmem %s1, %s268
      %s270 = smul.u32 32, %s17
      %s271 = smul.u32 32, %s17
      %p272 = scmp.lt.s32.totalorder %s271, 63
      %s273 = scalar_select %p272, %s271, 63
      %s274 = smul.addr %s273, 8
      %s275 = scalar_lea.vmem %s6, %s274
      %s276 = smul.u32 32, %s17
      %v277 = vld [vmem:[%s263] sm:$0xff]
      %v278 = vld [vmem:[%s263 + $0x8] sm:$0xff]
      %v279 = vld [vmem:[%s263 + $0x10] sm:$0xff]
      %v280 = vld [vmem:[%s263 + $0x18] sm:$0xff]
      %v281 = vld [vmem:[%s263 + $0x20] sm:$0xff]
      %v282 = vld [vmem:[%s263 + $0x28] sm:$0xff]
      %v283 = vld [vmem:[%s263 + $0x30] sm:$0xff]
      %v284 = vld [vmem:[%s263 + $0x38] sm:$0xff]
      %v285 = vld [vmem:[%s263 + $0x40] sm:$0xff]
      %v286 = vld [vmem:[%s263 + $0x48] sm:$0xff]
      %v287 = vld [vmem:[%s263 + $0x50] sm:$0xff]
      %v288 = vld [vmem:[%s263 + $0x58] sm:$0xff]
      %v289 = vld [vmem:[%s263 + $0x60] sm:$0xff]
      %v290 = vld [vmem:[%s263 + $0x68] sm:$0xff]
      %v291 = vld [vmem:[%s263 + $0x70] sm:$0xff]
      %v292 = vld [vmem:[%s263 + $0x78] sm:$0xff]
      %v293 = vld [vmem:[%s263 + $0x80] sm:$0xff]
      %v294 = vld [vmem:[%s263 + $0x88] sm:$0xff]
      %v295 = vld [vmem:[%s263 + $0x90] sm:$0xff]
      %v296 = vld [vmem:[%s263 + $0x98] sm:$0xff]
      %v297 = vld [vmem:[%s263 + $0xa0] sm:$0xff]
      %v298 = vld [vmem:[%s263 + $0xa8] sm:$0xff]
      %v299 = vld [vmem:[%s263 + $0xb0] sm:$0xff]
      %v300 = vld [vmem:[%s263 + $0xb8] sm:$0xff]
      %v301 = vld [vmem:[%s263 + $0xc0] sm:$0xff]
      %v302 = vld [vmem:[%s263 + $0xc8] sm:$0xff]
      %v303 = vld [vmem:[%s263 + $0xd0] sm:$0xff]
      %v304 = vld [vmem:[%s263 + $0xd8] sm:$0xff]
      %v305 = vld [vmem:[%s263 + $0xe0] sm:$0xff]
      %v306 = vld [vmem:[%s263 + $0xe8] sm:$0xff]
      %v307 = vld [vmem:[%s263 + $0xf0] sm:$0xff]
      %v308 = vld [vmem:[%s263 + $0xf8] sm:$0xff]
      %v309 = vld [vmem:[%s2] sm:$0x1]
      %v311 = vlaneseq
      %v312 = vshrl.u32 %v311, 7
      %v313 = vsub.s32 0, %v312
      %v314 = vrot.slane %v309, %v313
      %v316 = vmul.f32 %v277, %v314
      %v317 = vmul.f32 %v278, %v314
      %v318 = vmul.f32 %v279, %v314
      %v319 = vmul.f32 %v280, %v314
      %v320 = vmul.f32 %v281, %v314
      %v321 = vmul.f32 %v282, %v314
      %v322 = vmul.f32 %v283, %v314
      %v323 = vmul.f32 %v284, %v314
      %v324 = vmul.f32 %v285, %v314
      %v325 = vmul.f32 %v286, %v314
      %v326 = vmul.f32 %v287, %v314
      %v327 = vmul.f32 %v288, %v314
      %v328 = vmul.f32 %v289, %v314
      %v329 = vmul.f32 %v290, %v314
      %v330 = vmul.f32 %v291, %v314
      %v331 = vmul.f32 %v292, %v314
      %v332 = vmul.f32 %v293, %v314
      %v333 = vmul.f32 %v294, %v314
      %v334 = vmul.f32 %v295, %v314
      %v335 = vmul.f32 %v296, %v314
      %v336 = vmul.f32 %v297, %v314
      %v337 = vmul.f32 %v298, %v314
      %v338 = vmul.f32 %v299, %v314
      %v339 = vmul.f32 %v300, %v314
      %v340 = vmul.f32 %v301, %v314
      %v341 = vmul.f32 %v302, %v314
      %v342 = vmul.f32 %v303, %v314
      %v343 = vmul.f32 %v304, %v314
      %v344 = vmul.f32 %v305, %v314
      %v345 = vmul.f32 %v306, %v314
      %v346 = vmul.f32 %v307, %v314
      %v347 = vmul.f32 %v308, %v314
      %v348 = vld [vmem:[%s3] sm:$0x1]
      %v350 = vlaneseq
      %v351 = vshrl.u32 %v350, 7
      %v352 = vsub.s32 0, %v351
      %v353 = vrot.slane %v348, %v352
      %v355 = vadd.f32 %v316, %v353
      %v356 = vadd.f32 %v317, %v353
      %v357 = vadd.f32 %v318, %v353
      %v358 = vadd.f32 %v319, %v353
      %v359 = vadd.f32 %v320, %v353
      %v360 = vadd.f32 %v321, %v353
      %v361 = vadd.f32 %v322, %v353
      %v362 = vadd.f32 %v323, %v353
      %v363 = vadd.f32 %v324, %v353
      %v364 = vadd.f32 %v325, %v353
      %v365 = vadd.f32 %v326, %v353
      %v366 = vadd.f32 %v327, %v353
      %v367 = vadd.f32 %v328, %v353
      %v368 = vadd.f32 %v329, %v353
      %v369 = vadd.f32 %v330, %v353
      %v370 = vadd.f32 %v331, %v353
      %v371 = vadd.f32 %v332, %v353
      %v372 = vadd.f32 %v333, %v353
      %v373 = vadd.f32 %v334, %v353
      %v374 = vadd.f32 %v335, %v353
      %v375 = vadd.f32 %v336, %v353
      %v376 = vadd.f32 %v337, %v353
      %v377 = vadd.f32 %v338, %v353
      %v378 = vadd.f32 %v339, %v353
      %v379 = vadd.f32 %v340, %v353
      %v380 = vadd.f32 %v341, %v353
      %v381 = vadd.f32 %v342, %v353
      %v382 = vadd.f32 %v343, %v353
      %v383 = vadd.f32 %v344, %v353
      %v384 = vadd.f32 %v345, %v353
      %v385 = vadd.f32 %v346, %v353
      %v386 = vadd.f32 %v347, %v353
      %v387 = vld [vmem:[%s269] sm:$0xff]
      %v388 = vld [vmem:[%s269 + $0x8] sm:$0xff]
      %v389 = vld [vmem:[%s269 + $0x10] sm:$0xff]
      %v390 = vld [vmem:[%s269 + $0x18] sm:$0xff]
      %v391 = vld [vmem:[%s269 + $0x20] sm:$0xff]
      %v392 = vld [vmem:[%s269 + $0x28] sm:$0xff]
      %v393 = vld [vmem:[%s269 + $0x30] sm:$0xff]
      %v394 = vld [vmem:[%s269 + $0x38] sm:$0xff]
      %v395 = vld [vmem:[%s269 + $0x40] sm:$0xff]
      %v396 = vld [vmem:[%s269 + $0x48] sm:$0xff]
      %v397 = vld [vmem:[%s269 + $0x50] sm:$0xff]
      %v398 = vld [vmem:[%s269 + $0x58] sm:$0xff]
      %v399 = vld [vmem:[%s269 + $0x60] sm:$0xff]
      %v400 = vld [vmem:[%s269 + $0x68] sm:$0xff]
      %v401 = vld [vmem:[%s269 + $0x70] sm:$0xff]
      %v402 = vld [vmem:[%s269 + $0x78] sm:$0xff]
      %v403 = vld [vmem:[%s269 + $0x80] sm:$0xff]
      %v404 = vld [vmem:[%s269 + $0x88] sm:$0xff]
      %v405 = vld [vmem:[%s269 + $0x90] sm:$0xff]
      %v406 = vld [vmem:[%s269 + $0x98] sm:$0xff]
      %v407 = vld [vmem:[%s269 + $0xa0] sm:$0xff]
      %v408 = vld [vmem:[%s269 + $0xa8] sm:$0xff]
      %v409 = vld [vmem:[%s269 + $0xb0] sm:$0xff]
      %v410 = vld [vmem:[%s269 + $0xb8] sm:$0xff]
      %v411 = vld [vmem:[%s269 + $0xc0] sm:$0xff]
      %v412 = vld [vmem:[%s269 + $0xc8] sm:$0xff]
      %v413 = vld [vmem:[%s269 + $0xd0] sm:$0xff]
      %v414 = vld [vmem:[%s269 + $0xd8] sm:$0xff]
      %v415 = vld [vmem:[%s269 + $0xe0] sm:$0xff]
      %v416 = vld [vmem:[%s269 + $0xe8] sm:$0xff]
      %v417 = vld [vmem:[%s269 + $0xf0] sm:$0xff]
      %v418 = vld [vmem:[%s269 + $0xf8] sm:$0xff]
      %v419 = vld [vmem:[%s4] sm:$0x1]
      %v421 = vlaneseq
      %v422 = vshrl.u32 %v421, 7
      %v423 = vsub.s32 0, %v422
      %v424 = vrot.slane %v419, %v423
      %v426 = vmul.f32 %v387, %v424
      %v427 = vmul.f32 %v388, %v424
      %v428 = vmul.f32 %v389, %v424
      %v429 = vmul.f32 %v390, %v424
      %v430 = vmul.f32 %v391, %v424
      %v431 = vmul.f32 %v392, %v424
      %v432 = vmul.f32 %v393, %v424
      %v433 = vmul.f32 %v394, %v424
      %v434 = vmul.f32 %v395, %v424
      %v435 = vmul.f32 %v396, %v424
      %v436 = vmul.f32 %v397, %v424
      %v437 = vmul.f32 %v398, %v424
      %v438 = vmul.f32 %v399, %v424
      %v439 = vmul.f32 %v400, %v424
      %v440 = vmul.f32 %v401, %v424
      %v441 = vmul.f32 %v402, %v424
      %v442 = vmul.f32 %v403, %v424
      %v443 = vmul.f32 %v404, %v424
      %v444 = vmul.f32 %v405, %v424
      %v445 = vmul.f32 %v406, %v424
      %v446 = vmul.f32 %v407, %v424
      %v447 = vmul.f32 %v408, %v424
      %v448 = vmul.f32 %v409, %v424
      %v449 = vmul.f32 %v410, %v424
      %v450 = vmul.f32 %v411, %v424
      %v451 = vmul.f32 %v412, %v424
      %v452 = vmul.f32 %v413, %v424
      %v453 = vmul.f32 %v414, %v424
      %v454 = vmul.f32 %v415, %v424
      %v455 = vmul.f32 %v416, %v424
      %v456 = vmul.f32 %v417, %v424
      %v457 = vmul.f32 %v418, %v424
      %v458 = vld [vmem:[%s5] sm:$0x1]
      %v460 = vlaneseq
      %v461 = vshrl.u32 %v460, 7
      %v462 = vsub.s32 0, %v461
      %v463 = vrot.slane %v458, %v462
      %v465 = vadd.f32 %v426, %v463
      %v466 = vadd.f32 %v427, %v463
      %v467 = vadd.f32 %v428, %v463
      %v468 = vadd.f32 %v429, %v463
      %v469 = vadd.f32 %v430, %v463
      %v470 = vadd.f32 %v431, %v463
      %v471 = vadd.f32 %v432, %v463
      %v472 = vadd.f32 %v433, %v463
      %v473 = vadd.f32 %v434, %v463
      %v474 = vadd.f32 %v435, %v463
      %v475 = vadd.f32 %v436, %v463
      %v476 = vadd.f32 %v437, %v463
      %v477 = vadd.f32 %v438, %v463
      %v478 = vadd.f32 %v439, %v463
      %v479 = vadd.f32 %v440, %v463
      %v480 = vadd.f32 %v441, %v463
      %v481 = vadd.f32 %v442, %v463
      %v482 = vadd.f32 %v443, %v463
      %v483 = vadd.f32 %v444, %v463
      %v484 = vadd.f32 %v445, %v463
      %v485 = vadd.f32 %v446, %v463
      %v486 = vadd.f32 %v447, %v463
      %v487 = vadd.f32 %v448, %v463
      %v488 = vadd.f32 %v449, %v463
      %v489 = vadd.f32 %v450, %v463
      %v490 = vadd.f32 %v451, %v463
      %v491 = vadd.f32 %v452, %v463
      %v492 = vadd.f32 %v453, %v463
      %v493 = vadd.f32 %v454, %v463
      %v494 = vadd.f32 %v455, %v463
      %v495 = vadd.f32 %v456, %v463
      %v496 = vadd.f32 %v457, %v463
      %v497 = vadd.f32 %v355, %v465
      %v498 = vadd.f32 %v356, %v466
      %v499 = vadd.f32 %v357, %v467
      %v500 = vadd.f32 %v358, %v468
      %v501 = vadd.f32 %v359, %v469
      %v502 = vadd.f32 %v360, %v470
      %v503 = vadd.f32 %v361, %v471
      %v504 = vadd.f32 %v362, %v472
      %v505 = vadd.f32 %v363, %v473
      %v506 = vadd.f32 %v364, %v474
      %v507 = vadd.f32 %v365, %v475
      %v508 = vadd.f32 %v366, %v476
      %v509 = vadd.f32 %v367, %v477
      %v510 = vadd.f32 %v368, %v478
      %v511 = vadd.f32 %v369, %v479
      %v512 = vadd.f32 %v370, %v480
      %v513 = vadd.f32 %v371, %v481
      %v514 = vadd.f32 %v372, %v482
      %v515 = vadd.f32 %v373, %v483
      %v516 = vadd.f32 %v374, %v484
      %v517 = vadd.f32 %v375, %v485
      %v518 = vadd.f32 %v376, %v486
      %v519 = vadd.f32 %v377, %v487
      %v520 = vadd.f32 %v378, %v488
      %v521 = vadd.f32 %v379, %v489
      %v522 = vadd.f32 %v380, %v490
      %v523 = vadd.f32 %v381, %v491
      %v524 = vadd.f32 %v382, %v492
      %v525 = vadd.f32 %v383, %v493
      %v526 = vadd.f32 %v384, %v494
      %v527 = vadd.f32 %v385, %v495
      %v528 = vadd.f32 %v386, %v496
      %v529 = vmax.f32 %v497, 0.0
      %v530 = vmax.f32 %v498, 0.0
      %v531 = vmax.f32 %v499, 0.0
      %v532 = vmax.f32 %v500, 0.0
      %v533 = vmax.f32 %v501, 0.0
      %v534 = vmax.f32 %v502, 0.0
      %v535 = vmax.f32 %v503, 0.0
      %v536 = vmax.f32 %v504, 0.0
      %v537 = vmax.f32 %v505, 0.0
      %v538 = vmax.f32 %v506, 0.0
      %v539 = vmax.f32 %v507, 0.0
      %v540 = vmax.f32 %v508, 0.0
      %v541 = vmax.f32 %v509, 0.0
      %v542 = vmax.f32 %v510, 0.0
      %v543 = vmax.f32 %v511, 0.0
      %v544 = vmax.f32 %v512, 0.0
      %v545 = vmax.f32 %v513, 0.0
      %v546 = vmax.f32 %v514, 0.0
      %v547 = vmax.f32 %v515, 0.0
      %v548 = vmax.f32 %v516, 0.0
      %v549 = vmax.f32 %v517, 0.0
      %v550 = vmax.f32 %v518, 0.0
      %v551 = vmax.f32 %v519, 0.0
      %v552 = vmax.f32 %v520, 0.0
      %v553 = vmax.f32 %v521, 0.0
      %v554 = vmax.f32 %v522, 0.0
      %v555 = vmax.f32 %v523, 0.0
      %v556 = vmax.f32 %v524, 0.0
      %v557 = vmax.f32 %v525, 0.0
      %v558 = vmax.f32 %v526, 0.0
      %v559 = vmax.f32 %v527, 0.0
      %v560 = vmax.f32 %v528, 0.0
      %561 = vst [vmem:[%s275] sm:$0xff] %v529
      %562 = vst [vmem:[%s275 + $0x8] sm:$0xff] %v530
      %563 = vst [vmem:[%s275 + $0x10] sm:$0xff] %v531
      %564 = vst [vmem:[%s275 + $0x18] sm:$0xff] %v532
      %565 = vst [vmem:[%s275 + $0x20] sm:$0xff] %v533
      %566 = vst [vmem:[%s275 + $0x28] sm:$0xff] %v534
      %567 = vst [vmem:[%s275 + $0x30] sm:$0xff] %v535
      %568 = vst [vmem:[%s275 + $0x38] sm:$0xff] %v536
      %569 = vst [vmem:[%s275 + $0x40] sm:$0xff] %v537
      %570 = vst [vmem:[%s275 + $0x48] sm:$0xff] %v538
      %571 = vst [vmem:[%s275 + $0x50] sm:$0xff] %v539
      %572 = vst [vmem:[%s275 + $0x58] sm:$0xff] %v540
      %573 = vst [vmem:[%s275 + $0x60] sm:$0xff] %v541
      %574 = vst [vmem:[%s275 + $0x68] sm:$0xff] %v542
      %575 = vst [vmem:[%s275 + $0x70] sm:$0xff] %v543
      %576 = vst [vmem:[%s275 + $0x78] sm:$0xff] %v544
      %577 = vst [vmem:[%s275 + $0x80] sm:$0xff] %v545
      %578 = vst [vmem:[%s275 + $0x88] sm:$0xff] %v546
      %579 = vst [vmem:[%s275 + $0x90] sm:$0xff] %v547
      %580 = vst [vmem:[%s275 + $0x98] sm:$0xff] %v548
      %581 = vst [vmem:[%s275 + $0xa0] sm:$0xff] %v549
      %582 = vst [vmem:[%s275 + $0xa8] sm:$0xff] %v550
      %583 = vst [vmem:[%s275 + $0xb0] sm:$0xff] %v551
      %584 = vst [vmem:[%s275 + $0xb8] sm:$0xff] %v552
      %585 = vst [vmem:[%s275 + $0xc0] sm:$0xff] %v553
      %586 = vst [vmem:[%s275 + $0xc8] sm:$0xff] %v554
      %587 = vst [vmem:[%s275 + $0xd0] sm:$0xff] %v555
      %588 = vst [vmem:[%s275 + $0xd8] sm:$0xff] %v556
      %589 = vst [vmem:[%s275 + $0xe0] sm:$0xff] %v557
      %590 = vst [vmem:[%s275 + $0xe8] sm:$0xff] %v558
      %591 = vst [vmem:[%s275 + $0xf0] sm:$0xff] %v559
      %592 = vst [vmem:[%s275 + $0xf8] sm:$0xff] %v560
      %s593 = smul.u32 32, %s17
      %p594 = scmp.lt.s32.totalorder %s593, 63
      %s595 = scalar_select %p594, %s593, 63
      %s596 = smul.addr %s595, 8
      %s597 = scalar_lea.vmem %s6, %s596
      // Predicated region
      $region45: #{bottleneck_forward.11} parent=43 // pred_check
        %p598 = pneg %p171
      $region46: #{bottleneck_forward.11} parent=43 // pred_check_branch
        %600 = sbr.rel (%p598) target = $region48
      $region47: #{bottleneck_forward.11} parent=43 // pred_region
        %s601 = smul.u32 32, %s17
      $region48: #{bottleneck_forward.11} parent=43 // pred_fallthru
        _
    $region44: #{bottleneck_forward.11} parent=5 // pred_fallthru
      _
    %p602 = scmp.le.s32.totalorder 2, %s12
    // Predicated region
    $region49: #{bottleneck_forward.11} parent=5 // pred_check
      %p603 = pneg %p602
    $region50: #{bottleneck_forward.11} parent=5 // pred_check_branch
      %605 = sbr.rel (%p603) target = $region52
    $region51: #{bottleneck_forward.11} parent=5 // pred_region
      %s606 = ssub.s32 %s12, 2
      // Predicated region
      $region53: #{bottleneck_forward.11} parent=51 // pred_check
        %p607 = pneg %p177
      $region54: #{bottleneck_forward.11} parent=51 // pred_check_branch
        %609 = sbr.rel (%p607) target = $region56
      $region55: #{bottleneck_forward.11} parent=51 // pred_region
        %s610 = smul.u32 32, %s18
        %p611 = scmp.lt.s32.totalorder %s610, 63
        %s612 = scalar_select %p611, %s610, 63
        %s613 = smul.addr %s612, 8
        %s614 = scalar_lea.vmem %s6, %s613
      $region56: #{bottleneck_forward.11} parent=51 // pred_fallthru
        _
    $region52: #{bottleneck_forward.11} parent=5 // pred_fallthru
      _
  $region6: #{bottleneck_forward.11} parent=0 // loop_footer
    %s16 = sadd.s32 1, %s12
  $region7: #{bottleneck_forward.11} parent=0 // loop_footer_branch
    %11 = sbr.rel target = $region3
  $region8: #{bottleneck_forward.11} parent=0 // loop_exit
    _

// kernel: bottleneck_forward.8
$region0: #{bottleneck_forward.8}
  #allocation0 [shape = 'u32[]', space=smem, size = 0x4, offset = 0x4, fixed_abs, tag = 'smem constant byte address 0x4 - core index']
  #allocation1 [shape = 'u32[144,128]{1,0:T(1,128)}', space=vmem, size = 0x12000, scoped, tag = 'internal scratch']
  #allocation2 [shape = 'f32[256,128]{1,0:T(8,128)}', space=vmem, size = 0x20000, scoped, tag = 'scratch operand']
  %s0 = inlined_call_operand.vmem [shape: f32[2,18,18,128], index: 0, kind: input, shape index: {}]
  %s1 = inlined_call_operand.vmem [shape: f32[9,128,128], index: 1, kind: input, shape index: {}]
  %s2 = inlined_call_operand.vmem [shape: f32[2,256,128], index: 2, kind: output, shape index: {0}]
  %s3 = inlined_call_operand.vmem [shape: f32[2,2,128], index: 3, kind: output, shape index: {1}]
  %4 = xla_tuple %s2, %s3
  %s5 = sld [smem:[#allocation0]]
  $region49: #{bottleneck_forward.8} parent=0
    _
  %s7 = ssub.s32 1, %s5
  %s8 = scalar_select 0, %s7, %s5
  loop: start=0, step=1, limit=4
  $region2: #{bottleneck_forward.8} parent=0 // loop_pre_header
    _
  $region3: #{bottleneck_forward.8} parent=0 // loop_header
    %s10 = sphi 0, %s14
    %p11 = scmp.ge.s32.totalorder %s10, 4
    %s20 = sphi 0, %s22
    %s23 = sphi 0, %s20
    %s24 = sphi 0, %s23
    %s40 = sphi 0, %s24
    %s44 = sphi 0, %s44
    %s46 = sphi 0, %s44
    %s47 = sphi 0, %s46
    %s61 = sphi 0, %s47
    %s67 = sphi 0, %s69
    %s70 = sphi 0, %s67
    %s71 = sphi 0, %s70
    %s87 = sphi 0, %s71
    %s93 = sphi 0, %s95
    %s96 = sphi 0, %s93
    %s97 = sphi 0, %s96
    %s113 = sphi 0, %s97
  $region4: #{bottleneck_forward.8} parent=0 // loop_header_branch
    %13 = sbr.rel (%p11) target = $region8
  $region5: #{bottleneck_forward.8} parent=0 // loop_body
    %s15 = ssub.s32 %s10, 1
    %s16 = ssub.s32 %s10, 2
    %s17 = sadd.s32 %s10, 1
    %s18 = ssub.s32 %s10, %s17
    %p19 = scmp.eq.s32.totalorder %s18, 0
    %s21 = sadd.s32 %s20, 1
    %s22 = scalar_select %p19, %s20, %s21
    %p25 = pneg %p19
    %p26 = scmp.eq.s32.totalorder %s10, 1
    %p27 = por %p25, %p26
    %p28 = scmp.ne.s32.totalorder %s20, %s23
    %p29 = scmp.eq.s32.totalorder %s10, 0
    %p30 = por %p28, %p29
    %p31 = scmp.ne.s32.totalorder %s20, %s23
    %p32 = scmp.eq.s32.totalorder %s15, 1
    %p33 = por %p31, %p32
    %p34 = scmp.ne.s32.totalorder %s23, %s24
    %p35 = scmp.eq.s32.totalorder %s15, 0
    %p36 = por %p34, %p35
    %p37 = scmp.ne.s32.totalorder %s23, %s24
    %p38 = scmp.eq.s32.totalorder %s16, 1
    %p39 = por %p37, %p38
    %p41 = scmp.ne.s32.totalorder %s24, %s40
    %p42 = scmp.eq.s32.totalorder %s16, 0
    %p43 = por %p41, %p42
    %s45 = sadd.s32 %s44, 1
    %p48 = scmp.eq.s32.totalorder %s10, 1
    %p49 = scmp.ne.s32.totalorder %s44, %s46
    %p50 = scmp.eq.s32.totalorder %s10, 0
    %p51 = por %p49, %p50
    %p52 = scmp.ne.s32.totalorder %s44, %s46
    %p53 = scmp.eq.s32.totalorder %s15, 1
    %p54 = por %p52, %p53
    %p55 = scmp.ne.s32.totalorder %s46, %s47
    %p56 = scmp.eq.s32.totalorder %s15, 0
    %p57 = por %p55, %p56
    %p58 = scmp.ne.s32.totalorder %s46, %s47
    %p59 = scmp.eq.s32.totalorder %s16, 1
    %p60 = por %p58, %p59
    %p62 = scmp.ne.s32.totalorder %s47, %s61
    %p63 = scmp.eq.s32.totalorder %s16, 0
    %p64 = por %p62, %p63
    %s65 = ssub.s32 %s10, %s17
    %p66 = scmp.eq.s32.totalorder %s65, 0
    %s68 = sadd.s32 %s67, 1
    %s69 = scalar_select %p66, %s67, %s68
    %p72 = pneg %p66
    %p73 = scmp.eq.s32.totalorder %s10, 1
    %p74 = por %p72, %p73
    %p75 = scmp.ne.s32.totalorder %s67, %s70
    %p76 = scmp.eq.s32.totalorder %s10, 0
    %p77 = por %p75, %p76
    %p78 = scmp.ne.s32.totalorder %s67, %s70
    %p79 = scmp.eq.s32.totalorder %s15, 1
    %p80 = por %p78, %p79
    %p81 = scmp.ne.s32.totalorder %s70, %s71
    %p82 = scmp.eq.s32.totalorder %s15, 0
    %p83 = por %p81, %p82
    %p84 = scmp.ne.s32.totalorder %s70, %s71
    %p85 = scmp.eq.s32.totalorder %s16, 1
    %p86 = por %p84, %p85
    %p88 = scmp.ne.s32.totalorder %s71, %s87
    %p89 = scmp.eq.s32.totalorder %s16, 0
    %p90 = por %p88, %p89
    %s91 = ssub.s32 %s10, %s17
    %p92 = scmp.eq.s32.totalorder %s91, 0
    %s94 = sadd.s32 %s93, 1
    %s95 = scalar_select %p92, %s93, %s94
    %p98 = pneg %p92
    %p99 = scmp.eq.s32.totalorder %s10, 1
    %p100 = por %p98, %p99
    %p101 = scmp.ne.s32.totalorder %s93, %s96
    %p102 = scmp.eq.s32.totalorder %s10, 0
    %p103 = por %p101, %p102
    %p104 = scmp.ne.s32.totalorder %s93, %s96
    %p105 = scmp.eq.s32.totalorder %s15, 1
    %p106 = por %p104, %p105
    %p107 = scmp.ne.s32.totalorder %s96, %s97
    %p108 = scmp.eq.s32.totalorder %s15, 0
    %p109 = por %p107, %p108
    %p110 = scmp.ne.s32.totalorder %s96, %s97
    %p111 = scmp.eq.s32.totalorder %s16, 1
    %p112 = por %p110, %p111
    %p114 = scmp.ne.s32.totalorder %s97, %s113
    %p115 = scmp.eq.s32.totalorder %s16, 0
    %p116 = por %p114, %p115
    %p117 = scmp.le.s32.totalorder 1, %s10
    %p118 = scmp.lt.s32.totalorder %s10, 3
    %p119 = pnand %p117, %p118
    %p120 = pneg %p119
    // Predicated region
    $region9: #{bottleneck_forward.8} parent=5 // pred_check
      _
    $region10: #{bottleneck_forward.8} parent=5 // pred_check_branch
      %122 = sbr.rel (%p119) target = $region12
    $region11: #{bottleneck_forward.8} parent=5 // pred_region
      %s123 = ssub.s32 %s10, 1
      // Predicated region
      $region13: #{bottleneck_forward.8} parent=11 // pred_check
        %p124 = pneg %p57
      $region14: #{bottleneck_forward.8} parent=11 // pred_check_branch
        %126 = sbr.rel (%p124) target = $region16
      $region15: #{bottleneck_forward.8} parent=11 // pred_region
        _
      $region16: #{bottleneck_forward.8} parent=11 // pred_fallthru
        _
    $region12: #{bottleneck_forward.8} parent=5 // pred_fallthru
      _
    %p127 = scmp.lt.s32.totalorder %s10, 2
    // Predicated region
    $region17: #{bottleneck_forward.8} parent=5 // pred_check
      %p128 = pneg %p127
    $region18: #{bottleneck_forward.8} parent=5 // pred_check_branch
      %130 = sbr.rel (%p128) target = $region20
    $region19: #{bottleneck_forward.8} parent=5 // pred_region
      // Predicated region
      $region21: #{bottleneck_forward.8} parent=19 // pred_check
        %p131 = pneg %p30
      $region22: #{bottleneck_forward.8} parent=19 // pred_check_branch
        %133 = sbr.rel (%p131) target = $region24
      $region23: #{bottleneck_forward.8} parent=19 // pred_region
        %p134 = scmp.lt.s32.totalorder %s10, 1
        %s135 = scalar_select %p134, %s10, 1
        %s136 = smul.addr %s135, 54
        %s137 = smul.addr %s136, 8
        %s138 = scalar_lea.vmem %s0, %s137
      $region24: #{bottleneck_forward.8} parent=19 // pred_fallthru
        _
    $region20: #{bottleneck_forward.8} parent=5 // pred_fallthru
      _
    %p139 = scmp.le.s32.totalorder 1, %s10
    %p140 = scmp.lt.s32.totalorder %s10, 3
    %p141 = pnand %p139, %p140
    %p142 = pneg %p141
    // Predicated region
    $region25: #{bottleneck_forward.8} parent=5 // pred_check
      _
    $region26: #{bottleneck_forward.8} parent=5 // pred_check_branch
      %144 = sbr.rel (%p141) target = $region28
    $region27: #{bottleneck_forward.8} parent=5 // pred_region
      %s145 = ssub.s32 %s10, 1
      %p146 = scmp.lt.s32.totalorder %s15, 1
      %s147 = scalar_select %p146, %s15, 1
      %s148 = smul.addr %s147, 54
      %s149 = smul.addr %s148, 8
      %s150 = scalar_lea.vmem %s0, %s149
      %p151 = pneg %p36
      %p152 = pneg %p33
      %p153 = pneg %p57
      %p154 = pneg %p54
      %p155 = pneg %p83
      %p156 = pneg %p80
      %p157 = scmp.lt.s32.totalorder %s15, 1
      %s158 = scalar_select %p157, %s15, 1
      %s159 = smul.addr %s158, 32
      %s160 = smul.addr %s159, 8
      %s161 = scalar_lea.vmem %s2, %s160
      %p162 = pneg %p109
      %p163 = pneg %p106
      %p164 = scmp.lt.s32.totalorder %s15, 1
      %s165 = scalar_select %p164, %s15, 1
      %s166 = smul.addr %s165, 2
      %s167 = scalar_lea.vmem %s3, %s166
      %p168 = scmp.lt.s32.totalorder %s15, 1
      %s169 = scalar_select %p168, %s15, 1
      %s170 = smul.addr %s169, 54
      %s171 = smul.addr %s170, 8
      %s172 = scalar_lea.vmem %s0, %s171
      %p173 = scmp.lt.s32.totalorder %s15, 1
      %s174 = scalar_select %p173, %s15, 1
      %s175 = smul.addr %s174, 32
      %s176 = smul.addr %s175, 8
      %s177 = scalar_lea.vmem %s2, %s176
      %p178 = scmp.lt.s32.totalorder %s15, 1
      %s179 = scalar_select %p178, %s15, 1
      %s180 = smul.addr %s179, 2
      %s181 = scalar_lea.vmem %s3, %s180
      %182 = vst [vmem:[#allocation2] sm:$0xff] 0.0
      %183 = vst [vmem:[#allocation2 + $0x8] sm:$0xff] 0.0
      %184 = vst [vmem:[#allocation2 + $0x10] sm:$0xff] 0.0
      %185 = vst [vmem:[#allocation2 + $0x18] sm:$0xff] 0.0
      %186 = vst [vmem:[#allocation2 + $0x20] sm:$0xff] 0.0
      %187 = vst [vmem:[#allocation2 + $0x28] sm:$0xff] 0.0
      %188 = vst [vmem:[#allocation2 + $0x30] sm:$0xff] 0.0
      %189 = vst [vmem:[#allocation2 + $0x38] sm:$0xff] 0.0
      %190 = vst [vmem:[#allocation2 + $0x40] sm:$0xff] 0.0
      %191 = vst [vmem:[#allocation2 + $0x48] sm:$0xff] 0.0
      %192 = vst [vmem:[#allocation2 + $0x50] sm:$0xff] 0.0
      %193 = vst [vmem:[#allocation2 + $0x58] sm:$0xff] 0.0
      %194 = vst [vmem:[#allocation2 + $0x60] sm:$0xff] 0.0
      %195 = vst [vmem:[#allocation2 + $0x68] sm:$0xff] 0.0
      %196 = vst [vmem:[#allocation2 + $0x70] sm:$0xff] 0.0
      %197 = vst [vmem:[#allocation2 + $0x78] sm:$0xff] 0.0
      %198 = vst [vmem:[#allocation2 + $0x80] sm:$0xff] 0.0
      %199 = vst [vmem:[#allocation2 + $0x88] sm:$0xff] 0.0
      %200 = vst [vmem:[#allocation2 + $0x90] sm:$0xff] 0.0
      %201 = vst [vmem:[#allocation2 + $0x98] sm:$0xff] 0.0
      %202 = vst [vmem:[#allocation2 + $0xa0] sm:$0xff] 0.0
      %203 = vst [vmem:[#allocation2 + $0xa8] sm:$0xff] 0.0
      %204 = vst [vmem:[#allocation2 + $0xb0] sm:$0xff] 0.0
      %205 = vst [vmem:[#allocation2 + $0xb8] sm:$0xff] 0.0
      %206 = vst [vmem:[#allocation2 + $0xc0] sm:$0xff] 0.0
      %207 = vst [vmem:[#allocation2 + $0xc8] sm:$0xff] 0.0
      %208 = vst [vmem:[#allocation2 + $0xd0] sm:$0xff] 0.0
      %209 = vst [vmem:[#allocation2 + $0xd8] sm:$0xff] 0.0
      %210 = vst [vmem:[#allocation2 + $0xe0] sm:$0xff] 0.0
      %211 = vst [vmem:[#allocation2 + $0xe8] sm:$0xff] 0.0
      %212 = vst [vmem:[#allocation2 + $0xf0] sm:$0xff] 0.0
      %213 = vst [vmem:[#allocation2 + $0xf8] sm:$0xff] 0.0
      %v214 = vld [vmem:[%s172] sm:$0xff]
      %v215 = vld [vmem:[%s172 + $0x8] sm:$0xff]
      %v216 = vld [vmem:[%s172 + $0x18] sm:$0xff]
      %v217 = vld [vmem:[%s172 + $0x20] sm:$0xff]
      %v218 = vld [vmem:[%s172 + $0x30] sm:$0xff]
      %v219 = vld [vmem:[%s172 + $0x38] sm:$0xff]
      %v220 = vld [vmem:[%s172 + $0x48] sm:$0xff]
      %v221 = vld [vmem:[%s172 + $0x50] sm:$0xff]
      %v222 = vld [vmem:[%s172 + $0x60] sm:$0xff]
      %v223 = vld [vmem:[%s172 + $0x68] sm:$0xff]
      %v224 = vld [vmem:[%s172 + $0x78] sm:$0xff]
      %v225 = vld [vmem:[%s172 + $0x80] sm:$0xff]
      %v226 = vld [vmem:[%s172 + $0x90] sm:$0xff]
      %v227 = vld [vmem:[%s172 + $0x98] sm:$0xff]
      %v228 = vld [vmem:[%s172 + $0xa8] sm:$0xff]
      %v229 = vld [vmem:[%s172 + $0xb0] sm:$0xff]
      %v230 = vld [vmem:[%s172 + $0xc0] sm:$0xff]
      %v231 = vld [vmem:[%s172 + $0xc8] sm:$0xff]
      %v232 = vld [vmem:[%s172 + $0xd8] sm:$0xff]
      %v233 = vld [vmem:[%s172 + $0xe0] sm:$0xff]
      %v234 = vld [vmem:[%s172 + $0xf0] sm:$0xff]
      %v235 = vld [vmem:[%s172 + $0xf8] sm:$0xff]
      %v236 = vld [vmem:[%s172 + $0x108] sm:$0xff]
      %v237 = vld [vmem:[%s172 + $0x110] sm:$0xff]
      %v238 = vld [vmem:[%s172 + $0x120] sm:$0xff]
      %v239 = vld [vmem:[%s172 + $0x128] sm:$0xff]
      %v240 = vld [vmem:[%s172 + $0x138] sm:$0xff]
      %v241 = vld [vmem:[%s172 + $0x140] sm:$0xff]
      %v242 = vld [vmem:[%s172 + $0x150] sm:$0xff]
      %v243 = vld [vmem:[%s172 + $0x158] sm:$0xff]
      %v244 = vld [vmem:[%s172 + $0x168] sm:$0xff]
      %v245 = vld [vmem:[%s172 + $0x170] sm:$0xff]
      %v246 = vld [vmem:[#allocation2] sm:$0xff]
      %v247 = vld [vmem:[#allocation2 + $0x8] sm:$0xff]
      %v248 = vld [vmem:[#allocation2 + $0x10] sm:$0xff]
      %v249 = vld [vmem:[#allocation2 + $0x18] sm:$0xff]
      %v250 = vld [vmem:[#allocation2 + $0x20] sm:$0xff]
      %v251 = vld [vmem:[#allocation2 + $0x28] sm:$0xff]
      %v252 = vld [vmem:[#allocation2 + $0x30] sm:$0xff]
      %v253 = vld [vmem:[#allocation2 + $0x38] sm:$0xff]
      %v254 = vld [vmem:[#allocation2 + $0x40] sm:$0xff]
      %v255 = vld [vmem:[#allocation2 + $0x48] sm:$0xff]
      %v256 = vld [vmem:[#allocation2 + $0x50] sm:$0xff]
      %v257 = vld [vmem:[#allocation2 + $0x58] sm:$0xff]
      %v258 = vld [vmem:[#allocation2 + $0x60] sm:$0xff]
      %v259 = vld [vmem:[#allocation2 + $0x68] sm:$0xff]
      %v260 = vld [vmem:[#allocation2 + $0x70] sm:$0xff]
      %v261 = vld [vmem:[#allocation2 + $0x78] sm:$0xff]
      %v262 = vld [vmem:[#allocation2 + $0x80] sm:$0xff]
      %v263 = vld [vmem:[#allocation2 + $0x88] sm:$0xff]
      %v264 = vld [vmem:[#allocation2 + $0x90] sm:$0xff]
      %v265 = vld [vmem:[#allocation2 + $0x98] sm:$0xff]
      %v266 = vld [vmem:[#allocation2 + $0xa0] sm:$0xff]
      %v267 = vld [vmem:[#allocation2 + $0xa8] sm:$0xff]
      %v268 = vld [vmem:[#allocation2 + $0xb0] sm:$0xff]
      %v269 = vld [vmem:[#allocation2 + $0xb8] sm:$0xff]
      %v270 = vld [vmem:[#allocation2 + $0xc0] sm:$0xff]
      %v271 = vld [vmem:[#allocation2 + $0xc8] sm:$0xff]
      %v272 = vld [vmem:[#allocation2 + $0xd0] sm:$0xff]
      %v273 = vld [vmem:[#allocation2 + $0xd8] sm:$0xff]
      %v274 = vld [vmem:[#allocation2 + $0xe0] sm:$0xff]
      %v275 = vld [vmem:[#allocation2 + $0xe8] sm:$0xff]
      %v276 = vld [vmem:[#allocation2 + $0xf0] sm:$0xff]
      %v277 = vld [vmem:[#allocation2 + $0xf8] sm:$0xff]
      %v278 = vld [vmem:[%s1] sm:$0xff]
      %v279 = vld [vmem:[%s1 + $0x8] sm:$0xff]
      %v280 = vld [vmem:[%s1 + $0x10] sm:$0xff]
      %v281 = vld [vmem:[%s1 + $0x18] sm:$0xff]
      %v282 = vld [vmem:[%s1 + $0x20] sm:$0xff]
      %v283 = vld [vmem:[%s1 + $0x28] sm:$0xff]
      %v284 = vld [vmem:[%s1 + $0x30] sm:$0xff]
      %v285 = vld [vmem:[%s1 + $0x38] sm:$0xff]
      %v286 = vld [vmem:[%s1 + $0x40] sm:$0xff]
      %v287 = vld [vmem:[%s1 + $0x48] sm:$0xff]
      %v288 = vld [vmem:[%s1 + $0x50] sm:$0xff]
      %v289 = vld [vmem:[%s1 + $0x58] sm:$0xff]
      %v290 = vld [vmem:[%s1 + $0x60] sm:$0xff]
      %v291 = vld [vmem:[%s1 + $0x68] sm:$0xff]
      %v292 = vld [vmem:[%s1 + $0x70] sm:$0xff]
      %v293 = vld [vmem:[%s1 + $0x78] sm:$0xff]
      %294 = vmatprep.subr.mxu0 0.0
      %295 = vmatpush1.msra.mxu0 %v278
      %296 = vmatprep.subr.mxu0 0.0
      %297 = vmatpush1.msra.mxu0 %v279
      %298 = vmatprep.subr.mxu0 0.0
      %299 = vmatpush1.msra.mxu0 %v280
      %300 = vmatprep.subr.mxu0 0.0
      %301 = vmatpush1.msra.mxu0 %v281
      %302 = vmatprep.subr.mxu0 0.0
      %303 = vmatpush1.msra.mxu0 %v282
      %304 = vmatprep.subr.mxu0 0.0
      %305 = vmatpush1.msra.mxu0 %v283
      %306 = vmatprep.subr.mxu0 0.0
      %307 = vmatpush1.msra.mxu0 %v284
      %308 = vmatprep.subr.mxu0 0.0
      %309 = vmatpush1.msra.mxu0 %v285
      %310 = vmatprep.subr.mxu0 0.0
      %311 = vmatpush1.msra.mxu0 %v286
      %312 = vmatprep.subr.mxu0 0.0
      %313 = vmatpush1.msra.mxu0 %v287
      %314 = vmatprep.subr.mxu0 0.0
      %315 = vmatpush1.msra.mxu0 %v288
      %316 = vmatprep.subr.mxu0 0.0
      %317 = vmatpush1.msra.mxu0 %v289
      %318 = vmatprep.subr.mxu0 0.0
      %319 = vmatpush1.msra.mxu0 %v290
      %320 = vmatprep.subr.mxu0 0.0
      %321 = vmatpush1.msra.mxu0 %v291
      %322 = vmatprep.subr.mxu0 0.0
      %323 = vmatpush1.msra.mxu0 %v292
      %324 = vmatprep.subr.mxu0 0.0
      %325 = vmatpush1.msra.mxu0 %v293
      %326 = vmatprep.subr.mxu0 0.0
      %327 = vmatpush1.msra.mxu0 0.0
      %328 = vmatprep.subr.mxu0 0.0
      %329 = vmatpush1.msra.mxu0 0.0
      %330 = vmatprep.subr.mxu0 0.0
      %331 = vmatpush1.msra.mxu0 0.0
      %332 = vmatprep.subr.mxu0 0.0
      %333 = vmatpush1.msra.mxu0 0.0
      %334 = vmatprep.subr.mxu0 0.0
      %335 = vmatpush1.msra.mxu0 0.0
      %336 = vmatprep.subr.mxu0 0.0
      %337 = vmatpush1.msra.mxu0 0.0
      %338 = vmatprep.subr.mxu0 0.0
      %339 = vmatpush1.msra.mxu0 0.0
      %340 = vmatprep.subr.mxu0 0.0
      %341 = vmatpush1.msra.mxu0 0.0
      %342 = vmatprep.subr.mxu0 0.0
      %343 = vmatpush1.msra.mxu0 0.0
      %344 = vmatprep.subr.mxu0 0.0
      %345 = vmatpush1.msra.mxu0 0.0
      %346 = vmatprep.subr.mxu0 0.0
      %347 = vmatpush1.msra.mxu0 0.0
      %348 = vmatprep.subr.mxu0 0.0
      %349 = vmatpush1.msra.mxu0 0.0
      %350 = vmatprep.subr.mxu0 0.0
      %351 = vmatpush1.msra.mxu0 0.0
      %352 = vmatprep.subr.mxu0 0.0
      %353 = vmatpush1.msra.mxu0 0.0
      %354 = vmatprep.subr.mxu0 0.0
      %355 = vmatpush1.msra.mxu0 0.0
      %356 = vmatprep.subr.mxu0 0.0
      %357 = vmatpush1.msra.mxu0 0.0
      %358 = vmatprep.mubr.f32.mxu0 0.0
      %359 = vmatmul.mubr.f32.gmra.mrb[0].mxu0 %v214
      %v360 = vpop.f32.mrb[0].mxu0
      %v361 = vadd.f32 0.0, %v360
      %v362 = vpop.f32.mrb[0].mxu0
      %363 = vmatprep.mubr.f32.mxu0 0.0
      %364 = vmatmul.mubr.f32.gmra.mrb[0].mxu0 %v215
      %v365 = vpop.f32.mrb[0].mxu0
      %v366 = vadd.f32 0.0, %v365
      %v367 = vpop.f32.mrb[0].mxu0
      %368 = vmatprep.mubr.f32.mxu0 0.0
      %369 = vmatmul.mubr.f32.gmra.mrb[0].mxu0 %v216
      %v370 = vpop.f32.mrb[0].mxu0
      %v371 = vadd.f32 0.0, %v370
      %v372 = vpop.f32.mrb[0].mxu0
      %373 = vmatprep.mubr.f32.mxu0 0.0
      %374 = vmatmul.mubr.f32.gmra.mrb[0].mxu0 %v217
      %v375 = vpop.f32.mrb[0].mxu0
      %v376 = vadd.f32 0.0, %v375
      %v377 = vpop.f32.mrb[0].mxu0
      %378 = vmatprep.mubr.f32.mxu0 0.0
      %379 = vmatmul.mubr.f32.gmra.mrb[0].mxu0 %v218
      %v380 = vpop.f32.mrb[0].mxu0
      %v381 = vadd.f32 0.0, %v380
      %v382 = vpop.f32.mrb[0].mxu0
      %383 = vmatprep.mubr.f32.mxu0 0.0
      %384 = vmatmul.mubr.f32.gmra.mrb[0].mxu0 %v219
      %v385 = vpop.f32.mrb[0].mxu0
      %v386 = vadd.f32 0.0, %v385
      %v387 = vpop.f32.mrb[0].mxu0
      %388 = vmatprep.mubr.f32.mxu0 0.0
      %389 = vmatmul.mubr.f32.gmra.mrb[0].mxu0 %v220
      %v390 = vpop.f32.mrb[0].mxu0
      %v391 = vadd.f32 0.0, %v390
      %v392 = vpop.f32.mrb[0].mxu0
      %393 = vmatprep.mubr.f32.mxu0 0.0
      %394 = vmatmul.mubr.f32.gmra.mrb[0].mxu0 %v221
      %v395 = vpop.f32.mrb[0].mxu0
      %v396 = vadd.f32 0.0, %v395
      %v397 = vpop.f32.mrb[0].mxu0
      %398 = vmatprep.mubr.f32.mxu0 0.0
      %399 = vmatmul.mubr.f32.gmra.mrb[0].mxu0 %v222
      %v400 = vpop.f32.mrb[0].mxu0
      %v401 = vadd.f32 0.0, %v400
      %v402 = vpop.f32.mrb[0].mxu0
      %403 = vmatprep.mubr.f32.mxu0 0.0
      %404 = vmatmul.mubr.f32.gmra.mrb[0].mxu0 %v223
      %v405 = vpop.f32.mrb[0].mxu0
      %v406 = vadd.f32 0.0, %v405
      %v407 = vpop.f32.mrb[0].mxu0
      %408 = vmatprep.mubr.f32.mxu0 0.0
      %409 = vmatmul.mubr.f32.gmra.mrb[0].mxu0 %v224
      %v410 = vpop.f32.mrb[0].mxu0
      %v411 = vadd.f32 0.0, %v410
      %v412 = vpop.f32.mrb[0].mxu0
      %413 = vmatprep.mubr.f32.mxu0 0.0
      %414 = vmatmul.mubr.f32.gmra.mrb[0].mxu0 %v225
      %v415 = vpop.f32.mrb[0].mxu0
      %v416 = vadd.f32 0.0, %v415
      %v417 = vpop.f32.mrb[0].mxu0
      %418 = vmatprep.mubr.f32.mxu0 0.0
      %419 = vmatmul.mubr.f32.gmra.mrb[0].mxu0 %v226
      %v420 = vpop.f32.mrb[0].mxu0
      %v421 = vadd.f32 0.0, %v420
      %v422 = vpop.f32.mrb[0].mxu0
      %423 = vmatprep.mubr.f32.mxu0 0.0
      %424 = vmatmul.mubr.f32.gmra.mrb[0].mxu0 %v227
      %v425 = vpop.f32.mrb[0].mxu0
      %v426 = vadd.f32 0.0, %v425
      %v427 = vpop.f32.mrb[0].mxu0
      %428 = vmatprep.mubr.f32.mxu0 0.0
      %429 = vmatmul.mubr.f32.gmra.mrb[0].mxu0 %v228
      %v430 = vpop.f32.mrb[0].mxu0
      %v431 = vadd.f32 0.0, %v430
      %v432 = vpop.f32.mrb[0].mxu0
      %433 = vmatprep.mubr.f32.mxu0 0.0
      %434 = vmatmul.mubr.f32.gmra.mrb[0].mxu0 %v229
      %v435 = vpop.f32.mrb[0].mxu0
      %v436 = vadd.f32 0.0, %v435
      %v437 = vpop.f32.mrb[0].mxu0
      %438 = vmatprep.mubr.f32.mxu0 0.0
      %439 = vmatmul.mubr.f32.gmra.mrb[0].mxu0 %v230
      %v440 = vpop.f32.mrb[0].mxu0
      %v441 = vadd.f32 0.0, %v440
      %v442 = vpop.f32.mrb[0].mxu0
      %443 = vmatprep.mubr.f32.mxu0 0.0
      %444 = vmatmul.mubr.f32.gmra.mrb[0].mxu0 %v231
      %v445 = vpop.f32.mrb[0].mxu0
      %v446 = vadd.f32 0.0, %v445
      %v447 = vpop.f32.mrb[0].mxu0
      %448 = vmatprep.mubr.f32.mxu0 0.0
      %449 = vmatmul.mubr.f32.gmra.mrb[0].mxu0 %v232
      %v450 = vpop.f32.mrb[0].mxu0
      %v451 = vadd.f32 0.0, %v450
      %v452 = vpop.f32.mrb[0].mxu0
      %453 = vmatprep.mubr.f32.mxu0 0.0
      %454 = vmatmul.mubr.f32.gmra.mrb[0].mxu0 %v233
      %v455 = vpop.f32.mrb[0].mxu0
      %v456 = vadd.f32 0.0, %v455
      %v457 = vpop.f32.mrb[0].mxu0
      %458 = vmatprep.mubr.f32.mxu0 0.0
      %459 = vmatmul.mubr.f32.gmra.mrb[0].mxu0 %v234
      %v460 = vpop.f32.mrb[0].mxu0
      %v461 = vadd.f32 0.0, %v460
      %v462 = vpop.f32.mrb[0].mxu0
      %463 = vmatprep.mubr.f32.mxu0 0.0
      %464 = vmatmul.mubr.f32.gmra.mrb[0].mxu0 %v235
      %v465 = vpop.f32.mrb[0].mxu0
      %v466 = vadd.f32 0.0, %v465
      %v467 = vpop.f32.mrb[0].mxu0
      %468 = vmatprep.mubr.f32.mxu0 0.0
      %469 = vmatmul.mubr.f32.gmra.mrb[0].mxu0 %v236
      %v470 = vpop.f32.mrb[0].mxu0
      %v471 = vadd.f32 0.0, %v470
      %v472 = vpop.f32.mrb[0].mxu0
      %473 = vmatprep.mubr.f32.mxu0 0.0
      %474 = vmatmul.mubr.f32.gmra.mrb[0].mxu0 %v237
      %v475 = vpop.f32.mrb[0].mxu0
      %v476 = vadd.f32 0.0, %v475
      %v477 = vpop.f32.mrb[0].mxu0
      %478 = vmatprep.mubr.f32.mxu0 0.0
      %479 = vmatmul.mubr.f32.gmra.mrb[0].mxu0 %v238
      %v480 = vpop.f32.mrb[0].mxu0
      %v481 = vadd.f32 0.0, %v480
      %v482 = vpop.f32.mrb[0].mxu0
      %483 = vmatprep.mubr.f32.mxu0 0.0
      %484 = vmatmul.mubr.f32.gmra.mrb[0].mxu0 %v239
      %v485 = vpop.f32.mrb[0].mxu0
      %v486 = vadd.f32 0.0, %v485
      %v487 = vpop.f32.mrb[0].mxu0
      %488 = vmatprep.mubr.f32.mxu0 0.0
      %489 = vmatmul.mubr.f32.gmra.mrb[0].mxu0 %v240
      %v490 = vpop.f32.mrb[0].mxu0
      %v491 = vadd.f32 0.0, %v490
      %v492 = vpop.f32.mrb[0].mxu0
      %493 = vmatprep.mubr.f32.mxu0 0.0
      %494 = vmatmul.mubr.f32.gmra.mrb[0].mxu0 %v241
      %v495 = vpop.f32.mrb[0].mxu0
      %v496 = vadd.f32 0.0, %v495
      %v497 = vpop.f32.mrb[0].mxu0
      %498 = vmatprep.mubr.f32.mxu0 0.0
      %499 = vmatmul.mubr.f32.gmra.mrb[0].mxu0 %v242
      %v500 = vpop.f32.mrb[0].mxu0
      %v501 = vadd.f32 0.0, %v500
      %v502 = vpop.f32.mrb[0].mxu0
      %503 = vmatprep.mubr.f32.mxu0 0.0
      %504 = vmatmul.mubr.f32.gmra.mrb[0].mxu0 %v243
      %v505 = vpop.f32.mrb[0].mxu0
      %v506 = vadd.f32 0.0, %v505
      %v507 = vpop.f32.mrb[0].mxu0
      %508 = vmatprep.mubr.f32.mxu0 0.0
      %509 = vmatmul.mubr.f32.gmra.mrb[0].mxu0 %v244
      %v510 = vpop.f32.mrb[0].mxu0
      %v511 = vadd.f32 0.0, %v510
      %v512 = vpop.f32.mrb[0].mxu0
      %513 = vmatprep.mubr.f32.mxu0 0.0
      %514 = vmatmul.mubr.f32.gmra.mrb[0].mxu0 %v245
      %v515 = vpop.f32.mrb[0].mxu0
      %v516 = vadd.f32 0.0, %v515
      %v517 = vpop.f32.mrb[0].mxu0
      %518 = vdwg.mxu0
      %v519 = vadd.f32 %v246, %v361
      %v520 = vadd.f32 %v247, %v366
      %v521 = vadd.f32 %v248, %v371
      %v522 = vadd.f32 %v249, %v376
      %v523 = vadd.f32 %v250, %v381
      %v524 = vadd.f32 %v251, %v386
      %v525 = vadd.f32 %v252, %v391
      %v526 = vadd.f32 %v253, %v396
      %v527 = vadd.f32 %v254, %v401
      %v528 = vadd.f32 %v255, %v406
      %v529 = vadd.f32 %v256, %v411
      %v530 = vadd.f32 %v257, %v416
      %v531 = vadd.f32 %v258, %v421
      %v532 = vadd.f32 %v259, %v426
      %v533 = vadd.f32 %v260, %v431
      %v534 = vadd.f32 %v261, %v436
      %v535 = vadd.f32 %v262, %v441
      %v536 = vadd.f32 %v263, %v446
      %v537 = vadd.f32 %v264, %v451
      %v538 = vadd.f32 %v265, %v456
      %v539 = vadd.f32 %v266, %v461
      %v540 = vadd.f32 %v267, %v466
      %v541 = vadd.f32 %v268, %v471
      %v542 = vadd.f32 %v269, %v476
      %v543 = vadd.f32 %v270, %v481
      %v544 = vadd.f32 %v271, %v486
      %v545 = vadd.f32 %v272, %v491
      %v546 = vadd.f32 %v273, %v496
      %v547 = vadd.f32 %v274, %v501
      %v548 = vadd.f32 %v275, %v506
      %v549 = vadd.f32 %v276, %v511
      %v550 = vadd.f32 %v277, %v516
      %551 = vst [vmem:[#allocation2] sm:$0xff] %v519
      %552 = vst [vmem:[#allocation2 + $0x8] sm:$0xff] %v520
      %553 = vst [vmem:[#allocation2 + $0x10] sm:$0xff] %v521
      %554 = vst [vmem:[#allocation2 + $0x18] sm:$0xff] %v522
      %555 = vst [vmem:[#allocation2 + $0x20] sm:$0xff] %v523
      %556 = vst [vmem:[#allocation2 + $0x28] sm:$0xff] %v524
      %557 = vst [vmem:[#allocation2 + $0x30] sm:$0xff] %v525
      %558 = vst [vmem:[#allocation2 + $0x38] sm:$0xff] %v526
      %559 = vst [vmem:[#allocation2 + $0x40] sm:$0xff] %v527
      %560 = vst [vmem:[#allocation2 + $0x48] sm:$0xff] %v528
      %561 = vst [vmem:[#allocation2 + $0x50] sm:$0xff] %v529
      %562 = vst [vmem:[#allocation2 + $0x58] sm:$0xff] %v530
      %563 = vst [vmem:[#allocation2 + $0x60] sm:$0xff] %v531
      %564 = vst [vmem:[#allocation2 + $0x68] sm:$0xff] %v532
      %565 = vst [vmem:[#allocation2 + $0x70] sm:$0xff] %v533
      %566 = vst [vmem:[#allocation2 + $0x78] sm:$0xff] %v534
      %567 = vst [vmem:[#allocation2 + $0x80] sm:$0xff] %v535
      %568 = vst [vmem:[#allocation2 + $0x88] sm:$0xff] %v536
      %569 = vst [vmem:[#allocation2 + $0x90] sm:$0xff] %v537
      %570 = vst [vmem:[#allocation2 + $0x98] sm:$0xff] %v538
      %571 = vst [vmem:[#allocation2 + $0xa0] sm:$0xff] %v539
      %572 = vst [vmem:[#allocation2 + $0xa8] sm:$0xff] %v540
      %573 = vst [vmem:[#allocation2 + $0xb0] sm:$0xff] %v541
      %574 = vst [vmem:[#allocation2 + $0xb8] sm:$0xff] %v542
      %575 = vst [vmem:[#allocation2 + $0xc0] sm:$0xff] %v543
      %576 = vst [vmem:[#allocation2 + $0xc8] sm:$0xff] %v544
      %577 = vst [vmem:[#allocation2 + $0xd0] sm:$0xff] %v545
      %578 = vst [vmem:[#allocation2 + $0xd8] sm:$0xff] %v546
      %579 = vst [vmem:[#allocation2 + $0xe0] sm:$0xff] %v547
      %580 = vst [vmem:[#allocation2 + $0xe8] sm:$0xff] %v548
      %581 = vst [vmem:[#allocation2 + $0xf0] sm:$0xff] %v549
      %582 = vst [vmem:[#allocation2 + $0xf8] sm:$0xff] %v550
      %v583 = vld [vmem:[%s172 + $0x1] sm:$0xff]
      %v584 = vld [vmem:[%s172 + $0x9] sm:$0xff]
      %v585 = vld [vmem:[%s172 + $0x19] sm:$0xff]
      %v586 = vld [vmem:[%s172 + $0x21] sm:$0xff]
      %v587 = vld [vmem:[%s172 + $0x31] sm:$0xff]
      %v588 = vld [vmem:[%s172 + $0x39] sm:$0xff]
      %v589 = vld [vmem:[%s172 + $0x49] sm:$0xff]
      %v590 = vld [vmem:[%s172 + $0x51] sm:$0xff]
      %v591 = vld [vmem:[%s172 + $0x61] sm:$0xff]
      %v592 = vld [vmem:[%s172 + $0x69] sm:$0xff]
      %v593 = vld [vmem:[%s172 + $0x79] sm:$0xff]
      %v594 = vld [vmem:[%s172 + $0x81] sm:$0xff]
      %v595 = vld [vmem:[%s172 + $0x91] sm:$0xff]
      %v596 = vld [vmem:[%s172 + $0x99] sm:$0xff]
      %v597 = vld [vmem:[%s172 + $0xa9] sm:$0xff]
      %v598 = vld [vmem:[%s172 + $0xb1] sm:$0xff]
      %v599 = vld [vmem:[%s172 + $0xc1] sm:$0xff]
      %v600 = vld [vmem:[%s172 + $0xc9] sm:$0xff]
      %v601 = vld [vmem:[%s172 + $0xd9] sm:$0xff]
      %v602 = vld [vmem:[%s172 + $0xe1] sm:$0xff]
      %v603 = vld [vmem:[%s172 + $0xf1] sm:$0xff]
      %v604 = vld [vmem:[%s172 + $0xf9] sm:$0xff]
      %v605 = vld [vmem:[%s172 + $0x109] sm:$0xff]
      %v606 = vld [vmem:[%s172 + $0x111] sm:$0xff]
      %v607 = vld [vmem:[%s172 + $0x121] sm:$0xff]
      %v608 = vld [vmem:[%s172 + $0x129] sm:$0xff]
      %v609 = vld [vmem:[%s172 + $0x139] sm:$0xff]
      %v610 = vld [vmem:[%s172 + $0x141] sm:$0xff]
      %v611 = vld [vmem:[%s172 + $0x151] sm:$0xff]
      %v612 = vld [vmem:[%s172 + $0x159] sm:$0xff]
      %v613 = vld [vmem:[%s172 + $0x169] sm:$0xff]
      %v614 = vld [vmem:[%s172 + $0x171] sm:$0xff]
      %v615 = vld [vmem:[#allocation2] sm:$0xff]
      %v616 = vld [vmem:[#allocation2 + $0x8] sm:$0xff]
      %v617 = vld [vmem:[#allocation2 + $0x10] sm:$0xff]
      %v618 = vld [vmem:[#allocation2 + $0x18] sm:$0xff]
      %v619 = vld [vmem:[#allocation2 + $0x20] sm:$0xff]
      %v620 = vld [vmem:[#allocation2 + $0x28] sm:$0xff]
      %v621 = vld [vmem:[#allocation2 + $0x30] sm:$0xff]
      %v622 = vld [vmem:[#allocation2 + $0x38] sm:$0xff]
      %v623 = vld [vmem:[#allocation2 + $0x40] sm:$0xff]
      %v624 = vld [vmem:[#allocation2 + $0x48] sm:$0xff]
      %v625 = vld [vmem:[#allocation2 + $0x50] sm:$0xff]
      %v626 = vld [vmem:[#allocation2 + $0x58] sm:$0xff]
      %v627 = vld [vmem:[#allocation2 + $0x60] sm:$0xff]
      %v628 = vld [vmem:[#allocation2 + $0x68] sm:$0xff]
      %v629 = vld [vmem:[#allocation2 + $0x70] sm:$0xff]
      %v630 = vld [vmem:[#allocation2 + $0x78] sm:$0xff]
      %v631 = vld [vmem:[#allocation2 + $0x80] sm:$0xff]
      %v632 = vld [vmem:[#allocation2 + $0x88] sm:$0xff]
      %v633 = vld [vmem:[#allocation2 + $0x90] sm:$0xff]
      %v634 = vld [vmem:[#allocation2 + $0x98] sm:$0xff]
      %v635 = vld [vmem:[#allocation2 + $0xa0] sm:$0xff]
      %v636 = vld [vmem:[#allocation2 + $0xa8] sm:$0xff]
      %v637 = vld [vmem:[#allocation2 + $0xb0] sm:$0xff]
      %v638 = vld [vmem:[#allocation2 + $0xb8] sm:$0xff]
      %v639 = vld [vmem:[#allocation2 + $0xc0] sm:$0xff]
      %v640 = vld [vmem:[#allocation2 + $0xc8] sm:$0xff]
      %v641 = vld [vmem:[#allocation2 + $0xd0] sm:$0xff]
      %v642 = vld [vmem:[#allocation2 + $0xd8] sm:$0xff]
      %v643 = vld [vmem:[#allocation2 + $0xe0] sm:$0xff]
      %v644 = vld [vmem:[#allocation2 + $0xe8] sm:$0xff]
      %v645 = vld [vmem:[#allocation2 + $0xf0] sm:$0xff]
      %v646 = vld [vmem:[#allocation2 + $0xf8] sm:$0xff]
      %s647 = scalar_lea.vmem %s1, 128
      %v648 = vld [vmem:[%s647] sm:$0xff]
      %v649 = vld [vmem:[%s647 + $0x8] sm:$0xff]
      %v650 = vld [vmem:[%s647 + $0x10] sm:$0xff]
      %v651 = vld [vmem:[%s647 + $0x18] sm:$0xff]
      %v652 = vld [vmem:[%s647 + $0x20] sm:$0xff]
      %v653 = vld [vmem:[%s647 + $0x28] sm:$0xff]
      %v654 = vld [vmem:[%s647 + $0x30] sm:$0xff]
      %v655 = vld [vmem:[%s647 + $0x38] sm:$0xff]
      %v656 = vld [vmem:[%s647 + $0x40] sm:$0xff]
      %v657 = vld [vmem:[%s647 + $0x48] sm:$0xff]
      %v658 = vld [vmem:[%s647 + $0x50] sm:$0xff]
      %v659 = vld [vmem:[%s647 + $0x58] sm:$0xff]
      %v660 = vld [vmem:[%s647 + $0x60] sm:$0xff]
      %v661 = vld [vmem:[%s647 + $0x68] sm:$0xff]
      %v662 = vld [vmem:[%s647 + $0x70] sm:$0xff]
      %v663 = vld [vmem:[%s647 + $0x78] sm:$0xff]
      %664 = vmatprep.subr.mxu0 0.0
      %665 = vmatpush1.msra.mxu0 %v648
      %666 = vmatprep.subr.mxu0 0.0
      %667 = vmatpush1.msra.mxu0 %v649
      %668 = vmatprep.subr.mxu0 0.0
      %669 = vmatpush1.msra.mxu0 %v650
      %670 = vmatprep.subr.mxu0 0.0
      %671 = vmatpush1.msra.mxu0 %v651
      %672 = vmatprep.subr.mxu0 0.0
      %673 = vmatpush1.msra.mxu0 %v652
      %674 = vmatprep.subr.mxu0 0.0
      %675 = vmatpush1.msra.mxu0 %v653
      %676 = vmatprep.subr.mxu0 0.0
      %677 = vmatpush1.msra.mxu0 %v654
      %678 = vmatprep.subr.mxu0 0.0
      %679 = vmatpush1.msra.mxu0 %v655
      %680 = vmatprep.subr.mxu0 0.0
      %681 = vmatpush1.msra.mxu0 %v656
      %682 = vmatprep.subr.mxu0 0.0
      %683 = vmatpush1.msra.mxu0 %v657
      %684 = vmatprep.subr.mxu0 0.0
      %685 = vmatpush1.msra.mxu0 %v658
      %686 = vmatprep.subr.mxu0 0.0
      %687 = vmatpush1.msra.mxu0 %v659
      %688 = vmatprep.subr.mxu0 0.0
      %689 = vmatpush1.msra.mxu0 %v660
      %690 = vmatprep.subr.mxu0 0.0
      %691 = vmatpush1.msra.mxu0 %v661
      %692 = vmatprep.subr.mxu0 0.0
      %693 = vmatpush1.msra.mxu0 %v662
      %694 = vmatprep.subr.mxu0 0.0
      %695 = vmatpush1.msra.mxu0 %v663
      %696 = vmatprep.subr.mxu0 0.0
      %697 = vmatpush1.msra.mxu0 0.0
      %698 = vmatprep.subr.mxu0 0.0
      %699 = vmatpush1.msra.mxu0 0.0
      %700 = vmatprep.subr.mxu0 0.0
      %701 = vmatpush1.msra.mxu0 0.0
      %702 = vmatprep.subr.mxu0 0.0
      %703 = vmatpush1.msra.mxu0 0.0
      %704 = vmatprep.subr.mxu0 0.0
      %705 = vmatpush1.msra.mxu0 0.0
      %706 = vmatprep.subr.mxu0 0.0
      %707 = vmatpush1.msra.mxu0 0.0
      %708 = vmatprep.subr.mxu0 0.0
      %709 = vmatpush1.msra.mxu0 0.0
      %710 = vmatprep.subr.mxu0 0.0
      %711 = vmatpush1.msra.mxu0 0.0
      %712 = vmatprep.subr.mxu0 0.0
      %713 = vmatpush1.msra.mxu0 0.0
      %714 = vmatprep.subr.mxu0 0.0
      %715 = vmatpush1.msra.mxu0 0.0
      %716 = vmatprep.subr.mxu0 0.0
      %717 = vmatpush1.msra.mxu0 0.0
      %718 = vmatprep.subr.mxu0 0.0
      %719 = vmatpush1.msra.mxu0 0.0
      %720 = vmatprep.subr.mxu0 0.0
      %721 = vmatpush1.msra.mxu0 0.0
      %722 = vmatprep.subr.mxu0 0.0
      %723 = vmatpush1.msra.mxu0 0.0
      %724 = vmatprep.subr.mxu0 0.0
      %725 = vmatpush1.msra.mxu0 0.0
      %726 = vmatprep.subr.mxu0 0.0
      %727 = vmatpush1.msra.mxu0 0.0
      %728 = vmatprep.mubr.f32.mxu0 0.0
      %729 = vmatmul.mubr.f32.gmra.mrb[0].mxu0 %v583
      %v730 = vpop.f32.mrb[0].mxu0
      %v731 = vadd.f32 0.0, %v730
      %v732 = vpop.f32.mrb[0].mxu0
      %733 = vmatprep.mubr.f32.mxu0 0.0
      %734 = vmatmul.mubr.f32.gmra.mrb[0].mxu0 %v584
      %v735 = vpop.f32.mrb[0].mxu0
      %v736 = vadd.f32 0.0, %v735
      %v737 = vpop.f32.mrb[0].mxu0
      %738 = vmatprep.mubr.f32.mxu0 0.0
      %739 = vmatmul.mubr.f32.gmra.mrb[0].mxu0 %v585
      %v740 = vpop.f32.mrb[0].mxu0
      %v741 = vadd.f32 0.0, %v740
      %v742 = vpop.f32.mrb[0].mxu0
      %743 = vmatprep.mubr.f32.mxu0 0.0
      %744 = vmatmul.mubr.f32.gmra.mrb[0].mxu0 %v586
      %v745 = vpop.f32.mrb[0].mxu0
      %v746 = vadd.f32 0.0, %v745
      %v747 = vpop.f32.mrb[0].mxu0
      %748 = vmatprep.mubr.f32.mxu0 0.0
      %749 = vmatmul.mubr.f32.gmra.mrb[0].mxu0 %v587
      %v750 = vpop.f32.mrb[0].mxu0
      %v751 = vadd.f32 0.0, %v750
      %v752 = vpop.f32.mrb[0].mxu0
      %753 = vmatprep.mubr.f32.mxu0 0.0
      %754 = vmatmul.mubr.f32.gmra.mrb[0].mxu0 %v588
      %v755 = vpop.f32.mrb[0].mxu0
      %v756 = vadd.f32 0.0, %v755
      %v757 = vpop.f32.mrb[0].mxu0
      %758 = vmatprep.mubr.f32.mxu0 0.0
      %759 = vmatmul.mubr.f32.gmra.mrb[0].mxu0 %v589
      %v760 = vpop.f32.mrb[0].mxu0
      %v761 = vadd.f32 0.0, %v760
      %v762 = vpop.f32.mrb[0].mxu0
      %763 = vmatprep.mubr.f32.mxu0 0.0
      %764 = vmatmul.mubr.f32.gmra.mrb[0].mxu0 %v590
      %v765 = vpop.f32.mrb[0].mxu0
      %v766 = vadd.f32 0.0, %v765
      %v767 = vpop.f32.mrb[0].mxu0
      %768 = vmatprep.mubr.f32.mxu0 0.0
      %769 = vmatmul.mubr.f32.gmra.mrb[0].mxu0 %v591
      %v770 = vpop.f32.mrb[0].mxu0
      %v771 = vadd.f32 0.0, %v770
      %v772 = vpop.f32.mrb[0].mxu0
      %773 = vmatprep.mubr.f32.mxu0 0.0
      %774 = vmatmul.mubr.f32.gmra.mrb[0].mxu0 %v592
      %v775 = vpop.f32.mrb[0].mxu0
      %v776 = vadd.f32 0.0, %v775
      %v777 = vpop.f32.mrb[0].mxu0
      %778 = vmatprep.mubr.f32.mxu0 0.0
      %779 = vmatmul.mubr.f32.gmra.mrb[0].mxu0 %v593
      %v780 = vpop.f32.mrb[0].mxu0
      %v781 = vadd.f32 0.0, %v780
      %v782 = vpop.f32.mrb[0].mxu0
      %783 = vmatprep.mubr.f32.mxu0 0.0
      %784 = vmatmul.mubr.f32.gmra.mrb[0].mxu0 %v594
      %v785 = vpop.f32.mrb[0].mxu0
      %v786 = vadd.f32 0.0, %v785
      %v787 = vpop.f32.mrb[0].mxu0
      %788 = vmatprep.mubr.f32.mxu0 0.0
      %789 = vmatmul.mubr.f32.gmra.mrb[0].mxu0 %v595
      %v790 = vpop.f32.mrb[0].mxu0
      %v791 = vadd.f32 0.0, %v790
      %v792 = vpop.f32.mrb[0].mxu0
      %793 = vmatprep.mubr.f32.mxu0 0.0
      %794 = vmatmul.mubr.f32.gmra.mrb[0].mxu0 %v596
      %v795 = vpop.f32.mrb[0].mxu0
      %v796 = vadd.f32 0.0, %v795
      %v797 = vpop.f32.mrb[0].mxu0
      %798 = vmatprep.mubr.f32.mxu0 0.0
      %799 = vmatmul.mubr.f32.gmra.mrb[0].mxu0 %v597
      %v800 = vpop.f32.mrb[0].mxu0
      %v801 = vadd.f32 0.0, %v800
      %v802 = vpop.f32.mrb[0].mxu0
      %803 = vmatprep.mubr.f32.mxu0 0.0
      %804 = vmatmul.mubr.f32.gmra.mrb[0].mxu0 %v598
      %v805 = vpop.f32.mrb[0].mxu0
      %v806 = vadd.f32 0.0, %v805
      %v807 = vpop.f32.mrb[0].mxu0
      %808 = vmatprep.mubr.f32.mxu0 0.0
      %809 = vmatmul.mubr.f32.gmra.mrb[0].mxu0 %v599
      %v810 = vpop.f32.mrb[0].mxu0
      %v811 = vadd.f32 0.0, %v810
      %v812 = vpop.f32.mrb[0].mxu0
      %813 = vmatprep.mubr.f32.mxu0 0.0
      %814 = vmatmul.mubr.f32.gmra.mrb[0].mxu0 %v600
      %v815 = vpop.f32.mrb[0].mxu0
      %v816 = vadd.f32 0.0, %v815
      %v817 = vpop.f32.mrb[0].mxu0
      %818 = vmatprep.mubr.f32.mxu0 0.0
      %819 = vmatmul.mubr.f32.gmra.mrb[0].mxu0 %v601
      %v820 = vpop.f32.mrb[0].mxu0
      %v821 = vadd.f32 0.0, %v820
      %v822 = vpop.f32.mrb[0].mxu0
      %823 = vmatprep.mubr.f32.mxu0 0.0
      %824 = vmatmul.mubr.f32.gmra.mrb[0].mxu0 %v602
      %v825 = vpop.f32.mrb[0].mxu0
      %v826 = vadd.f32 0.0, %v825
      %v827 = vpop.f32.mrb[0].mxu0
      %828 = vmatprep.mubr.f32.mxu0 0.0
      %829 = vmatmul.mubr.f32.gmra.mrb[0].mxu0 %v603
      %v830 = vpop.f32.mrb[0].mxu0
      %v831 = vadd.f32 0.0, %v830
      %v832 = vpop.f32.mrb[0].mxu0
      %833 = vmatprep.mubr.f32.mxu0 0.0
      %834 = vmatmul.mubr.f32.gmra.mrb[0].mxu0 %v604
      %v835 = vpop.f32.mrb[0].mxu0
      %v836 = vadd.f32 0.0, %v835
      %v837 = vpop.f32.mrb[0].mxu0
      %838 = vmatprep.mubr.f32.mxu0 0.0
      %839 = vmatmul.mubr.f32.gmra.mrb[0].mxu0 %v605
      %v840 = vpop.f32.mrb[0].mxu0
      %v841 = vadd.f32 0.0, %v840
      %v842 = vpop.f32.mrb[0].mxu0
      %843 = vmatprep.mubr.f32.mxu0 0.0
      %844 = vmatmul.mubr.f32.gmra.mrb[0].mxu0 %v606
      %v845 = vpop.f32.mrb[0].mxu0
      %v846 = vadd.f32 0.0, %v845
      %v847 = vpop.f32.mrb[0].mxu0
      %848 = vmatprep.mubr.f32.mxu0 0.0
      %849 = vmatmul.mubr.f32.gmra.mrb[0].mxu0 %v607
      %v850 = vpop.f32.mrb[0].mxu0
      %v851 = vadd.f32 0.0, %v850
      %v852 = vpop.f32.mrb[0].mxu0
      %853 = vmatprep.mubr.f32.mxu0 0.0
      %854 = vmatmul.mubr.f32.gmra.mrb[0].mxu0 %v608
      %v855 = vpop.f32.mrb[0].mxu0
      %v856 = vadd.f32 0.0, %v855
      %v857 = vpop.f32.mrb[0].mxu0
      %858 = vmatprep.mubr.f32.mxu0 0.0
      %859 = vmatmul.mubr.f32.gmra.mrb[0].mxu0 %v609
      %v860 = vpop.f32.mrb[0].mxu0
      %v861 = vadd.f32 0.0, %v860
      %v862 = vpop.f32.mrb[0].mxu0
      %863 = vmatprep.mubr.f32.mxu0 0.0
      %864 = vmatmul.mubr.f32.gmra.mrb[0].mxu0 %v610
      %v865 = vpop.f32.mrb[0].mxu0
      %v866 = vadd.f32 0.0, %v865
      %v867 = vpop.f32.mrb[0].mxu0
      %868 = vmatprep.mubr.f32.mxu0 0.0
      %869 = vmatmul.mubr.f32.gmra.mrb[0].mxu0 %v611
      %v870 = vpop.f32.mrb[0].mxu0
      %v871 = vadd.f32 0.0, %v870
      %v872 = vpop.f32.mrb[0].mxu0
      %873 = vmatprep.mubr.f32.mxu0 0.0
      %874 = vmatmul.mubr.f32.gmra.mrb[0].mxu0 %v612
      %v875 = vpop.f32.mrb[0].mxu0
      %v876 = vadd.f32 0.0, %v875
      %v877 = vpop.f32.mrb[0].mxu0
      %878 = vmatprep.mubr.f32.mxu0 0.0
      %879 = vmatmul.mubr.f32.gmra.mrb[0].mxu0 %v613
      %v880 = vpop.f32.mrb[0].mxu0
      %v881 = vadd.f32 0.0, %v880
      %v882 = vpop.f32.mrb[0].mxu0
      %883 = vmatprep.mubr.f32.mxu0 0.0
      %884 = vmatmul.mubr.f32.gmra.mrb[0].mxu0 %v614
      %v885 = vpop.f32.mrb[0].mxu0
      %v886 = vadd.f32 0.0, %v885
      %v887 = vpop.f32.mrb[0].mxu0
      %888 = vdwg.mxu0
      %v889 = vadd.f32 %v615, %v731
      %v890 = vadd.f32 %v616, %v736
      %v891 = vadd.f32 %v617, %v741
      %v892 = vadd.f32 %v618, %v746
      %v893 = vadd.f32 %v619, %v751
      %v894 = vadd.f32 %v620, %v756
      %v895 = vadd.f32 %v621, %v761
      %v896 = vadd.f32 %v622, %v766
      %v897 = vadd.f32 %v623, %v771
      %v898 = vadd.f32 %v624, %v776
      %v899 = vadd.f32 %v625, %v781
      %v900 = vadd.f32 %v626, %v786
      %v901 = vadd.f32 %v627, %v791
      %v902 = vadd.f32 %v628, %v796
      %v903 = vadd.f32 %v629, %v801
      %v904 = vadd.f32 %v630, %v806
      %v905 = vadd.f32 %v631, %v811
      %v906 = vadd.f32 %v632, %v816
      %v907 = vadd.f32 %v633, %v821
      %v908 = vadd.f32 %v634, %v826
      %v909 = vadd.f32 %v635, %v831
      %v910 = vadd.f32 %v636, %v836
      %v911 = vadd.f32 %v637, %v841
      %v912 = vadd.f32 %v638, %v846
      %v913 = vadd.f32 %v639, %v851
      %v914 = vadd.f32 %v640, %v856
      %v915 = vadd.f32 %v641, %v861
      %v916 = vadd.f32 %v642, %v866
      %v917 = vadd.f32 %v643, %v871
      %v918 = vadd.f32 %v644, %v876
      %v919 = vadd.f32 %v645, %v881
      %v920 = vadd.f32 %v646, %v886
      %921 = vst [vmem:[#allocation2] sm:$0xff] %v889
      %922 = vst [vmem:[#allocation2 + $0x8] sm:$0xff] %v890
      %923 = vst [vmem:[#allocation2 + $0x10] sm:$0xff] %v891
      %924 = vst [vmem:[#allocation2 + $0x18] sm:$0xff] %v892
      %925 = vst [vmem:[#allocation2 + $0x20] sm:$0xff] %v893
      %926 = vst [vmem:[#allocation2 + $0x28] sm:$0xff] %v894
      %927 = vst [vmem:[#allocation2 + $0x30] sm:$0xff] %v895
      %928 = vst [vmem:[#allocation2 + $0x38] sm:$0xff] %v896
      %929 = vst [vmem:[#allocation2 + $0x40] sm:$0xff] %v897
      %930 = vst [vmem:[#allocation2 + $0x48] sm:$0xff] %v898
      %931 = vst [vmem:[#allocation2 + $0x50] sm:$0xff] %v899
      %932 = vst [vmem:[#allocation2 + $0x58] sm:$0xff] %v900
      %933 = vst [vmem:[#allocation2 + $0x60] sm:$0xff] %v901
      %934 = vst [vmem:[#allocation2 + $0x68] sm:$0xff] %v902
      %935 = vst [vmem:[#allocation2 + $0x70] sm:$0xff] %v903
      %936 = vst [vmem:[#allocation2 + $0x78] sm:$0xff] %v904
      %937 = vst [vmem:[#allocation2 + $0x80] sm:$0xff] %v905
      %938 = vst [vmem:[#allocation2 + $0x88] sm:$0xff] %v906
      %939 = vst [vmem:[#allocation2 + $0x90] sm:$0xff] %v907
      %940 = vst [vmem:[#allocation2 + $0x98] sm:$0xff] %v908
      %941 = vst [vmem:[#allocation2 + $0xa0] sm:$0xff] %v909
      %942 = vst [vmem:[#allocation2 + $0xa8] sm:$0xff] %v910
      %943 = vst [vmem:[#allocation2 + $0xb0] sm:$0xff] %v911
      %944 = vst [vmem:[#allocation2 + $0xb8] sm:$0xff] %v912
      %945 = vst [vmem:[#allocation2 + $0xc0] sm:$0xff] %v913
      %946 = vst [vmem:[#allocation2 + $0xc8] sm:$0xff] %v914
      %947 = vst [vmem:[#allocation2 + $0xd0] sm:$0xff] %v915
      %948 = vst [vmem:[#allocation2 + $0xd8] sm:$0xff] %v916
      %949 = vst [vmem:[#allocation2 + $0xe0] sm:$0xff] %v917
      %950 = vst [vmem:[#allocation2 + $0xe8] sm:$0xff] %v918
      %951 = vst [vmem:[#allocation2 + $0xf0] sm:$0xff] %v919
      %952 = vst [vmem:[#allocation2 + $0xf8] sm:$0xff] %v920
      %v953 = vld [vmem:[%s172 + $0x2] sm:$0xff]
      %v954 = vld [vmem:[%s172 + $0xa] sm:$0xff]
      %v955 = vld [vmem:[%s172 + $0x1a] sm:$0xff]
      %v956 = vld [vmem:[%s172 + $0x22] sm:$0xff]
      %v957 = vld [vmem:[%s172 + $0x32] sm:$0xff]
      %v958 = vld [vmem:[%s172 + $0x3a] sm:$0xff]
      %v959 = vld [vmem:[%s172 + $0x4a] sm:$0xff]
      %v960 = vld [vmem:[%s172 + $0x52] sm:$0xff]
      %v961 = vld [vmem:[%s172 + $0x62] sm:$0xff]
      %v962 = vld [vmem:[%s172 + $0x6a] sm:$0xff]
      %v963 = vld [vmem:[%s172 + $0x7a] sm:$0xff]
      %v964 = vld [vmem:[%s172 + $0x82] sm:$0xff]
      %v965 = vld [vmem:[%s172 + $0x92] sm:$0xff]
      %v966 = vld [vmem:[%s172 + $0x9a] sm:$0xff]
      %v967 = vld [vmem:[%s172 + $0xaa] sm:$0xff]
      %v968 = vld [vmem:[%s172 + $0xb2] sm:$0xff]
      %v969 = vld [vmem:[%s172 + $0xc2] sm:$0xff]
      %v970 = vld [vmem:[%s172 + $0xca] sm:$0xff]
      %v971 = vld [vmem:[%s172 + $0xda] sm:$0xff]
      %v972 = vld [vmem:[%s172 + $0xe2] sm:$0xff]
      %v973 = vld [vmem:[%s172 + $0xf2] sm:$0xff]
      %v974 = vld [vmem:[%s172 + $0xfa] sm:$0xff]
      %v975 = vld [vmem:[%s172 + $0x10a] sm:$0xff]
      %v976 = vld [vmem:[%s172 + $0x112] sm:$0xff]
      %v977 = vld [vmem:[%s172 + $0x122] sm:$0xff]
      %v978 = vld [vmem:[%s172 + $0x12a] sm:$0xff]
      %v979 = vld [vmem:[%s172 + $0x13a] sm:$0xff]
      %v980 = vld [vmem:[%s172 + $0x142] sm:$0xff]
      %v981 = vld [vmem:[%s172 + $0x152] sm:$0xff]
      %v982 = vld [vmem:[%s172 + $0x15a] sm:$0xff]
      %v983 = vld [vmem:[%s172 + $0x16a] sm:$0xff]
      %v984 = vld [vmem:[%s172 + $0x172] sm:$0xff]
      %v985 = vld [vmem:[#allocation2] sm:$0xff]
      %v986 = vld [vmem:[#allocation2 + $0x8] sm:$0xff]
      %v987 = vld [vmem:[#allocation2 + $0x10] sm:$0xff]
      %v988 = vld [vmem:[#allocation2 + $0x18] sm:$0xff]
      %v989 = vld [vmem:[#allocation2 + $0x20] sm:$0xff]
      %v990 = vld [vmem:[#allocation2 + $0x28] sm:$0xff]
      %v991 = vld [vmem:[#allocation2 + $0x30] sm:$0xff]
      %v992 = vld [vmem:[#allocation2 + $0x38] sm:$0xff]
      %v993 = vld [vmem:[#allocation2 + $0x40] sm:$0xff]
      %v994 = vld [vmem:[#allocation2 + $0x48] sm:$0xff]
      %v995 = vld [vmem:[#allocation2 + $0x50] sm:$0xff]
      %v996 = vld [vmem:[#allocation2 + $0x58] sm:$0xff]
      %v997 = vld [vmem:[#allocation2 + $0x60] sm:$0xff]
      %v998 = vld [vmem:[#allocation2 + $0x68] sm:$0xff]
      %v999 = vld [vmem:[#allocation2 + $0x70] sm:$0xff]
      %v1000 = vld [vmem:[#allocation2 + $0x78] sm:$0xff]
      %v1001 = vld [vmem:[#allocation2 + $0x80] sm:$0xff]
      %v1002 = vld [vmem:[#allocation2 + $0x88] sm:$0xff]
      %v1003 = vld [vmem:[#allocation2 + $0x90] sm:$0xff]
      %v1004 = vld [vmem:[#allocation2 + $0x98] sm:$0xff]
      %v1005 = vld [vmem:[#allocation2 + $0xa0] sm:$0xff]
      %v1006 = vld [vmem:[#allocation2 + $0xa8] sm:$0xff]
      %v1007 = vld [vmem:[#allocation2 + $0xb0] sm:$0xff]
      %v1008 = vld [vmem:[#allocation2 + $0xb8] sm:$0xff]
      %v1009 = vld [vmem:[#allocation2 + $0xc0] sm:$0xff]
      %v1010 = vld [vmem:[#allocation2 + $0xc8] sm:$0xff]
      %v1011 = vld [vmem:[#allocation2 + $0xd0] sm:$0xff]
      %v1012 = vld [vmem:[#allocation2 + $0xd8] sm:$0xff]
      %v1013 = vld [vmem:[#allocation2 + $0xe0] sm:$0xff]
      %v1014 = vld [vmem:[#allocation2 + $0xe8] sm:$0xff]
      %v1015 = vld [vmem:[#allocation2 + $0xf0] sm:$0xff]
      %v1016 = vld [vmem:[#allocation2 + $0xf8] sm:$0xff]
      %s1017 = scalar_lea.vmem %s1, 256
      %v1018 = vld [vmem:[%s1017] sm:$0xff]
      %v1019 = vld [vmem:[%s1017 + $0x8] sm:$0xff]
      %v1020 = vld [vmem:[%s1017 + $0x10] sm:$0xff]
      %v1021 = vld [vmem:[%s1017 + $0x18] sm:$0xff]
      %v1022 = vld [vmem:[%s1017 + $0x20] sm:$0xff]
      %v1023 = vld [vmem:[%s1017 + $0x28] sm:$0xff]
      %v1024 = vld [vmem:[%s1017 + $0x30] sm:$0xff]
      %v1025 = vld [vmem:[%s1017 + $0x38] sm:$0xff]
      %v1026 = vld [vmem:[%s1017 + $0x40] sm:$0xff]
      %v1027 = vld [vmem:[%s1017 + $0x48] sm:$0xff]
      %v1028 = vld [vmem:[%s1017 + $0x50] sm:$0xff]
      %v1029 = vld [vmem:[%s1017 + $0x58] sm:$0xff]
      %v1030 = vld [vmem:[%s1017 + $0x60] sm:$0xff]
      %v1031 = vld [vmem:[%s1017 + $0x68] sm:$0xff]
      %v1032 = vld [vmem:[%s1017 + $0x70] sm:$0xff]
      %v1033 = vld [vmem:[%s1017 + $0x78] sm:$0xff]
      %1034 = vmatprep.subr.mxu0 0.0
      %1035 = vmatpush1.msra.mxu0 %v1018
      %1036 = vmatprep.subr.mxu0 0.0
      %1037 = vmatpush1.msra.mxu0 %v1019
      %1038 = vmatprep.subr.mxu0 0.0
      %1039 = vmatpush1.msra.mxu0 %v1020
      %1040 = vmatprep.subr.mxu0 0.0
      %1041 = vmatpush1.msra.mxu0 %v1021
      %1042 = vmatprep.subr.mxu0 0.0
      %1043 = vmatpush1.msra.mxu0 %v1022
      %1044 = vmatprep.subr.mxu0 0.0
      %1045 = vmatpush1.msra.mxu0 %v1023
      %1046 = vmatprep.subr.mxu0 0.0
      %1047 = vmatpush1.msra.mxu0 %v1024
      %1048 = vmatprep.subr.mxu0 0.0
      %1049 = vmatpush1.msra.mxu0 %v1025
      %1050 = vmatprep.subr.mxu0 0.0
      %1051 = vmatpush1.msra.mxu0 %v1026
      %1052 = vmatprep.subr.mxu0 0.0
      %1053 = vmatpush1.msra.mxu0 %v1027
      %1054 = vmatprep.subr.mxu0 0.0
      %1055 = vmatpush1.msra.mxu0 %v1028
      %1056 = vmatprep.subr.mxu0 0.0
      %1057 = vmatpush1.msra.mxu0 %v1029
      %1058 = vmatprep.subr.mxu0 0.0
      %1059 = vmatpush1.msra.mxu0 %v1030
      %1060 = vmatprep.subr.mxu0 0.0
      %1061 = vmatpush1.msra.mxu0 %v1031
      %1062 = vmatprep.subr.mxu0 0.0
      %1063 = vmatpush1.msra.mxu0 %v1032
      %1064 = vmatprep.subr.mxu0 0.0
      %1065 = vmatpush1.msra.mxu0 %v1033
      %1066 = vmatprep.subr.mxu0 0.0
      %1067 = vmatpush1.msra.mxu0 0.0
      %1068 = vmatprep.subr.mxu0 0.0
      %1069 = vmatpush1.msra.mxu0 0.0
      %1070 = vmatprep.subr.mxu0 0.0
      %1071 = vmatpush1.msra.mxu0 0.0
      %1072 = vmatprep.subr.mxu0 0.0
      %1073 = vmatpush1.msra.mxu0 0.0
      %1074 = vmatprep.subr.mxu0 0.0
      %1075 = vmatpush1.msra.mxu0 0.0
      %1076 = vmatprep.subr.mxu0 0.0
      %1077 = vmatpush1.msra.mxu0 0.0
      %1078 = vmatprep.subr.mxu0 0.0
      %1079 = vmatpush1.msra.mxu0 0.0
      %1080 = vmatprep.subr.mxu0 0.0
      %1081 = vmatpush1.msra.mxu0 0.0
      %1082 = vmatprep.subr.mxu0 0.0
      %1083 = vmatpush1.msra.mxu0 0.0
      %1084 = vmatprep.subr.mxu0 0.0
      %1085 = vmatpush1.msra.mxu0 0.0
      %1086 = vmatprep.subr.mxu0 0.0
      %1087 = vmatpush1.msra.mxu0 0.0
      %1088 = vmatprep.subr.mxu0 0.0
      %1089 = vmatpush1.msra.mxu0 0.0
      %1090 = vmatprep.subr.mxu0 0.0
      %1091 = vmatpush1.msra.mxu0 0.0
      %1092 = vmatprep.subr.mxu0 0.0
      %1093 = vmatpush1.msra.mxu0 0.0
      %1094 = vmatprep.subr.mxu0 0.0
      %1095 = vmatpush1.msra.mxu0 0.0
      %1096 = vmatprep.subr.mxu0 0.0
      %1097 = vmatpush1.msra.mxu0 0.0
      %1098 = vmatprep.mubr.f32.mxu0 0.0
      %1099 = vmatmul.mubr.f32.gmra.mrb[0].mxu0 %v953
      %v1100 = vpop.f32.mrb[0].mxu0
      %v1101 = vadd.f32 0.0, %v1100
      %v1102 = vpop.f32.mrb[0].mxu0
      %1103 = vmatprep.mubr.f32.mxu0 0.0
      %1104 = vmatmul.mubr.f32.gmra.mrb[0].mxu0 %v954
      %v1105 = vpop.f32.mrb[0].mxu0
      %v1106 = vadd.f32 0.0, %v1105
      %v1107 = vpop.f32.mrb[0].mxu0
      %1108 = vmatprep.mubr.f32.mxu0 0.0
      %1109 = vmatmul.mubr.f32.gmra.mrb[0].mxu0 %v955
      %v1110 = vpop.f32.mrb[0].mxu0
      %v1111 = vadd.f32 0.0, %v1110
      %v1112 = vpop.f32.mrb[0].mxu0
      %1113 = vmatprep.mubr.f32.mxu0 0.0
      %1114 = vmatmul.mubr.f32.gmra.mrb[0].mxu0 %v956
      %v1115 = vpop.f32.mrb[0].mxu0
      %v1116 = vadd.f32 0.0, %v1115
      %v1117 = vpop.f32.mrb[0].mxu0
      %1118 = vmatprep.mubr.f32.mxu0 0.0
      %1119 = vmatmul.mubr.f32.gmra.mrb[0].mxu0 %v957
      %v1120 = vpop.f32.mrb[0].mxu0
      %v1121 = vadd.f32 0.0, %v1120
      %v1122 = vpop.f32.mrb[0].mxu0
      %1123 = vmatprep.mubr.f32.mxu0 0.0
      %1124 = vmatmul.mubr.f32.gmra.mrb[0].mxu0 %v958
      %v1125 = vpop.f32.mrb[0].mxu0
      %v1126 = vadd.f32 0.0, %v1125
      %v1127 = vpop.f32.mrb[0].mxu0
      %1128 = vmatprep.mubr.f32.mxu0 0.0
      %1129 = vmatmul.mubr.f32.gmra.mrb[0].mxu0 %v959
      %v1130 = vpop.f32.mrb[0].mxu0
      %v1131 = vadd.f32 0.0, %v1130
      %v1132 = vpop.f32.mrb[0].mxu0
      %1133 = vmatprep.mubr.f32.mxu0 0.0
      %1134 = vmatmul.mubr.f32.gmra.mrb[0].mxu0 %v960
      %v1135 = vpop.f32.mrb[0].mxu0
      %v1136 = vadd.f32 0.0, %v1135
      %v1137 = vpop.f32.mrb[0].mxu0
      %1138 = vmatprep.mubr.f32.mxu0 0.0
      %1139 = vmatmul.mubr.f32.gmra.mrb[0].mxu0 %v961
      %v1140 = vpop.f32.mrb[0].mxu0
      %v1141 = vadd.f32 0.0, %v1140
      %v1142 = vpop.f32.mrb[0].mxu0
      %1143 = vmatprep.mubr.f32.mxu0 0.0
      %1144 = vmatmul.mubr.f32.gmra.mrb[0].mxu0 %v962
      %v1145 = vpop.f32.mrb[0].mxu0
      %v1146 = vadd.f32 0.0, %v1145
      %v1147 = vpop.f32.mrb[0].mxu0
      %1148 = vmatprep.mubr.f32.mxu0 0.0
      %1149 = vmatmul.mubr.f32.gmra.mrb[0].mxu0 %v963
      %v1150 = vpop.f32.mrb[0].mxu0
      %v1151 = vadd.f32 0.0, %v1150
      %v1152 = vpop.f32.mrb[0].mxu0
      %1153 = vmatprep.mubr.f32.mxu0 0.0
      %1154 = vmatmul.mubr.f32.gmra.mrb[0].mxu0 %v964
      %v1155 = vpop.f32.mrb[0].mxu0
      %v1156 = vadd.f32 0.0, %v1155
      %v1157 = vpop.f32.mrb[0].mxu0
      %1158 = vmatprep.mubr.f32.mxu0 0.0
      %1159 = vmatmul.mubr.f32.gmra.mrb[0].mxu0 %v965
      %v1160 = vpop.f32.mrb[0].mxu0
      %v1161 = vadd.f32 0.0, %v1160
      %v1162 = vpop.f32.mrb[0].mxu0
      %1163 = vmatprep.mubr.f32.mxu0 0.0
      %1164 = vmatmul.mubr.f32.gmra.mrb[0].mxu0 %v966
      %v1165 = vpop.f32.mrb[0].mxu0
      %v1166 = vadd.f32 0.0, %v1165
      %v1167 = vpop.f32.mrb[0].mxu0
      %1168 = vmatprep.mubr.f32.mxu0 0.0
      %1169 = vmatmul.mubr.f32.gmra.mrb[0].mxu0 %v967
      %v1170 = vpop.f32.mrb[0].mxu0
      %v1171 = vadd.f32 0.0, %v1170
      %v1172 = vpop.f32.mrb[0].mxu0
      %1173 = vmatprep.mubr.f32.mxu0 0.0
      %1174 = vmatmul.mubr.f32.gmra.mrb[0].mxu0 %v968
      %v1175 = vpop.f32.mrb[0].mxu0
      %v1176 = vadd.f32 0.0, %v1175
      %v1177 = vpop.f32.mrb[0].mxu0
      %1178 = vmatprep.mubr.f32.mxu0 0.0
      %1179 = vmatmul.mubr.f32.gmra.mrb[0].mxu0 %v969
      %v1180 = vpop.f32.mrb[0].mxu0
      %v1181 = vadd.f32 0.0, %v1180
      %v1182 = vpop.f32.mrb[0].mxu0
      %1183 = vmatprep.mubr.f32.mxu0 0.0
      %1184 = vmatmul.mubr.f32.gmra.mrb[0].mxu0 %v970
      %v1185 = vpop.f32.mrb[0].mxu0
      %v1186 = vadd.f32 0.0, %v1185
      %v1187 = vpop.f32.mrb[0].mxu0
      %1188 = vmatprep.mubr.f32.mxu0 0.0
      %1189 = vmatmul.mubr.f32.gmra.mrb[0].mxu0 %v971
      %v1190 = vpop.f32.mrb[0].mxu0
      %v1191 = vadd.f32 0.0, %v1190
      %v1192 = vpop.f32.mrb[0].mxu0
      %1193 = vmatprep.mubr.f32.mxu0 0.0
      %1194 = vmatmul.mubr.f32.gmra.mrb[0].mxu0 %v972
      %v1195 = vpop.f32.mrb[0].mxu0
      %v1196 = vadd.f32 0.0, %v1195
      %v1197 = vpop.f32.mrb[0].mxu0
      %1198 = vmatprep.mubr.f32.mxu0 0.0
      %1199 = vmatmul.mubr.f32.gmra.mrb[0].mxu0 %v973
      %v1200 = vpop.f32.mrb[0].mxu0
      %v1201 = vadd.f32 0.0, %v1200
      %v1202 = vpop.f32.mrb[0].mxu0
      %1203 = vmatprep.mubr.f32.mxu0 0.0
      %1204 = vmatmul.mubr.f32.gmra.mrb[0].mxu0 %v974
      %v1205 = vpop.f32.mrb[0].mxu0
      %v1206 = vadd.f32 0.0, %v1205
      %v1207 = vpop.f32.mrb[0].mxu0
      %1208 = vmatprep.mubr.f32.mxu0 0.0
      %1209 = vmatmul.mubr.f32.gmra.mrb[0].mxu0 %v975
      %v1210 = vpop.f32.mrb[0].mxu0
      %v1211 = vadd.f32 0.0, %v1210
      %v1212 = vpop.f32.mrb[0].mxu0
      %1213 = vmatprep.mubr.f32.mxu0 0.0
      %1214 = vmatmul.mubr.f32.gmra.mrb[0].mxu0 %v976
      %v1215 = vpop.f32.mrb[0].mxu0
      %v1216 = vadd.f32 0.0, %v1215
      %v1217 = vpop.f32.mrb[0].mxu0
      %1218 = vmatprep.mubr.f32.mxu0 0.0
      %1219 = vmatmul.mubr.f32.gmra.mrb[0].mxu0 %v977
      %v1220 = vpop.f32.mrb[0].mxu0
      %v1221 = vadd.f32 0.0, %v1220
      %v1222 = vpop.f32.mrb[0].mxu0
      %1223 = vmatprep.mubr.f32.mxu0 0.0
      %1224 = vmatmul.mubr.f32.gmra.mrb[0].mxu0 %v978
      %v1225 = vpop.f32.mrb[0].mxu0
      %v1226 = vadd.f32 0.0, %v1225
      %v1227 = vpop.f32.mrb[0].mxu0
      %1228 = vmatprep.mubr.f32.mxu0 0.0
      %1229 = vmatmul.mubr.f32.gmra.mrb[0].mxu0 %v979
      %v1230 = vpop.f32.mrb[0].mxu0
      %v1231 = vadd.f32 0.0, %v1230
      %v1232 = vpop.f32.mrb[0].mxu0
      %1233 = vmatprep.mubr.f32.mxu0 0.0
      %1234 = vmatmul.mubr.f32.gmra.mrb[0].mxu0 %v980
      %v1235 = vpop.f32.mrb[0].mxu0
      %v1236 = vadd.f32 0.0, %v1235
      %v1237 = vpop.f32.mrb[0].mxu0
      %1238 = vmatprep.mubr.f32.mxu0 0.0
      %1239 = vmatmul.mubr.f32.gmra.mrb[0].mxu0 %v981
      %v1240 = vpop.f32.mrb[0].mxu0
      %v1241 = vadd.f32 0.0, %v1240
      %v1242 = vpop.f32.mrb[0].mxu0
      %1243 = vmatprep.mubr.f32.mxu0 0.0
      %1244 = vmatmul.mubr.f32.gmra.mrb[0].mxu0 %v982
      %v1245 = vpop.f32.mrb[0].mxu0
      %v1246 = vadd.f32 0.0, %v1245
      %v1247 = vpop.f32.mrb[0].mxu0
      %1248 = vmatprep.mubr.f32.mxu0 0.0
      %1249 = vmatmul.mubr.f32.gmra.mrb[0].mxu0 %v983
      %v1250 = vpop.f32.mrb[0].mxu0
      %v1251 = vadd.f32 0.0, %v1250
      %v1252 = vpop.f32.mrb[0].mxu0
      %1253 = vmatprep.mubr.f32.mxu0 0.0
      %1254 = vmatmul.mubr.f32.gmra.mrb[0].mxu0 %v984
      %v1255 = vpop.f32.mrb[0].mxu0
      %v1256 = vadd.f32 0.0, %v1255
      %v1257 = vpop.f32.mrb[0].mxu0
      %1258 = vdwg.mxu0
      %v1259 = vadd.f32 %v985, %v1101
      %v1260 = vadd.f32 %v986, %v1106
      %v1261 = vadd.f32 %v987, %v1111
      %v1262 = vadd.f32 %v988, %v1116
      %v1263 = vadd.f32 %v989, %v1121
      %v1264 = vadd.f32 %v990, %v1126
      %v1265 = vadd.f32 %v991, %v1131
      %v1266 = vadd.f32 %v992, %v1136
      %v1267 = vadd.f32 %v993, %v1141
      %v1268 = vadd.f32 %v994, %v1146
      %v1269 = vadd.f32 %v995, %v1151
      %v1270 = vadd.f32 %v996, %v1156
      %v1271 = vadd.f32 %v997, %v1161
      %v1272 = vadd.f32 %v998, %v1166
      %v1273 = vadd.f32 %v999, %v1171
      %v1274 = vadd.f32 %v1000, %v1176
      %v1275 = vadd.f32 %v1001, %v1181
      %v1276 = vadd.f32 %v1002, %v1186
      %v1277 = vadd.f32 %v1003, %v1191
      %v1278 = vadd.f32 %v1004, %v1196
      %v1279 = vadd.f32 %v1005, %v1201
      %v1280 = vadd.f32 %v1006, %v1206
      %v1281 = vadd.f32 %v1007, %v1211
      %v1282 = vadd.f32 %v1008, %v1216
      %v1283 = vadd.f32 %v1009, %v1221
      %v1284 = vadd.f32 %v1010, %v1226
      %v1285 = vadd.f32 %v1011, %v1231
      %v1286 = vadd.f32 %v1012, %v1236
      %v1287 = vadd.f32 %v1013, %v1241
      %v1288 = vadd.f32 %v1014, %v1246
      %v1289 = vadd.f32 %v1015, %v1251
      %v1290 = vadd.f32 %v1016, %v1256
      %1291 = vst [vmem:[#allocation2] sm:$0xff] %v1259
      %1292 = vst [vmem:[#allocation2 + $0x8] sm:$0xff] %v1260
      %1293 = vst [vmem:[#allocation2 + $0x10] sm:$0xff] %v1261
      %1294 = vst [vmem:[#allocation2 + $0x18] sm:$0xff] %v1262
      %1295 = vst [vmem:[#allocation2 + $0x20] sm:$0xff] %v1263
      %1296 = vst [vmem:[#allocation2 + $0x28] sm:$0xff] %v1264
      %1297 = vst [vmem:[#allocation2 + $0x30] sm:$0xff] %v1265
      %1298 = vst [vmem:[#allocation2 + $0x38] sm:$0xff] %v1266
      %1299 = vst [vmem:[#allocation2 + $0x40] sm:$0xff] %v1267
      %1300 = vst [vmem:[#allocation2 + $0x48] sm:$0xff] %v1268
      %1301 = vst [vmem:[#allocation2 + $0x50] sm:$0xff] %v1269
      %1302 = vst [vmem:[#allocation2 + $0x58] sm:$0xff] %v1270
      %1303 = vst [vmem:[#allocation2 + $0x60] sm:$0xff] %v1271
      %1304 = vst [vmem:[#allocation2 + $0x68] sm:$0xff] %v1272
      %1305 = vst [vmem:[#allocation2 + $0x70] sm:$0xff] %v1273
      %1306 = vst [vmem:[#allocation2 + $0x78] sm:$0xff] %v1274
      %1307 = vst [vmem:[#allocation2 + $0x80] sm:$0xff] %v1275
      %1308 = vst [vmem:[#allocation2 + $0x88] sm:$0xff] %v1276
      %1309 = vst [vmem:[#allocation2 + $0x90] sm:$0xff] %v1277
      %1310 = vst [vmem:[#allocation2 + $0x98] sm:$0xff] %v1278
      %1311 = vst [vmem:[#allocation2 + $0xa0] sm:$0xff] %v1279
      %1312 = vst [vmem:[#allocation2 + $0xa8] sm:$0xff] %v1280
      %1313 = vst [vmem:[#allocation2 + $0xb0] sm:$0xff] %v1281
      %1314 = vst [vmem:[#allocation2 + $0xb8] sm:$0xff] %v1282
      %1315 = vst [vmem:[#allocation2 + $0xc0] sm:$0xff] %v1283
      %1316 = vst [vmem:[#allocation2 + $0xc8] sm:$0xff] %v1284
      %1317 = vst [vmem:[#allocation2 + $0xd0] sm:$0xff] %v1285
      %1318 = vst [vmem:[#allocation2 + $0xd8] sm:$0xff] %v1286
      %1319 = vst [vmem:[#allocation2 + $0xe0] sm:$0xff] %v1287
      %1320 = vst [vmem:[#allocation2 + $0xe8] sm:$0xff] %v1288
      %1321 = vst [vmem:[#allocation2 + $0xf0] sm:$0xff] %v1289
      %1322 = vst [vmem:[#allocation2 + $0xf8] sm:$0xff] %v1290
      %s1323 = scalar_lea.vmem %s172, 24
      %v1324 = vld [vmem:[%s1323] sm:$0xff]
      %v1325 = vld [vmem:[%s1323 + $0x8] sm:$0xff]
      %v1326 = vld [vmem:[%s1323 + $0x18] sm:$0xff]
      %v1327 = vld [vmem:[%s1323 + $0x20] sm:$0xff]
      %v1328 = vld [vmem:[%s1323 + $0x30] sm:$0xff]
      %v1329 = vld [vmem:[%s1323 + $0x38] sm:$0xff]
      %v1330 = vld [vmem:[%s1323 + $0x48] sm:$0xff]
      %v1331 = vld [vmem:[%s1323 + $0x50] sm:$0xff]
      %v1332 = vld [vmem:[%s1323 + $0x60] sm:$0xff]
      %v1333 = vld [vmem:[%s1323 + $0x68] sm:$0xff]
      %v1334 = vld [vmem:[%s1323 + $0x78] sm:$0xff]
      %v1335 = vld [vmem:[%s1323 + $0x80] sm:$0xff]
      %v1336 = vld [vmem:[%s1323 + $0x90] sm:$0xff]
      %v1337 = vld [vmem:[%s1323 + $0x98] sm:$0xff]
      %v1338 = vld [vmem:[%s1323 + $0xa8] sm:$0xff]
      %v1339 = vld [vmem:[%s1323 + $0xb0] sm:$0xff]
      %v1340 = vld [vmem:[%s1323 + $0xc0] sm:$0xff]
      %v1341 = vld [vmem:[%s1323 + $0xc8] sm:$0xff]
      %v1342 = vld [vmem:[%s1323 + $0xd8] sm:$0xff]
      %v1343 = vld [vmem:[%s1323 + $0xe0] sm:$0xff]
      %v1344 = vld [vmem:[%s1323 + $0xf0] sm:$0xff]
      %v1345 = vld [vmem:[%s1323 + $0xf8] sm:$0xff]
      %v1346 = vld [vmem:[%s1323 + $0x108] sm:$0xff]
      %v1347 = vld [vmem:[%s1323 + $0x110] sm:$0xff]
      %v1348 = vld [vmem:[%s1323 + $0x120] sm:$0xff]
      %v1349 = vld [vmem:[%s1323 + $0x128] sm:$0xff]
      %v1350 = vld [vmem:[%s1323 + $0x138] sm:$0xff]
      %v1351 = vld [vmem:[%s1323 + $0x140] sm:$0xff]
      %v1352 = vld [vmem:[%s1323 + $0x150] sm:$0xff]
      %v1353 = vld [vmem:[%s1323 + $0x158] sm:$0xff]
      %v1354 = vld [vmem:[%s1323 + $0x168] sm:$0xff]
      %v1355 = vld [vmem:[%s1323 + $0x170] sm:$0xff]
      %v1356 = vld [vmem:[#allocation2] sm:$0xff]
      %v1357 = vld [vmem:[#allocation2 + $0x8] sm:$0xff]
      %v1358 = vld [vmem:[#allocation2 + $0x10] sm:$0xff]
      %v1359 = vld [vmem:[#allocation2 + $0x18] sm:$0xff]
      %v1360 = vld [vmem:[#allocation2 + $0x20] sm:$0xff]
      %v1361 = vld [vmem:[#allocation2 + $0x28] sm:$0xff]
      %v1362 = vld [vmem:[#allocation2 + $0x30] sm:$0xff]
      %v1363 = vld [vmem:[#allocation2 + $0x38] sm:$0xff]
      %v1364 = vld [vmem:[#allocation2 + $0x40] sm:$0xff]
      %v1365 = vld [vmem:[#allocation2 + $0x48] sm:$0xff]
      %v1366 = vld [vmem:[#allocation2 + $0x50] sm:$0xff]
      %v1367 = vld [vmem:[#allocation2 + $0x58] sm:$0xff]
      %v1368 = vld [vmem:[#allocation2 + $0x60] sm:$0xff]
      %v1369 = vld [vmem:[#allocation2 + $0x68] sm:$0xff]
      %v1370 = vld [vmem:[#allocation2 + $0x70] sm:$0xff]
      %v1371 = vld [vmem:[#allocation2 + $0x78] sm:$0xff]
      %v1372 = vld [vmem:[#allocation2 + $0x80] sm:$0xff]
      %v1373 = vld [vmem:[#allocation2 + $0x88] sm:$0xff]
      %v1374 = vld [vmem:[#allocation2 + $0x90] sm:$0xff]
      %v1375 = vld [vmem:[#allocation2 + $0x98] sm:$0xff]
      %v1376 = vld [vmem:[#allocation2 + $0xa0] sm:$0xff]
      %v1377 = vld [vmem:[#allocation2 + $0xa8] sm:$0xff]
      %v1378 = vld [vmem:[#allocation2 + $0xb0] sm:$0xff]
      %v1379 = vld [vmem:[#allocation2 + $0xb8] sm:$0xff]
      %v1380 = vld [vmem:[#allocation2 + $0xc0] sm:$0xff]
      %v1381 = vld [vmem:[#allocation2 + $0xc8] sm:$0xff]
      %v1382 = vld [vmem:[#allocation2 + $0xd0] sm:$0xff]
      %v1383 = vld [vmem:[#allocation2 + $0xd8] sm:$0xff]
      %v1384 = vld [vmem:[#allocation2 + $0xe0] sm:$0xff]
      %v1385 = vld [vmem:[#allocation2 + $0xe8] sm:$0xff]
      %v1386 = vld [vmem:[#allocation2 + $0xf0] sm:$0xff]
      %v1387 = vld [vmem:[#allocation2 + $0xf8] sm:$0xff]
      %s1388 = scalar_lea.vmem %s1, 384
      %v1389 = vld [vmem:[%s1388] sm:$0xff]
      %v1390 = vld [vmem:[%s1388 + $0x8] sm:$0xff]
      %v1391 = vld [vmem:[%s1388 + $0x10] sm:$0xff]
      %v1392 = vld [vmem:[%s1388 + $0x18] sm:$0xff]
      %v1393 = vld [vmem:[%s1388 + $0x20] sm:$0xff]
      %v1394 = vld [vmem:[%s1388 + $0x28] sm:$0xff]
      %v1395 = vld [vmem:[%s1388 + $0x30] sm:$0xff]
      %v1396 = vld [vmem:[%s1388 + $0x38] sm:$0xff]
      %v1397 = vld [vmem:[%s1388 + $0x40] sm:$0xff]
      %v1398 = vld [vmem:[%s1388 + $0x48] sm:$0xff]
      %v1399 = vld [vmem:[%s1388 + $0x50] sm:$0xff]
      %v1400 = vld [vmem:[%s1388 + $0x58] sm:$0xff]
      %v1401 = vld [vmem:[%s1388 + $0x60] sm:$0xff]
      %v1402 = vld [vmem:[%s1388 + $0x68] sm:$0xff]
      %v1403 = vld [vmem:[%s1388 + $0x70] sm:$0xff]
      %v1404 = vld [vmem:[%s1388 + $0x78] sm:$0xff]
      %1405 = vmatprep.subr.mxu0 0.0
      %1406 = vmatpush1.msra.mxu0 %v1389
      %1407 = vmatprep.subr.mxu0 0.0
      %1408 = vmatpush1.msra.mxu0 %v1390
      %1409 = vmatprep.subr.mxu0 0.0
      %1410 = vmatpush1.msra.mxu0 %v1391
      %1411 = vmatprep.subr.mxu0 0.0
      %1412 = vmatpush1.msra.mxu0 %v1392
      %1413 = vmatprep.subr.mxu0 0.0
      %1414 = vmatpush1.msra.mxu0 %v1393
      %1415 = vmatprep.subr.mxu0 0.0
      %1416 = vmatpush1.msra.mxu0 %v1394
      %1417 = vmatprep.subr.mxu0 0.0
      %1418 = vmatpush1.msra.mxu0 %v1395
      %1419 = vmatprep.subr.mxu0 0.0
      %1420 = vmatpush1.msra.mxu0 %v1396
      %1421 = vmatprep.subr.mxu0 0.0
      %1422 = vmatpush1.msra.mxu0 %v1397
      %1423 = vmatprep.subr.mxu0 0.0
      %1424 = vmatpush1.msra.mxu0 %v1398
      %1425 = vmatprep.subr.mxu0 0.0
      %1426 = vmatpush1.msra.mxu0 %v1399
      %1427 = vmatprep.subr.mxu0 0.0
      %1428 = vmatpush1.msra.mxu0 %v1400
      %1429 = vmatprep.subr.mxu0 0.0
      %1430 = vmatpush1.msra.mxu0 %v1401
      %1431 = vmatprep.subr.mxu0 0.0
      %1432 = vmatpush1.msra.mxu0 %v1402
      %1433 = vmatprep.subr.mxu0 0.0
      %1434 = vmatpush1.msra.mxu0 %v1403
      %1435 = vmatprep.subr.mxu0 0.0
      %1436 = vmatpush1.msra.mxu0 %v1404
      %1437 = vmatprep.subr.mxu0 0.0
      %1438 = vmatpush1.msra.mxu0 0.0
      %1439 = vmatprep.subr.mxu0 0.0
      %1440 = vmatpush1.msra.mxu0 0.0
      %1441 = vmatprep.subr.mxu0 0.0
      %1442 = vmatpush1.msra.mxu0 0.0
      %1443 = vmatprep.subr.mxu0 0.0
      %1444 = vmatpush1.msra.mxu0 0.0
      %1445 = vmatprep.subr.mxu0 0.0
      %1446 = vmatpush1.msra.mxu0 0.0
      %1447 = vmatprep.subr.mxu0 0.0
      %1448 = vmatpush1.msra.mxu0 0.0
      %1449 = vmatprep.subr.mxu0 0.0
      %1450 = vmatpush1.msra.mxu0 0.0
      %1451 = vmatprep.subr.mxu0 0.0
      %1452 = vmatpush1.msra.mxu0 0.0
      %1453 = vmatprep.subr.mxu0 0.0
      %1454 = vmatpush1.msra.mxu0 0.0
      %1455 = vmatprep.subr.mxu0 0.0
      %1456 = vmatpush1.msra.mxu0 0.0
      %1457 = vmatprep.subr.mxu0 0.0
      %1458 = vmatpush1.msra.mxu0 0.0
      %1459 = vmatprep.subr.mxu0 0.0
      %1460 = vmatpush1.msra.mxu0 0.0
      %1461 = vmatprep.subr.mxu0 0.0
      %1462 = vmatpush1.msra.mxu0 0.0
      %1463 = vmatprep.subr.mxu0 0.0
      %1464 = vmatpush1.msra.mxu0 0.0
      %1465 = vmatprep.subr.mxu0 0.0
      %1466 = vmatpush1.msra.mxu0 0.0
      %1467 = vmatprep.subr.mxu0 0.0
      %1468 = vmatpush1.msra.mxu0 0.0
      %1469 = vmatprep.mubr.f32.mxu0 0.0
      %1470 = vmatmul.mubr.f32.gmra.mrb[0].mxu0 %v1324
      %v1471 = vpop.f32.mrb[0].mxu0
      %v1472 = vadd.f32 0.0, %v1471
      %v1473 = vpop.f32.mrb[0].mxu0
      %1474 = vmatprep.mubr.f32.mxu0 0.0
      %1475 = vmatmul.mubr.f32.gmra.mrb[0].mxu0 %v1325
      %v1476 = vpop.f32.mrb[0].mxu0
      %v1477 = vadd.f32 0.0, %v1476
      %v1478 = vpop.f32.mrb[0].mxu0
      %1479 = vmatprep.mubr.f32.mxu0 0.0
      %1480 = vmatmul.mubr.f32.gmra.mrb[0].mxu0 %v1326
      %v1481 = vpop.f32.mrb[0].mxu0
      %v1482 = vadd.f32 0.0, %v1481
      %v1483 = vpop.f32.mrb[0].mxu0
      %1484 = vmatprep.mubr.f32.mxu0 0.0
      %1485 = vmatmul.mubr.f32.gmra.mrb[0].mxu0 %v1327
      %v1486 = vpop.f32.mrb[0].mxu0
      %v1487 = vadd.f32 0.0, %v1486
      %v1488 = vpop.f32.mrb[0].mxu0
      %1489 = vmatprep.mubr.f32.mxu0 0.0
      %1490 = vmatmul.mubr.f32.gmra.mrb[0].mxu0 %v1328
      %v1491 = vpop.f32.mrb[0].mxu0
      %v1492 = vadd.f32 0.0, %v1491
      %v1493 = vpop.f32.mrb[0].mxu0
      %1494 = vmatprep.mubr.f32.mxu0 0.0
      %1495 = vmatmul.mubr.f32.gmra.mrb[0].mxu0 %v1329
      %v1496 = vpop.f32.mrb[0].mxu0
      %v1497 = vadd.f32 0.0, %v1496
      %v1498 = vpop.f32.mrb[0].mxu0
      %1499 = vmatprep.mubr.f32.mxu0 0.0
      %1500 = vmatmul.mubr.f32.gmra.mrb[0].mxu0 %v1330
      %v1501 = vpop.f32.mrb[0].mxu0
      %v1502 = vadd.f32 0.0, %v1501
      %v1503 = vpop.f32.mrb[0].mxu0
      %1504 = vmatprep.mubr.f32.mxu0 0.0
      %1505 = vmatmul.mubr.f32.gmra.mrb[0].mxu0 %v1331
      %v1506 = vpop.f32.mrb[0].mxu0
      %v1507 = vadd.f32 0.0, %v1506
      %v1508 = vpop.f32.mrb[0].mxu0
      %1509 = vmatprep.mubr.f32.mxu0 0.0
      %1510 = vmatmul.mubr.f32.gmra.mrb[0].mxu0 %v1332
      %v1511 = vpop.f32.mrb[0].mxu0
      %v1512 = vadd.f32 0.0, %v1511
      %v1513 = vpop.f32.mrb[0].mxu0
      %1514 = vmatprep.mubr.f32.mxu0 0.0
      %1515 = vmatmul.mubr.f32.gmra.mrb[0].mxu0 %v1333
      %v1516 = vpop.f32.mrb[0].mxu0
      %v1517 = vadd.f32 0.0, %v1516
      %v1518 = vpop.f32.mrb[0].mxu0
      %1519 = vmatprep.mubr.f32.mxu0 0.0
      %1520 = vmatmul.mubr.f32.gmra.mrb[0].mxu0 %v1334
      %v1521 = vpop.f32.mrb[0].mxu0
      %v1522 = vadd.f32 0.0, %v1521
      %v1523 = vpop.f32.mrb[0].mxu0
      %1524 = vmatprep.mubr.f32.mxu0 0.0
      %1525 = vmatmul.mubr.f32.gmra.mrb[0].mxu0 %v1335
      %v1526 = vpop.f32.mrb[0].mxu0
      %v1527 = vadd.f32 0.0, %v1526
      %v1528 = vpop.f32.mrb[0].mxu0
      %1529 = vmatprep.mubr.f32.mxu0 0.0
      %1530 = vmatmul.mubr.f32.gmra.mrb[0].mxu0 %v1336
      %v1531 = vpop.f32.mrb[0].mxu0
      %v1532 = vadd.f32 0.0, %v1531
      %v1533 = vpop.f32.mrb[0].mxu0
      %1534 = vmatprep.mubr.f32.mxu0 0.0
      %1535 = vmatmul.mubr.f32.gmra.mrb[0].mxu0 %v1337
      %v1536 = vpop.f32.mrb[0].mxu0
      %v1537 = vadd.f32 0.0, %v1536
      %v1538 = vpop.f32.mrb[0].mxu0
      %1539 = vmatprep.mubr.f32.mxu0 0.0
      %1540 = vmatmul.mubr.f32.gmra.mrb[0].mxu0 %v1338
      %v1541 = vpop.f32.mrb[0].mxu0
      %v1542 = vadd.f32 0.0, %v1541
      %v1543 = vpop.f32.mrb[0].mxu0
      %1544 = vmatprep.mubr.f32.mxu0 0.0
      %1545 = vmatmul.mubr.f32.gmra.mrb[0].mxu0 %v1339
      %v1546 = vpop.f32.mrb[0].mxu0
      %v1547 = vadd.f32 0.0, %v1546
      %v1548 = vpop.f32.mrb[0].mxu0
      %1549 = vmatprep.mubr.f32.mxu0 0.0
      %1550 = vmatmul.mubr.f32.gmra.mrb[0].mxu0 %v1340
      %v1551 = vpop.f32.mrb[0].mxu0
      %v1552 = vadd.f32 0.0, %v1551
      %v1553 = vpop.f32.mrb[0].mxu0
      %1554 = vmatprep.mubr.f32.mxu0 0.0
      %1555 = vmatmul.mubr.f32.gmra.mrb[0].mxu0 %v1341
      %v1556 = vpop.f32.mrb[0].mxu0
      %v1557 = vadd.f32 0.0, %v1556
      %v1558 = vpop.f32.mrb[0].mxu0
      %1559 = vmatprep.mubr.f32.mxu0 0.0
      %1560 = vmatmul.mubr.f32.gmra.mrb[0].mxu0 %v1342
      %v1561 = vpop.f32.mrb[0].mxu0
      %v1562 = vadd.f32 0.0, %v1561
      %v1563 = vpop.f32.mrb[0].mxu0
      %1564 = vmatprep.mubr.f32.mxu0 0.0
      %1565 = vmatmul.mubr.f32.gmra.mrb[0].mxu0 %v1343
      %v1566 = vpop.f32.mrb[0].mxu0
      %v1567 = vadd.f32 0.0, %v1566
      %v1568 = vpop.f32.mrb[0].mxu0
      %1569 = vmatprep.mubr.f32.mxu0 0.0
      %1570 = vmatmul.mubr.f32.gmra.mrb[0].mxu0 %v1344
      %v1571 = vpop.f32.mrb[0].mxu0
      %v1572 = vadd.f32 0.0, %v1571
      %v1573 = vpop.f32.mrb[0].mxu0
      %1574 = vmatprep.mubr.f32.mxu0 0.0
      %1575 = vmatmul.mubr.f32.gmra.mrb[0].mxu0 %v1345
      %v1576 = vpop.f32.mrb[0].mxu0
      %v1577 = vadd.f32 0.0, %v1576
      %v1578 = vpop.f32.mrb[0].mxu0
      %1579 = vmatprep.mubr.f32.mxu0 0.0
      %1580 = vmatmul.mubr.f32.gmra.mrb[0].mxu0 %v1346
      %v1581 = vpop.f32.mrb[0].mxu0
      %v1582 = vadd.f32 0.0, %v1581
      %v1583 = vpop.f32.mrb[0].mxu0
      %1584 = vmatprep.mubr.f32.mxu0 0.0
      %1585 = vmatmul.mubr.f32.gmra.mrb[0].mxu0 %v1347
      %v1586 = vpop.f32.mrb[0].mxu0
      %v1587 = vadd.f32 0.0, %v1586
      %v1588 = vpop.f32.mrb[0].mxu0
      %1589 = vmatprep.mubr.f32.mxu0 0.0
      %1590 = vmatmul.mubr.f32.gmra.mrb[0].mxu0 %v1348
      %v1591 = vpop.f32.mrb[0].mxu0
      %v1592 = vadd.f32 0.0, %v1591
      %v1593 = vpop.f32.mrb[0].mxu0
      %1594 = vmatprep.mubr.f32.mxu0 0.0
      %1595 = vmatmul.mubr.f32.gmra.mrb[0].mxu0 %v1349
      %v1596 = vpop.f32.mrb[0].mxu0
      %v1597 = vadd.f32 0.0, %v1596
      %v1598 = vpop.f32.mrb[0].mxu0
      %1599 = vmatprep.mubr.f32.mxu0 0.0
      %1600 = vmatmul.mubr.f32.gmra.mrb[0].mxu0 %v1350
      %v1601 = vpop.f32.mrb[0].mxu0
      %v1602 = vadd.f32 0.0, %v1601
      %v1603 = vpop.f32.mrb[0].mxu0
      %1604 = vmatprep.mubr.f32.mxu0 0.0
      %1605 = vmatmul.mubr.f32.gmra.mrb[0].mxu0 %v1351
      %v1606 = vpop.f32.mrb[0].mxu0
      %v1607 = vadd.f32 0.0, %v1606
      %v1608 = vpop.f32.mrb[0].mxu0
      %1609 = vmatprep.mubr.f32.mxu0 0.0
      %1610 = vmatmul.mubr.f32.gmra.mrb[0].mxu0 %v1352
      %v1611 = vpop.f32.mrb[0].mxu0
      %v1612 = vadd.f32 0.0, %v1611
      %v1613 = vpop.f32.mrb[0].mxu0
      %1614 = vmatprep.mubr.f32.mxu0 0.0
      %1615 = vmatmul.mubr.f32.gmra.mrb[0].mxu0 %v1353
      %v1616 = vpop.f32.mrb[0].mxu0
      %v1617 = vadd.f32 0.0, %v1616
      %v1618 = vpop.f32.mrb[0].mxu0
      %1619 = vmatprep.mubr.f32.mxu0 0.0
      %1620 = vmatmul.mubr.f32.gmra.mrb[0].mxu0 %v1354
      %v1621 = vpop.f32.mrb[0].mxu0
      %v1622 = vadd.f32 0.0, %v1621
      %v1623 = vpop.f32.mrb[0].mxu0
      %1624 = vmatprep.mubr.f32.mxu0 0.0
      %1625 = vmatmul.mubr.f32.gmra.mrb[0].mxu0 %v1355
      %v1626 = vpop.f32.mrb[0].mxu0
      %v1627 = vadd.f32 0.0, %v1626
      %v1628 = vpop.f32.mrb[0].mxu0
      %1629 = vdwg.mxu0
      %v1630 = vadd.f32 %v1356, %v1472
      %v1631 = vadd.f32 %v1357, %v1477
      %v1632 = vadd.f32 %v1358, %v1482
      %v1633 = vadd.f32 %v1359, %v1487
      %v1634 = vadd.f32 %v1360, %v1492
      %v1635 = vadd.f32 %v1361, %v1497
      %v1636 = vadd.f32 %v1362, %v1502
      %v1637 = vadd.f32 %v1363, %v1507
      %v1638 = vadd.f32 %v1364, %v1512
      %v1639 = vadd.f32 %v1365, %v1517
      %v1640 = vadd.f32 %v1366, %v1522
      %v1641 = vadd.f32 %v1367, %v1527
      %v1642 = vadd.f32 %v1368, %v1532
      %v1643 = vadd.f32 %v1369, %v1537
      %v1644 = vadd.f32 %v1370, %v1542
      %v1645 = vadd.f32 %v1371, %v1547
      %v1646 = vadd.f32 %v1372, %v1552
      %v1647 = vadd.f32 %v1373, %v1557
      %v1648 = vadd.f32 %v1374, %v1562
      %v1649 = vadd.f32 %v1375, %v1567
      %v1650 = vadd.f32 %v1376, %v1572
      %v1651 = vadd.f32 %v1377, %v1577
      %v1652 = vadd.f32 %v1378, %v1582
      %v1653 = vadd.f32 %v1379, %v1587
      %v1654 = vadd.f32 %v1380, %v1592
      %v1655 = vadd.f32 %v1381, %v1597
      %v1656 = vadd.f32 %v1382, %v1602
      %v1657 = vadd.f32 %v1383, %v1607
      %v1658 = vadd.f32 %v1384, %v1612
      %v1659 = vadd.f32 %v1385, %v1617
      %v1660 = vadd.f32 %v1386, %v1622
      %v1661 = vadd.f32 %v1387, %v1627
      %1662 = vst [vmem:[#allocation2] sm:$0xff] %v1630
      %1663 = vst [vmem:[#allocation2 + $0x8] sm:$0xff] %v1631
      %1664 = vst [vmem:[#allocation2 + $0x10] sm:$0xff] %v1632
      %1665 = vst [vmem:[#allocation2 + $0x18] sm:$0xff] %v1633
      %1666 = vst [vmem:[#allocation2 + $0x20] sm:$0xff] %v1634
      %1667 = vst [vmem:[#allocation2 + $0x28] sm:$0xff] %v1635
      %1668 = vst [vmem:[#allocation2 + $0x30] sm:$0xff] %v1636
      %1669 = vst [vmem:[#allocation2 + $0x38] sm:$0xff] %v1637
      %1670 = vst [vmem:[#allocation2 + $0x40] sm:$0xff] %v1638
      %1671 = vst [vmem:[#allocation2 + $0x48] sm:$0xff] %v1639
      %1672 = vst [vmem:[#allocation2 + $0x50] sm:$0xff] %v1640
      %1673 = vst [vmem:[#allocation2 + $0x58] sm:$0xff] %v1641
      %1674 = vst [vmem:[#allocation2 + $0x60] sm:$0xff] %v1642
      %1675 = vst [vmem:[#allocation2 + $0x68] sm:$0xff] %v1643
      %1676 = vst [vmem:[#allocation2 + $0x70] sm:$0xff] %v1644
      %1677 = vst [vmem:[#allocation2 + $0x78] sm:$0xff] %v1645
      %1678 = vst [vmem:[#allocation2 + $0x80] sm:$0xff] %v1646
      %1679 = vst [vmem:[#allocation2 + $0x88] sm:$0xff] %v1647
      %1680 = vst [vmem:[#allocation2 + $0x90] sm:$0xff] %v1648
      %1681 = vst [vmem:[#allocation2 + $0x98] sm:$0xff] %v1649
      %1682 = vst [vmem:[#allocation2 + $0xa0] sm:$0xff] %v1650
      %1683 = vst [vmem:[#allocation2 + $0xa8] sm:$0xff] %v1651
      %1684 = vst [vmem:[#allocation2 + $0xb0] sm:$0xff] %v1652
      %1685 = vst [vmem:[#allocation2 + $0xb8] sm:$0xff] %v1653
      %1686 = vst [vmem:[#allocation2 + $0xc0] sm:$0xff] %v1654
      %1687 = vst [vmem:[#allocation2 + $0xc8] sm:$0xff] %v1655
      %1688 = vst [vmem:[#allocation2 + $0xd0] sm:$0xff] %v1656
      %1689 = vst [vmem:[#allocation2 + $0xd8] sm:$0xff] %v1657
      %1690 = vst [vmem:[#allocation2 + $0xe0] sm:$0xff] %v1658
      %1691 = vst [vmem:[#allocation2 + $0xe8] sm:$0xff] %v1659
      %1692 = vst [vmem:[#allocation2 + $0xf0] sm:$0xff] %v1660
      %1693 = vst [vmem:[#allocation2 + $0xf8] sm:$0xff] %v1661
      %v1694 = vld [vmem:[%s1323 + $0x1] sm:$0xff]
      %v1695 = vld [vmem:[%s1323 + $0x9] sm:$0xff]
      %v1696 = vld [vmem:[%s1323 + $0x19] sm:$0xff]
      %v1697 = vld [vmem:[%s1323 + $0x21] sm:$0xff]
      %v1698 = vld [vmem:[%s1323 + $0x31] sm:$0xff]
      %v1699 = vld [vmem:[%s1323 + $0x39] sm:$0xff]
      %v1700 = vld [vmem:[%s1323 + $0x49] sm:$0xff]
      %v1701 = vld [vmem:[%s1323 + $0x51] sm:$0xff]
      %v1702 = vld [vmem:[%s1323 + $0x61] sm:$0xff]
      %v1703 = vld [vmem:[%s1323 + $0x69] sm:$0xff]
      %v1704 = vld [vmem:[%s1323 + $0x79] sm:$0xff]
      %v1705 = vld [vmem:[%s1323 + $0x81] sm:$0xff]
      %v1706 = vld [vmem:[%s1323 + $0x91] sm:$0xff]
      %v1707 = vld [vmem:[%s1323 + $0x99] sm:$0xff]
      %v1708 = vld [vmem:[%s1323 + $0xa9] sm:$0xff]
      %v1709 = vld [vmem:[%s1323 + $0xb1] sm:$0xff]
      %v1710 = vld [vmem:[%s1323 + $0xc1] sm:$0xff]
      %v1711 = vld [vmem:[%s1323 + $0xc9] sm:$0xff]
      %v1712 = vld [vmem:[%s1323 + $0xd9] sm:$0xff]
      %v1713 = vld [vmem:[%s1323 + $0xe1] sm:$0xff]
      %v1714 = vld [vmem:[%s1323 + $0xf1] sm:$0xff]
      %v1715 = vld [vmem:[%s1323 + $0xf9] sm:$0xff]
      %v1716 = vld [vmem:[%s1323 + $0x109] sm:$0xff]
      %v1717 = vld [vmem:[%s1323 + $0x111] sm:$0xff]
      %v1718 = vld [vmem:[%s1323 + $0x121] sm:$0xff]
      %v1719 = vld [vmem:[%s1323 + $0x129] sm:$0xff]
      %v1720 = vld [vmem:[%s1323 + $0x139] sm:$0xff]
      %v1721 = vld [vmem:[%s1323 + $0x141] sm:$0xff]
      %v1722 = vld [vmem:[%s1323 + $0x151] sm:$0xff]
      %v1723 = vld [vmem:[%s1323 + $0x159] sm:$0xff]
      %v1724 = vld [vmem:[%s1323 + $0x169] sm:$0xff]
      %v1725 = vld [vmem:[%s1323 + $0x171] sm:$0xff]
      %v1726 = vld [vmem:[#allocation2] sm:$0xff]
      %v1727 = vld [vmem:[#allocation2 + $0x8] sm:$0xff]
      %v1728 = vld [vmem:[#allocation2 + $0x10] sm:$0xff]
      %v1729 = vld [vmem:[#allocation2 + $0x18] sm:$0xff]
      %v1730 = vld [vmem:[#allocation2 + $0x20] sm:$0xff]
      %v1731 = vld [vmem:[#allocation2 + $0x28] sm:$0xff]
      %v1732 = vld [vmem:[#allocation2 + $0x30] sm:$0xff]
      %v1733 = vld [vmem:[#allocation2 + $0x38] sm:$0xff]
      %v1734 = vld [vmem:[#allocation2 + $0x40] sm:$0xff]
      %v1735 = vld [vmem:[#allocation2 + $0x48] sm:$0xff]
      %v1736 = vld [vmem:[#allocation2 + $0x50] sm:$0xff]
      %v1737 = vld [vmem:[#allocation2 + $0x58] sm:$0xff]
      %v1738 = vld [vmem:[#allocation2 + $0x60] sm:$0xff]
      %v1739 = vld [vmem:[#allocation2 + $0x68] sm:$0xff]
      %v1740 = vld [vmem:[#allocation2 + $0x70] sm:$0xff]
      %v1741 = vld [vmem:[#allocation2 + $0x78] sm:$0xff]
      %v1742 = vld [vmem:[#allocation2 + $0x80] sm:$0xff]
      %v1743 = vld [vmem:[#allocation2 + $0x88] sm:$0xff]
      %v1744 = vld [vmem:[#allocation2 + $0x90] sm:$0xff]
      %v1745 = vld [vmem:[#allocation2 + $0x98] sm:$0xff]
      %v1746 = vld [vmem:[#allocation2 + $0xa0] sm:$0xff]
      %v1747 = vld [vmem:[#allocation2 + $0xa8] sm:$0xff]
      %v1748 = vld [vmem:[#allocation2 + $0xb0] sm:$0xff]
      %v1749 = vld [vmem:[#allocation2 + $0xb8] sm:$0xff]
      %v1750 = vld [vmem:[#allocation2 + $0xc0] sm:$0xff]
      %v1751 = vld [vmem:[#allocation2 + $0xc8] sm:$0xff]
      %v1752 = vld [vmem:[#allocation2 + $0xd0] sm:$0xff]
      %v1753 = vld [vmem:[#allocation2 + $0xd8] sm:$0xff]
      %v1754 = vld [vmem:[#allocation2 + $0xe0] sm:$0xff]
      %v1755 = vld [vmem:[#allocation2 + $0xe8] sm:$0xff]
      %v1756 = vld [vmem:[#allocation2 + $0xf0] sm:$0xff]
      %v1757 = vld [vmem:[#allocation2 + $0xf8] sm:$0xff]
      %s1758 = scalar_lea.vmem %s1, 512
      %v1759 = vld [vmem:[%s1758] sm:$0xff]
      %v1760 = vld [vmem:[%s1758 + $0x8] sm:$0xff]
      %v1761 = vld [vmem:[%s1758 + $0x10] sm:$0xff]
      %v1762 = vld [vmem:[%s1758 + $0x18] sm:$0xff]
      %v1763 = vld [vmem:[%s1758 + $0x20] sm:$0xff]
      %v1764 = vld [vmem:[%s1758 + $0x28] sm:$0xff]
      %v1765 = vld [vmem:[%s1758 + $0x30] sm:$0xff]
      %v1766 = vld [vmem:[%s1758 + $0x38] sm:$0xff]
      %v1767 = vld [vmem:[%s1758 + $0x40] sm:$0xff]
      %v1768 = vld [vmem:[%s1758 + $0x48] sm:$0xff]
      %v1769 = vld [vmem:[%s1758 + $0x50] sm:$0xff]
      %v1770 = vld [vmem:[%s1758 + $0x58] sm:$0xff]
      %v1771 = vld [vmem:[%s1758 + $0x60] sm:$0xff]
      %v1772 = vld [vmem:[%s1758 + $0x68] sm:$0xff]
      %v1773 = vld [vmem:[%s1758 + $0x70] sm:$0xff]
      %v1774 = vld [vmem:[%s1758 + $0x78] sm:$0xff]
      %1775 = vmatprep.subr.mxu0 0.0
      %1776 = vmatpush1.msra.mxu0 %v1759
      %1777 = vmatprep.subr.mxu0 0.0
      %1778 = vmatpush1.msra.mxu0 %v1760
      %1779 = vmatprep.subr.mxu0 0.0
      %1780 = vmatpush1.msra.mxu0 %v1761
      %1781 = vmatprep.subr.mxu0 0.0
      %1782 = vmatpush1.msra.mxu0 %v1762
      %1783 = vmatprep.subr.mxu0 0.0
      %1784 = vmatpush1.msra.mxu0 %v1763
      %1785 = vmatprep.subr.mxu0 0.0
      %1786 = vmatpush1.msra.mxu0 %v1764
      %1787 = vmatprep.subr.mxu0 0.0
      %1788 = vmatpush1.msra.mxu0 %v1765
      %1789 = vmatprep.subr.mxu0 0.0
      %1790 = vmatpush1.msra.mxu0 %v1766
      %1791 = vmatprep.subr.mxu0 0.0
      %1792 = vmatpush1.msra.mxu0 %v1767
      %1793 = vmatprep.subr.mxu0 0.0
      %1794 = vmatpush1.msra.mxu0 %v1768
      %1795 = vmatprep.subr.mxu0 0.0
      %1796 = vmatpush1.msra.mxu0 %v1769
      %1797 = vmatprep.subr.mxu0 0.0
      %1798 = vmatpush1.msra.mxu0 %v1770
      %1799 = vmatprep.subr.mxu0 0.0
      %1800 = vmatpush1.msra.mxu0 %v1771
      %1801 = vmatprep.subr.mxu0 0.0
      %1802 = vmatpush1.msra.mxu0 %v1772
      %1803 = vmatprep.subr.mxu0 0.0
      %1804 = vmatpush1.msra.mxu0 %v1773
      %1805 = vmatprep.subr.mxu0 0.0
      %1806 = vmatpush1.msra.mxu0 %v1774
      %1807 = vmatprep.subr.mxu0 0.0
      %1808 = vmatpush1.msra.mxu0 0.0
      %1809 = vmatprep.subr.mxu0 0.0
      %1810 = vmatpush1.msra.mxu0 0.0
      %1811 = vmatprep.subr.mxu0 0.0
      %1812 = vmatpush1.msra.mxu0 0.0
      %1813 = vmatprep.subr.mxu0 0.0
      %1814 = vmatpush1.msra.mxu0 0.0
      %1815 = vmatprep.subr.mxu0 0.0
      %1816 = vmatpush1.msra.mxu0 0.0
      %1817 = vmatprep.subr.mxu0 0.0
      %1818 = vmatpush1.msra.mxu0 0.0
      %1819 = vmatprep.subr.mxu0 0.0
      %1820 = vmatpush1.msra.mxu0 0.0
      %1821 = vmatprep.subr.mxu0 0.0
      %1822 = vmatpush1.msra.mxu0 0.0
      %1823 = vmatprep.subr.mxu0 0.0
      %1824 = vmatpush1.msra.mxu0 0.0
      %1825 = vmatprep.subr.mxu0 0.0
      %1826 = vmatpush1.msra.mxu0 0.0
      %1827 = vmatprep.subr.mxu0 0.0
      %1828 = vmatpush1.msra.mxu0 0.0
      %1829 = vmatprep.subr.mxu0 0.0
      %1830 = vmatpush1.msra.mxu0 0.0
      %1831 = vmatprep.subr.mxu0 0.0
      %1832 = vmatpush1.msra.mxu0 0.0
      %1833 = vmatprep.subr.mxu0 0.0
      %1834 = vmatpush1.msra.mxu0 0.0
      %1835 = vmatprep.subr.mxu0 0.0
      %1836 = vmatpush1.msra.mxu0 0.0
      %1837 = vmatprep.subr.mxu0 0.0
      %1838 = vmatpush1.msra.mxu0 0.0
      %1839 = vmatprep.mubr.f32.mxu0 0.0
      %1840 = vmatmul.mubr.f32.gmra.mrb[0].mxu0 %v1694
      %v1841 = vpop.f32.mrb[0].mxu0
      %v1842 = vadd.f32 0.0, %v1841
      %v1843 = vpop.f32.mrb[0].mxu0
      %1844 = vmatprep.mubr.f32.mxu0 0.0
      %1845 = vmatmul.mubr.f32.gmra.mrb[0].mxu0 %v1695
      %v1846 = vpop.f32.mrb[0].mxu0
      %v1847 = vadd.f32 0.0, %v1846
      %v1848 = vpop.f32.mrb[0].mxu0
      %1849 = vmatprep.mubr.f32.mxu0 0.0
      %1850 = vmatmul.mubr.f32.gmra.mrb[0].mxu0 %v1696
      %v1851 = vpop.f32.mrb[0].mxu0
      %v1852 = vadd.f32 0.0, %v1851
      %v1853 = vpop.f32.mrb[0].mxu0
      %1854 = vmatprep.mubr.f32.mxu0 0.0
      %1855 = vmatmul.mubr.f32.gmra.mrb[0].mxu0 %v1697
      %v1856 = vpop.f32.mrb[0].mxu0
      %v1857 = vadd.f32 0.0, %v1856
      %v1858 = vpop.f32.mrb[0].mxu0
      %1859 = vmatprep.mubr.f32.mxu0 0.0
      %1860 = vmatmul.mubr.f32.gmra.mrb[0].mxu0 %v1698
      %v1861 = vpop.f32.mrb[0].mxu0
      %v1862 = vadd.f32 0.0, %v1861
      %v1863 = vpop.f32.mrb[0].mxu0
      %1864 = vmatprep.mubr.f32.mxu0 0.0
      %1865 = vmatmul.mubr.f32.gmra.mrb[0].mxu0 %v1699
      %v1866 = vpop.f32.mrb[0].mxu0
      %v1867 = vadd.f32 0.0, %v1866
      %v1868 = vpop.f32.mrb[0].mxu0
      %1869 = vmatprep.mubr.f32.mxu0 0.0
      %1870 = vmatmul.mubr.f32.gmra.mrb[0].mxu0 %v1700
      %v1871 = vpop.f32.mrb[0].mxu0
      %v1872 = vadd.f32 0.0, %v1871
      %v1873 = vpop.f32.mrb[0].mxu0
      %1874 = vmatprep.mubr.f32.mxu0 0.0
      %1875 = vmatmul.mubr.f32.gmra.mrb[0].mxu0 %v1701
      %v1876 = vpop.f32.mrb[0].mxu0
      %v1877 = vadd.f32 0.0, %v1876
      %v1878 = vpop.f32.mrb[0].mxu0
      %1879 = vmatprep.mubr.f32.mxu0 0.0
      %1880 = vmatmul.mubr.f32.gmra.mrb[0].mxu0 %v1702
      %v1881 = vpop.f32.mrb[0].mxu0
      %v1882 = vadd.f32 0.0, %v1881
      %v1883 = vpop.f32.mrb[0].mxu0
      %1884 = vmatprep.mubr.f32.mxu0 0.0
      %1885 = vmatmul.mubr.f32.gmra.mrb[0].mxu0 %v1703
      %v1886 = vpop.f32.mrb[0].mxu0
      %v1887 = vadd.f32 0.0, %v1886
      %v1888 = vpop.f32.mrb[0].mxu0
      %1889 = vmatprep.mubr.f32.mxu0 0.0
      %1890 = vmatmul.mubr.f32.gmra.mrb[0].mxu0 %v1704
      %v1891 = vpop.f32.mrb[0].mxu0
      %v1892 = vadd.f32 0.0, %v1891
      %v1893 = vpop.f32.mrb[0].mxu0
      %1894 = vmatprep.mubr.f32.mxu0 0.0
      %1895 = vmatmul.mubr.f32.gmra.mrb[0].mxu0 %v1705
      %v1896 = vpop.f32.mrb[0].mxu0
      %v1897 = vadd.f32 0.0, %v1896
      %v1898 = vpop.f32.mrb[0].mxu0
      %1899 = vmatprep.mubr.f32.mxu0 0.0
      %1900 = vmatmul.mubr.f32.gmra.mrb[0].mxu0 %v1706
      %v1901 = vpop.f32.mrb[0].mxu0
      %v1902 = vadd.f32 0.0, %v1901
      %v1903 = vpop.f32.mrb[0].mxu0
      %1904 = vmatprep.mubr.f32.mxu0 0.0
      %1905 = vmatmul.mubr.f32.gmra.mrb[0].mxu0 %v1707
      %v1906 = vpop.f32.mrb[0].mxu0
      %v1907 = vadd.f32 0.0, %v1906
      %v1908 = vpop.f32.mrb[0].mxu0
      %1909 = vmatprep.mubr.f32.mxu0 0.0
      %1910 = vmatmul.mubr.f32.gmra.mrb[0].mxu0 %v1708
      %v1911 = vpop.f32.mrb[0].mxu0
      %v1912 = vadd.f32 0.0, %v1911
      %v1913 = vpop.f32.mrb[0].mxu0
      %1914 = vmatprep.mubr.f32.mxu0 0.0
      %1915 = vmatmul.mubr.f32.gmra.mrb[0].mxu0 %v1709
      %v1916 = vpop.f32.mrb[0].mxu0
      %v1917 = vadd.f32 0.0, %v1916
      %v1918 = vpop.f32.mrb[0].mxu0
      %1919 = vmatprep.mubr.f32.mxu0 0.0
      %1920 = vmatmul.mubr.f32.gmra.mrb[0].mxu0 %v1710
      %v1921 = vpop.f32.mrb[0].mxu0
      %v1922 = vadd.f32 0.0, %v1921
      %v1923 = vpop.f32.mrb[0].mxu0
      %1924 = vmatprep.mubr.f32.mxu0 0.0
      %1925 = vmatmul.mubr.f32.gmra.mrb[0].mxu0 %v1711
      %v1926 = vpop.f32.mrb[0].mxu0
      %v1927 = vadd.f32 0.0, %v1926
      %v1928 = vpop.f32.mrb[0].mxu0
      %1929 = vmatprep.mubr.f32.mxu0 0.0
      %1930 = vmatmul.mubr.f32.gmra.mrb[0].mxu0 %v1712
      %v1931 = vpop.f32.mrb[0].mxu0
      %v1932 = vadd.f32 0.0, %v1931
      %v1933 = vpop.f32.mrb[0].mxu0
      %1934 = vmatprep.mubr.f32.mxu0 0.0
      %1935 = vmatmul.mubr.f32.gmra.mrb[0].mxu0 %v1713
      %v1936 = vpop.f32.mrb[0].mxu0
      %v1937 = vadd.f32 0.0, %v1936
      %v1938 = vpop.f32.mrb[0].mxu0
      %1939 = vmatprep.mubr.f32.mxu0 0.0
      %1940 = vmatmul.mubr.f32.gmra.mrb[0].mxu0 %v1714
      %v1941 = vpop.f32.mrb[0].mxu0
      %v1942 = vadd.f32 0.0, %v1941
      %v1943 = vpop.f32.mrb[0].mxu0
      %1944 = vmatprep.mubr.f32.mxu0 0.0
      %1945 = vmatmul.mubr.f32.gmra.mrb[0].mxu0 %v1715
      %v1946 = vpop.f32.mrb[0].mxu0
      %v1947 = vadd.f32 0.0, %v1946
      %v1948 = vpop.f32.mrb[0].mxu0
      %1949 = vmatprep.mubr.f32.mxu0 0.0
      %1950 = vmatmul.mubr.f32.gmra.mrb[0].mxu0 %v1716
      %v1951 = vpop.f32.mrb[0].mxu0
      %v1952 = vadd.f32 0.0, %v1951
      %v1953 = vpop.f32.mrb[0].mxu0
      %1954 = vmatprep.mubr.f32.mxu0 0.0
      %1955 = vmatmul.mubr.f32.gmra.mrb[0].mxu0 %v1717
      %v1956 = vpop.f32.mrb[0].mxu0
      %v1957 = vadd.f32 0.0, %v1956
      %v1958 = vpop.f32.mrb[0].mxu0
      %1959 = vmatprep.mubr.f32.mxu0 0.0
      %1960 = vmatmul.mubr.f32.gmra.mrb[0].mxu0 %v1718
      %v1961 = vpop.f32.mrb[0].mxu0
      %v1962 = vadd.f32 0.0, %v1961
      %v1963 = vpop.f32.mrb[0].mxu0
      %1964 = vmatprep.mubr.f32.mxu0 0.0
      %1965 = vmatmul.mubr.f32.gmra.mrb[0].mxu0 %v1719
      %v1966 = vpop.f32.mrb[0].mxu0
      %v1967 = vadd.f32 0.0, %v1966
      %v1968 = vpop.f32.mrb[0].mxu0
      %1969 = vmatprep.mubr.f32.mxu0 0.0
      %1970 = vmatmul.mubr.f32.gmra.mrb[0].mxu0 %v1720
      %v1971 = vpop.f32.mrb[0].mxu0
      %v1972 = vadd.f32 0.0, %v1971
      %v1973 = vpop.f32.mrb[0].mxu0
      %1974 = vmatprep.mubr.f32.mxu0 0.0
      %1975 = vmatmul.mubr.f32.gmra.mrb[0].mxu0 %v1721
      %v1976 = vpop.f32.mrb[0].mxu0
      %v1977 = vadd.f32 0.0, %v1976
      %v1978 = vpop.f32.mrb[0].mxu0
      %1979 = vmatprep.mubr.f32.mxu0 0.0
      %1980 = vmatmul.mubr.f32.gmra.mrb[0].mxu0 %v1722
      %v1981 = vpop.f32.mrb[0].mxu0
      %v1982 = vadd.f32 0.0, %v1981
      %v1983 = vpop.f32.mrb[0].mxu0
      %1984 = vmatprep.mubr.f32.mxu0 0.0
      %1985 = vmatmul.mubr.f32.gmra.mrb[0].mxu0 %v1723
      %v1986 = vpop.f32.mrb[0].mxu0
      %v1987 = vadd.f32 0.0, %v1986
      %v1988 = vpop.f32.mrb[0].mxu0
      %1989 = vmatprep.mubr.f32.mxu0 0.0
      %1990 = vmatmul.mubr.f32.gmra.mrb[0].mxu0 %v1724
      %v1991 = vpop.f32.mrb[0].mxu0
      %v1992 = vadd.f32 0.0, %v1991
      %v1993 = vpop.f32.mrb[0].mxu0
      %1994 = vmatprep.mubr.f32.mxu0 0.0
      %1995 = vmatmul.mubr.f32.gmra.mrb[0].mxu0 %v1725
      %v1996 = vpop.f32.mrb[0].mxu0
      %v1997 = vadd.f32 0.0, %v1996
      %v1998 = vpop.f32.mrb[0].mxu0
      %1999 = vdwg.mxu0
      %v2000 = vadd.f32 %v1726, %v1842
      %v2001 = vadd.f32 %v1727, %v1847
      %v2002 = vadd.f32 %v1728, %v1852
      %v2003 = vadd.f32 %v1729, %v1857
      %v2004 = vadd.f32 %v1730, %v1862
      %v2005 = vadd.f32 %v1731, %v1867
      %v2006 = vadd.f32 %v1732, %v1872
      %v2007 = vadd.f32 %v1733, %v1877
      %v2008 = vadd.f32 %v1734, %v1882
      %v2009 = vadd.f32 %v1735, %v1887
      %v2010 = vadd.f32 %v1736, %v1892
      %v2011 = vadd.f32 %v1737, %v1897
      %v2012 = vadd.f32 %v1738, %v1902
      %v2013 = vadd.f32 %v1739, %v1907
      %v2014 = vadd.f32 %v1740, %v1912
      %v2015 = vadd.f32 %v1741, %v1917
      %v2016 = vadd.f32 %v1742, %v1922
      %v2017 = vadd.f32 %v1743, %v1927
      %v2018 = vadd.f32 %v1744, %v1932
      %v2019 = vadd.f32 %v1745, %v1937
      %v2020 = vadd.f32 %v1746, %v1942
      %v2021 = vadd.f32 %v1747, %v1947
      %v2022 = vadd.f32 %v1748, %v1952
      %v2023 = vadd.f32 %v1749, %v1957
      %v2024 = vadd.f32 %v1750, %v1962
      %v2025 = vadd.f32 %v1751, %v1967
      %v2026 = vadd.f32 %v1752, %v1972
      %v2027 = vadd.f32 %v1753, %v1977
      %v2028 = vadd.f32 %v1754, %v1982
      %v2029 = vadd.f32 %v1755, %v1987
      %v2030 = vadd.f32 %v1756, %v1992
      %v2031 = vadd.f32 %v1757, %v1997
      %2032 = vst [vmem:[#allocation2] sm:$0xff] %v2000
      %2033 = vst [vmem:[#allocation2 + $0x8] sm:$0xff] %v2001
      %2034 = vst [vmem:[#allocation2 + $0x10] sm:$0xff] %v2002
      %2035 = vst [vmem:[#allocation2 + $0x18] sm:$0xff] %v2003
      %2036 = vst [vmem:[#allocation2 + $0x20] sm:$0xff] %v2004
      %2037 = vst [vmem:[#allocation2 + $0x28] sm:$0xff] %v2005
      %2038 = vst [vmem:[#allocation2 + $0x30] sm:$0xff] %v2006
      %2039 = vst [vmem:[#allocation2 + $0x38] sm:$0xff] %v2007
      %2040 = vst [vmem:[#allocation2 + $0x40] sm:$0xff] %v2008
      %2041 = vst [vmem:[#allocation2 + $0x48] sm:$0xff] %v2009
      %2042 = vst [vmem:[#allocation2 + $0x50] sm:$0xff] %v2010
      %2043 = vst [vmem:[#allocation2 + $0x58] sm:$0xff] %v2011
      %2044 = vst [vmem:[#allocation2 + $0x60] sm:$0xff] %v2012
      %2045 = vst [vmem:[#allocation2 + $0x68] sm:$0xff] %v2013
      %2046 = vst [vmem:[#allocation2 + $0x70] sm:$0xff] %v2014
      %2047 = vst [vmem:[#allocation2 + $0x78] sm:$0xff] %v2015
      %2048 = vst [vmem:[#allocation2 + $0x80] sm:$0xff] %v2016
      %2049 = vst [vmem:[#allocation2 + $0x88] sm:$0xff] %v2017
      %2050 = vst [vmem:[#allocation2 + $0x90] sm:$0xff] %v2018
      %2051 = vst [vmem:[#allocation2 + $0x98] sm:$0xff] %v2019
      %2052 = vst [vmem:[#allocation2 + $0xa0] sm:$0xff] %v2020
      %2053 = vst [vmem:[#allocation2 + $0xa8] sm:$0xff] %v2021
      %2054 = vst [vmem:[#allocation2 + $0xb0] sm:$0xff] %v2022
      %2055 = vst [vmem:[#allocation2 + $0xb8] sm:$0xff] %v2023
      %2056 = vst [vmem:[#allocation2 + $0xc0] sm:$0xff] %v2024
      %2057 = vst [vmem:[#allocation2 + $0xc8] sm:$0xff] %v2025
      %2058 = vst [vmem:[#allocation2 + $0xd0] sm:$0xff] %v2026
      %2059 = vst [vmem:[#allocation2 + $0xd8] sm:$0xff] %v2027
      %2060 = vst [vmem:[#allocation2 + $0xe0] sm:$0xff] %v2028
      %2061 = vst [vmem:[#allocation2 + $0xe8] sm:$0xff] %v2029
      %2062 = vst [vmem:[#allocation2 + $0xf0] sm:$0xff] %v2030
      %2063 = vst [vmem:[#allocation2 + $0xf8] sm:$0xff] %v2031
      %v2064 = vld [vmem:[%s1323 + $0x2] sm:$0xff]
      %v2065 = vld [vmem:[%s1323 + $0xa] sm:$0xff]
      %v2066 = vld [vmem:[%s1323 + $0x1a] sm:$0xff]
      %v2067 = vld [vmem:[%s1323 + $0x22] sm:$0xff]
      %v2068 = vld [vmem:[%s1323 + $0x32] sm:$0xff]
      %v2069 = vld [vmem:[%s1323 + $0x3a] sm:$0xff]
      %v2070 = vld [vmem:[%s1323 + $0x4a] sm:$0xff]
      %v2071 = vld [vmem:[%s1323 + $0x52] sm:$0xff]
      %v2072 = vld [vmem:[%s1323 + $0x62] sm:$0xff]
      %v2073 = vld [vmem:[%s1323 + $0x6a] sm:$0xff]
      %v2074 = vld [vmem:[%s1323 + $0x7a] sm:$0xff]
      %v2075 = vld [vmem:[%s1323 + $0x82] sm:$0xff]
      %v2076 = vld [vmem:[%s1323 + $0x92] sm:$0xff]
      %v2077 = vld [vmem:[%s1323 + $0x9a] sm:$0xff]
      %v2078 = vld [vmem:[%s1323 + $0xaa] sm:$0xff]
      %v2079 = vld [vmem:[%s1323 + $0xb2] sm:$0xff]
      %v2080 = vld [vmem:[%s1323 + $0xc2] sm:$0xff]
      %v2081 = vld [vmem:[%s1323 + $0xca] sm:$0xff]
      %v2082 = vld [vmem:[%s1323 + $0xda] sm:$0xff]
      %v2083 = vld [vmem:[%s1323 + $0xe2] sm:$0xff]
      %v2084 = vld [vmem:[%s1323 + $0xf2] sm:$0xff]
      %v2085 = vld [vmem:[%s1323 + $0xfa] sm:$0xff]
      %v2086 = vld [vmem:[%s1323 + $0x10a] sm:$0xff]
      %v2087 = vld [vmem:[%s1323 + $0x112] sm:$0xff]
      %v2088 = vld [vmem:[%s1323 + $0x122] sm:$0xff]
      %v2089 = vld [vmem:[%s1323 + $0x12a] sm:$0xff]
      %v2090 = vld [vmem:[%s1323 + $0x13a] sm:$0xff]
      %v2091 = vld [vmem:[%s1323 + $0x142] sm:$0xff]
      %v2092 = vld [vmem:[%s1323 + $0x152] sm:$0xff]
      %v2093 = vld [vmem:[%s1323 + $0x15a] sm:$0xff]
      %v2094 = vld [vmem:[%s1323 + $0x16a] sm:$0xff]
      %v2095 = vld [vmem:[%s1323 + $0x172] sm:$0xff]
      %v2096 = vld [vmem:[#allocation2] sm:$0xff]
      %v2097 = vld [vmem:[#allocation2 + $0x8] sm:$0xff]
      %v2098 = vld [vmem:[#allocation2 + $0x10] sm:$0xff]
      %v2099 = vld [vmem:[#allocation2 + $0x18] sm:$0xff]
      %v2100 = vld [vmem:[#allocation2 + $0x20] sm:$0xff]
      %v2101 = vld [vmem:[#allocation2 + $0x28] sm:$0xff]
      %v2102 = vld [vmem:[#allocation2 + $0x30] sm:$0xff]
      %v2103 = vld [vmem:[#allocation2 + $0x38] sm:$0xff]
      %v2104 = vld [vmem:[#allocation2 + $0x40] sm:$0xff]
      %v2105 = vld [vmem:[#allocation2 + $0x48] sm:$0xff]
      %v2106 = vld [vmem:[#allocation2 + $0x50] sm:$0xff]
      %v2107 = vld [vmem:[#allocation2 + $0x58] sm:$0xff]
      %v2108 = vld [vmem:[#allocation2 + $0x60] sm:$0xff]
      %v2109 = vld [vmem:[#allocation2 + $0x68] sm:$0xff]
      %v2110 = vld [vmem:[#allocation2 + $0x70] sm:$0xff]
      %v2111 = vld [vmem:[#allocation2 + $0x78] sm:$0xff]
      %v2112 = vld [vmem:[#allocation2 + $0x80] sm:$0xff]
      %v2113 = vld [vmem:[#allocation2 + $0x88] sm:$0xff]
      %v2114 = vld [vmem:[#allocation2 + $0x90] sm:$0xff]
      %v2115 = vld [vmem:[#allocation2 + $0x98] sm:$0xff]
      %v2116 = vld [vmem:[#allocation2 + $0xa0] sm:$0xff]
      %v2117 = vld [vmem:[#allocation2 + $0xa8] sm:$0xff]
      %v2118 = vld [vmem:[#allocation2 + $0xb0] sm:$0xff]
      %v2119 = vld [vmem:[#allocation2 + $0xb8] sm:$0xff]
      %v2120 = vld [vmem:[#allocation2 + $0xc0] sm:$0xff]
      %v2121 = vld [vmem:[#allocation2 + $0xc8] sm:$0xff]
      %v2122 = vld [vmem:[#allocation2 + $0xd0] sm:$0xff]
      %v2123 = vld [vmem:[#allocation2 + $0xd8] sm:$0xff]
      %v2124 = vld [vmem:[#allocation2 + $0xe0] sm:$0xff]
      %v2125 = vld [vmem:[#allocation2 + $0xe8] sm:$0xff]
      %v2126 = vld [vmem:[#allocation2 + $0xf0] sm:$0xff]
      %v2127 = vld [vmem:[#allocation2 + $0xf8] sm:$0xff]
      %s2128 = scalar_lea.vmem %s1, 640
      %v2129 = vld [vmem:[%s2128] sm:$0xff]
      %v2130 = vld [vmem:[%s2128 + $0x8] sm:$0xff]
      %v2131 = vld [vmem:[%s2128 + $0x10] sm:$0xff]
      %v2132 = vld [vmem:[%s2128 + $0x18] sm:$0xff]
      %v2133 = vld [vmem:[%s2128 + $0x20] sm:$0xff]
      %v2134 = vld [vmem:[%s2128 + $0x28] sm:$0xff]
      %v2135 = vld [vmem:[%s2128 + $0x30] sm:$0xff]
      %v2136 = vld [vmem:[%s2128 + $0x38] sm:$0xff]
      %v2137 = vld [vmem:[%s2128 + $0x40] sm:$0xff]
      %v2138 = vld [vmem:[%s2128 + $0x48] sm:$0xff]
      %v2139 = vld [vmem:[%s2128 + $0x50] sm:$0xff]
      %v2140 = vld [vmem:[%s2128 + $0x58] sm:$0xff]
      %v2141 = vld [vmem:[%s2128 + $0x60] sm:$0xff]
      %v2142 = vld [vmem:[%s2128 + $0x68] sm:$0xff]
      %v2143 = vld [vmem:[%s2128 + $0x70] sm:$0xff]
      %v2144 = vld [vmem:[%s2128 + $0x78] sm:$0xff]
      %2145 = vmatprep.subr.mxu0 0.0
      %2146 = vmatpush1.msra.mxu0 %v2129
      %2147 = vmatprep.subr.mxu0 0.0
      %2148 = vmatpush1.msra.mxu0 %v2130
      %2149 = vmatprep.subr.mxu0 0.0
      %2150 = vmatpush1.msra.mxu0 %v2131
      %2151 = vmatprep.subr.mxu0 0.0
      %2152 = vmatpush1.msra.mxu0 %v2132
      %2153 = vmatprep.subr.mxu0 0.0
      %2154 = vmatpush1.msra.mxu0 %v2133
      %2155 = vmatprep.subr.mxu0 0.0
      %2156 = vmatpush1.msra.mxu0 %v2134
      %2157 = vmatprep.subr.mxu0 0.0
      %2158 = vmatpush1.msra.mxu0 %v2135
      %2159 = vmatprep.subr.mxu0 0.0
      %2160 = vmatpush1.msra.mxu0 %v2136
      %2161 = vmatprep.subr.mxu0 0.0
      %2162 = vmatpush1.msra.mxu0 %v2137
      %2163 = vmatprep.subr.mxu0 0.0
      %2164 = vmatpush1.msra.mxu0 %v2138
      %2165 = vmatprep.subr.mxu0 0.0
      %2166 = vmatpush1.msra.mxu0 %v2139
      %2167 = vmatprep.subr.mxu0 0.0
      %2168 = vmatpush1.msra.mxu0 %v2140
      %2169 = vmatprep.subr.mxu0 0.0
      %2170 = vmatpush1.msra.mxu0 %v2141
      %2171 = vmatprep.subr.mxu0 0.0
      %2172 = vmatpush1.msra.mxu0 %v2142
      %2173 = vmatprep.subr.mxu0 0.0
      %2174 = vmatpush1.msra.mxu0 %v2143
      %2175 = vmatprep.subr.mxu0 0.0
      %2176 = vmatpush1.msra.mxu0 %v2144
      %2177 = vmatprep.subr.mxu0 0.0
      %2178 = vmatpush1.msra.mxu0 0.0
      %2179 = vmatprep.subr.mxu0 0.0
      %2180 = vmatpush1.msra.mxu0 0.0
      %2181 = vmatprep.subr.mxu0 0.0
      %2182 = vmatpush1.msra.mxu0 0.0
      %2183 = vmatprep.subr.mxu0 0.0
      %2184 = vmatpush1.msra.mxu0 0.0
      %2185 = vmatprep.subr.mxu0 0.0
      %2186 = vmatpush1.msra.mxu0 0.0
      %2187 = vmatprep.subr.mxu0 0.0
      %2188 = vmatpush1.msra.mxu0 0.0
      %2189 = vmatprep.subr.mxu0 0.0
      %2190 = vmatpush1.msra.mxu0 0.0
      %2191 = vmatprep.subr.mxu0 0.0
      %2192 = vmatpush1.msra.mxu0 0.0
      %2193 = vmatprep.subr.mxu0 0.0
      %2194 = vmatpush1.msra.mxu0 0.0
      %2195 = vmatprep.subr.mxu0 0.0
      %2196 = vmatpush1.msra.mxu0 0.0
      %2197 = vmatprep.subr.mxu0 0.0
      %2198 = vmatpush1.msra.mxu0 0.0
      %2199 = vmatprep.subr.mxu0 0.0
      %2200 = vmatpush1.msra.mxu0 0.0
      %2201 = vmatprep.subr.mxu0 0.0
      %2202 = vmatpush1.msra.mxu0 0.0
      %2203 = vmatprep.subr.mxu0 0.0
      %2204 = vmatpush1.msra.mxu0 0.0
      %2205 = vmatprep.subr.mxu0 0.0
      %2206 = vmatpush1.msra.mxu0 0.0
      %2207 = vmatprep.subr.mxu0 0.0
      %2208 = vmatpush1.msra.mxu0 0.0
      %2209 = vmatprep.mubr.f32.mxu0 0.0
      %2210 = vmatmul.mubr.f32.gmra.mrb[0].mxu0 %v2064
      %v2211 = vpop.f32.mrb[0].mxu0
      %v2212 = vadd.f32 0.0, %v2211
      %v2213 = vpop.f32.mrb[0].mxu0
      %2214 = vmatprep.mubr.f32.mxu0 0.0
      %2215 = vmatmul.mubr.f32.gmra.mrb[0].mxu0 %v2065
      %v2216 = vpop.f32.mrb[0].mxu0
      %v2217 = vadd.f32 0.0, %v2216
      %v2218 = vpop.f32.mrb[0].mxu0
      %2219 = vmatprep.mubr.f32.mxu0 0.0
      %2220 = vmatmul.mubr.f32.gmra.mrb[0].mxu0 %v2066
      %v2221 = vpop.f32.mrb[0].mxu0
      %v2222 = vadd.f32 0.0, %v2221
      %v2223 = vpop.f32.mrb[0].mxu0
      %2224 = vmatprep.mubr.f32.mxu0 0.0
      %2225 = vmatmul.mubr.f32.gmra.mrb[0].mxu0 %v2067
      %v2226 = vpop.f32.mrb[0].mxu0
      %v2227 = vadd.f32 0.0, %v2226
      %v2228 = vpop.f32.mrb[0].mxu0
      %2229 = vmatprep.mubr.f32.mxu0 0.0
      %2230 = vmatmul.mubr.f32.gmra.mrb[0].mxu0 %v2068
      %v2231 = vpop.f32.mrb[0].mxu0
      %v2232 = vadd.f32 0.0, %v2231
      %v2233 = vpop.f32.mrb[0].mxu0
      %2234 = vmatprep.mubr.f32.mxu0 0.0
      %2235 = vmatmul.mubr.f32.gmra.mrb[0].mxu0 %v2069
      %v2236 = vpop.f32.mrb[0].mxu0
      %v2237 = vadd.f32 0.0, %v2236
      %v2238 = vpop.f32.mrb[0].mxu0
      %2239 = vmatprep.mubr.f32.mxu0 0.0
      %2240 = vmatmul.mubr.f32.gmra.mrb[0].mxu0 %v2070
      %v2241 = vpop.f32.mrb[0].mxu0
      %v2242 = vadd.f32 0.0, %v2241
      %v2243 = vpop.f32.mrb[0].mxu0
      %2244 = vmatprep.mubr.f32.mxu0 0.0
      %2245 = vmatmul.mubr.f32.gmra.mrb[0].mxu0 %v2071
      %v2246 = vpop.f32.mrb[0].mxu0
      %v2247 = vadd.f32 0.0, %v2246
      %v2248 = vpop.f32.mrb[0].mxu0
      %2249 = vmatprep.mubr.f32.mxu0 0.0
      %2250 = vmatmul.mubr.f32.gmra.mrb[0].mxu0 %v2072
      %v2251 = vpop.f32.mrb[0].mxu0
      %v2252 = vadd.f32 0.0, %v2251
      %v2253 = vpop.f32.mrb[0].mxu0
      %2254 = vmatprep.mubr.f32.mxu0 0.0
      %2255 = vmatmul.mubr.f32.gmra.mrb[0].mxu0 %v2073
      %v2256 = vpop.f32.mrb[0].mxu0
      %v2257 = vadd.f32 0.0, %v2256
      %v2258 = vpop.f32.mrb[0].mxu0
      %2259 = vmatprep.mubr.f32.mxu0 0.0
      %2260 = vmatmul.mubr.f32.gmra.mrb[0].mxu0 %v2074
      %v2261 = vpop.f32.mrb[0].mxu0
      %v2262 = vadd.f32 0.0, %v2261
      %v2263 = vpop.f32.mrb[0].mxu0
      %2264 = vmatprep.mubr.f32.mxu0 0.0
      %2265 = vmatmul.mubr.f32.gmra.mrb[0].mxu0 %v2075
      %v2266 = vpop.f32.mrb[0].mxu0
      %v2267 = vadd.f32 0.0, %v2266
      %v2268 = vpop.f32.mrb[0].mxu0
      %2269 = vmatprep.mubr.f32.mxu0 0.0
      %2270 = vmatmul.mubr.f32.gmra.mrb[0].mxu0 %v2076
      %v2271 = vpop.f32.mrb[0].mxu0
      %v2272 = vadd.f32 0.0, %v2271
      %v2273 = vpop.f32.mrb[0].mxu0
      %2274 = vmatprep.mubr.f32.mxu0 0.0
      %2275 = vmatmul.mubr.f32.gmra.mrb[0].mxu0 %v2077
      %v2276 = vpop.f32.mrb[0].mxu0
      %v2277 = vadd.f32 0.0, %v2276
      %v2278 = vpop.f32.mrb[0].mxu0
      %2279 = vmatprep.mubr.f32.mxu0 0.0
      %2280 = vmatmul.mubr.f32.gmra.mrb[0].mxu0 %v2078
      %v2281 = vpop.f32.mrb[0].mxu0
      %v2282 = vadd.f32 0.0, %v2281
      %v2283 = vpop.f32.mrb[0].mxu0
      %2284 = vmatprep.mubr.f32.mxu0 0.0
      %2285 = vmatmul.mubr.f32.gmra.mrb[0].mxu0 %v2079
      %v2286 = vpop.f32.mrb[0].mxu0
      %v2287 = vadd.f32 0.0, %v2286
      %v2288 = vpop.f32.mrb[0].mxu0
      %2289 = vmatprep.mubr.f32.mxu0 0.0
      %2290 = vmatmul.mubr.f32.gmra.mrb[0].mxu0 %v2080
      %v2291 = vpop.f32.mrb[0].mxu0
      %v2292 = vadd.f32 0.0, %v2291
      %v2293 = vpop.f32.mrb[0].mxu0
      %2294 = vmatprep.mubr.f32.mxu0 0.0
      %2295 = vmatmul.mubr.f32.gmra.mrb[0].mxu0 %v2081
      %v2296 = vpop.f32.mrb[0].mxu0
      %v2297 = vadd.f32 0.0, %v2296
      %v2298 = vpop.f32.mrb[0].mxu0
      %2299 = vmatprep.mubr.f32.mxu0 0.0
      %2300 = vmatmul.mubr.f32.gmra.mrb[0].mxu0 %v2082
      %v2301 = vpop.f32.mrb[0].mxu0
      %v2302 = vadd.f32 0.0, %v2301
      %v2303 = vpop.f32.mrb[0].mxu0
      %2304 = vmatprep.mubr.f32.mxu0 0.0
      %2305 = vmatmul.mubr.f32.gmra.mrb[0].mxu0 %v2083
      %v2306 = vpop.f32.mrb[0].mxu0
      %v2307 = vadd.f32 0.0, %v2306
      %v2308 = vpop.f32.mrb[0].mxu0
      %2309 = vmatprep.mubr.f32.mxu0 0.0
      %2310 = vmatmul.mubr.f32.gmra.mrb[0].mxu0 %v2084
      %v2311 = vpop.f32.mrb[0].mxu0
      %v2312 = vadd.f32 0.0, %v2311
      %v2313 = vpop.f32.mrb[0].mxu0
      %2314 = vmatprep.mubr.f32.mxu0 0.0
      %2315 = vmatmul.mubr.f32.gmra.mrb[0].mxu0 %v2085
      %v2316 = vpop.f32.mrb[0].mxu0
      %v2317 = vadd.f32 0.0, %v2316
      %v2318 = vpop.f32.mrb[0].mxu0
      %2319 = vmatprep.mubr.f32.mxu0 0.0
      %2320 = vmatmul.mubr.f32.gmra.mrb[0].mxu0 %v2086
      %v2321 = vpop.f32.mrb[0].mxu0
      %v2322 = vadd.f32 0.0, %v2321
      %v2323 = vpop.f32.mrb[0].mxu0
      %2324 = vmatprep.mubr.f32.mxu0 0.0
      %2325 = vmatmul.mubr.f32.gmra.mrb[0].mxu0 %v2087
      %v2326 = vpop.f32.mrb[0].mxu0
      %v2327 = vadd.f32 0.0, %v2326
      %v2328 = vpop.f32.mrb[0].mxu0
      %2329 = vmatprep.mubr.f32.mxu0 0.0
      %2330 = vmatmul.mubr.f32.gmra.mrb[0].mxu0 %v2088
      %v2331 = vpop.f32.mrb[0].mxu0
      %v2332 = vadd.f32 0.0, %v2331
      %v2333 = vpop.f32.mrb[0].mxu0
      %2334 = vmatprep.mubr.f32.mxu0 0.0
      %2335 = vmatmul.mubr.f32.gmra.mrb[0].mxu0 %v2089
      %v2336 = vpop.f32.mrb[0].mxu0
      %v2337 = vadd.f32 0.0, %v2336
      %v2338 = vpop.f32.mrb[0].mxu0
      %2339 = vmatprep.mubr.f32.mxu0 0.0
      %2340 = vmatmul.mubr.f32.gmra.mrb[0].mxu0 %v2090
      %v2341 = vpop.f32.mrb[0].mxu0
      %v2342 = vadd.f32 0.0, %v2341
      %v2343 = vpop.f32.mrb[0].mxu0
      %2344 = vmatprep.mubr.f32.mxu0 0.0
      %2345 = vmatmul.mubr.f32.gmra.mrb[0].mxu0 %v2091
      %v2346 = vpop.f32.mrb[0].mxu0
      %v2347 = vadd.f32 0.0, %v2346
      %v2348 = vpop.f32.mrb[0].mxu0
      %2349 = vmatprep.mubr.f32.mxu0 0.0
      %2350 = vmatmul.mubr.f32.gmra.mrb[0].mxu0 %v2092
      %v2351 = vpop.f32.mrb[0].mxu0
      %v2352 = vadd.f32 0.0, %v2351
      %v2353 = vpop.f32.mrb[0].mxu0
      %2354 = vmatprep.mubr.f32.mxu0 0.0
      %2355 = vmatmul.mubr.f32.gmra.mrb[0].mxu0 %v2093
      %v2356 = vpop.f32.mrb[0].mxu0
      %v2357 = vadd.f32 0.0, %v2356
      %v2358 = vpop.f32.mrb[0].mxu0
      %2359 = vmatprep.mubr.f32.mxu0 0.0
      %2360 = vmatmul.mubr.f32.gmra.mrb[0].mxu0 %v2094
      %v2361 = vpop.f32.mrb[0].mxu0
      %v2362 = vadd.f32 0.0, %v2361
      %v2363 = vpop.f32.mrb[0].mxu0
      %2364 = vmatprep.mubr.f32.mxu0 0.0
      %2365 = vmatmul.mubr.f32.gmra.mrb[0].mxu0 %v2095
      %v2366 = vpop.f32.mrb[0].mxu0
      %v2367 = vadd.f32 0.0, %v2366
      %v2368 = vpop.f32.mrb[0].mxu0
      %2369 = vdwg.mxu0
      %v2370 = vadd.f32 %v2096, %v2212
      %v2371 = vadd.f32 %v2097, %v2217
      %v2372 = vadd.f32 %v2098, %v2222
      %v2373 = vadd.f32 %v2099, %v2227
      %v2374 = vadd.f32 %v2100, %v2232
      %v2375 = vadd.f32 %v2101, %v2237
      %v2376 = vadd.f32 %v2102, %v2242
      %v2377 = vadd.f32 %v2103, %v2247
      %v2378 = vadd.f32 %v2104, %v2252
      %v2379 = vadd.f32 %v2105, %v2257
      %v2380 = vadd.f32 %v2106, %v2262
      %v2381 = vadd.f32 %v2107, %v2267
      %v2382 = vadd.f32 %v2108, %v2272
      %v2383 = vadd.f32 %v2109, %v2277
      %v2384 = vadd.f32 %v2110, %v2282
      %v2385 = vadd.f32 %v2111, %v2287
      %v2386 = vadd.f32 %v2112, %v2292
      %v2387 = vadd.f32 %v2113, %v2297
      %v2388 = vadd.f32 %v2114, %v2302
      %v2389 = vadd.f32 %v2115, %v2307
      %v2390 = vadd.f32 %v2116, %v2312
      %v2391 = vadd.f32 %v2117, %v2317
      %v2392 = vadd.f32 %v2118, %v2322
      %v2393 = vadd.f32 %v2119, %v2327
      %v2394 = vadd.f32 %v2120, %v2332
      %v2395 = vadd.f32 %v2121, %v2337
      %v2396 = vadd.f32 %v2122, %v2342
      %v2397 = vadd.f32 %v2123, %v2347
      %v2398 = vadd.f32 %v2124, %v2352
      %v2399 = vadd.f32 %v2125, %v2357
      %v2400 = vadd.f32 %v2126, %v2362
      %v2401 = vadd.f32 %v2127, %v2367
      %2402 = vst [vmem:[#allocation2] sm:$0xff] %v2370
      %2403 = vst [vmem:[#allocation2 + $0x8] sm:$0xff] %v2371
      %2404 = vst [vmem:[#allocation2 + $0x10] sm:$0xff] %v2372
      %2405 = vst [vmem:[#allocation2 + $0x18] sm:$0xff] %v2373
      %2406 = vst [vmem:[#allocation2 + $0x20] sm:$0xff] %v2374
      %2407 = vst [vmem:[#allocation2 + $0x28] sm:$0xff] %v2375
      %2408 = vst [vmem:[#allocation2 + $0x30] sm:$0xff] %v2376
      %2409 = vst [vmem:[#allocation2 + $0x38] sm:$0xff] %v2377
      %2410 = vst [vmem:[#allocation2 + $0x40] sm:$0xff] %v2378
      %2411 = vst [vmem:[#allocation2 + $0x48] sm:$0xff] %v2379
      %2412 = vst [vmem:[#allocation2 + $0x50] sm:$0xff] %v2380
      %2413 = vst [vmem:[#allocation2 + $0x58] sm:$0xff] %v2381
      %2414 = vst [vmem:[#allocation2 + $0x60] sm:$0xff] %v2382
      %2415 = vst [vmem:[#allocation2 + $0x68] sm:$0xff] %v2383
      %2416 = vst [vmem:[#allocation2 + $0x70] sm:$0xff] %v2384
      %2417 = vst [vmem:[#allocation2 + $0x78] sm:$0xff] %v2385
      %2418 = vst [vmem:[#allocation2 + $0x80] sm:$0xff] %v2386
      %2419 = vst [vmem:[#allocation2 + $0x88] sm:$0xff] %v2387
      %2420 = vst [vmem:[#allocation2 + $0x90] sm:$0xff] %v2388
      %2421 = vst [vmem:[#allocation2 + $0x98] sm:$0xff] %v2389
      %2422 = vst [vmem:[#allocation2 + $0xa0] sm:$0xff] %v2390
      %2423 = vst [vmem:[#allocation2 + $0xa8] sm:$0xff] %v2391
      %2424 = vst [vmem:[#allocation2 + $0xb0] sm:$0xff] %v2392
      %2425 = vst [vmem:[#allocation2 + $0xb8] sm:$0xff] %v2393
      %2426 = vst [vmem:[#allocation2 + $0xc0] sm:$0xff] %v2394
      %2427 = vst [vmem:[#allocation2 + $0xc8] sm:$0xff] %v2395
      %2428 = vst [vmem:[#allocation2 + $0xd0] sm:$0xff] %v2396
      %2429 = vst [vmem:[#allocation2 + $0xd8] sm:$0xff] %v2397
      %2430 = vst [vmem:[#allocation2 + $0xe0] sm:$0xff] %v2398
      %2431 = vst [vmem:[#allocation2 + $0xe8] sm:$0xff] %v2399
      %2432 = vst [vmem:[#allocation2 + $0xf0] sm:$0xff] %v2400
      %2433 = vst [vmem:[#allocation2 + $0xf8] sm:$0xff] %v2401
      %s2434 = scalar_lea.vmem %s172, 48
      %v2435 = vld [vmem:[%s2434] sm:$0xff]
      %v2436 = vld [vmem:[%s2434 + $0x8] sm:$0xff]
      %v2437 = vld [vmem:[%s2434 + $0x18] sm:$0xff]
      %v2438 = vld [vmem:[%s2434 + $0x20] sm:$0xff]
      %v2439 = vld [vmem:[%s2434 + $0x30] sm:$0xff]
      %v2440 = vld [vmem:[%s2434 + $0x38] sm:$0xff]
      %v2441 = vld [vmem:[%s2434 + $0x48] sm:$0xff]
      %v2442 = vld [vmem:[%s2434 + $0x50] sm:$0xff]
      %v2443 = vld [vmem:[%s2434 + $0x60] sm:$0xff]
      %v2444 = vld [vmem:[%s2434 + $0x68] sm:$0xff]
      %v2445 = vld [vmem:[%s2434 + $0x78] sm:$0xff]
      %v2446 = vld [vmem:[%s2434 + $0x80] sm:$0xff]
      %v2447 = vld [vmem:[%s2434 + $0x90] sm:$0xff]
      %v2448 = vld [vmem:[%s2434 + $0x98] sm:$0xff]
      %v2449 = vld [vmem:[%s2434 + $0xa8] sm:$0xff]
      %v2450 = vld [vmem:[%s2434 + $0xb0] sm:$0xff]
      %v2451 = vld [vmem:[%s2434 + $0xc0] sm:$0xff]
      %v2452 = vld [vmem:[%s2434 + $0xc8] sm:$0xff]
      %v2453 = vld [vmem:[%s2434 + $0xd8] sm:$0xff]
      %v2454 = vld [vmem:[%s2434 + $0xe0] sm:$0xff]
      %v2455 = vld [vmem:[%s2434 + $0xf0] sm:$0xff]
      %v2456 = vld [vmem:[%s2434 + $0xf8] sm:$0xff]
      %v2457 = vld [vmem:[%s2434 + $0x108] sm:$0xff]
      %v2458 = vld [vmem:[%s2434 + $0x110] sm:$0xff]
      %v2459 = vld [vmem:[%s2434 + $0x120] sm:$0xff]
      %v2460 = vld [vmem:[%s2434 + $0x128] sm:$0xff]
      %v2461 = vld [vmem:[%s2434 + $0x138] sm:$0xff]
      %v2462 = vld [vmem:[%s2434 + $0x140] sm:$0xff]
      %v2463 = vld [vmem:[%s2434 + $0x150] sm:$0xff]
      %v2464 = vld [vmem:[%s2434 + $0x158] sm:$0xff]
      %v2465 = vld [vmem:[%s2434 + $0x168] sm:$0xff]
      %v2466 = vld [vmem:[%s2434 + $0x170] sm:$0xff]
      %v2467 = vld [vmem:[#allocation2] sm:$0xff]
      %v2468 = vld [vmem:[#allocation2 + $0x8] sm:$0xff]
      %v2469 = vld [vmem:[#allocation2 + $0x10] sm:$0xff]
      %v2470 = vld [vmem:[#allocation2 + $0x18] sm:$0xff]
      %v2471 = vld [vmem:[#allocation2 + $0x20] sm:$0xff]
      %v2472 = vld [vmem:[#allocation2 + $0x28] sm:$0xff]
      %v2473 = vld [vmem:[#allocation2 + $0x30] sm:$0xff]
      %v2474 = vld [vmem:[#allocation2 + $0x38] sm:$0xff]
      %v2475 = vld [vmem:[#allocation2 + $0x40] sm:$0xff]
      %v2476 = vld [vmem:[#allocation2 + $0x48] sm:$0xff]
      %v2477 = vld [vmem:[#allocation2 + $0x50] sm:$0xff]
      %v2478 = vld [vmem:[#allocation2 + $0x58] sm:$0xff]
      %v2479 = vld [vmem:[#allocation2 + $0x60] sm:$0xff]
      %v2480 = vld [vmem:[#allocation2 + $0x68] sm:$0xff]
      %v2481 = vld [vmem:[#allocation2 + $0x70] sm:$0xff]
      %v2482 = vld [vmem:[#allocation2 + $0x78] sm:$0xff]
      %v2483 = vld [vmem:[#allocation2 + $0x80] sm:$0xff]
      %v2484 = vld [vmem:[#allocation2 + $0x88] sm:$0xff]
      %v2485 = vld [vmem:[#allocation2 + $0x90] sm:$0xff]
      %v2486 = vld [vmem:[#allocation2 + $0x98] sm:$0xff]
      %v2487 = vld [vmem:[#allocation2 + $0xa0] sm:$0xff]
      %v2488 = vld [vmem:[#allocation2 + $0xa8] sm:$0xff]
      %v2489 = vld [vmem:[#allocation2 + $0xb0] sm:$0xff]
      %v2490 = vld [vmem:[#allocation2 + $0xb8] sm:$0xff]
      %v2491 = vld [vmem:[#allocation2 + $0xc0] sm:$0xff]
      %v2492 = vld [vmem:[#allocation2 + $0xc8] sm:$0xff]
      %v2493 = vld [vmem:[#allocation2 + $0xd0] sm:$0xff]
      %v2494 = vld [vmem:[#allocation2 + $0xd8] sm:$0xff]
      %v2495 = vld [vmem:[#allocation2 + $0xe0] sm:$0xff]
      %v2496 = vld [vmem:[#allocation2 + $0xe8] sm:$0xff]
      %v2497 = vld [vmem:[#allocation2 + $0xf0] sm:$0xff]
      %v2498 = vld [vmem:[#allocation2 + $0xf8] sm:$0xff]
      %s2499 = scalar_lea.vmem %s1, 768
      %v2500 = vld [vmem:[%s2499] sm:$0xff]
      %v2501 = vld [vmem:[%s2499 + $0x8] sm:$0xff]
      %v2502 = vld [vmem:[%s2499 + $0x10] sm:$0xff]
      %v2503 = vld [vmem:[%s2499 + $0x18] sm:$0xff]
      %v2504 = vld [vmem:[%s2499 + $0x20] sm:$0xff]
      %v2505 = vld [vmem:[%s2499 + $0x28] sm:$0xff]
      %v2506 = vld [vmem:[%s2499 + $0x30] sm:$0xff]
      %v2507 = vld [vmem:[%s2499 + $0x38] sm:$0xff]
      %v2508 = vld [vmem:[%s2499 + $0x40] sm:$0xff]
      %v2509 = vld [vmem:[%s2499 + $0x48] sm:$0xff]
      %v2510 = vld [vmem:[%s2499 + $0x50] sm:$0xff]
      %v2511 = vld [vmem:[%s2499 + $0x58] sm:$0xff]
      %v2512 = vld [vmem:[%s2499 + $0x60] sm:$0xff]
      %v2513 = vld [vmem:[%s2499 + $0x68] sm:$0xff]
      %v2514 = vld [vmem:[%s2499 + $0x70] sm:$0xff]
      %v2515 = vld [vmem:[%s2499 + $0x78] sm:$0xff]
      %2516 = vmatprep.subr.mxu0 0.0
      %2517 = vmatpush1.msra.mxu0 %v2500
      %2518 = vmatprep.subr.mxu0 0.0
      %2519 = vmatpush1.msra.mxu0 %v2501
      %2520 = vmatprep.subr.mxu0 0.0
      %2521 = vmatpush1.msra.mxu0 %v2502
      %2522 = vmatprep.subr.mxu0 0.0
      %2523 = vmatpush1.msra.mxu0 %v2503
      %2524 = vmatprep.subr.mxu0 0.0
      %2525 = vmatpush1.msra.mxu0 %v2504
      %2526 = vmatprep.subr.mxu0 0.0
      %2527 = vmatpush1.msra.mxu0 %v2505
      %2528 = vmatprep.subr.mxu0 0.0
      %2529 = vmatpush1.msra.mxu0 %v2506
      %2530 = vmatprep.subr.mxu0 0.0
      %2531 = vmatpush1.msra.mxu0 %v2507
      %2532 = vmatprep.subr.mxu0 0.0
      %2533 = vmatpush1.msra.mxu0 %v2508
      %2534 = vmatprep.subr.mxu0 0.0
      %2535 = vmatpush1.msra.mxu0 %v2509
      %2536 = vmatprep.subr.mxu0 0.0
      %2537 = vmatpush1.msra.mxu0 %v2510
      %2538 = vmatprep.subr.mxu0 0.0
      %2539 = vmatpush1.msra.mxu0 %v2511
      %2540 = vmatprep.subr.mxu0 0.0
      %2541 = vmatpush1.msra.mxu0 %v2512
      %2542 = vmatprep.subr.mxu0 0.0
      %2543 = vmatpush1.msra.mxu0 %v2513
      %2544 = vmatprep.subr.mxu0 0.0
      %2545 = vmatpush1.msra.mxu0 %v2514
      %2546 = vmatprep.subr.mxu0 0.0
      %2547 = vmatpush1.msra.mxu0 %v2515
      %2548 = vmatprep.subr.mxu0 0.0
      %2549 = vmatpush1.msra.mxu0 0.0
      %2550 = vmatprep.subr.mxu0 0.0
      %2551 = vmatpush1.msra.mxu0 0.0
      %2552 = vmatprep.subr.mxu0 0.0
      %2553 = vmatpush1.msra.mxu0 0.0
      %2554 = vmatprep.subr.mxu0 0.0
      %2555 = vmatpush1.msra.mxu0 0.0
      %2556 = vmatprep.subr.mxu0 0.0
      %2557 = vmatpush1.msra.mxu0 0.0
      %2558 = vmatprep.subr.mxu0 0.0
      %2559 = vmatpush1.msra.mxu0 0.0
      %2560 = vmatprep.subr.mxu0 0.0
      %2561 = vmatpush1.msra.mxu0 0.0
      %2562 = vmatprep.subr.mxu0 0.0
      %2563 = vmatpush1.msra.mxu0 0.0
      %2564 = vmatprep.subr.mxu0 0.0
      %2565 = vmatpush1.msra.mxu0 0.0
      %2566 = vmatprep.subr.mxu0 0.0
      %2567 = vmatpush1.msra.mxu0 0.0
      %2568 = vmatprep.subr.mxu0 0.0
      %2569 = vmatpush1.msra.mxu0 0.0
      %2570 = vmatprep.subr.mxu0 0.0
      %2571 = vmatpush1.msra.mxu0 0.0
      %2572 = vmatprep.subr.mxu0 0.0
      %2573 = vmatpush1.msra.mxu0 0.0
      %2574 = vmatprep.subr.mxu0 0.0
      %2575 = vmatpush1.msra.mxu0 0.0
      %2576 = vmatprep.subr.mxu0 0.0
      %2577 = vmatpush1.msra.mxu0 0.0
      %2578 = vmatprep.subr.mxu0 0.0
      %2579 = vmatpush1.msra.mxu0 0.0
      %2580 = vmatprep.mubr.f32.mxu0 0.0
      %2581 = vmatmul.mubr.f32.gmra.mrb[0].mxu0 %v2435
      %v2582 = vpop.f32.mrb[0].mxu0
      %v2583 = vadd.f32 0.0, %v2582
      %v2584 = vpop.f32.mrb[0].mxu0
      %2585 = vmatprep.mubr.f32.mxu0 0.0
      %2586 = vmatmul.mubr.f32.gmra.mrb[0].mxu0 %v2436
      %v2587 = vpop.f32.mrb[0].mxu0
      %v2588 = vadd.f32 0.0, %v2587
      %v2589 = vpop.f32.mrb[0].mxu0
      %2590 = vmatprep.mubr.f32.mxu0 0.0
      %2591 = vmatmul.mubr.f32.gmra.mrb[0].mxu0 %v2437
      %v2592 = vpop.f32.mrb[0].mxu0
      %v2593 = vadd.f32 0.0, %v2592
      %v2594 = vpop.f32.mrb[0].mxu0
      %2595 = vmatprep.mubr.f32.mxu0 0.0
      %2596 = vmatmul.mubr.f32.gmra.mrb[0].mxu0 %v2438
      %v2597 = vpop.f32.mrb[0].mxu0
      %v2598 = vadd.f32 0.0, %v2597
      %v2599 = vpop.f32.mrb[0].mxu0
      %2600 = vmatprep.mubr.f32.mxu0 0.0
      %2601 = vmatmul.mubr.f32.gmra.mrb[0].mxu0 %v2439
      %v2602 = vpop.f32.mrb[0].mxu0
      %v2603 = vadd.f32 0.0, %v2602
      %v2604 = vpop.f32.mrb[0].mxu0
      %2605 = vmatprep.mubr.f32.mxu0 0.0
      %2606 = vmatmul.mubr.f32.gmra.mrb[0].mxu0 %v2440
      %v2607 = vpop.f32.mrb[0].mxu0
      %v2608 = vadd.f32 0.0, %v2607
      %v2609 = vpop.f32.mrb[0].mxu0
      %2610 = vmatprep.mubr.f32.mxu0 0.0
      %2611 = vmatmul.mubr.f32.gmra.mrb[0].mxu0 %v2441
      %v2612 = vpop.f32.mrb[0].mxu0
      %v2613 = vadd.f32 0.0, %v2612
      %v2614 = vpop.f32.mrb[0].mxu0
      %2615 = vmatprep.mubr.f32.mxu0 0.0
      %2616 = vmatmul.mubr.f32.gmra.mrb[0].mxu0 %v2442
      %v2617 = vpop.f32.mrb[0].mxu0
      %v2618 = vadd.f32 0.0, %v2617
      %v2619 = vpop.f32.mrb[0].mxu0
      %2620 = vmatprep.mubr.f32.mxu0 0.0
      %2621 = vmatmul.mubr.f32.gmra.mrb[0].mxu0 %v2443
      %v2622 = vpop.f32.mrb[0].mxu0
      %v2623 = vadd.f32 0.0, %v2622
      %v2624 = vpop.f32.mrb[0].mxu0
      %2625 = vmatprep.mubr.f32.mxu0 0.0
      %2626 = vmatmul.mubr.f32.gmra.mrb[0].mxu0 %v2444
      %v2627 = vpop.f32.mrb[0].mxu0
      %v2628 = vadd.f32 0.0, %v2627
      %v2629 = vpop.f32.mrb[0].mxu0
      %2630 = vmatprep.mubr.f32.mxu0 0.0
      %2631 = vmatmul.mubr.f32.gmra.mrb[0].mxu0 %v2445
      %v2632 = vpop.f32.mrb[0].mxu0
      %v2633 = vadd.f32 0.0, %v2632
      %v2634 = vpop.f32.mrb[0].mxu0
      %2635 = vmatprep.mubr.f32.mxu0 0.0
      %2636 = vmatmul.mubr.f32.gmra.mrb[0].mxu0 %v2446
      %v2637 = vpop.f32.mrb[0].mxu0
      %v2638 = vadd.f32 0.0, %v2637
      %v2639 = vpop.f32.mrb[0].mxu0
      %2640 = vmatprep.mubr.f32.mxu0 0.0
      %2641 = vmatmul.mubr.f32.gmra.mrb[0].mxu0 %v2447
      %v2642 = vpop.f32.mrb[0].mxu0
      %v2643 = vadd.f32 0.0, %v2642
      %v2644 = vpop.f32.mrb[0].mxu0
      %2645 = vmatprep.mubr.f32.mxu0 0.0
      %2646 = vmatmul.mubr.f32.gmra.mrb[0].mxu0 %v2448
      %v2647 = vpop.f32.mrb[0].mxu0
      %v2648 = vadd.f32 0.0, %v2647
      %v2649 = vpop.f32.mrb[0].mxu0
      %2650 = vmatprep.mubr.f32.mxu0 0.0
      %2651 = vmatmul.mubr.f32.gmra.mrb[0].mxu0 %v2449
      %v2652 = vpop.f32.mrb[0].mxu0
      %v2653 = vadd.f32 0.0, %v2652
      %v2654 = vpop.f32.mrb[0].mxu0
      %2655 = vmatprep.mubr.f32.mxu0 0.0
      %2656 = vmatmul.mubr.f32.gmra.mrb[0].mxu0 %v2450
      %v2657 = vpop.f32.mrb[0].mxu0
      %v2658 = vadd.f32 0.0, %v2657
      %v2659 = vpop.f32.mrb[0].mxu0
      %2660 = vmatprep.mubr.f32.mxu0 0.0
      %2661 = vmatmul.mubr.f32.gmra.mrb[0].mxu0 %v2451
      %v2662 = vpop.f32.mrb[0].mxu0
      %v2663 = vadd.f32 0.0, %v2662
      %v2664 = vpop.f32.mrb[0].mxu0
      %2665 = vmatprep.mubr.f32.mxu0 0.0
      %2666 = vmatmul.mubr.f32.gmra.mrb[0].mxu0 %v2452
      %v2667 = vpop.f32.mrb[0].mxu0
      %v2668 = vadd.f32 0.0, %v2667
      %v2669 = vpop.f32.mrb[0].mxu0
      %2670 = vmatprep.mubr.f32.mxu0 0.0
      %2671 = vmatmul.mubr.f32.gmra.mrb[0].mxu0 %v2453
      %v2672 = vpop.f32.mrb[0].mxu0
      %v2673 = vadd.f32 0.0, %v2672
      %v2674 = vpop.f32.mrb[0].mxu0
      %2675 = vmatprep.mubr.f32.mxu0 0.0
      %2676 = vmatmul.mubr.f32.gmra.mrb[0].mxu0 %v2454
      %v2677 = vpop.f32.mrb[0].mxu0
      %v2678 = vadd.f32 0.0, %v2677
      %v2679 = vpop.f32.mrb[0].mxu0
      %2680 = vmatprep.mubr.f32.mxu0 0.0
      %2681 = vmatmul.mubr.f32.gmra.mrb[0].mxu0 %v2455
      %v2682 = vpop.f32.mrb[0].mxu0
      %v2683 = vadd.f32 0.0, %v2682
      %v2684 = vpop.f32.mrb[0].mxu0
      %2685 = vmatprep.mubr.f32.mxu0 0.0
      %2686 = vmatmul.mubr.f32.gmra.mrb[0].mxu0 %v2456
      %v2687 = vpop.f32.mrb[0].mxu0
      %v2688 = vadd.f32 0.0, %v2687
      %v2689 = vpop.f32.mrb[0].mxu0
      %2690 = vmatprep.mubr.f32.mxu0 0.0
      %2691 = vmatmul.mubr.f32.gmra.mrb[0].mxu0 %v2457
      %v2692 = vpop.f32.mrb[0].mxu0
      %v2693 = vadd.f32 0.0, %v2692
      %v2694 = vpop.f32.mrb[0].mxu0
      %2695 = vmatprep.mubr.f32.mxu0 0.0
      %2696 = vmatmul.mubr.f32.gmra.mrb[0].mxu0 %v2458
      %v2697 = vpop.f32.mrb[0].mxu0
      %v2698 = vadd.f32 0.0, %v2697
      %v2699 = vpop.f32.mrb[0].mxu0
      %2700 = vmatprep.mubr.f32.mxu0 0.0
      %2701 = vmatmul.mubr.f32.gmra.mrb[0].mxu0 %v2459
      %v2702 = vpop.f32.mrb[0].mxu0
      %v2703 = vadd.f32 0.0, %v2702
      %v2704 = vpop.f32.mrb[0].mxu0
      %2705 = vmatprep.mubr.f32.mxu0 0.0
      %2706 = vmatmul.mubr.f32.gmra.mrb[0].mxu0 %v2460
      %v2707 = vpop.f32.mrb[0].mxu0
      %v2708 = vadd.f32 0.0, %v2707
      %v2709 = vpop.f32.mrb[0].mxu0
      %2710 = vmatprep.mubr.f32.mxu0 0.0
      %2711 = vmatmul.mubr.f32.gmra.mrb[0].mxu0 %v2461
      %v2712 = vpop.f32.mrb[0].mxu0
      %v2713 = vadd.f32 0.0, %v2712
      %v2714 = vpop.f32.mrb[0].mxu0
      %2715 = vmatprep.mubr.f32.mxu0 0.0
      %2716 = vmatmul.mubr.f32.gmra.mrb[0].mxu0 %v2462
      %v2717 = vpop.f32.mrb[0].mxu0
      %v2718 = vadd.f32 0.0, %v2717
      %v2719 = vpop.f32.mrb[0].mxu0
      %2720 = vmatprep.mubr.f32.mxu0 0.0
      %2721 = vmatmul.mubr.f32.gmra.mrb[0].mxu0 %v2463
      %v2722 = vpop.f32.mrb[0].mxu0
      %v2723 = vadd.f32 0.0, %v2722
      %v2724 = vpop.f32.mrb[0].mxu0
      %2725 = vmatprep.mubr.f32.mxu0 0.0
      %2726 = vmatmul.mubr.f32.gmra.mrb[0].mxu0 %v2464
      %v2727 = vpop.f32.mrb[0].mxu0
      %v2728 = vadd.f32 0.0, %v2727
      %v2729 = vpop.f32.mrb[0].mxu0
      %2730 = vmatprep.mubr.f32.mxu0 0.0
      %2731 = vmatmul.mubr.f32.gmra.mrb[0].mxu0 %v2465
      %v2732 = vpop.f32.mrb[0].mxu0
      %v2733 = vadd.f32 0.0, %v2732
      %v2734 = vpop.f32.mrb[0].mxu0
      %2735 = vmatprep.mubr.f32.mxu0 0.0
      %2736 = vmatmul.mubr.f32.gmra.mrb[0].mxu0 %v2466
      %v2737 = vpop.f32.mrb[0].mxu0
      %v2738 = vadd.f32 0.0, %v2737
      %v2739 = vpop.f32.mrb[0].mxu0
      %2740 = vdwg.mxu0
      %v2741 = vadd.f32 %v2467, %v2583
      %v2742 = vadd.f32 %v2468, %v2588
      %v2743 = vadd.f32 %v2469, %v2593
      %v2744 = vadd.f32 %v2470, %v2598
      %v2745 = vadd.f32 %v2471, %v2603
      %v2746 = vadd.f32 %v2472, %v2608
      %v2747 = vadd.f32 %v2473, %v2613
      %v2748 = vadd.f32 %v2474, %v2618
      %v2749 = vadd.f32 %v2475, %v2623
      %v2750 = vadd.f32 %v2476, %v2628
      %v2751 = vadd.f32 %v2477, %v2633
      %v2752 = vadd.f32 %v2478, %v2638
      %v2753 = vadd.f32 %v2479, %v2643
      %v2754 = vadd.f32 %v2480, %v2648
      %v2755 = vadd.f32 %v2481, %v2653
      %v2756 = vadd.f32 %v2482, %v2658
      %v2757 = vadd.f32 %v2483, %v2663
      %v2758 = vadd.f32 %v2484, %v2668
      %v2759 = vadd.f32 %v2485, %v2673
      %v2760 = vadd.f32 %v2486, %v2678
      %v2761 = vadd.f32 %v2487, %v2683
      %v2762 = vadd.f32 %v2488, %v2688
      %v2763 = vadd.f32 %v2489, %v2693
      %v2764 = vadd.f32 %v2490, %v2698
      %v2765 = vadd.f32 %v2491, %v2703
      %v2766 = vadd.f32 %v2492, %v2708
      %v2767 = vadd.f32 %v2493, %v2713
      %v2768 = vadd.f32 %v2494, %v2718
      %v2769 = vadd.f32 %v2495, %v2723
      %v2770 = vadd.f32 %v2496, %v2728
      %v2771 = vadd.f32 %v2497, %v2733
      %v2772 = vadd.f32 %v2498, %v2738
      %2773 = vst [vmem:[#allocation2] sm:$0xff] %v2741
      %2774 = vst [vmem:[#allocation2 + $0x8] sm:$0xff] %v2742
      %2775 = vst [vmem:[#allocation2 + $0x10] sm:$0xff] %v2743
      %2776 = vst [vmem:[#allocation2 + $0x18] sm:$0xff] %v2744
      %2777 = vst [vmem:[#allocation2 + $0x20] sm:$0xff] %v2745
      %2778 = vst [vmem:[#allocation2 + $0x28] sm:$0xff] %v2746
      %2779 = vst [vmem:[#allocation2 + $0x30] sm:$0xff] %v2747
      %2780 = vst [vmem:[#allocation2 + $0x38] sm:$0xff] %v2748
      %2781 = vst [vmem:[#allocation2 + $0x40] sm:$0xff] %v2749
      %2782 = vst [vmem:[#allocation2 + $0x48] sm:$0xff] %v2750
      %2783 = vst [vmem:[#allocation2 + $0x50] sm:$0xff] %v2751
      %2784 = vst [vmem:[#allocation2 + $0x58] sm:$0xff] %v2752
      %2785 = vst [vmem:[#allocation2 + $0x60] sm:$0xff] %v2753
      %2786 = vst [vmem:[#allocation2 + $0x68] sm:$0xff] %v2754
      %2787 = vst [vmem:[#allocation2 + $0x70] sm:$0xff] %v2755
      %2788 = vst [vmem:[#allocation2 + $0x78] sm:$0xff] %v2756
      %2789 = vst [vmem:[#allocation2 + $0x80] sm:$0xff] %v2757
      %2790 = vst [vmem:[#allocation2 + $0x88] sm:$0xff] %v2758
      %2791 = vst [vmem:[#allocation2 + $0x90] sm:$0xff] %v2759
      %2792 = vst [vmem:[#allocation2 + $0x98] sm:$0xff] %v2760
      %2793 = vst [vmem:[#allocation2 + $0xa0] sm:$0xff] %v2761
      %2794 = vst [vmem:[#allocation2 + $0xa8] sm:$0xff] %v2762
      %2795 = vst [vmem:[#allocation2 + $0xb0] sm:$0xff] %v2763
      %2796 = vst [vmem:[#allocation2 + $0xb8] sm:$0xff] %v2764
      %2797 = vst [vmem:[#allocation2 + $0xc0] sm:$0xff] %v2765
      %2798 = vst [vmem:[#allocation2 + $0xc8] sm:$0xff] %v2766
      %2799 = vst [vmem:[#allocation2 + $0xd0] sm:$0xff] %v2767
      %2800 = vst [vmem:[#allocation2 + $0xd8] sm:$0xff] %v2768
      %2801 = vst [vmem:[#allocation2 + $0xe0] sm:$0xff] %v2769
      %2802 = vst [vmem:[#allocation2 + $0xe8] sm:$0xff] %v2770
      %2803 = vst [vmem:[#allocation2 + $0xf0] sm:$0xff] %v2771
      %2804 = vst [vmem:[#allocation2 + $0xf8] sm:$0xff] %v2772
      %v2805 = vld [vmem:[%s2434 + $0x1] sm:$0xff]
      %v2806 = vld [vmem:[%s2434 + $0x9] sm:$0xff]
      %v2807 = vld [vmem:[%s2434 + $0x19] sm:$0xff]
      %v2808 = vld [vmem:[%s2434 + $0x21] sm:$0xff]
      %v2809 = vld [vmem:[%s2434 + $0x31] sm:$0xff]
      %v2810 = vld [vmem:[%s2434 + $0x39] sm:$0xff]
      %v2811 = vld [vmem:[%s2434 + $0x49] sm:$0xff]
      %v2812 = vld [vmem:[%s2434 + $0x51] sm:$0xff]
      %v2813 = vld [vmem:[%s2434 + $0x61] sm:$0xff]
      %v2814 = vld [vmem:[%s2434 + $0x69] sm:$0xff]
      %v2815 = vld [vmem:[%s2434 + $0x79] sm:$0xff]
      %v2816 = vld [vmem:[%s2434 + $0x81] sm:$0xff]
      %v2817 = vld [vmem:[%s2434 + $0x91] sm:$0xff]
      %v2818 = vld [vmem:[%s2434 + $0x99] sm:$0xff]
      %v2819 = vld [vmem:[%s2434 + $0xa9] sm:$0xff]
      %v2820 = vld [vmem:[%s2434 + $0xb1] sm:$0xff]
      %v2821 = vld [vmem:[%s2434 + $0xc1] sm:$0xff]
      %v2822 = vld [vmem:[%s2434 + $0xc9] sm:$0xff]
      %v2823 = vld [vmem:[%s2434 + $0xd9] sm:$0xff]
      %v2824 = vld [vmem:[%s2434 + $0xe1] sm:$0xff]
      %v2825 = vld [vmem:[%s2434 + $0xf1] sm:$0xff]
      %v2826 = vld [vmem:[%s2434 + $0xf9] sm:$0xff]
      %v2827 = vld [vmem:[%s2434 + $0x109] sm:$0xff]
      %v2828 = vld [vmem:[%s2434 + $0x111] sm:$0xff]
      %v2829 = vld [vmem:[%s2434 + $0x121] sm:$0xff]
      %v2830 = vld [vmem:[%s2434 + $0x129] sm:$0xff]
      %v2831 = vld [vmem:[%s2434 + $0x139] sm:$0xff]
      %v2832 = vld [vmem:[%s2434 + $0x141] sm:$0xff]
      %v2833 = vld [vmem:[%s2434 + $0x151] sm:$0xff]
      %v2834 = vld [vmem:[%s2434 + $0x159] sm:$0xff]
      %v2835 = vld [vmem:[%s2434 + $0x169] sm:$0xff]
      %v2836 = vld [vmem:[%s2434 + $0x171] sm:$0xff]
      %v2837 = vld [vmem:[#allocation2] sm:$0xff]
      %v2838 = vld [vmem:[#allocation2 + $0x8] sm:$0xff]
      %v2839 = vld [vmem:[#allocation2 + $0x10] sm:$0xff]
      %v2840 = vld [vmem:[#allocation2 + $0x18] sm:$0xff]
      %v2841 = vld [vmem:[#allocation2 + $0x20] sm:$0xff]
      %v2842 = vld [vmem:[#allocation2 + $0x28] sm:$0xff]
      %v2843 = vld [vmem:[#allocation2 + $0x30] sm:$0xff]
      %v2844 = vld [vmem:[#allocation2 + $0x38] sm:$0xff]
      %v2845 = vld [vmem:[#allocation2 + $0x40] sm:$0xff]
      %v2846 = vld [vmem:[#allocation2 + $0x48] sm:$0xff]
      %v2847 = vld [vmem:[#allocation2 + $0x50] sm:$0xff]
      %v2848 = vld [vmem:[#allocation2 + $0x58] sm:$0xff]
      %v2849 = vld [vmem:[#allocation2 + $0x60] sm:$0xff]
      %v2850 = vld [vmem:[#allocation2 + $0x68] sm:$0xff]
      %v2851 = vld [vmem:[#allocation2 + $0x70] sm:$0xff]
      %v2852 = vld [vmem:[#allocation2 + $0x78] sm:$0xff]
      %v2853 = vld [vmem:[#allocation2 + $0x80] sm:$0xff]
      %v2854 = vld [vmem:[#allocation2 + $0x88] sm:$0xff]
      %v2855 = vld [vmem:[#allocation2 + $0x90] sm:$0xff]
      %v2856 = vld [vmem:[#allocation2 + $0x98] sm:$0xff]
      %v2857 = vld [vmem:[#allocation2 + $0xa0] sm:$0xff]
      %v2858 = vld [vmem:[#allocation2 + $0xa8] sm:$0xff]
      %v2859 = vld [vmem:[#allocation2 + $0xb0] sm:$0xff]
      %v2860 = vld [vmem:[#allocation2 + $0xb8] sm:$0xff]
      %v2861 = vld [vmem:[#allocation2 + $0xc0] sm:$0xff]
      %v2862 = vld [vmem:[#allocation2 + $0xc8] sm:$0xff]
      %v2863 = vld [vmem:[#allocation2 + $0xd0] sm:$0xff]
      %v2864 = vld [vmem:[#allocation2 + $0xd8] sm:$0xff]
      %v2865 = vld [vmem:[#allocation2 + $0xe0] sm:$0xff]
      %v2866 = vld [vmem:[#allocation2 + $0xe8] sm:$0xff]
      %v2867 = vld [vmem:[#allocation2 + $0xf0] sm:$0xff]
      %v2868 = vld [vmem:[#allocation2 + $0xf8] sm:$0xff]
      %s2869 = scalar_lea.vmem %s1, 896
      %v2870 = vld [vmem:[%s2869] sm:$0xff]
      %v2871 = vld [vmem:[%s2869 + $0x8] sm:$0xff]
      %v2872 = vld [vmem:[%s2869 + $0x10] sm:$0xff]
      %v2873 = vld [vmem:[%s2869 + $0x18] sm:$0xff]
      %v2874 = vld [vmem:[%s2869 + $0x20] sm:$0xff]
      %v2875 = vld [vmem:[%s2869 + $0x28] sm:$0xff]
      %v2876 = vld [vmem:[%s2869 + $0x30] sm:$0xff]
      %v2877 = vld [vmem:[%s2869 + $0x38] sm:$0xff]
      %v2878 = vld [vmem:[%s2869 + $0x40] sm:$0xff]
      %v2879 = vld [vmem:[%s2869 + $0x48] sm:$0xff]
      %v2880 = vld [vmem:[%s2869 + $0x50] sm:$0xff]
      %v2881 = vld [vmem:[%s2869 + $0x58] sm:$0xff]
      %v2882 = vld [vmem:[%s2869 + $0x60] sm:$0xff]
      %v2883 = vld [vmem:[%s2869 + $0x68] sm:$0xff]
      %v2884 = vld [vmem:[%s2869 + $0x70] sm:$0xff]
      %v2885 = vld [vmem:[%s2869 + $0x78] sm:$0xff]
      %2886 = vmatprep.subr.mxu0 0.0
      %2887 = vmatpush1.msra.mxu0 %v2870
      %2888 = vmatprep.subr.mxu0 0.0
      %2889 = vmatpush1.msra.mxu0 %v2871
      %2890 = vmatprep.subr.mxu0 0.0
      %2891 = vmatpush1.msra.mxu0 %v2872
      %2892 = vmatprep.subr.mxu0 0.0
      %2893 = vmatpush1.msra.mxu0 %v2873
      %2894 = vmatprep.subr.mxu0 0.0
      %2895 = vmatpush1.msra.mxu0 %v2874
      %2896 = vmatprep.subr.mxu0 0.0
      %2897 = vmatpush1.msra.mxu0 %v2875
      %2898 = vmatprep.subr.mxu0 0.0
      %2899 = vmatpush1.msra.mxu0 %v2876
      %2900 = vmatprep.subr.mxu0 0.0
      %2901 = vmatpush1.msra.mxu0 %v2877
      %2902 = vmatprep.subr.mxu0 0.0
      %2903 = vmatpush1.msra.mxu0 %v2878
      %2904 = vmatprep.subr.mxu0 0.0
      %2905 = vmatpush1.msra.mxu0 %v2879
      %2906 = vmatprep.subr.mxu0 0.0
      %2907 = vmatpush1.msra.mxu0 %v2880
      %2908 = vmatprep.subr.mxu0 0.0
      %2909 = vmatpush1.msra.mxu0 %v2881
      %2910 = vmatprep.subr.mxu0 0.0
      %2911 = vmatpush1.msra.mxu0 %v2882
      %2912 = vmatprep.subr.mxu0 0.0
      %2913 = vmatpush1.msra.mxu0 %v2883
      %2914 = vmatprep.subr.mxu0 0.0
      %2915 = vmatpush1.msra.mxu0 %v2884
      %2916 = vmatprep.subr.mxu0 0.0
      %2917 = vmatpush1.msra.mxu0 %v2885
      %2918 = vmatprep.subr.mxu0 0.0
      %2919 = vmatpush1.msra.mxu0 0.0
      %2920 = vmatprep.subr.mxu0 0.0
      %2921 = vmatpush1.msra.mxu0 0.0
      %2922 = vmatprep.subr.mxu0 0.0
      %2923 = vmatpush1.msra.mxu0 0.0
      %2924 = vmatprep.subr.mxu0 0.0
      %2925 = vmatpush1.msra.mxu0 0.0
      %2926 = vmatprep.subr.mxu0 0.0
      %2927 = vmatpush1.msra.mxu0 0.0
      %2928 = vmatprep.subr.mxu0 0.0
      %2929 = vmatpush1.msra.mxu0 0.0
      %2930 = vmatprep.subr.mxu0 0.0
      %2931 = vmatpush1.msra.mxu0 0.0
      %2932 = vmatprep.subr.mxu0 0.0
      %2933 = vmatpush1.msra.mxu0 0.0
      %2934 = vmatprep.subr.mxu0 0.0
      %2935 = vmatpush1.msra.mxu0 0.0
      %2936 = vmatprep.subr.mxu0 0.0
      %2937 = vmatpush1.msra.mxu0 0.0
      %2938 = vmatprep.subr.mxu0 0.0
      %2939 = vmatpush1.msra.mxu0 0.0
      %2940 = vmatprep.subr.mxu0 0.0
      %2941 = vmatpush1.msra.mxu0 0.0
      %2942 = vmatprep.subr.mxu0 0.0
      %2943 = vmatpush1.msra.mxu0 0.0
      %2944 = vmatprep.subr.mxu0 0.0
      %2945 = vmatpush1.msra.mxu0 0.0
      %2946 = vmatprep.subr.mxu0 0.0
      %2947 = vmatpush1.msra.mxu0 0.0
      %2948 = vmatprep.subr.mxu0 0.0
      %2949 = vmatpush1.msra.mxu0 0.0
      %2950 = vmatprep.mubr.f32.mxu0 0.0
      %2951 = vmatmul.mubr.f32.gmra.mrb[0].mxu0 %v2805
      %v2952 = vpop.f32.mrb[0].mxu0
      %v2953 = vadd.f32 0.0, %v2952
      %v2954 = vpop.f32.mrb[0].mxu0
      %2955 = vmatprep.mubr.f32.mxu0 0.0
      %2956 = vmatmul.mubr.f32.gmra.mrb[0].mxu0 %v2806
      %v2957 = vpop.f32.mrb[0].mxu0
      %v2958 = vadd.f32 0.0, %v2957
      %v2959 = vpop.f32.mrb[0].mxu0
      %2960 = vmatprep.mubr.f32.mxu0 0.0
      %2961 = vmatmul.mubr.f32.gmra.mrb[0].mxu0 %v2807
      %v2962 = vpop.f32.mrb[0].mxu0
      %v2963 = vadd.f32 0.0, %v2962
      %v2964 = vpop.f32.mrb[0].mxu0
      %2965 = vmatprep.mubr.f32.mxu0 0.0
      %2966 = vmatmul.mubr.f32.gmra.mrb[0].mxu0 %v2808
      %v2967 = vpop.f32.mrb[0].mxu0
      %v2968 = vadd.f32 0.0, %v2967
      %v2969 = vpop.f32.mrb[0].mxu0
      %2970 = vmatprep.mubr.f32.mxu0 0.0
      %2971 = vmatmul.mubr.f32.gmra.mrb[0].mxu0 %v2809
      %v2972 = vpop.f32.mrb[0].mxu0
      %v2973 = vadd.f32 0.0, %v2972
      %v2974 = vpop.f32.mrb[0].mxu0
      %2975 = vmatprep.mubr.f32.mxu0 0.0
      %2976 = vmatmul.mubr.f32.gmra.mrb[0].mxu0 %v2810
      %v2977 = vpop.f32.mrb[0].mxu0
      %v2978 = vadd.f32 0.0, %v2977
      %v2979 = vpop.f32.mrb[0].mxu0
      %2980 = vmatprep.mubr.f32.mxu0 0.0
      %2981 = vmatmul.mubr.f32.gmra.mrb[0].mxu0 %v2811
      %v2982 = vpop.f32.mrb[0].mxu0
      %v2983 = vadd.f32 0.0, %v2982
      %v2984 = vpop.f32.mrb[0].mxu0
      %2985 = vmatprep.mubr.f32.mxu0 0.0
      %2986 = vmatmul.mubr.f32.gmra.mrb[0].mxu0 %v2812
      %v2987 = vpop.f32.mrb[0].mxu0
      %v2988 = vadd.f32 0.0, %v2987
      %v2989 = vpop.f32.mrb[0].mxu0
      %2990 = vmatprep.mubr.f32.mxu0 0.0
      %2991 = vmatmul.mubr.f32.gmra.mrb[0].mxu0 %v2813
      %v2992 = vpop.f32.mrb[0].mxu0
      %v2993 = vadd.f32 0.0, %v2992
      %v2994 = vpop.f32.mrb[0].mxu0
      %2995 = vmatprep.mubr.f32.mxu0 0.0
      %2996 = vmatmul.mubr.f32.gmra.mrb[0].mxu0 %v2814
      %v2997 = vpop.f32.mrb[0].mxu0
      %v2998 = vadd.f32 0.0, %v2997
      %v2999 = vpop.f32.mrb[0].mxu0
      %3000 = vmatprep.mubr.f32.mxu0 0.0
      %3001 = vmatmul.mubr.f32.gmra.mrb[0].mxu0 %v2815
      %v3002 = vpop.f32.mrb[0].mxu0
      %v3003 = vadd.f32 0.0, %v3002
      %v3004 = vpop.f32.mrb[0].mxu0
      %3005 = vmatprep.mubr.f32.mxu0 0.0
      %3006 = vmatmul.mubr.f32.gmra.mrb[0].mxu0 %v2816
      %v3007 = vpop.f32.mrb[0].mxu0
      %v3008 = vadd.f32 0.0, %v3007
      %v3009 = vpop.f32.mrb[0].mxu0
      %3010 = vmatprep.mubr.f32.mxu0 0.0
      %3011 = vmatmul.mubr.f32.gmra.mrb[0].mxu0 %v2817
      %v3012 = vpop.f32.mrb[0].mxu0
      %v3013 = vadd.f32 0.0, %v3012
      %v3014 = vpop.f32.mrb[0].mxu0
      %3015 = vmatprep.mubr.f32.mxu0 0.0
      %3016 = vmatmul.mubr.f32.gmra.mrb[0].mxu0 %v2818
      %v3017 = vpop.f32.mrb[0].mxu0
      %v3018 = vadd.f32 0.0, %v3017
      %v3019 = vpop.f32.mrb[0].mxu0
      %3020 = vmatprep.mubr.f32.mxu0 0.0
      %3021 = vmatmul.mubr.f32.gmra.mrb[0].mxu0 %v2819
      %v3022 = vpop.f32.mrb[0].mxu0
      %v3023 = vadd.f32 0.0, %v3022
      %v3024 = vpop.f32.mrb[0].mxu0
      %3025 = vmatprep.mubr.f32.mxu0 0.0
      %3026 = vmatmul.mubr.f32.gmra.mrb[0].mxu0 %v2820
      %v3027 = vpop.f32.mrb[0].mxu0
      %v3028 = vadd.f32 0.0, %v3027
      %v3029 = vpop.f32.mrb[0].mxu0
      %3030 = vmatprep.mubr.f32.mxu0 0.0
      %3031 = vmatmul.mubr.f32.gmra.mrb[0].mxu0 %v2821
      %v3032 = vpop.f32.mrb[0].mxu0
      %v3033 = vadd.f32 0.0, %v3032
      %v3034 = vpop.f32.mrb[0].mxu0
      %3035 = vmatprep.mubr.f32.mxu0 0.0
      %3036 = vmatmul.mubr.f32.gmra.mrb[0].mxu0 %v2822
      %v3037 = vpop.f32.mrb[0].mxu0
      %v3038 = vadd.f32 0.0, %v3037
      %v3039 = vpop.f32.mrb[0].mxu0
      %3040 = vmatprep.mubr.f32.mxu0 0.0
      %3041 = vmatmul.mubr.f32.gmra.mrb[0].mxu0 %v2823
      %v3042 = vpop.f32.mrb[0].mxu0
      %v3043 = vadd.f32 0.0, %v3042
      %v3044 = vpop.f32.mrb[0].mxu0
      %3045 = vmatprep.mubr.f32.mxu0 0.0
      %3046 = vmatmul.mubr.f32.gmra.mrb[0].mxu0 %v2824
      %v3047 = vpop.f32.mrb[0].mxu0
      %v3048 = vadd.f32 0.0, %v3047
      %v3049 = vpop.f32.mrb[0].mxu0
      %3050 = vmatprep.mubr.f32.mxu0 0.0
      %3051 = vmatmul.mubr.f32.gmra.mrb[0].mxu0 %v2825
      %v3052 = vpop.f32.mrb[0].mxu0
      %v3053 = vadd.f32 0.0, %v3052
      %v3054 = vpop.f32.mrb[0].mxu0
      %3055 = vmatprep.mubr.f32.mxu0 0.0
      %3056 = vmatmul.mubr.f32.gmra.mrb[0].mxu0 %v2826
      %v3057 = vpop.f32.mrb[0].mxu0
      %v3058 = vadd.f32 0.0, %v3057
      %v3059 = vpop.f32.mrb[0].mxu0
      %3060 = vmatprep.mubr.f32.mxu0 0.0
      %3061 = vmatmul.mubr.f32.gmra.mrb[0].mxu0 %v2827
      %v3062 = vpop.f32.mrb[0].mxu0
      %v3063 = vadd.f32 0.0, %v3062
      %v3064 = vpop.f32.mrb[0].mxu0
      %3065 = vmatprep.mubr.f32.mxu0 0.0
      %3066 = vmatmul.mubr.f32.gmra.mrb[0].mxu0 %v2828
      %v3067 = vpop.f32.mrb[0].mxu0
      %v3068 = vadd.f32 0.0, %v3067
      %v3069 = vpop.f32.mrb[0].mxu0
      %3070 = vmatprep.mubr.f32.mxu0 0.0
      %3071 = vmatmul.mubr.f32.gmra.mrb[0].mxu0 %v2829
      %v3072 = vpop.f32.mrb[0].mxu0
      %v3073 = vadd.f32 0.0, %v3072
      %v3074 = vpop.f32.mrb[0].mxu0
      %3075 = vmatprep.mubr.f32.mxu0 0.0
      %3076 = vmatmul.mubr.f32.gmra.mrb[0].mxu0 %v2830
      %v3077 = vpop.f32.mrb[0].mxu0
      %v3078 = vadd.f32 0.0, %v3077
      %v3079 = vpop.f32.mrb[0].mxu0
      %3080 = vmatprep.mubr.f32.mxu0 0.0
      %3081 = vmatmul.mubr.f32.gmra.mrb[0].mxu0 %v2831
      %v3082 = vpop.f32.mrb[0].mxu0
      %v3083 = vadd.f32 0.0, %v3082
      %v3084 = vpop.f32.mrb[0].mxu0
      %3085 = vmatprep.mubr.f32.mxu0 0.0
      %3086 = vmatmul.mubr.f32.gmra.mrb[0].mxu0 %v2832
      %v3087 = vpop.f32.mrb[0].mxu0
      %v3088 = vadd.f32 0.0, %v3087
      %v3089 = vpop.f32.mrb[0].mxu0
      %3090 = vmatprep.mubr.f32.mxu0 0.0
      %3091 = vmatmul.mubr.f32.gmra.mrb[0].mxu0 %v2833
      %v3092 = vpop.f32.mrb[0].mxu0
      %v3093 = vadd.f32 0.0, %v3092
      %v3094 = vpop.f32.mrb[0].mxu0
      %3095 = vmatprep.mubr.f32.mxu0 0.0
      %3096 = vmatmul.mubr.f32.gmra.mrb[0].mxu0 %v2834
      %v3097 = vpop.f32.mrb[0].mxu0
      %v3098 = vadd.f32 0.0, %v3097
      %v3099 = vpop.f32.mrb[0].mxu0
      %3100 = vmatprep.mubr.f32.mxu0 0.0
      %3101 = vmatmul.mubr.f32.gmra.mrb[0].mxu0 %v2835
      %v3102 = vpop.f32.mrb[0].mxu0
      %v3103 = vadd.f32 0.0, %v3102
      %v3104 = vpop.f32.mrb[0].mxu0
      %3105 = vmatprep.mubr.f32.mxu0 0.0
      %3106 = vmatmul.mubr.f32.gmra.mrb[0].mxu0 %v2836
      %v3107 = vpop.f32.mrb[0].mxu0
      %v3108 = vadd.f32 0.0, %v3107
      %v3109 = vpop.f32.mrb[0].mxu0
      %3110 = vdwg.mxu0
      %v3111 = vadd.f32 %v2837, %v2953
      %v3112 = vadd.f32 %v2838, %v2958
      %v3113 = vadd.f32 %v2839, %v2963
      %v3114 = vadd.f32 %v2840, %v2968
      %v3115 = vadd.f32 %v2841, %v2973
      %v3116 = vadd.f32 %v2842, %v2978
      %v3117 = vadd.f32 %v2843, %v2983
      %v3118 = vadd.f32 %v2844, %v2988
      %v3119 = vadd.f32 %v2845, %v2993
      %v3120 = vadd.f32 %v2846, %v2998
      %v3121 = vadd.f32 %v2847, %v3003
      %v3122 = vadd.f32 %v2848, %v3008
      %v3123 = vadd.f32 %v2849, %v3013
      %v3124 = vadd.f32 %v2850, %v3018
      %v3125 = vadd.f32 %v2851, %v3023
      %v3126 = vadd.f32 %v2852, %v3028
      %v3127 = vadd.f32 %v2853, %v3033
      %v3128 = vadd.f32 %v2854, %v3038
      %v3129 = vadd.f32 %v2855, %v3043
      %v3130 = vadd.f32 %v2856, %v3048
      %v3131 = vadd.f32 %v2857, %v3053
      %v3132 = vadd.f32 %v2858, %v3058
      %v3133 = vadd.f32 %v2859, %v3063
      %v3134 = vadd.f32 %v2860, %v3068
      %v3135 = vadd.f32 %v2861, %v3073
      %v3136 = vadd.f32 %v2862, %v3078
      %v3137 = vadd.f32 %v2863, %v3083
      %v3138 = vadd.f32 %v2864, %v3088
      %v3139 = vadd.f32 %v2865, %v3093
      %v3140 = vadd.f32 %v2866, %v3098
      %v3141 = vadd.f32 %v2867, %v3103
      %v3142 = vadd.f32 %v2868, %v3108
      %3143 = vst [vmem:[#allocation2] sm:$0xff] %v3111
      %3144 = vst [vmem:[#allocation2 + $0x8] sm:$0xff] %v3112
      %3145 = vst [vmem:[#allocation2 + $0x10] sm:$0xff] %v3113
      %3146 = vst [vmem:[#allocation2 + $0x18] sm:$0xff] %v3114
      %3147 = vst [vmem:[#allocation2 + $0x20] sm:$0xff] %v3115
      %3148 = vst [vmem:[#allocation2 + $0x28] sm:$0xff] %v3116
      %3149 = vst [vmem:[#allocation2 + $0x30] sm:$0xff] %v3117
      %3150 = vst [vmem:[#allocation2 + $0x38] sm:$0xff] %v3118
      %3151 = vst [vmem:[#allocation2 + $0x40] sm:$0xff] %v3119
      %3152 = vst [vmem:[#allocation2 + $0x48] sm:$0xff] %v3120
      %3153 = vst [vmem:[#allocation2 + $0x50] sm:$0xff] %v3121
      %3154 = vst [vmem:[#allocation2 + $0x58] sm:$0xff] %v3122
      %3155 = vst [vmem:[#allocation2 + $0x60] sm:$0xff] %v3123
      %3156 = vst [vmem:[#allocation2 + $0x68] sm:$0xff] %v3124
      %3157 = vst [vmem:[#allocation2 + $0x70] sm:$0xff] %v3125
      %3158 = vst [vmem:[#allocation2 + $0x78] sm:$0xff] %v3126
      %3159 = vst [vmem:[#allocation2 + $0x80] sm:$0xff] %v3127
      %3160 = vst [vmem:[#allocation2 + $0x88] sm:$0xff] %v3128
      %3161 = vst [vmem:[#allocation2 + $0x90] sm:$0xff] %v3129
      %3162 = vst [vmem:[#allocation2 + $0x98] sm:$0xff] %v3130
      %3163 = vst [vmem:[#allocation2 + $0xa0] sm:$0xff] %v3131
      %3164 = vst [vmem:[#allocation2 + $0xa8] sm:$0xff] %v3132
      %3165 = vst [vmem:[#allocation2 + $0xb0] sm:$0xff] %v3133
      %3166 = vst [vmem:[#allocation2 + $0xb8] sm:$0xff] %v3134
      %3167 = vst [vmem:[#allocation2 + $0xc0] sm:$0xff] %v3135
      %3168 = vst [vmem:[#allocation2 + $0xc8] sm:$0xff] %v3136
      %3169 = vst [vmem:[#allocation2 + $0xd0] sm:$0xff] %v3137
      %3170 = vst [vmem:[#allocation2 + $0xd8] sm:$0xff] %v3138
      %3171 = vst [vmem:[#allocation2 + $0xe0] sm:$0xff] %v3139
      %3172 = vst [vmem:[#allocation2 + $0xe8] sm:$0xff] %v3140
      %3173 = vst [vmem:[#allocation2 + $0xf0] sm:$0xff] %v3141
      %3174 = vst [vmem:[#allocation2 + $0xf8] sm:$0xff] %v3142
      %v3175 = vld [vmem:[%s2434 + $0x2] sm:$0xff]
      %v3176 = vld [vmem:[%s2434 + $0xa] sm:$0xff]
      %v3177 = vld [vmem:[%s2434 + $0x1a] sm:$0xff]
      %v3178 = vld [vmem:[%s2434 + $0x22] sm:$0xff]
      %v3179 = vld [vmem:[%s2434 + $0x32] sm:$0xff]
      %v3180 = vld [vmem:[%s2434 + $0x3a] sm:$0xff]
      %v3181 = vld [vmem:[%s2434 + $0x4a] sm:$0xff]
      %v3182 = vld [vmem:[%s2434 + $0x52] sm:$0xff]
      %v3183 = vld [vmem:[%s2434 + $0x62] sm:$0xff]
      %v3184 = vld [vmem:[%s2434 + $0x6a] sm:$0xff]
      %v3185 = vld [vmem:[%s2434 + $0x7a] sm:$0xff]
      %v3186 = vld [vmem:[%s2434 + $0x82] sm:$0xff]
      %v3187 = vld [vmem:[%s2434 + $0x92] sm:$0xff]
      %v3188 = vld [vmem:[%s2434 + $0x9a] sm:$0xff]
      %v3189 = vld [vmem:[%s2434 + $0xaa] sm:$0xff]
      %v3190 = vld [vmem:[%s2434 + $0xb2] sm:$0xff]
      %v3191 = vld [vmem:[%s2434 + $0xc2] sm:$0xff]
      %v3192 = vld [vmem:[%s2434 + $0xca] sm:$0xff]
      %v3193 = vld [vmem:[%s2434 + $0xda] sm:$0xff]
      %v3194 = vld [vmem:[%s2434 + $0xe2] sm:$0xff]
      %v3195 = vld [vmem:[%s2434 + $0xf2] sm:$0xff]
      %v3196 = vld [vmem:[%s2434 + $0xfa] sm:$0xff]
      %v3197 = vld [vmem:[%s2434 + $0x10a] sm:$0xff]
      %v3198 = vld [vmem:[%s2434 + $0x112] sm:$0xff]
      %v3199 = vld [vmem:[%s2434 + $0x122] sm:$0xff]
      %v3200 = vld [vmem:[%s2434 + $0x12a] sm:$0xff]
      %v3201 = vld [vmem:[%s2434 + $0x13a] sm:$0xff]
      %v3202 = vld [vmem:[%s2434 + $0x142] sm:$0xff]
      %v3203 = vld [vmem:[%s2434 + $0x152] sm:$0xff]
      %v3204 = vld [vmem:[%s2434 + $0x15a] sm:$0xff]
      %v3205 = vld [vmem:[%s2434 + $0x16a] sm:$0xff]
      %v3206 = vld [vmem:[%s2434 + $0x172] sm:$0xff]
      %v3207 = vld [vmem:[#allocation2] sm:$0xff]
      %v3208 = vld [vmem:[#allocation2 + $0x8] sm:$0xff]
      %v3209 = vld [vmem:[#allocation2 + $0x10] sm:$0xff]
      %v3210 = vld [vmem:[#allocation2 + $0x18] sm:$0xff]
      %v3211 = vld [vmem:[#allocation2 + $0x20] sm:$0xff]
      %v3212 = vld [vmem:[#allocation2 + $0x28] sm:$0xff]
      %v3213 = vld [vmem:[#allocation2 + $0x30] sm:$0xff]
      %v3214 = vld [vmem:[#allocation2 + $0x38] sm:$0xff]
      %v3215 = vld [vmem:[#allocation2 + $0x40] sm:$0xff]
      %v3216 = vld [vmem:[#allocation2 + $0x48] sm:$0xff]
      %v3217 = vld [vmem:[#allocation2 + $0x50] sm:$0xff]
      %v3218 = vld [vmem:[#allocation2 + $0x58] sm:$0xff]
      %v3219 = vld [vmem:[#allocation2 + $0x60] sm:$0xff]
      %v3220 = vld [vmem:[#allocation2 + $0x68] sm:$0xff]
      %v3221 = vld [vmem:[#allocation2 + $0x70] sm:$0xff]
      %v3222 = vld [vmem:[#allocation2 + $0x78] sm:$0xff]
      %v3223 = vld [vmem:[#allocation2 + $0x80] sm:$0xff]
      %v3224 = vld [vmem:[#allocation2 + $0x88] sm:$0xff]
      %v3225 = vld [vmem:[#allocation2 + $0x90] sm:$0xff]
      %v3226 = vld [vmem:[#allocation2 + $0x98] sm:$0xff]
      %v3227 = vld [vmem:[#allocation2 + $0xa0] sm:$0xff]
      %v3228 = vld [vmem:[#allocation2 + $0xa8] sm:$0xff]
      %v3229 = vld [vmem:[#allocation2 + $0xb0] sm:$0xff]
      %v3230 = vld [vmem:[#allocation2 + $0xb8] sm:$0xff]
      %v3231 = vld [vmem:[#allocation2 + $0xc0] sm:$0xff]
      %v3232 = vld [vmem:[#allocation2 + $0xc8] sm:$0xff]
      %v3233 = vld [vmem:[#allocation2 + $0xd0] sm:$0xff]
      %v3234 = vld [vmem:[#allocation2 + $0xd8] sm:$0xff]
      %v3235 = vld [vmem:[#allocation2 + $0xe0] sm:$0xff]
      %v3236 = vld [vmem:[#allocation2 + $0xe8] sm:$0xff]
      %v3237 = vld [vmem:[#allocation2 + $0xf0] sm:$0xff]
      %v3238 = vld [vmem:[#allocation2 + $0xf8] sm:$0xff]
      %s3239 = scalar_lea.vmem %s1, 1024
      %v3240 = vld [vmem:[%s3239] sm:$0xff]
      %v3241 = vld [vmem:[%s3239 + $0x8] sm:$0xff]
      %v3242 = vld [vmem:[%s3239 + $0x10] sm:$0xff]
      %v3243 = vld [vmem:[%s3239 + $0x18] sm:$0xff]
      %v3244 = vld [vmem:[%s3239 + $0x20] sm:$0xff]
      %v3245 = vld [vmem:[%s3239 + $0x28] sm:$0xff]
      %v3246 = vld [vmem:[%s3239 + $0x30] sm:$0xff]
      %v3247 = vld [vmem:[%s3239 + $0x38] sm:$0xff]
      %v3248 = vld [vmem:[%s3239 + $0x40] sm:$0xff]
      %v3249 = vld [vmem:[%s3239 + $0x48] sm:$0xff]
      %v3250 = vld [vmem:[%s3239 + $0x50] sm:$0xff]
      %v3251 = vld [vmem:[%s3239 + $0x58] sm:$0xff]
      %v3252 = vld [vmem:[%s3239 + $0x60] sm:$0xff]
      %v3253 = vld [vmem:[%s3239 + $0x68] sm:$0xff]
      %v3254 = vld [vmem:[%s3239 + $0x70] sm:$0xff]
      %v3255 = vld [vmem:[%s3239 + $0x78] sm:$0xff]
      %3256 = vmatprep.subr.mxu0 0.0
      %3257 = vmatpush1.msra.mxu0 %v3240
      %3258 = vmatprep.subr.mxu0 0.0
      %3259 = vmatpush1.msra.mxu0 %v3241
      %3260 = vmatprep.subr.mxu0 0.0
      %3261 = vmatpush1.msra.mxu0 %v3242
      %3262 = vmatprep.subr.mxu0 0.0
      %3263 = vmatpush1.msra.mxu0 %v3243
      %3264 = vmatprep.subr.mxu0 0.0
      %3265 = vmatpush1.msra.mxu0 %v3244
      %3266 = vmatprep.subr.mxu0 0.0
      %3267 = vmatpush1.msra.mxu0 %v3245
      %3268 = vmatprep.subr.mxu0 0.0
      %3269 = vmatpush1.msra.mxu0 %v3246
      %3270 = vmatprep.subr.mxu0 0.0
      %3271 = vmatpush1.msra.mxu0 %v3247
      %3272 = vmatprep.subr.mxu0 0.0
      %3273 = vmatpush1.msra.mxu0 %v3248
      %3274 = vmatprep.subr.mxu0 0.0
      %3275 = vmatpush1.msra.mxu0 %v3249
      %3276 = vmatprep.subr.mxu0 0.0
      %3277 = vmatpush1.msra.mxu0 %v3250
      %3278 = vmatprep.subr.mxu0 0.0
      %3279 = vmatpush1.msra.mxu0 %v3251
      %3280 = vmatprep.subr.mxu0 0.0
      %3281 = vmatpush1.msra.mxu0 %v3252
      %3282 = vmatprep.subr.mxu0 0.0
      %3283 = vmatpush1.msra.mxu0 %v3253
      %3284 = vmatprep.subr.mxu0 0.0
      %3285 = vmatpush1.msra.mxu0 %v3254
      %3286 = vmatprep.subr.mxu0 0.0
      %3287 = vmatpush1.msra.mxu0 %v3255
      %3288 = vmatprep.subr.mxu0 0.0
      %3289 = vmatpush1.msra.mxu0 0.0
      %3290 = vmatprep.subr.mxu0 0.0
      %3291 = vmatpush1.msra.mxu0 0.0
      %3292 = vmatprep.subr.mxu0 0.0
      %3293 = vmatpush1.msra.mxu0 0.0
      %3294 = vmatprep.subr.mxu0 0.0
      %3295 = vmatpush1.msra.mxu0 0.0
      %3296 = vmatprep.subr.mxu0 0.0
      %3297 = vmatpush1.msra.mxu0 0.0
      %3298 = vmatprep.subr.mxu0 0.0
      %3299 = vmatpush1.msra.mxu0 0.0
      %3300 = vmatprep.subr.mxu0 0.0
      %3301 = vmatpush1.msra.mxu0 0.0
      %3302 = vmatprep.subr.mxu0 0.0
      %3303 = vmatpush1.msra.mxu0 0.0
      %3304 = vmatprep.subr.mxu0 0.0
      %3305 = vmatpush1.msra.mxu0 0.0
      %3306 = vmatprep.subr.mxu0 0.0
      %3307 = vmatpush1.msra.mxu0 0.0
      %3308 = vmatprep.subr.mxu0 0.0
      %3309 = vmatpush1.msra.mxu0 0.0
      %3310 = vmatprep.subr.mxu0 0.0
      %3311 = vmatpush1.msra.mxu0 0.0
      %3312 = vmatprep.subr.mxu0 0.0
      %3313 = vmatpush1.msra.mxu0 0.0
      %3314 = vmatprep.subr.mxu0 0.0
      %3315 = vmatpush1.msra.mxu0 0.0
      %3316 = vmatprep.subr.mxu0 0.0
      %3317 = vmatpush1.msra.mxu0 0.0
      %3318 = vmatprep.subr.mxu0 0.0
      %3319 = vmatpush1.msra.mxu0 0.0
      %3320 = vmatprep.mubr.f32.mxu0 0.0
      %3321 = vmatmul.mubr.f32.gmra.mrb[0].mxu0 %v3175
      %v3322 = vpop.f32.mrb[0].mxu0
      %v3323 = vadd.f32 0.0, %v3322
      %v3324 = vpop.f32.mrb[0].mxu0
      %3325 = vmatprep.mubr.f32.mxu0 0.0
      %3326 = vmatmul.mubr.f32.gmra.mrb[0].mxu0 %v3176
      %v3327 = vpop.f32.mrb[0].mxu0
      %v3328 = vadd.f32 0.0, %v3327
      %v3329 = vpop.f32.mrb[0].mxu0
      %3330 = vmatprep.mubr.f32.mxu0 0.0
      %3331 = vmatmul.mubr.f32.gmra.mrb[0].mxu0 %v3177
      %v3332 = vpop.f32.mrb[0].mxu0
      %v3333 = vadd.f32 0.0, %v3332
      %v3334 = vpop.f32.mrb[0].mxu0
      %3335 = vmatprep.mubr.f32.mxu0 0.0
      %3336 = vmatmul.mubr.f32.gmra.mrb[0].mxu0 %v3178
      %v3337 = vpop.f32.mrb[0].mxu0
      %v3338 = vadd.f32 0.0, %v3337
      %v3339 = vpop.f32.mrb[0].mxu0
      %3340 = vmatprep.mubr.f32.mxu0 0.0
      %3341 = vmatmul.mubr.f32.gmra.mrb[0].mxu0 %v3179
      %v3342 = vpop.f32.mrb[0].mxu0
      %v3343 = vadd.f32 0.0, %v3342
      %v3344 = vpop.f32.mrb[0].mxu0
      %3345 = vmatprep.mubr.f32.mxu0 0.0
      %3346 = vmatmul.mubr.f32.gmra.mrb[0].mxu0 %v3180
      %v3347 = vpop.f32.mrb[0].mxu0
      %v3348 = vadd.f32 0.0, %v3347
      %v3349 = vpop.f32.mrb[0].mxu0
      %3350 = vmatprep.mubr.f32.mxu0 0.0
      %3351 = vmatmul.mubr.f32.gmra.mrb[0].mxu0 %v3181
      %v3352 = vpop.f32.mrb[0].mxu0
      %v3353 = vadd.f32 0.0, %v3352
      %v3354 = vpop.f32.mrb[0].mxu0
      %3355 = vmatprep.mubr.f32.mxu0 0.0
      %3356 = vmatmul.mubr.f32.gmra.mrb[0].mxu0 %v3182
      %v3357 = vpop.f32.mrb[0].mxu0
      %v3358 = vadd.f32 0.0, %v3357
      %v3359 = vpop.f32.mrb[0].mxu0
      %3360 = vmatprep.mubr.f32.mxu0 0.0
      %3361 = vmatmul.mubr.f32.gmra.mrb[0].mxu0 %v3183
      %v3362 = vpop.f32.mrb[0].mxu0
      %v3363 = vadd.f32 0.0, %v3362
      %v3364 = vpop.f32.mrb[0].mxu0
      %3365 = vmatprep.mubr.f32.mxu0 0.0
      %3366 = vmatmul.mubr.f32.gmra.mrb[0].mxu0 %v3184
      %v3367 = vpop.f32.mrb[0].mxu0
      %v3368 = vadd.f32 0.0, %v3367
      %v3369 = vpop.f32.mrb[0].mxu0
      %3370 = vmatprep.mubr.f32.mxu0 0.0
      %3371 = vmatmul.mubr.f32.gmra.mrb[0].mxu0 %v3185
      %v3372 = vpop.f32.mrb[0].mxu0
      %v3373 = vadd.f32 0.0, %v3372
      %v3374 = vpop.f32.mrb[0].mxu0
      %3375 = vmatprep.mubr.f32.mxu0 0.0
      %3376 = vmatmul.mubr.f32.gmra.mrb[0].mxu0 %v3186
      %v3377 = vpop.f32.mrb[0].mxu0
      %v3378 = vadd.f32 0.0, %v3377
      %v3379 = vpop.f32.mrb[0].mxu0
      %3380 = vmatprep.mubr.f32.mxu0 0.0
      %3381 = vmatmul.mubr.f32.gmra.mrb[0].mxu0 %v3187
      %v3382 = vpop.f32.mrb[0].mxu0
      %v3383 = vadd.f32 0.0, %v3382
      %v3384 = vpop.f32.mrb[0].mxu0
      %3385 = vmatprep.mubr.f32.mxu0 0.0
      %3386 = vmatmul.mubr.f32.gmra.mrb[0].mxu0 %v3188
      %v3387 = vpop.f32.mrb[0].mxu0
      %v3388 = vadd.f32 0.0, %v3387
      %v3389 = vpop.f32.mrb[0].mxu0
      %3390 = vmatprep.mubr.f32.mxu0 0.0
      %3391 = vmatmul.mubr.f32.gmra.mrb[0].mxu0 %v3189
      %v3392 = vpop.f32.mrb[0].mxu0
      %v3393 = vadd.f32 0.0, %v3392
      %v3394 = vpop.f32.mrb[0].mxu0
      %3395 = vmatprep.mubr.f32.mxu0 0.0
      %3396 = vmatmul.mubr.f32.gmra.mrb[0].mxu0 %v3190
      %v3397 = vpop.f32.mrb[0].mxu0
      %v3398 = vadd.f32 0.0, %v3397
      %v3399 = vpop.f32.mrb[0].mxu0
      %3400 = vmatprep.mubr.f32.mxu0 0.0
      %3401 = vmatmul.mubr.f32.gmra.mrb[0].mxu0 %v3191
      %v3402 = vpop.f32.mrb[0].mxu0
      %v3403 = vadd.f32 0.0, %v3402
      %v3404 = vpop.f32.mrb[0].mxu0
      %3405 = vmatprep.mubr.f32.mxu0 0.0
      %3406 = vmatmul.mubr.f32.gmra.mrb[0].mxu0 %v3192
      %v3407 = vpop.f32.mrb[0].mxu0
      %v3408 = vadd.f32 0.0, %v3407
      %v3409 = vpop.f32.mrb[0].mxu0
      %3410 = vmatprep.mubr.f32.mxu0 0.0
      %3411 = vmatmul.mubr.f32.gmra.mrb[0].mxu0 %v3193
      %v3412 = vpop.f32.mrb[0].mxu0
      %v3413 = vadd.f32 0.0, %v3412
      %v3414 = vpop.f32.mrb[0].mxu0
      %3415 = vmatprep.mubr.f32.mxu0 0.0
      %3416 = vmatmul.mubr.f32.gmra.mrb[0].mxu0 %v3194
      %v3417 = vpop.f32.mrb[0].mxu0
      %v3418 = vadd.f32 0.0, %v3417
      %v3419 = vpop.f32.mrb[0].mxu0
      %3420 = vmatprep.mubr.f32.mxu0 0.0
      %3421 = vmatmul.mubr.f32.gmra.mrb[0].mxu0 %v3195
      %v3422 = vpop.f32.mrb[0].mxu0
      %v3423 = vadd.f32 0.0, %v3422
      %v3424 = vpop.f32.mrb[0].mxu0
      %3425 = vmatprep.mubr.f32.mxu0 0.0
      %3426 = vmatmul.mubr.f32.gmra.mrb[0].mxu0 %v3196
      %v3427 = vpop.f32.mrb[0].mxu0
      %v3428 = vadd.f32 0.0, %v3427
      %v3429 = vpop.f32.mrb[0].mxu0
      %3430 = vmatprep.mubr.f32.mxu0 0.0
      %3431 = vmatmul.mubr.f32.gmra.mrb[0].mxu0 %v3197
      %v3432 = vpop.f32.mrb[0].mxu0
      %v3433 = vadd.f32 0.0, %v3432
      %v3434 = vpop.f32.mrb[0].mxu0
      %3435 = vmatprep.mubr.f32.mxu0 0.0
      %3436 = vmatmul.mubr.f32.gmra.mrb[0].mxu0 %v3198
      %v3437 = vpop.f32.mrb[0].mxu0
      %v3438 = vadd.f32 0.0, %v3437
      %v3439 = vpop.f32.mrb[0].mxu0
      %3440 = vmatprep.mubr.f32.mxu0 0.0
      %3441 = vmatmul.mubr.f32.gmra.mrb[0].mxu0 %v3199
      %v3442 = vpop.f32.mrb[0].mxu0
      %v3443 = vadd.f32 0.0, %v3442
      %v3444 = vpop.f32.mrb[0].mxu0
      %3445 = vmatprep.mubr.f32.mxu0 0.0
      %3446 = vmatmul.mubr.f32.gmra.mrb[0].mxu0 %v3200
      %v3447 = vpop.f32.mrb[0].mxu0
      %v3448 = vadd.f32 0.0, %v3447
      %v3449 = vpop.f32.mrb[0].mxu0
      %3450 = vmatprep.mubr.f32.mxu0 0.0
      %3451 = vmatmul.mubr.f32.gmra.mrb[0].mxu0 %v3201
      %v3452 = vpop.f32.mrb[0].mxu0
      %v3453 = vadd.f32 0.0, %v3452
      %v3454 = vpop.f32.mrb[0].mxu0
      %3455 = vmatprep.mubr.f32.mxu0 0.0
      %3456 = vmatmul.mubr.f32.gmra.mrb[0].mxu0 %v3202
      %v3457 = vpop.f32.mrb[0].mxu0
      %v3458 = vadd.f32 0.0, %v3457
      %v3459 = vpop.f32.mrb[0].mxu0
      %3460 = vmatprep.mubr.f32.mxu0 0.0
      %3461 = vmatmul.mubr.f32.gmra.mrb[0].mxu0 %v3203
      %v3462 = vpop.f32.mrb[0].mxu0
      %v3463 = vadd.f32 0.0, %v3462
      %v3464 = vpop.f32.mrb[0].mxu0
      %3465 = vmatprep.mubr.f32.mxu0 0.0
      %3466 = vmatmul.mubr.f32.gmra.mrb[0].mxu0 %v3204
      %v3467 = vpop.f32.mrb[0].mxu0
      %v3468 = vadd.f32 0.0, %v3467
      %v3469 = vpop.f32.mrb[0].mxu0
      %3470 = vmatprep.mubr.f32.mxu0 0.0
      %3471 = vmatmul.mubr.f32.gmra.mrb[0].mxu0 %v3205
      %v3472 = vpop.f32.mrb[0].mxu0
      %v3473 = vadd.f32 0.0, %v3472
      %v3474 = vpop.f32.mrb[0].mxu0
      %3475 = vmatprep.mubr.f32.mxu0 0.0
      %3476 = vmatmul.mubr.f32.gmra.mrb[0].mxu0 %v3206
      %v3477 = vpop.f32.mrb[0].mxu0
      %v3478 = vadd.f32 0.0, %v3477
      %v3479 = vpop.f32.mrb[0].mxu0
      %3480 = vdwg.mxu0
      %v3481 = vadd.f32 %v3207, %v3323
      %v3482 = vadd.f32 %v3208, %v3328
      %v3483 = vadd.f32 %v3209, %v3333
      %v3484 = vadd.f32 %v3210, %v3338
      %v3485 = vadd.f32 %v3211, %v3343
      %v3486 = vadd.f32 %v3212, %v3348
      %v3487 = vadd.f32 %v3213, %v3353
      %v3488 = vadd.f32 %v3214, %v3358
      %v3489 = vadd.f32 %v3215, %v3363
      %v3490 = vadd.f32 %v3216, %v3368
      %v3491 = vadd.f32 %v3217, %v3373
      %v3492 = vadd.f32 %v3218, %v3378
      %v3493 = vadd.f32 %v3219, %v3383
      %v3494 = vadd.f32 %v3220, %v3388
      %v3495 = vadd.f32 %v3221, %v3393
      %v3496 = vadd.f32 %v3222, %v3398
      %v3497 = vadd.f32 %v3223, %v3403
      %v3498 = vadd.f32 %v3224, %v3408
      %v3499 = vadd.f32 %v3225, %v3413
      %v3500 = vadd.f32 %v3226, %v3418
      %v3501 = vadd.f32 %v3227, %v3423
      %v3502 = vadd.f32 %v3228, %v3428
      %v3503 = vadd.f32 %v3229, %v3433
      %v3504 = vadd.f32 %v3230, %v3438
      %v3505 = vadd.f32 %v3231, %v3443
      %v3506 = vadd.f32 %v3232, %v3448
      %v3507 = vadd.f32 %v3233, %v3453
      %v3508 = vadd.f32 %v3234, %v3458
      %v3509 = vadd.f32 %v3235, %v3463
      %v3510 = vadd.f32 %v3236, %v3468
      %v3511 = vadd.f32 %v3237, %v3473
      %v3512 = vadd.f32 %v3238, %v3478
      %3513 = vst [vmem:[#allocation2] sm:$0xff] %v3481
      %3514 = vst [vmem:[#allocation2 + $0x8] sm:$0xff] %v3482
      %3515 = vst [vmem:[#allocation2 + $0x10] sm:$0xff] %v3483
      %3516 = vst [vmem:[#allocation2 + $0x18] sm:$0xff] %v3484
      %3517 = vst [vmem:[#allocation2 + $0x20] sm:$0xff] %v3485
      %3518 = vst [vmem:[#allocation2 + $0x28] sm:$0xff] %v3486
      %3519 = vst [vmem:[#allocation2 + $0x30] sm:$0xff] %v3487
      %3520 = vst [vmem:[#allocation2 + $0x38] sm:$0xff] %v3488
      %3521 = vst [vmem:[#allocation2 + $0x40] sm:$0xff] %v3489
      %3522 = vst [vmem:[#allocation2 + $0x48] sm:$0xff] %v3490
      %3523 = vst [vmem:[#allocation2 + $0x50] sm:$0xff] %v3491
      %3524 = vst [vmem:[#allocation2 + $0x58] sm:$0xff] %v3492
      %3525 = vst [vmem:[#allocation2 + $0x60] sm:$0xff] %v3493
      %3526 = vst [vmem:[#allocation2 + $0x68] sm:$0xff] %v3494
      %3527 = vst [vmem:[#allocation2 + $0x70] sm:$0xff] %v3495
      %3528 = vst [vmem:[#allocation2 + $0x78] sm:$0xff] %v3496
      %3529 = vst [vmem:[#allocation2 + $0x80] sm:$0xff] %v3497
      %3530 = vst [vmem:[#allocation2 + $0x88] sm:$0xff] %v3498
      %3531 = vst [vmem:[#allocation2 + $0x90] sm:$0xff] %v3499
      %3532 = vst [vmem:[#allocation2 + $0x98] sm:$0xff] %v3500
      %3533 = vst [vmem:[#allocation2 + $0xa0] sm:$0xff] %v3501
      %3534 = vst [vmem:[#allocation2 + $0xa8] sm:$0xff] %v3502
      %3535 = vst [vmem:[#allocation2 + $0xb0] sm:$0xff] %v3503
      %3536 = vst [vmem:[#allocation2 + $0xb8] sm:$0xff] %v3504
      %3537 = vst [vmem:[#allocation2 + $0xc0] sm:$0xff] %v3505
      %3538 = vst [vmem:[#allocation2 + $0xc8] sm:$0xff] %v3506
      %3539 = vst [vmem:[#allocation2 + $0xd0] sm:$0xff] %v3507
      %3540 = vst [vmem:[#allocation2 + $0xd8] sm:$0xff] %v3508
      %3541 = vst [vmem:[#allocation2 + $0xe0] sm:$0xff] %v3509
      %3542 = vst [vmem:[#allocation2 + $0xe8] sm:$0xff] %v3510
      %3543 = vst [vmem:[#allocation2 + $0xf0] sm:$0xff] %v3511
      %3544 = vst [vmem:[#allocation2 + $0xf8] sm:$0xff] %v3512
      %v3545 = vld [vmem:[#allocation2] sm:$0xff]
      %v3546 = vld [vmem:[#allocation2 + $0x8] sm:$0xff]
      %v3547 = vld [vmem:[#allocation2 + $0x10] sm:$0xff]
      %v3548 = vld [vmem:[#allocation2 + $0x18] sm:$0xff]
      %v3549 = vld [vmem:[#allocation2 + $0x20] sm:$0xff]
      %v3550 = vld [vmem:[#allocation2 + $0x28] sm:$0xff]
      %v3551 = vld [vmem:[#allocation2 + $0x30] sm:$0xff]
      %v3552 = vld [vmem:[#allocation2 + $0x38] sm:$0xff]
      %v3553 = vld [vmem:[#allocation2 + $0x40] sm:$0xff]
      %v3554 = vld [vmem:[#allocation2 + $0x48] sm:$0xff]
      %v3555 = vld [vmem:[#allocation2 + $0x50] sm:$0xff]
      %v3556 = vld [vmem:[#allocation2 + $0x58] sm:$0xff]
      %v3557 = vld [vmem:[#allocation2 + $0x60] sm:$0xff]
      %v3558 = vld [vmem:[#allocation2 + $0x68] sm:$0xff]
      %v3559 = vld [vmem:[#allocation2 + $0x70] sm:$0xff]
      %v3560 = vld [vmem:[#allocation2 + $0x78] sm:$0xff]
      %v3561 = vld [vmem:[#allocation2 + $0x80] sm:$0xff]
      %v3562 = vld [vmem:[#allocation2 + $0x88] sm:$0xff]
      %v3563 = vld [vmem:[#allocation2 + $0x90] sm:$0xff]
      %v3564 = vld [vmem:[#allocation2 + $0x98] sm:$0xff]
      %v3565 = vld [vmem:[#allocation2 + $0xa0] sm:$0xff]
      %v3566 = vld [vmem:[#allocation2 + $0xa8] sm:$0xff]
      %v3567 = vld [vmem:[#allocation2 + $0xb0] sm:$0xff]
      %v3568 = vld [vmem:[#allocation2 + $0xb8] sm:$0xff]
      %v3569 = vld [vmem:[#allocation2 + $0xc0] sm:$0xff]
      %v3570 = vld [vmem:[#allocation2 + $0xc8] sm:$0xff]
      %v3571 = vld [vmem:[#allocation2 + $0xd0] sm:$0xff]
      %v3572 = vld [vmem:[#allocation2 + $0xd8] sm:$0xff]
      %v3573 = vld [vmem:[#allocation2 + $0xe0] sm:$0xff]
      %v3574 = vld [vmem:[#allocation2 + $0xe8] sm:$0xff]
      %v3575 = vld [vmem:[#allocation2 + $0xf0] sm:$0xff]
      %v3576 = vld [vmem:[#allocation2 + $0xf8] sm:$0xff]
      %3577 = vst [vmem:[%s177] sm:$0xff] %v3545
      %3578 = vst [vmem:[%s177 + $0x8] sm:$0xff] %v3546
      %3579 = vst [vmem:[%s177 + $0x10] sm:$0xff] %v3547
      %3580 = vst [vmem:[%s177 + $0x18] sm:$0xff] %v3548
      %3581 = vst [vmem:[%s177 + $0x20] sm:$0xff] %v3549
      %3582 = vst [vmem:[%s177 + $0x28] sm:$0xff] %v3550
      %3583 = vst [vmem:[%s177 + $0x30] sm:$0xff] %v3551
      %3584 = vst [vmem:[%s177 + $0x38] sm:$0xff] %v3552
      %3585 = vst [vmem:[%s177 + $0x40] sm:$0xff] %v3553
      %3586 = vst [vmem:[%s177 + $0x48] sm:$0xff] %v3554
      %3587 = vst [vmem:[%s177 + $0x50] sm:$0xff] %v3555
      %3588 = vst [vmem:[%s177 + $0x58] sm:$0xff] %v3556
      %3589 = vst [vmem:[%s177 + $0x60] sm:$0xff] %v3557
      %3590 = vst [vmem:[%s177 + $0x68] sm:$0xff] %v3558
      %3591 = vst [vmem:[%s177 + $0x70] sm:$0xff] %v3559
      %3592 = vst [vmem:[%s177 + $0x78] sm:$0xff] %v3560
      %3593 = vst [vmem:[%s177 + $0x80] sm:$0xff] %v3561
      %3594 = vst [vmem:[%s177 + $0x88] sm:$0xff] %v3562
      %3595 = vst [vmem:[%s177 + $0x90] sm:$0xff] %v3563
      %3596 = vst [vmem:[%s177 + $0x98] sm:$0xff] %v3564
      %3597 = vst [vmem:[%s177 + $0xa0] sm:$0xff] %v3565
      %3598 = vst [vmem:[%s177 + $0xa8] sm:$0xff] %v3566
      %3599 = vst [vmem:[%s177 + $0xb0] sm:$0xff] %v3567
      %3600 = vst [vmem:[%s177 + $0xb8] sm:$0xff] %v3568
      %3601 = vst [vmem:[%s177 + $0xc0] sm:$0xff] %v3569
      %3602 = vst [vmem:[%s177 + $0xc8] sm:$0xff] %v3570
      %3603 = vst [vmem:[%s177 + $0xd0] sm:$0xff] %v3571
      %3604 = vst [vmem:[%s177 + $0xd8] sm:$0xff] %v3572
      %3605 = vst [vmem:[%s177 + $0xe0] sm:$0xff] %v3573
      %3606 = vst [vmem:[%s177 + $0xe8] sm:$0xff] %v3574
      %3607 = vst [vmem:[%s177 + $0xf0] sm:$0xff] %v3575
      %3608 = vst [vmem:[%s177 + $0xf8] sm:$0xff] %v3576
      %v3609 = vadd.f32 %v3545, %v3546
      %v3610 = vadd.f32 %v3609, %v3547
      %v3611 = vadd.f32 %v3610, %v3548
      %v3612 = vadd.f32 %v3611, %v3549
      %v3613 = vadd.f32 %v3612, %v3550
      %v3614 = vadd.f32 %v3613, %v3551
      %v3615 = vadd.f32 %v3614, %v3552
      %v3616 = vadd.f32 %v3615, %v3553
      %v3617 = vadd.f32 %v3616, %v3554
      %v3618 = vadd.f32 %v3617, %v3555
      %v3619 = vadd.f32 %v3618, %v3556
      %v3620 = vadd.f32 %v3619, %v3557
      %v3621 = vadd.f32 %v3620, %v3558
      %v3622 = vadd.f32 %v3621, %v3559
      %v3623 = vadd.f32 %v3622, %v3560
      %v3624 = vadd.f32 %v3623, %v3561
      %v3625 = vadd.f32 %v3624, %v3562
      %v3626 = vadd.f32 %v3625, %v3563
      %v3627 = vadd.f32 %v3626, %v3564
      %v3628 = vadd.f32 %v3627, %v3565
      %v3629 = vadd.f32 %v3628, %v3566
      %v3630 = vadd.f32 %v3629, %v3567
      %v3631 = vadd.f32 %v3630, %v3568
      %v3632 = vadd.f32 %v3631, %v3569
      %v3633 = vadd.f32 %v3632, %v3570
      %v3634 = vadd.f32 %v3633, %v3571
      %v3635 = vadd.f32 %v3634, %v3572
      %v3636 = vadd.f32 %v3635, %v3573
      %v3637 = vadd.f32 %v3636, %v3574
      %v3638 = vadd.f32 %v3637, %v3575
      %v3639 = vadd.f32 %v3638, %v3576
      %v3640 = vrot.slane %v3639, 4
      %v3641 = vadd.f32 %v3639, %v3640
      %v3642 = vrot.slane %v3641, 2
      %v3643 = vadd.f32 %v3641, %v3642
      %v3644 = vrot.slane %v3643, 1
      %v3645 = vadd.f32 %v3643, %v3644
      %v3646 = vmul.f32 %v3545, %v3545
      %v3647 = vmul.f32 %v3546, %v3546
      %v3648 = vmul.f32 %v3547, %v3547
      %v3649 = vmul.f32 %v3548, %v3548
      %v3650 = vmul.f32 %v3549, %v3549
      %v3651 = vmul.f32 %v3550, %v3550
      %v3652 = vmul.f32 %v3551, %v3551
      %v3653 = vmul.f32 %v3552, %v3552
      %v3654 = vmul.f32 %v3553, %v3553
      %v3655 = vmul.f32 %v3554, %v3554
      %v3656 = vmul.f32 %v3555, %v3555
      %v3657 = vmul.f32 %v3556, %v3556
      %v3658 = vmul.f32 %v3557, %v3557
      %v3659 = vmul.f32 %v3558, %v3558
      %v3660 = vmul.f32 %v3559, %v3559
      %v3661 = vmul.f32 %v3560, %v3560
      %v3662 = vmul.f32 %v3561, %v3561
      %v3663 = vmul.f32 %v3562, %v3562
      %v3664 = vmul.f32 %v3563, %v3563
      %v3665 = vmul.f32 %v3564, %v3564
      %v3666 = vmul.f32 %v3565, %v3565
      %v3667 = vmul.f32 %v3566, %v3566
      %v3668 = vmul.f32 %v3567, %v3567
      %v3669 = vmul.f32 %v3568, %v3568
      %v3670 = vmul.f32 %v3569, %v3569
      %v3671 = vmul.f32 %v3570, %v3570
      %v3672 = vmul.f32 %v3571, %v3571
      %v3673 = vmul.f32 %v3572, %v3572
      %v3674 = vmul.f32 %v3573, %v3573
      %v3675 = vmul.f32 %v3574, %v3574
      %v3676 = vmul.f32 %v3575, %v3575
      %v3677 = vmul.f32 %v3576, %v3576
      %v3678 = vadd.f32 %v3646, %v3647
      %v3679 = vadd.f32 %v3678, %v3648
      %v3680 = vadd.f32 %v3679, %v3649
      %v3681 = vadd.f32 %v3680, %v3650
      %v3682 = vadd.f32 %v3681, %v3651
      %v3683 = vadd.f32 %v3682, %v3652
      %v3684 = vadd.f32 %v3683, %v3653
      %v3685 = vadd.f32 %v3684, %v3654
      %v3686 = vadd.f32 %v3685, %v3655
      %v3687 = vadd.f32 %v3686, %v3656
      %v3688 = vadd.f32 %v3687, %v3657
      %v3689 = vadd.f32 %v3688, %v3658
      %v3690 = vadd.f32 %v3689, %v3659
      %v3691 = vadd.f32 %v3690, %v3660
      %v3692 = vadd.f32 %v3691, %v3661
      %v3693 = vadd.f32 %v3692, %v3662
      %v3694 = vadd.f32 %v3693, %v3663
      %v3695 = vadd.f32 %v3694, %v3664
      %v3696 = vadd.f32 %v3695, %v3665
      %v3697 = vadd.f32 %v3696, %v3666
      %v3698 = vadd.f32 %v3697, %v3667
      %v3699 = vadd.f32 %v3698, %v3668
      %v3700 = vadd.f32 %v3699, %v3669
      %v3701 = vadd.f32 %v3700, %v3670
      %v3702 = vadd.f32 %v3701, %v3671
      %v3703 = vadd.f32 %v3702, %v3672
      %v3704 = vadd.f32 %v3703, %v3673
      %v3705 = vadd.f32 %v3704, %v3674
      %v3706 = vadd.f32 %v3705, %v3675
      %v3707 = vadd.f32 %v3706, %v3676
      %v3708 = vadd.f32 %v3707, %v3677
      %v3709 = vrot.slane %v3708, 4
      %v3710 = vadd.f32 %v3708, %v3709
      %v3711 = vrot.slane %v3710, 2
      %v3712 = vadd.f32 %v3710, %v3711
      %v3713 = vrot.slane %v3712, 1
      %v3714 = vadd.f32 %v3712, %v3713
      %vm3715 = vcmask 1040384
      %v3716 = vsel %vm3715, %v3645, %v3714
      %3717 = vst [vmem:[%s181] sm:$0x3] %v3716
      %p3718 = scmp.lt.s32.totalorder %s15, 1
      %s3719 = scalar_select %p3718, %s15, 1
      %s3720 = smul.addr %s3719, 32
      %s3721 = smul.addr %s3720, 8
      %s3722 = scalar_lea.vmem %s2, %s3721
      %p3723 = scmp.lt.s32.totalorder %s15, 1
      %s3724 = scalar_select %p3723, %s15, 1
      %s3725 = smul.addr %s3724, 2
      %s3726 = scalar_lea.vmem %s3, %s3725
      // Predicated region
      $region29: #{bottleneck_forward.8} parent=27 // pred_check
        %p3727 = pneg %p80
      $region30: #{bottleneck_forward.8} parent=27 // pred_check_branch
        %3729 = sbr.rel (%p3727) target = $region32
      $region31: #{bottleneck_forward.8} parent=27 // pred_region
        _
      $region32: #{bottleneck_forward.8} parent=27 // pred_fallthru
        _
      // Predicated region
      $region33: #{bottleneck_forward.8} parent=27 // pred_check
        %p3730 = pneg %p106
      $region34: #{bottleneck_forward.8} parent=27 // pred_check_branch
        %3732 = sbr.rel (%p3730) target = $region36
      $region35: #{bottleneck_forward.8} parent=27 // pred_region
        _
      $region36: #{bottleneck_forward.8} parent=27 // pred_fallthru
        _
    $region28: #{bottleneck_forward.8} parent=5 // pred_fallthru
      _
    %p3733 = scmp.le.s32.totalorder 2, %s10
    // Predicated region
    $region37: #{bottleneck_forward.8} parent=5 // pred_check
      %p3734 = pneg %p3733
    $region38: #{bottleneck_forward.8} parent=5 // pred_check_branch
      %3736 = sbr.rel (%p3734) target = $region40
    $region39: #{bottleneck_forward.8} parent=5 // pred_region
      %s3737 = ssub.s32 %s10, 2
      // Predicated region
      $region41: #{bottleneck_forward.8} parent=39 // pred_check
        %p3738 = pneg %p86
      $region42: #{bottleneck_forward.8} parent=39 // pred_check_branch
        %3740 = sbr.rel (%p3738) target = $region44
      $region43: #{bottleneck_forward.8} parent=39 // pred_region
        %p3741 = scmp.lt.s32.totalorder %s16, 1
        %s3742 = scalar_select %p3741, %s16, 1
        %s3743 = smul.addr %s3742, 32
        %s3744 = smul.addr %s3743, 8
        %s3745 = scalar_lea.vmem %s2, %s3744
      $region44: #{bottleneck_forward.8} parent=39 // pred_fallthru
        _
      // Predicated region
      $region45: #{bottleneck_forward.8} parent=39 // pred_check
        %p3746 = pneg %p112
      $region46: #{bottleneck_forward.8} parent=39 // pred_check_branch
        %3748 = sbr.rel (%p3746) target = $region48
      $region47: #{bottleneck_forward.8} parent=39 // pred_region
        %p3749 = scmp.lt.s32.totalorder %s16, 1
        %s3750 = scalar_select %p3749, %s16, 1
        %s3751 = smul.addr %s3750, 2
        %s3752 = scalar_lea.vmem %s3, %s3751
      $region48: #{bottleneck_forward.8} parent=39 // pred_fallthru
        _
    $region40: #{bottleneck_forward.8} parent=5 // pred_fallthru
      _
  $region6: #{bottleneck_forward.8} parent=0 // loop_footer
    %s14 = sadd.s32 1, %s10
  $region7: #{bottleneck_forward.8} parent=0 // loop_footer_branch
    %9 = sbr.rel target = $region3
  $region8: #{bottleneck_forward.8} parent=0 // loop_exit
    _

</llo_original>
